<compile_context>
chip_gen: v6e
topology: v6e:2x2x1
jax: 0.10.0
libtpu: 0.0.40
codegen_flags: <defaults>
</compile_context>

<pallas_src>
import numpy as np

import jax
import jax.numpy as jnp
from jax.experimental import pallas as pl
from jax.experimental.pallas import tpu as pltpu


# ----------------------------------------------------------------------------
# small helpers
# ----------------------------------------------------------------------------
def _round_up(x, m):
    return ((x + m - 1) // m) * m


def _conv_out(size, k, stride, pad):
    return (size + 2 * pad - k) // stride + 1


def _build_selection(n, hin, win, ho, wo, kh, kw, stride, pad,
                     m_out_pad, m_in_pad):
    """0/1 row-selection matrices implementing im2col as matmuls.

    sel[t, dst, src] = 1  iff output row `dst` reads input row `src` for
    kernel tap t = ki*kw + kj (zero rows encode spatial zero padding).
    Rows are (N, H, W)-major flattened, matching the GEMM activation layout.
    """
    sel = np.zeros((kh * kw, m_out_pad, m_in_pad), np.float32)
    for ki in range(kh):
        for kj in range(kw):
            t = ki * kw + kj
            for b in range(n):
                for i in range(ho):
                    hi = i * stride + ki - pad
                    if hi < 0 or hi >= hin:
                        continue
                    for j in range(wo):
                        wi = j * stride + kj - pad
                        if wi < 0 or wi >= win:
                            continue
                        dst = (b * ho + i) * wo + j
                        src = (b * hin + hi) * win + wi
                        sel[t, dst, src] = 1.0
    return sel


# ----------------------------------------------------------------------------
# Pallas kernel (whole encoder, fused)
# ----------------------------------------------------------------------------
def _conv_taps(sel_ref, w_ref, y_f32):
    """One conv layer as  sum_t (Sel_t @ y) @ W_t  on the MXU.

    sel_ref: (taps, M_out_pad, M_in_pad) bf16 0/1 row-selection (im2col gather)
    w_ref:   (taps, C_in_pad, C_out_pad) bf16 per-tap weight slice
    y_f32:   (M_in_pad, C_in_pad)        f32 previous-layer activation
    """
    taps = sel_ref.shape[0]
    m_out_p = sel_ref.shape[1]
    c_out_p = w_ref.shape[2]
    y_bf = y_f32.astype(jnp.bfloat16)
    acc = jnp.zeros((m_out_p, c_out_p), jnp.float32)
    for t in range(taps):
        # Exact row gather (0/1 matrix) -> rows hold bf16 values in f32.
        rows = jnp.dot(sel_ref[t], y_bf, preferred_element_type=jnp.float32)
        acc = acc + jnp.dot(rows.astype(jnp.bfloat16), w_ref[t],
                            preferred_element_type=jnp.float32)
    return acc


def _make_encoder_kernel(n_pyramid, bn_rows, slope=0.2, eps=1e-5):
    """bn_rows[i] = real (unpadded) number of output rows of pyramid layer i."""

    def kernel(*refs):
        out_ref = refs[-1]
        it = iter(refs[:-1])

        # ---- initial conv (im2col patches precomputed in the wrapper) -------
        patches_ref = next(it)
        w1_ref = next(it)
        y = jnp.dot(patches_ref[...], w1_ref[...],
                    preferred_element_type=jnp.float32)
        y = jnp.where(y >= 0.0, y, slope * y)                  # LeakyReLU(0.2)

        # ---- pyramid: conv + BatchNorm (train-mode batch stats) + LeakyReLU -
        # TODO(synk): running_mean/running_var buffer updates are stateful and
        # do not affect the forward output, so they are not produced here.
        for i in range(n_pyramid):
            sel_ref = next(it)
            w_ref = next(it)
            g_ref = next(it)
            b_ref = next(it)
            y = _conv_taps(sel_ref, w_ref, y)
            # Padded rows/cols of the conv output are exactly zero, so plain
            # column sums divided by the REAL row count give the batch stats.
            inv_m = 1.0 / float(bn_rows[i])
            mean = jnp.sum(y, axis=0, keepdims=True) * inv_m
            ex2 = jnp.sum(y * y, axis=0, keepdims=True) * inv_m
            var = jnp.maximum(ex2 - mean * mean, 0.0)           # biased var
            y = (y - mean) * jax.lax.rsqrt(var + eps)
            y = y * g_ref[...] + b_ref[...]
            y = jnp.where(y >= 0.0, y, slope * y)

        # ---- final conv ------------------------------------------------------
        sel_ref = next(it)
        w_ref = next(it)
        out_ref[...] = _conv_taps(sel_ref, w_ref, y)

    return kernel


# ----------------------------------------------------------------------------
# Wrapper: builds padded GEMM operands + selection matrices, one pallas_call
# ----------------------------------------------------------------------------
def encoder_forward(params, x):
    N, C, H, W = (int(s) for s in x.shape)
    kh = kw = 4
    taps = kh * kw

    w1 = params["initial_w"]                       # (C1, C, 4, 4)
    C1 = int(w1.shape[0])

    # ---- initial conv geometry + wrapper-side im2col of the network input ---
    Ho = _conv_out(H, 4, 2, 4)
    Wo = _conv_out(W, 4, 2, 4)
    M1 = N * Ho * Wo
    K1 = C * taps
    M1p = _round_up(M1, 128)
    K1p = _round_up(K1, 128)
    C1p = _round_up(C1, 128)

    xp = jnp.pad(x, ((0, 0), (0, 0), (4, 4), (4, 4)))
    slabs = [xp[:, :, i:i + 2 * Ho:2, j:j + 2 * Wo:2]
             for i in range(kh) for j in range(kw)]
    p = jnp.stack(slabs, axis=0).reshape(kh, kw, N, C, Ho, Wo)
    patches = p.transpose(2, 4, 5, 3, 0, 1).reshape(M1, K1)   # K order (C,kh,kw)
    patches = jnp.pad(patches, ((0, M1p - M1), (0, K1p - K1))).astype(jnp.bfloat16)
    w1_2d = jnp.pad(w1.reshape(C1, K1).T, ((0, K1p - K1), (0, C1p - C1)))

    ops = [patches, w1_2d.astype(jnp.bfloat16)]
    flops = 2 * M1p * K1p * C1p

    # ---- pyramid layers ------------------------------------------------------
    h, w_sp = Ho, Wo
    m_in_p, c_in, c_in_p = M1p, C1, C1p
    bn_rows = []
    for (wt, gamma, beta) in params["pyramid"]:
        c_out = int(wt.shape[0])
        ho = _conv_out(h, 4, 2, 1)
        wo = _conv_out(w_sp, 4, 2, 1)
        m_out = N * ho * wo
        m_out_p = _round_up(m_out, 128)
        c_out_p = _round_up(c_out, 128)

        sel = _build_selection(N, h, w_sp, ho, wo, kh, kw, 2, 1, m_out_p, m_in_p)
        w_taps = jnp.transpose(wt, (2, 3, 1, 0)).reshape(taps, c_in, c_out)
        w_taps = jnp.pad(w_taps, ((0, 0), (0, c_in_p - c_in), (0, c_out_p - c_out)))
        g = jnp.pad(gamma, (0, c_out_p - c_out), constant_values=1.0)
        b = jnp.pad(beta, (0, c_out_p - c_out))

        ops += [jnp.asarray(sel, jnp.bfloat16),
                w_taps.astype(jnp.bfloat16),
                g.reshape(1, c_out_p).astype(jnp.float32),
                b.reshape(1, c_out_p).astype(jnp.float32)]
        bn_rows.append(m_out)
        flops += taps * 2 * (m_out_p * m_in_p * c_in_p + m_out_p * c_in_p * c_out_p)

        h, w_sp = ho, wo
        m_in_p, c_in, c_in_p = m_out_p, c_out, c_out_p

    # ---- final conv ----------------------------------------------------------
    wf = params["final_w"]                         # (latent, c_in, 4, 4)
    c_lat = int(wf.shape[0])
    ho = _conv_out(h, 4, 1, 0)
    wo = _conv_out(w_sp, 4, 1, 0)
    m_out = N * ho * wo
    m_out_p = _round_up(m_out, 16)                 # sublane dim only
    c_lat_p = _round_up(c_lat, 128)

    sel = _build_selection(N, h, w_sp, ho, wo, kh, kw, 1, 0, m_out_p, m_in_p)
    w_taps = jnp.transpose(wf, (2, 3, 1, 0)).reshape(taps, c_in, c_lat)
    w_taps = jnp.pad(w_taps, ((0, 0), (0, c_in_p - c_in), (0, c_lat_p - c_lat)))
    ops += [jnp.asarray(sel, jnp.bfloat16), w_taps.astype(jnp.bfloat16)]
    flops += taps * 2 * (m_out_p * m_in_p * c_in_p + m_out_p * c_in_p * c_lat_p)

    bytes_accessed = sum(int(np.prod(o.shape)) * o.dtype.itemsize for o in ops)
    bytes_accessed += m_out_p * c_lat_p * 4

    kernel = _make_encoder_kernel(len(params["pyramid"]), tuple(bn_rows))
    vmem = pl.BlockSpec(memory_space=pltpu.MemorySpace.VMEM)
    out2d = pl.pallas_call(
        kernel,
        out_shape=jax.ShapeDtypeStruct((m_out_p, c_lat_p), jnp.float32),
        in_specs=[vmem] * len(ops),
        out_specs=vmem,
        cost_estimate=pl.CostEstimate(
            flops=int(flops),
            transcendentals=128 * len(bn_rows),
            bytes_accessed=int(bytes_accessed)),
    )(*ops)

    # Single layout conversion at the encoder boundary: GEMM (M, Cout) -> NCHW.
    out = out2d[:m_out, :c_lat].reshape(N, ho, wo, c_lat).transpose(0, 3, 1, 2)
    return out


# ----------------------------------------------------------------------------
# Encoder parameter construction (mirrors the PyTorch __init__ structure)
# ----------------------------------------------------------------------------
def init_encoder_params(key, img_size, latent_vec_size, img_channels, n_features):
    keys = jax.random.split(key, 16)
    ki = iter(range(16))
    params = {}

    # initial-conv: Conv2d(img_channels, n_features, k=4, s=2, p=4, bias=False)
    params["initial_w"] = 0.05 * jax.random.normal(
        keys[next(ki)], (n_features, img_channels, 4, 4), jnp.float32)

    # pyramid layers: Conv2d(nf, 2nf, k=4, s=2, p=1) + BatchNorm2d + LeakyReLU
    pyramid = []
    pyramid_dim = min(*img_size) // 2
    nf = n_features
    while pyramid_dim > 4:
        in_f, out_f = nf, nf * 2
        w = 0.05 * jax.random.normal(keys[next(ki)], (out_f, in_f, 4, 4), jnp.float32)
        gamma = 1.0 + 0.1 * jax.random.normal(keys[next(ki)], (out_f,), jnp.float32)
        beta = 0.1 * jax.random.normal(keys[next(ki)], (out_f,), jnp.float32)
        pyramid.append((w, gamma, beta))
        nf = out_f
        pyramid_dim //= 2
    params["pyramid"] = pyramid

    # final conv: Conv2d(nf, latent_vec_size, k=4, s=1, p=0, bias=False)
    params["final_w"] = 0.05 * jax.random.normal(
        keys[next(ki)], (latent_vec_size, nf, 4, 4), jnp.float32)
    return params


# ----------------------------------------------------------------------------
# Pure-JAX reference (same bf16-operand / f32-accumulate precision as kernel)
# ----------------------------------------------------------------------------
def _ref_conv(x, w, stride, padding):
    return jax.lax.conv_general_dilated(
        x.astype(jnp.bfloat16), w.astype(jnp.bfloat16),
        window_strides=(stride, stride),
        padding=[(padding, padding), (padding, padding)],
        dimension_numbers=("NCHW", "OIHW", "NCHW"),
        preferred_element_type=jnp.float32)


def encoder_forward_ref(params, x):
    x = _ref_conv(x, params["initial_w"], 2, 4)
    x = jnp.where(x >= 0, x, 0.2 * x)
    for (w, gamma, beta) in params["pyramid"]:
        x = _ref_conv(x, w, 2, 1)
        mean = jnp.mean(x, axis=(0, 2, 3), keepdims=True)
        var = jnp.mean(jnp.square(x - mean), axis=(0, 2, 3), keepdims=True)
        x = (x - mean) * jax.lax.rsqrt(var + 1e-5)
        x = x * gamma.reshape(1, -1, 1, 1) + beta.reshape(1, -1, 1, 1)
        x = jnp.where(x >= 0, x, 0.2 * x)
    return _ref_conv(x, params["final_w"], 1, 0)


# ----------------------------------------------------------------------------
if __name__ == "__main__":
    # Small config consistent with the module:
    #   img_size=(16,16), img_channels=4, n_features=8, latent_vec_size=16
    # Forward shape trace (NCHW):
    #   (2,4,16,16) -conv k4s2p4+LReLU-> (2,8,11,11)
    #   -conv k4s2p1+BN+LReLU-> (2,16,5,5) -conv k4s1p0-> (2,16,2,2)
    img_size = (16, 16)
    latent_vec_size = 16
    img_channels = 4
    n_features = 8
    batch = 2

    key = jax.random.PRNGKey(0)
    k_params, k_x = jax.random.split(key)
    params = init_encoder_params(k_params, img_size, latent_vec_size,
                                 img_channels, n_features)
    x = jax.random.normal(k_x, (batch, img_channels, *img_size), jnp.float32)

    fwd = jax.jit(encoder_forward)
    out = jax.block_until_ready(fwd(params, x))

    expected_shape = (batch, latent_vec_size, 2, 2)
    assert out.shape == expected_shape, (out.shape, expected_shape)

    ref = jax.block_until_ready(encoder_forward_ref(params, x))
    max_err = float(jnp.max(jnp.abs(out - ref)))
    assert jnp.allclose(out, ref, rtol=5e-3, atol=5e-3), max_err

    print("KERNEL_OK")
</pallas_src>

<mosaic_0001>
module attributes {stable_mosaic.version = 11 : i64} {
  func.func @kernel(%arg0: memref<256x128xbf16, #tpu.memory_space<vmem>>, %arg1: memref<128x128xbf16, #tpu.memory_space<vmem>>, %arg2: memref<16x128x256xbf16, #tpu.memory_space<vmem>>, %arg3: memref<16x128x128xbf16, #tpu.memory_space<vmem>>, %arg4: memref<1x128xf32, #tpu.memory_space<vmem>>, %arg5: memref<1x128xf32, #tpu.memory_space<vmem>>, %arg6: memref<16x16x128xbf16, #tpu.memory_space<vmem>>, %arg7: memref<16x128x128xbf16, #tpu.memory_space<vmem>>, %arg8: memref<16x128xf32, #tpu.memory_space<vmem>>) attributes {dimension_semantics = [], scalar_prefetch = 0 : i64, scratch_operands = 0 : i64, tpu.core_type = #tpu.core_type<tc>} {
    %c0 = arith.constant 0 : index
    %c0_0 = arith.constant 0 : index
    %0 = vector.load %arg0[%c0, %c0_0] : memref<256x128xbf16, #tpu.memory_space<vmem>>, vector<256x128xbf16>
    %c0_1 = arith.constant 0 : index
    %c0_2 = arith.constant 0 : index
    %1 = vector.load %arg1[%c0_1, %c0_2] : memref<128x128xbf16, #tpu.memory_space<vmem>>, vector<128x128xbf16>
    %cst = arith.constant dense<0.000000e+00> : vector<256x128xf32>
    %2 = tpu.matmul %0, %1, %cst {dimension_numbers = #tpu.dot_dimension_numbers<[1], [0], [0], [1], [0, 0, 1, 1], [], []>} : vector<256x128xbf16>, vector<128x128xbf16>, vector<256x128xf32> -> vector<256x128xf32>
    %cst_3 = arith.constant 0.000000e+00 : f32
    %3 = vector.broadcast %cst_3 : f32 to vector<256x128xf32>
    %4 = arith.cmpf oge, %2, %3 : vector<256x128xf32>
    %cst_4 = arith.constant 2.000000e-01 : f32
    %5 = vector.broadcast %cst_4 : f32 to vector<256x128xf32>
    %6 = arith.mulf %5, %2 : vector<256x128xf32>
    %7 = arith.select %4, %2, %6 : vector<256x128xi1>, vector<256x128xf32>
    %8 = arith.truncf %7 : vector<256x128xf32> to vector<256x128xbf16>
    %cst_5 = arith.constant 0.000000e+00 : f32
    %9 = vector.broadcast %cst_5 : f32 to vector<128x128xf32>
    %c0_6 = arith.constant 0 : index
    %c0_7 = arith.constant 0 : index
    %c0_8 = arith.constant 0 : index
    %10 = vector.load %arg2[%c0_6, %c0_7, %c0_8] : memref<16x128x256xbf16, #tpu.memory_space<vmem>>, vector<1x128x256xbf16>
    %11 = vector.shape_cast %10 : vector<1x128x256xbf16> to vector<128x256xbf16>
    %cst_9 = arith.constant dense<0.000000e+00> : vector<128x128xf32>
    %12 = tpu.matmul %11, %8, %cst_9 {dimension_numbers = #tpu.dot_dimension_numbers<[1], [0], [0], [1], [0, 0, 1, 1], [], []>} : vector<128x256xbf16>, vector<256x128xbf16>, vector<128x128xf32> -> vector<128x128xf32>
    %13 = arith.truncf %12 : vector<128x128xf32> to vector<128x128xbf16>
    %c0_10 = arith.constant 0 : index
    %c0_11 = arith.constant 0 : index
    %c0_12 = arith.constant 0 : index
    %14 = vector.load %arg3[%c0_10, %c0_11, %c0_12] : memref<16x128x128xbf16, #tpu.memory_space<vmem>>, vector<1x128x128xbf16>
    %15 = vector.shape_cast %14 : vector<1x128x128xbf16> to vector<128x128xbf16>
    %cst_13 = arith.constant dense<0.000000e+00> : vector<128x128xf32>
    %16 = tpu.matmul %13, %15, %cst_13 {dimension_numbers = #tpu.dot_dimension_numbers<[1], [0], [0], [1], [0, 0, 1, 1], [], []>} : vector<128x128xbf16>, vector<128x128xbf16>, vector<128x128xf32> -> vector<128x128xf32>
    %17 = arith.addf %9, %16 : vector<128x128xf32>
    %c1 = arith.constant 1 : index
    %c0_14 = arith.constant 0 : index
    %c0_15 = arith.constant 0 : index
    %18 = vector.load %arg2[%c1, %c0_14, %c0_15] : memref<16x128x256xbf16, #tpu.memory_space<vmem>>, vector<1x128x256xbf16>
    %19 = vector.shape_cast %18 : vector<1x128x256xbf16> to vector<128x256xbf16>
    %cst_16 = arith.constant dense<0.000000e+00> : vector<128x128xf32>
    %20 = tpu.matmul %19, %8, %cst_16 {dimension_numbers = #tpu.dot_dimension_numbers<[1], [0], [0], [1], [0, 0, 1, 1], [], []>} : vector<128x256xbf16>, vector<256x128xbf16>, vector<128x128xf32> -> vector<128x128xf32>
    %21 = arith.truncf %20 : vector<128x128xf32> to vector<128x128xbf16>
    %c1_17 = arith.constant 1 : index
    %c0_18 = arith.constant 0 : index
    %c0_19 = arith.constant 0 : index
    %22 = vector.load %arg3[%c1_17, %c0_18, %c0_19] : memref<16x128x128xbf16, #tpu.memory_space<vmem>>, vector<1x128x128xbf16>
    %23 = vector.shape_cast %22 : vector<1x128x128xbf16> to vector<128x128xbf16>
    %cst_20 = arith.constant dense<0.000000e+00> : vector<128x128xf32>
    %24 = tpu.matmul %21, %23, %cst_20 {dimension_numbers = #tpu.dot_dimension_numbers<[1], [0], [0], [1], [0, 0, 1, 1], [], []>} : vector<128x128xbf16>, vector<128x128xbf16>, vector<128x128xf32> -> vector<128x128xf32>
    %25 = arith.addf %17, %24 : vector<128x128xf32>
    %c2 = arith.constant 2 : index
    %c0_21 = arith.constant 0 : index
    %c0_22 = arith.constant 0 : index
    %26 = vector.load %arg2[%c2, %c0_21, %c0_22] : memref<16x128x256xbf16, #tpu.memory_space<vmem>>, vector<1x128x256xbf16>
    %27 = vector.shape_cast %26 : vector<1x128x256xbf16> to vector<128x256xbf16>
    %cst_23 = arith.constant dense<0.000000e+00> : vector<128x128xf32>
    %28 = tpu.matmul %27, %8, %cst_23 {dimension_numbers = #tpu.dot_dimension_numbers<[1], [0], [0], [1], [0, 0, 1, 1], [], []>} : vector<128x256xbf16>, vector<256x128xbf16>, vector<128x128xf32> -> vector<128x128xf32>
    %29 = arith.truncf %28 : vector<128x128xf32> to vector<128x128xbf16>
    %c2_24 = arith.constant 2 : index
    %c0_25 = arith.constant 0 : index
    %c0_26 = arith.constant 0 : index
    %30 = vector.load %arg3[%c2_24, %c0_25, %c0_26] : memref<16x128x128xbf16, #tpu.memory_space<vmem>>, vector<1x128x128xbf16>
    %31 = vector.shape_cast %30 : vector<1x128x128xbf16> to vector<128x128xbf16>
    %cst_27 = arith.constant dense<0.000000e+00> : vector<128x128xf32>
    %32 = tpu.matmul %29, %31, %cst_27 {dimension_numbers = #tpu.dot_dimension_numbers<[1], [0], [0], [1], [0, 0, 1, 1], [], []>} : vector<128x128xbf16>, vector<128x128xbf16>, vector<128x128xf32> -> vector<128x128xf32>
    %33 = arith.addf %25, %32 : vector<128x128xf32>
    %c3 = arith.constant 3 : index
    %c0_28 = arith.constant 0 : index
    %c0_29 = arith.constant 0 : index
    %34 = vector.load %arg2[%c3, %c0_28, %c0_29] : memref<16x128x256xbf16, #tpu.memory_space<vmem>>, vector<1x128x256xbf16>
    %35 = vector.shape_cast %34 : vector<1x128x256xbf16> to vector<128x256xbf16>
    %cst_30 = arith.constant dense<0.000000e+00> : vector<128x128xf32>
    %36 = tpu.matmul %35, %8, %cst_30 {dimension_numbers = #tpu.dot_dimension_numbers<[1], [0], [0], [1], [0, 0, 1, 1], [], []>} : vector<128x256xbf16>, vector<256x128xbf16>, vector<128x128xf32> -> vector<128x128xf32>
    %37 = arith.truncf %36 : vector<128x128xf32> to vector<128x128xbf16>
    %c3_31 = arith.constant 3 : index
    %c0_32 = arith.constant 0 : index
    %c0_33 = arith.constant 0 : index
    %38 = vector.load %arg3[%c3_31, %c0_32, %c0_33] : memref<16x128x128xbf16, #tpu.memory_space<vmem>>, vector<1x128x128xbf16>
    %39 = vector.shape_cast %38 : vector<1x128x128xbf16> to vector<128x128xbf16>
    %cst_34 = arith.constant dense<0.000000e+00> : vector<128x128xf32>
    %40 = tpu.matmul %37, %39, %cst_34 {dimension_numbers = #tpu.dot_dimension_numbers<[1], [0], [0], [1], [0, 0, 1, 1], [], []>} : vector<128x128xbf16>, vector<128x128xbf16>, vector<128x128xf32> -> vector<128x128xf32>
    %41 = arith.addf %33, %40 : vector<128x128xf32>
    %c4 = arith.constant 4 : index
    %c0_35 = arith.constant 0 : index
    %c0_36 = arith.constant 0 : index
    %42 = vector.load %arg2[%c4, %c0_35, %c0_36] : memref<16x128x256xbf16, #tpu.memory_space<vmem>>, vector<1x128x256xbf16>
    %43 = vector.shape_cast %42 : vector<1x128x256xbf16> to vector<128x256xbf16>
    %cst_37 = arith.constant dense<0.000000e+00> : vector<128x128xf32>
    %44 = tpu.matmul %43, %8, %cst_37 {dimension_numbers = #tpu.dot_dimension_numbers<[1], [0], [0], [1], [0, 0, 1, 1], [], []>} : vector<128x256xbf16>, vector<256x128xbf16>, vector<128x128xf32> -> vector<128x128xf32>
    %45 = arith.truncf %44 : vector<128x128xf32> to vector<128x128xbf16>
    %c4_38 = arith.constant 4 : index
    %c0_39 = arith.constant 0 : index
    %c0_40 = arith.constant 0 : index
    %46 = vector.load %arg3[%c4_38, %c0_39, %c0_40] : memref<16x128x128xbf16, #tpu.memory_space<vmem>>, vector<1x128x128xbf16>
    %47 = vector.shape_cast %46 : vector<1x128x128xbf16> to vector<128x128xbf16>
    %cst_41 = arith.constant dense<0.000000e+00> : vector<128x128xf32>
    %48 = tpu.matmul %45, %47, %cst_41 {dimension_numbers = #tpu.dot_dimension_numbers<[1], [0], [0], [1], [0, 0, 1, 1], [], []>} : vector<128x128xbf16>, vector<128x128xbf16>, vector<128x128xf32> -> vector<128x128xf32>
    %49 = arith.addf %41, %48 : vector<128x128xf32>
    %c5 = arith.constant 5 : index
    %c0_42 = arith.constant 0 : index
    %c0_43 = arith.constant 0 : index
    %50 = vector.load %arg2[%c5, %c0_42, %c0_43] : memref<16x128x256xbf16, #tpu.memory_space<vmem>>, vector<1x128x256xbf16>
    %51 = vector.shape_cast %50 : vector<1x128x256xbf16> to vector<128x256xbf16>
    %cst_44 = arith.constant dense<0.000000e+00> : vector<128x128xf32>
    %52 = tpu.matmul %51, %8, %cst_44 {dimension_numbers = #tpu.dot_dimension_numbers<[1], [0], [0], [1], [0, 0, 1, 1], [], []>} : vector<128x256xbf16>, vector<256x128xbf16>, vector<128x128xf32> -> vector<128x128xf32>
    %53 = arith.truncf %52 : vector<128x128xf32> to vector<128x128xbf16>
    %c5_45 = arith.constant 5 : index
    %c0_46 = arith.constant 0 : index
    %c0_47 = arith.constant 0 : index
    %54 = vector.load %arg3[%c5_45, %c0_46, %c0_47] : memref<16x128x128xbf16, #tpu.memory_space<vmem>>, vector<1x128x128xbf16>
    %55 = vector.shape_cast %54 : vector<1x128x128xbf16> to vector<128x128xbf16>
    %cst_48 = arith.constant dense<0.000000e+00> : vector<128x128xf32>
    %56 = tpu.matmul %53, %55, %cst_48 {dimension_numbers = #tpu.dot_dimension_numbers<[1], [0], [0], [1], [0, 0, 1, 1], [], []>} : vector<128x128xbf16>, vector<128x128xbf16>, vector<128x128xf32> -> vector<128x128xf32>
    %57 = arith.addf %49, %56 : vector<128x128xf32>
    %c6 = arith.constant 6 : index
    %c0_49 = arith.constant 0 : index
    %c0_50 = arith.constant 0 : index
    %58 = vector.load %arg2[%c6, %c0_49, %c0_50] : memref<16x128x256xbf16, #tpu.memory_space<vmem>>, vector<1x128x256xbf16>
    %59 = vector.shape_cast %58 : vector<1x128x256xbf16> to vector<128x256xbf16>
    %cst_51 = arith.constant dense<0.000000e+00> : vector<128x128xf32>
    %60 = tpu.matmul %59, %8, %cst_51 {dimension_numbers = #tpu.dot_dimension_numbers<[1], [0], [0], [1], [0, 0, 1, 1], [], []>} : vector<128x256xbf16>, vector<256x128xbf16>, vector<128x128xf32> -> vector<128x128xf32>
    %61 = arith.truncf %60 : vector<128x128xf32> to vector<128x128xbf16>
    %c6_52 = arith.constant 6 : index
    %c0_53 = arith.constant 0 : index
    %c0_54 = arith.constant 0 : index
    %62 = vector.load %arg3[%c6_52, %c0_53, %c0_54] : memref<16x128x128xbf16, #tpu.memory_space<vmem>>, vector<1x128x128xbf16>
    %63 = vector.shape_cast %62 : vector<1x128x128xbf16> to vector<128x128xbf16>
    %cst_55 = arith.constant dense<0.000000e+00> : vector<128x128xf32>
    %64 = tpu.matmul %61, %63, %cst_55 {dimension_numbers = #tpu.dot_dimension_numbers<[1], [0], [0], [1], [0, 0, 1, 1], [], []>} : vector<128x128xbf16>, vector<128x128xbf16>, vector<128x128xf32> -> vector<128x128xf32>
    %65 = arith.addf %57, %64 : vector<128x128xf32>
    %c7 = arith.constant 7 : index
    %c0_56 = arith.constant 0 : index
    %c0_57 = arith.constant 0 : index
    %66 = vector.load %arg2[%c7, %c0_56, %c0_57] : memref<16x128x256xbf16, #tpu.memory_space<vmem>>, vector<1x128x256xbf16>
    %67 = vector.shape_cast %66 : vector<1x128x256xbf16> to vector<128x256xbf16>
    %cst_58 = arith.constant dense<0.000000e+00> : vector<128x128xf32>
    %68 = tpu.matmul %67, %8, %cst_58 {dimension_numbers = #tpu.dot_dimension_numbers<[1], [0], [0], [1], [0, 0, 1, 1], [], []>} : vector<128x256xbf16>, vector<256x128xbf16>, vector<128x128xf32> -> vector<128x128xf32>
    %69 = arith.truncf %68 : vector<128x128xf32> to vector<128x128xbf16>
    %c7_59 = arith.constant 7 : index
    %c0_60 = arith.constant 0 : index
    %c0_61 = arith.constant 0 : index
    %70 = vector.load %arg3[%c7_59, %c0_60, %c0_61] : memref<16x128x128xbf16, #tpu.memory_space<vmem>>, vector<1x128x128xbf16>
    %71 = vector.shape_cast %70 : vector<1x128x128xbf16> to vector<128x128xbf16>
    %cst_62 = arith.constant dense<0.000000e+00> : vector<128x128xf32>
    %72 = tpu.matmul %69, %71, %cst_62 {dimension_numbers = #tpu.dot_dimension_numbers<[1], [0], [0], [1], [0, 0, 1, 1], [], []>} : vector<128x128xbf16>, vector<128x128xbf16>, vector<128x128xf32> -> vector<128x128xf32>
    %73 = arith.addf %65, %72 : vector<128x128xf32>
    %c8 = arith.constant 8 : index
    %c0_63 = arith.constant 0 : index
    %c0_64 = arith.constant 0 : index
    %74 = vector.load %arg2[%c8, %c0_63, %c0_64] : memref<16x128x256xbf16, #tpu.memory_space<vmem>>, vector<1x128x256xbf16>
    %75 = vector.shape_cast %74 : vector<1x128x256xbf16> to vector<128x256xbf16>
    %cst_65 = arith.constant dense<0.000000e+00> : vector<128x128xf32>
    %76 = tpu.matmul %75, %8, %cst_65 {dimension_numbers = #tpu.dot_dimension_numbers<[1], [0], [0], [1], [0, 0, 1, 1], [], []>} : vector<128x256xbf16>, vector<256x128xbf16>, vector<128x128xf32> -> vector<128x128xf32>
    %77 = arith.truncf %76 : vector<128x128xf32> to vector<128x128xbf16>
    %c8_66 = arith.constant 8 : index
    %c0_67 = arith.constant 0 : index
    %c0_68 = arith.constant 0 : index
    %78 = vector.load %arg3[%c8_66, %c0_67, %c0_68] : memref<16x128x128xbf16, #tpu.memory_space<vmem>>, vector<1x128x128xbf16>
    %79 = vector.shape_cast %78 : vector<1x128x128xbf16> to vector<128x128xbf16>
    %cst_69 = arith.constant dense<0.000000e+00> : vector<128x128xf32>
    %80 = tpu.matmul %77, %79, %cst_69 {dimension_numbers = #tpu.dot_dimension_numbers<[1], [0], [0], [1], [0, 0, 1, 1], [], []>} : vector<128x128xbf16>, vector<128x128xbf16>, vector<128x128xf32> -> vector<128x128xf32>
    %81 = arith.addf %73, %80 : vector<128x128xf32>
    %c9 = arith.constant 9 : index
    %c0_70 = arith.constant 0 : index
    %c0_71 = arith.constant 0 : index
    %82 = vector.load %arg2[%c9, %c0_70, %c0_71] : memref<16x128x256xbf16, #tpu.memory_space<vmem>>, vector<1x128x256xbf16>
    %83 = vector.shape_cast %82 : vector<1x128x256xbf16> to vector<128x256xbf16>
    %cst_72 = arith.constant dense<0.000000e+00> : vector<128x128xf32>
    %84 = tpu.matmul %83, %8, %cst_72 {dimension_numbers = #tpu.dot_dimension_numbers<[1], [0], [0], [1], [0, 0, 1, 1], [], []>} : vector<128x256xbf16>, vector<256x128xbf16>, vector<128x128xf32> -> vector<128x128xf32>
    %85 = arith.truncf %84 : vector<128x128xf32> to vector<128x128xbf16>
    %c9_73 = arith.constant 9 : index
    %c0_74 = arith.constant 0 : index
    %c0_75 = arith.constant 0 : index
    %86 = vector.load %arg3[%c9_73, %c0_74, %c0_75] : memref<16x128x128xbf16, #tpu.memory_space<vmem>>, vector<1x128x128xbf16>
    %87 = vector.shape_cast %86 : vector<1x128x128xbf16> to vector<128x128xbf16>
    %cst_76 = arith.constant dense<0.000000e+00> : vector<128x128xf32>
    %88 = tpu.matmul %85, %87, %cst_76 {dimension_numbers = #tpu.dot_dimension_numbers<[1], [0], [0], [1], [0, 0, 1, 1], [], []>} : vector<128x128xbf16>, vector<128x128xbf16>, vector<128x128xf32> -> vector<128x128xf32>
    %89 = arith.addf %81, %88 : vector<128x128xf32>
    %c10 = arith.constant 10 : index
    %c0_77 = arith.constant 0 : index
    %c0_78 = arith.constant 0 : index
    %90 = vector.load %arg2[%c10, %c0_77, %c0_78] : memref<16x128x256xbf16, #tpu.memory_space<vmem>>, vector<1x128x256xbf16>
    %91 = vector.shape_cast %90 : vector<1x128x256xbf16> to vector<128x256xbf16>
    %cst_79 = arith.constant dense<0.000000e+00> : vector<128x128xf32>
    %92 = tpu.matmul %91, %8, %cst_79 {dimension_numbers = #tpu.dot_dimension_numbers<[1], [0], [0], [1], [0, 0, 1, 1], [], []>} : vector<128x256xbf16>, vector<256x128xbf16>, vector<128x128xf32> -> vector<128x128xf32>
    %93 = arith.truncf %92 : vector<128x128xf32> to vector<128x128xbf16>
    %c10_80 = arith.constant 10 : index
    %c0_81 = arith.constant 0 : index
    %c0_82 = arith.constant 0 : index
    %94 = vector.load %arg3[%c10_80, %c0_81, %c0_82] : memref<16x128x128xbf16, #tpu.memory_space<vmem>>, vector<1x128x128xbf16>
    %95 = vector.shape_cast %94 : vector<1x128x128xbf16> to vector<128x128xbf16>
    %cst_83 = arith.constant dense<0.000000e+00> : vector<128x128xf32>
    %96 = tpu.matmul %93, %95, %cst_83 {dimension_numbers = #tpu.dot_dimension_numbers<[1], [0], [0], [1], [0, 0, 1, 1], [], []>} : vector<128x128xbf16>, vector<128x128xbf16>, vector<128x128xf32> -> vector<128x128xf32>
    %97 = arith.addf %89, %96 : vector<128x128xf32>
    %c11 = arith.constant 11 : index
    %c0_84 = arith.constant 0 : index
    %c0_85 = arith.constant 0 : index
    %98 = vector.load %arg2[%c11, %c0_84, %c0_85] : memref<16x128x256xbf16, #tpu.memory_space<vmem>>, vector<1x128x256xbf16>
    %99 = vector.shape_cast %98 : vector<1x128x256xbf16> to vector<128x256xbf16>
    %cst_86 = arith.constant dense<0.000000e+00> : vector<128x128xf32>
    %100 = tpu.matmul %99, %8, %cst_86 {dimension_numbers = #tpu.dot_dimension_numbers<[1], [0], [0], [1], [0, 0, 1, 1], [], []>} : vector<128x256xbf16>, vector<256x128xbf16>, vector<128x128xf32> -> vector<128x128xf32>
    %101 = arith.truncf %100 : vector<128x128xf32> to vector<128x128xbf16>
    %c11_87 = arith.constant 11 : index
    %c0_88 = arith.constant 0 : index
    %c0_89 = arith.constant 0 : index
    %102 = vector.load %arg3[%c11_87, %c0_88, %c0_89] : memref<16x128x128xbf16, #tpu.memory_space<vmem>>, vector<1x128x128xbf16>
    %103 = vector.shape_cast %102 : vector<1x128x128xbf16> to vector<128x128xbf16>
    %cst_90 = arith.constant dense<0.000000e+00> : vector<128x128xf32>
    %104 = tpu.matmul %101, %103, %cst_90 {dimension_numbers = #tpu.dot_dimension_numbers<[1], [0], [0], [1], [0, 0, 1, 1], [], []>} : vector<128x128xbf16>, vector<128x128xbf16>, vector<128x128xf32> -> vector<128x128xf32>
    %105 = arith.addf %97, %104 : vector<128x128xf32>
    %c12 = arith.constant 12 : index
    %c0_91 = arith.constant 0 : index
    %c0_92 = arith.constant 0 : index
    %106 = vector.load %arg2[%c12, %c0_91, %c0_92] : memref<16x128x256xbf16, #tpu.memory_space<vmem>>, vector<1x128x256xbf16>
    %107 = vector.shape_cast %106 : vector<1x128x256xbf16> to vector<128x256xbf16>
    %cst_93 = arith.constant dense<0.000000e+00> : vector<128x128xf32>
    %108 = tpu.matmul %107, %8, %cst_93 {dimension_numbers = #tpu.dot_dimension_numbers<[1], [0], [0], [1], [0, 0, 1, 1], [], []>} : vector<128x256xbf16>, vector<256x128xbf16>, vector<128x128xf32> -> vector<128x128xf32>
    %109 = arith.truncf %108 : vector<128x128xf32> to vector<128x128xbf16>
    %c12_94 = arith.constant 12 : index
    %c0_95 = arith.constant 0 : index
    %c0_96 = arith.constant 0 : index
    %110 = vector.load %arg3[%c12_94, %c0_95, %c0_96] : memref<16x128x128xbf16, #tpu.memory_space<vmem>>, vector<1x128x128xbf16>
    %111 = vector.shape_cast %110 : vector<1x128x128xbf16> to vector<128x128xbf16>
    %cst_97 = arith.constant dense<0.000000e+00> : vector<128x128xf32>
    %112 = tpu.matmul %109, %111, %cst_97 {dimension_numbers = #tpu.dot_dimension_numbers<[1], [0], [0], [1], [0, 0, 1, 1], [], []>} : vector<128x128xbf16>, vector<128x128xbf16>, vector<128x128xf32> -> vector<128x128xf32>
    %113 = arith.addf %105, %112 : vector<128x128xf32>
    %c13 = arith.constant 13 : index
    %c0_98 = arith.constant 0 : index
    %c0_99 = arith.constant 0 : index
    %114 = vector.load %arg2[%c13, %c0_98, %c0_99] : memref<16x128x256xbf16, #tpu.memory_space<vmem>>, vector<1x128x256xbf16>
    %115 = vector.shape_cast %114 : vector<1x128x256xbf16> to vector<128x256xbf16>
    %cst_100 = arith.constant dense<0.000000e+00> : vector<128x128xf32>
    %116 = tpu.matmul %115, %8, %cst_100 {dimension_numbers = #tpu.dot_dimension_numbers<[1], [0], [0], [1], [0, 0, 1, 1], [], []>} : vector<128x256xbf16>, vector<256x128xbf16>, vector<128x128xf32> -> vector<128x128xf32>
    %117 = arith.truncf %116 : vector<128x128xf32> to vector<128x128xbf16>
    %c13_101 = arith.constant 13 : index
    %c0_102 = arith.constant 0 : index
    %c0_103 = arith.constant 0 : index
    %118 = vector.load %arg3[%c13_101, %c0_102, %c0_103] : memref<16x128x128xbf16, #tpu.memory_space<vmem>>, vector<1x128x128xbf16>
    %119 = vector.shape_cast %118 : vector<1x128x128xbf16> to vector<128x128xbf16>
    %cst_104 = arith.constant dense<0.000000e+00> : vector<128x128xf32>
    %120 = tpu.matmul %117, %119, %cst_104 {dimension_numbers = #tpu.dot_dimension_numbers<[1], [0], [0], [1], [0, 0, 1, 1], [], []>} : vector<128x128xbf16>, vector<128x128xbf16>, vector<128x128xf32> -> vector<128x128xf32>
    %121 = arith.addf %113, %120 : vector<128x128xf32>
    %c14 = arith.constant 14 : index
    %c0_105 = arith.constant 0 : index
    %c0_106 = arith.constant 0 : index
    %122 = vector.load %arg2[%c14, %c0_105, %c0_106] : memref<16x128x256xbf16, #tpu.memory_space<vmem>>, vector<1x128x256xbf16>
    %123 = vector.shape_cast %122 : vector<1x128x256xbf16> to vector<128x256xbf16>
    %cst_107 = arith.constant dense<0.000000e+00> : vector<128x128xf32>
    %124 = tpu.matmul %123, %8, %cst_107 {dimension_numbers = #tpu.dot_dimension_numbers<[1], [0], [0], [1], [0, 0, 1, 1], [], []>} : vector<128x256xbf16>, vector<256x128xbf16>, vector<128x128xf32> -> vector<128x128xf32>
    %125 = arith.truncf %124 : vector<128x128xf32> to vector<128x128xbf16>
    %c14_108 = arith.constant 14 : index
    %c0_109 = arith.constant 0 : index
    %c0_110 = arith.constant 0 : index
    %126 = vector.load %arg3[%c14_108, %c0_109, %c0_110] : memref<16x128x128xbf16, #tpu.memory_space<vmem>>, vector<1x128x128xbf16>
    %127 = vector.shape_cast %126 : vector<1x128x128xbf16> to vector<128x128xbf16>
    %cst_111 = arith.constant dense<0.000000e+00> : vector<128x128xf32>
    %128 = tpu.matmul %125, %127, %cst_111 {dimension_numbers = #tpu.dot_dimension_numbers<[1], [0], [0], [1], [0, 0, 1, 1], [], []>} : vector<128x128xbf16>, vector<128x128xbf16>, vector<128x128xf32> -> vector<128x128xf32>
    %129 = arith.addf %121, %128 : vector<128x128xf32>
    %c15 = arith.constant 15 : index
    %c0_112 = arith.constant 0 : index
    %c0_113 = arith.constant 0 : index
    %130 = vector.load %arg2[%c15, %c0_112, %c0_113] : memref<16x128x256xbf16, #tpu.memory_space<vmem>>, vector<1x128x256xbf16>
    %131 = vector.shape_cast %130 : vector<1x128x256xbf16> to vector<128x256xbf16>
    %cst_114 = arith.constant dense<0.000000e+00> : vector<128x128xf32>
    %132 = tpu.matmul %131, %8, %cst_114 {dimension_numbers = #tpu.dot_dimension_numbers<[1], [0], [0], [1], [0, 0, 1, 1], [], []>} : vector<128x256xbf16>, vector<256x128xbf16>, vector<128x128xf32> -> vector<128x128xf32>
    %133 = arith.truncf %132 : vector<128x128xf32> to vector<128x128xbf16>
    %c15_115 = arith.constant 15 : index
    %c0_116 = arith.constant 0 : index
    %c0_117 = arith.constant 0 : index
    %134 = vector.load %arg3[%c15_115, %c0_116, %c0_117] : memref<16x128x128xbf16, #tpu.memory_space<vmem>>, vector<1x128x128xbf16>
    %135 = vector.shape_cast %134 : vector<1x128x128xbf16> to vector<128x128xbf16>
    %cst_118 = arith.constant dense<0.000000e+00> : vector<128x128xf32>
    %136 = tpu.matmul %133, %135, %cst_118 {dimension_numbers = #tpu.dot_dimension_numbers<[1], [0], [0], [1], [0, 0, 1, 1], [], []>} : vector<128x128xbf16>, vector<128x128xbf16>, vector<128x128xf32> -> vector<128x128xf32>
    %137 = arith.addf %129, %136 : vector<128x128xf32>
    %cst_119 = arith.constant dense<0.000000e+00> : vector<128xf32>
    %138 = vector.multi_reduction <add>, %137, %cst_119 [0] : vector<128x128xf32> to vector<128xf32>
    %139 = vector.shape_cast %138 : vector<128xf32> to vector<1x128xf32>
    %cst_120 = arith.constant 2.000000e-02 : f32
    %140 = vector.broadcast %cst_120 : f32 to vector<1x128xf32>
    %141 = arith.mulf %139, %140 : vector<1x128xf32>
    %142 = arith.mulf %137, %137 : vector<128x128xf32>
    %cst_121 = arith.constant dense<0.000000e+00> : vector<128xf32>
    %143 = vector.multi_reduction <add>, %142, %cst_121 [0] : vector<128x128xf32> to vector<128xf32>
    %144 = vector.shape_cast %143 : vector<128xf32> to vector<1x128xf32>
    %cst_122 = arith.constant 2.000000e-02 : f32
    %145 = vector.broadcast %cst_122 : f32 to vector<1x128xf32>
    %146 = arith.mulf %144, %145 : vector<1x128xf32>
    %147 = arith.mulf %141, %141 : vector<1x128xf32>
    %148 = arith.subf %146, %147 : vector<1x128xf32>
    %cst_123 = arith.constant 0.000000e+00 : f32
    %149 = vector.broadcast %cst_123 : f32 to vector<1x128xf32>
    %150 = arith.maximumf %148, %149 : vector<1x128xf32>
    %151 = vector.broadcast %141 : vector<1x128xf32> to vector<128x128xf32>
    %152 = arith.subf %137, %151 : vector<128x128xf32>
    %cst_124 = arith.constant 9.99999974E-6 : f32
    %153 = vector.broadcast %cst_124 : f32 to vector<1x128xf32>
    %154 = arith.addf %150, %153 : vector<1x128xf32>
    %155 = math.rsqrt %154 : vector<1x128xf32>
    %156 = vector.broadcast %155 : vector<1x128xf32> to vector<128x128xf32>
    %157 = arith.mulf %152, %156 : vector<128x128xf32>
    %c0_125 = arith.constant 0 : index
    %c0_126 = arith.constant 0 : index
    %158 = vector.load %arg4[%c0_125, %c0_126] : memref<1x128xf32, #tpu.memory_space<vmem>>, vector<1x128xf32>
    %159 = vector.broadcast %158 : vector<1x128xf32> to vector<128x128xf32>
    %160 = arith.mulf %157, %159 : vector<128x128xf32>
    %c0_127 = arith.constant 0 : index
    %c0_128 = arith.constant 0 : index
    %161 = vector.load %arg5[%c0_127, %c0_128] : memref<1x128xf32, #tpu.memory_space<vmem>>, vector<1x128xf32>
    %162 = vector.broadcast %161 : vector<1x128xf32> to vector<128x128xf32>
    %163 = arith.addf %160, %162 : vector<128x128xf32>
    %cst_129 = arith.constant 0.000000e+00 : f32
    %164 = vector.broadcast %cst_129 : f32 to vector<128x128xf32>
    %165 = arith.cmpf oge, %163, %164 : vector<128x128xf32>
    %cst_130 = arith.constant 2.000000e-01 : f32
    %166 = vector.broadcast %cst_130 : f32 to vector<128x128xf32>
    %167 = arith.mulf %166, %163 : vector<128x128xf32>
    %168 = arith.select %165, %163, %167 : vector<128x128xi1>, vector<128x128xf32>
    %169 = arith.truncf %168 : vector<128x128xf32> to vector<128x128xbf16>
    %cst_131 = arith.constant 0.000000e+00 : f32
    %170 = vector.broadcast %cst_131 : f32 to vector<16x128xf32>
    %c0_132 = arith.constant 0 : index
    %c0_133 = arith.constant 0 : index
    %c0_134 = arith.constant 0 : index
    %171 = vector.load %arg6[%c0_132, %c0_133, %c0_134] : memref<16x16x128xbf16, #tpu.memory_space<vmem>>, vector<1x16x128xbf16>
    %172 = vector.shape_cast %171 : vector<1x16x128xbf16> to vector<16x128xbf16>
    %cst_135 = arith.constant dense<0.000000e+00> : vector<16x128xf32>
    %173 = tpu.matmul %172, %169, %cst_135 {dimension_numbers = #tpu.dot_dimension_numbers<[1], [0], [0], [1], [0, 0, 1, 1], [], []>} : vector<16x128xbf16>, vector<128x128xbf16>, vector<16x128xf32> -> vector<16x128xf32>
    %174 = arith.truncf %173 : vector<16x128xf32> to vector<16x128xbf16>
    %c0_136 = arith.constant 0 : index
    %c0_137 = arith.constant 0 : index
    %c0_138 = arith.constant 0 : index
    %175 = vector.load %arg7[%c0_136, %c0_137, %c0_138] : memref<16x128x128xbf16, #tpu.memory_space<vmem>>, vector<1x128x128xbf16>
    %176 = vector.shape_cast %175 : vector<1x128x128xbf16> to vector<128x128xbf16>
    %cst_139 = arith.constant dense<0.000000e+00> : vector<16x128xf32>
    %177 = tpu.matmul %174, %176, %cst_139 {dimension_numbers = #tpu.dot_dimension_numbers<[1], [0], [0], [1], [0, 0, 1, 1], [], []>} : vector<16x128xbf16>, vector<128x128xbf16>, vector<16x128xf32> -> vector<16x128xf32>
    %178 = arith.addf %170, %177 : vector<16x128xf32>
    %c1_140 = arith.constant 1 : index
    %c0_141 = arith.constant 0 : index
    %c0_142 = arith.constant 0 : index
    %179 = vector.load %arg6[%c1_140, %c0_141, %c0_142] : memref<16x16x128xbf16, #tpu.memory_space<vmem>>, vector<1x16x128xbf16>
    %180 = vector.shape_cast %179 : vector<1x16x128xbf16> to vector<16x128xbf16>
    %cst_143 = arith.constant dense<0.000000e+00> : vector<16x128xf32>
    %181 = tpu.matmul %180, %169, %cst_143 {dimension_numbers = #tpu.dot_dimension_numbers<[1], [0], [0], [1], [0, 0, 1, 1], [], []>} : vector<16x128xbf16>, vector<128x128xbf16>, vector<16x128xf32> -> vector<16x128xf32>
    %182 = arith.truncf %181 : vector<16x128xf32> to vector<16x128xbf16>
    %c1_144 = arith.constant 1 : index
    %c0_145 = arith.constant 0 : index
    %c0_146 = arith.constant 0 : index
    %183 = vector.load %arg7[%c1_144, %c0_145, %c0_146] : memref<16x128x128xbf16, #tpu.memory_space<vmem>>, vector<1x128x128xbf16>
    %184 = vector.shape_cast %183 : vector<1x128x128xbf16> to vector<128x128xbf16>
    %cst_147 = arith.constant dense<0.000000e+00> : vector<16x128xf32>
    %185 = tpu.matmul %182, %184, %cst_147 {dimension_numbers = #tpu.dot_dimension_numbers<[1], [0], [0], [1], [0, 0, 1, 1], [], []>} : vector<16x128xbf16>, vector<128x128xbf16>, vector<16x128xf32> -> vector<16x128xf32>
    %186 = arith.addf %178, %185 : vector<16x128xf32>
    %c2_148 = arith.constant 2 : index
    %c0_149 = arith.constant 0 : index
    %c0_150 = arith.constant 0 : index
    %187 = vector.load %arg6[%c2_148, %c0_149, %c0_150] : memref<16x16x128xbf16, #tpu.memory_space<vmem>>, vector<1x16x128xbf16>
    %188 = vector.shape_cast %187 : vector<1x16x128xbf16> to vector<16x128xbf16>
    %cst_151 = arith.constant dense<0.000000e+00> : vector<16x128xf32>
    %189 = tpu.matmul %188, %169, %cst_151 {dimension_numbers = #tpu.dot_dimension_numbers<[1], [0], [0], [1], [0, 0, 1, 1], [], []>} : vector<16x128xbf16>, vector<128x128xbf16>, vector<16x128xf32> -> vector<16x128xf32>
    %190 = arith.truncf %189 : vector<16x128xf32> to vector<16x128xbf16>
    %c2_152 = arith.constant 2 : index
    %c0_153 = arith.constant 0 : index
    %c0_154 = arith.constant 0 : index
    %191 = vector.load %arg7[%c2_152, %c0_153, %c0_154] : memref<16x128x128xbf16, #tpu.memory_space<vmem>>, vector<1x128x128xbf16>
    %192 = vector.shape_cast %191 : vector<1x128x128xbf16> to vector<128x128xbf16>
    %cst_155 = arith.constant dense<0.000000e+00> : vector<16x128xf32>
    %193 = tpu.matmul %190, %192, %cst_155 {dimension_numbers = #tpu.dot_dimension_numbers<[1], [0], [0], [1], [0, 0, 1, 1], [], []>} : vector<16x128xbf16>, vector<128x128xbf16>, vector<16x128xf32> -> vector<16x128xf32>
    %194 = arith.addf %186, %193 : vector<16x128xf32>
    %c3_156 = arith.constant 3 : index
    %c0_157 = arith.constant 0 : index
    %c0_158 = arith.constant 0 : index
    %195 = vector.load %arg6[%c3_156, %c0_157, %c0_158] : memref<16x16x128xbf16, #tpu.memory_space<vmem>>, vector<1x16x128xbf16>
    %196 = vector.shape_cast %195 : vector<1x16x128xbf16> to vector<16x128xbf16>
    %cst_159 = arith.constant dense<0.000000e+00> : vector<16x128xf32>
    %197 = tpu.matmul %196, %169, %cst_159 {dimension_numbers = #tpu.dot_dimension_numbers<[1], [0], [0], [1], [0, 0, 1, 1], [], []>} : vector<16x128xbf16>, vector<128x128xbf16>, vector<16x128xf32> -> vector<16x128xf32>
    %198 = arith.truncf %197 : vector<16x128xf32> to vector<16x128xbf16>
    %c3_160 = arith.constant 3 : index
    %c0_161 = arith.constant 0 : index
    %c0_162 = arith.constant 0 : index
    %199 = vector.load %arg7[%c3_160, %c0_161, %c0_162] : memref<16x128x128xbf16, #tpu.memory_space<vmem>>, vector<1x128x128xbf16>
    %200 = vector.shape_cast %199 : vector<1x128x128xbf16> to vector<128x128xbf16>
    %cst_163 = arith.constant dense<0.000000e+00> : vector<16x128xf32>
    %201 = tpu.matmul %198, %200, %cst_163 {dimension_numbers = #tpu.dot_dimension_numbers<[1], [0], [0], [1], [0, 0, 1, 1], [], []>} : vector<16x128xbf16>, vector<128x128xbf16>, vector<16x128xf32> -> vector<16x128xf32>
    %202 = arith.addf %194, %201 : vector<16x128xf32>
    %c4_164 = arith.constant 4 : index
    %c0_165 = arith.constant 0 : index
    %c0_166 = arith.constant 0 : index
    %203 = vector.load %arg6[%c4_164, %c0_165, %c0_166] : memref<16x16x128xbf16, #tpu.memory_space<vmem>>, vector<1x16x128xbf16>
    %204 = vector.shape_cast %203 : vector<1x16x128xbf16> to vector<16x128xbf16>
    %cst_167 = arith.constant dense<0.000000e+00> : vector<16x128xf32>
    %205 = tpu.matmul %204, %169, %cst_167 {dimension_numbers = #tpu.dot_dimension_numbers<[1], [0], [0], [1], [0, 0, 1, 1], [], []>} : vector<16x128xbf16>, vector<128x128xbf16>, vector<16x128xf32> -> vector<16x128xf32>
    %206 = arith.truncf %205 : vector<16x128xf32> to vector<16x128xbf16>
    %c4_168 = arith.constant 4 : index
    %c0_169 = arith.constant 0 : index
    %c0_170 = arith.constant 0 : index
    %207 = vector.load %arg7[%c4_168, %c0_169, %c0_170] : memref<16x128x128xbf16, #tpu.memory_space<vmem>>, vector<1x128x128xbf16>
    %208 = vector.shape_cast %207 : vector<1x128x128xbf16> to vector<128x128xbf16>
    %cst_171 = arith.constant dense<0.000000e+00> : vector<16x128xf32>
    %209 = tpu.matmul %206, %208, %cst_171 {dimension_numbers = #tpu.dot_dimension_numbers<[1], [0], [0], [1], [0, 0, 1, 1], [], []>} : vector<16x128xbf16>, vector<128x128xbf16>, vector<16x128xf32> -> vector<16x128xf32>
    %210 = arith.addf %202, %209 : vector<16x128xf32>
    %c5_172 = arith.constant 5 : index
    %c0_173 = arith.constant 0 : index
    %c0_174 = arith.constant 0 : index
    %211 = vector.load %arg6[%c5_172, %c0_173, %c0_174] : memref<16x16x128xbf16, #tpu.memory_space<vmem>>, vector<1x16x128xbf16>
    %212 = vector.shape_cast %211 : vector<1x16x128xbf16> to vector<16x128xbf16>
    %cst_175 = arith.constant dense<0.000000e+00> : vector<16x128xf32>
    %213 = tpu.matmul %212, %169, %cst_175 {dimension_numbers = #tpu.dot_dimension_numbers<[1], [0], [0], [1], [0, 0, 1, 1], [], []>} : vector<16x128xbf16>, vector<128x128xbf16>, vector<16x128xf32> -> vector<16x128xf32>
    %214 = arith.truncf %213 : vector<16x128xf32> to vector<16x128xbf16>
    %c5_176 = arith.constant 5 : index
    %c0_177 = arith.constant 0 : index
    %c0_178 = arith.constant 0 : index
    %215 = vector.load %arg7[%c5_176, %c0_177, %c0_178] : memref<16x128x128xbf16, #tpu.memory_space<vmem>>, vector<1x128x128xbf16>
    %216 = vector.shape_cast %215 : vector<1x128x128xbf16> to vector<128x128xbf16>
    %cst_179 = arith.constant dense<0.000000e+00> : vector<16x128xf32>
    %217 = tpu.matmul %214, %216, %cst_179 {dimension_numbers = #tpu.dot_dimension_numbers<[1], [0], [0], [1], [0, 0, 1, 1], [], []>} : vector<16x128xbf16>, vector<128x128xbf16>, vector<16x128xf32> -> vector<16x128xf32>
    %218 = arith.addf %210, %217 : vector<16x128xf32>
    %c6_180 = arith.constant 6 : index
    %c0_181 = arith.constant 0 : index
    %c0_182 = arith.constant 0 : index
    %219 = vector.load %arg6[%c6_180, %c0_181, %c0_182] : memref<16x16x128xbf16, #tpu.memory_space<vmem>>, vector<1x16x128xbf16>
    %220 = vector.shape_cast %219 : vector<1x16x128xbf16> to vector<16x128xbf16>
    %cst_183 = arith.constant dense<0.000000e+00> : vector<16x128xf32>
    %221 = tpu.matmul %220, %169, %cst_183 {dimension_numbers = #tpu.dot_dimension_numbers<[1], [0], [0], [1], [0, 0, 1, 1], [], []>} : vector<16x128xbf16>, vector<128x128xbf16>, vector<16x128xf32> -> vector<16x128xf32>
    %222 = arith.truncf %221 : vector<16x128xf32> to vector<16x128xbf16>
    %c6_184 = arith.constant 6 : index
    %c0_185 = arith.constant 0 : index
    %c0_186 = arith.constant 0 : index
    %223 = vector.load %arg7[%c6_184, %c0_185, %c0_186] : memref<16x128x128xbf16, #tpu.memory_space<vmem>>, vector<1x128x128xbf16>
    %224 = vector.shape_cast %223 : vector<1x128x128xbf16> to vector<128x128xbf16>
    %cst_187 = arith.constant dense<0.000000e+00> : vector<16x128xf32>
    %225 = tpu.matmul %222, %224, %cst_187 {dimension_numbers = #tpu.dot_dimension_numbers<[1], [0], [0], [1], [0, 0, 1, 1], [], []>} : vector<16x128xbf16>, vector<128x128xbf16>, vector<16x128xf32> -> vector<16x128xf32>
    %226 = arith.addf %218, %225 : vector<16x128xf32>
    %c7_188 = arith.constant 7 : index
    %c0_189 = arith.constant 0 : index
    %c0_190 = arith.constant 0 : index
    %227 = vector.load %arg6[%c7_188, %c0_189, %c0_190] : memref<16x16x128xbf16, #tpu.memory_space<vmem>>, vector<1x16x128xbf16>
    %228 = vector.shape_cast %227 : vector<1x16x128xbf16> to vector<16x128xbf16>
    %cst_191 = arith.constant dense<0.000000e+00> : vector<16x128xf32>
    %229 = tpu.matmul %228, %169, %cst_191 {dimension_numbers = #tpu.dot_dimension_numbers<[1], [0], [0], [1], [0, 0, 1, 1], [], []>} : vector<16x128xbf16>, vector<128x128xbf16>, vector<16x128xf32> -> vector<16x128xf32>
    %230 = arith.truncf %229 : vector<16x128xf32> to vector<16x128xbf16>
    %c7_192 = arith.constant 7 : index
    %c0_193 = arith.constant 0 : index
    %c0_194 = arith.constant 0 : index
    %231 = vector.load %arg7[%c7_192, %c0_193, %c0_194] : memref<16x128x128xbf16, #tpu.memory_space<vmem>>, vector<1x128x128xbf16>
    %232 = vector.shape_cast %231 : vector<1x128x128xbf16> to vector<128x128xbf16>
    %cst_195 = arith.constant dense<0.000000e+00> : vector<16x128xf32>
    %233 = tpu.matmul %230, %232, %cst_195 {dimension_numbers = #tpu.dot_dimension_numbers<[1], [0], [0], [1], [0, 0, 1, 1], [], []>} : vector<16x128xbf16>, vector<128x128xbf16>, vector<16x128xf32> -> vector<16x128xf32>
    %234 = arith.addf %226, %233 : vector<16x128xf32>
    %c8_196 = arith.constant 8 : index
    %c0_197 = arith.constant 0 : index
    %c0_198 = arith.constant 0 : index
    %235 = vector.load %arg6[%c8_196, %c0_197, %c0_198] : memref<16x16x128xbf16, #tpu.memory_space<vmem>>, vector<1x16x128xbf16>
    %236 = vector.shape_cast %235 : vector<1x16x128xbf16> to vector<16x128xbf16>
    %cst_199 = arith.constant dense<0.000000e+00> : vector<16x128xf32>
    %237 = tpu.matmul %236, %169, %cst_199 {dimension_numbers = #tpu.dot_dimension_numbers<[1], [0], [0], [1], [0, 0, 1, 1], [], []>} : vector<16x128xbf16>, vector<128x128xbf16>, vector<16x128xf32> -> vector<16x128xf32>
    %238 = arith.truncf %237 : vector<16x128xf32> to vector<16x128xbf16>
    %c8_200 = arith.constant 8 : index
    %c0_201 = arith.constant 0 : index
    %c0_202 = arith.constant 0 : index
    %239 = vector.load %arg7[%c8_200, %c0_201, %c0_202] : memref<16x128x128xbf16, #tpu.memory_space<vmem>>, vector<1x128x128xbf16>
    %240 = vector.shape_cast %239 : vector<1x128x128xbf16> to vector<128x128xbf16>
    %cst_203 = arith.constant dense<0.000000e+00> : vector<16x128xf32>
    %241 = tpu.matmul %238, %240, %cst_203 {dimension_numbers = #tpu.dot_dimension_numbers<[1], [0], [0], [1], [0, 0, 1, 1], [], []>} : vector<16x128xbf16>, vector<128x128xbf16>, vector<16x128xf32> -> vector<16x128xf32>
    %242 = arith.addf %234, %241 : vector<16x128xf32>
    %c9_204 = arith.constant 9 : index
    %c0_205 = arith.constant 0 : index
    %c0_206 = arith.constant 0 : index
    %243 = vector.load %arg6[%c9_204, %c0_205, %c0_206] : memref<16x16x128xbf16, #tpu.memory_space<vmem>>, vector<1x16x128xbf16>
    %244 = vector.shape_cast %243 : vector<1x16x128xbf16> to vector<16x128xbf16>
    %cst_207 = arith.constant dense<0.000000e+00> : vector<16x128xf32>
    %245 = tpu.matmul %244, %169, %cst_207 {dimension_numbers = #tpu.dot_dimension_numbers<[1], [0], [0], [1], [0, 0, 1, 1], [], []>} : vector<16x128xbf16>, vector<128x128xbf16>, vector<16x128xf32> -> vector<16x128xf32>
    %246 = arith.truncf %245 : vector<16x128xf32> to vector<16x128xbf16>
    %c9_208 = arith.constant 9 : index
    %c0_209 = arith.constant 0 : index
    %c0_210 = arith.constant 0 : index
    %247 = vector.load %arg7[%c9_208, %c0_209, %c0_210] : memref<16x128x128xbf16, #tpu.memory_space<vmem>>, vector<1x128x128xbf16>
    %248 = vector.shape_cast %247 : vector<1x128x128xbf16> to vector<128x128xbf16>
    %cst_211 = arith.constant dense<0.000000e+00> : vector<16x128xf32>
    %249 = tpu.matmul %246, %248, %cst_211 {dimension_numbers = #tpu.dot_dimension_numbers<[1], [0], [0], [1], [0, 0, 1, 1], [], []>} : vector<16x128xbf16>, vector<128x128xbf16>, vector<16x128xf32> -> vector<16x128xf32>
    %250 = arith.addf %242, %249 : vector<16x128xf32>
    %c10_212 = arith.constant 10 : index
    %c0_213 = arith.constant 0 : index
    %c0_214 = arith.constant 0 : index
    %251 = vector.load %arg6[%c10_212, %c0_213, %c0_214] : memref<16x16x128xbf16, #tpu.memory_space<vmem>>, vector<1x16x128xbf16>
    %252 = vector.shape_cast %251 : vector<1x16x128xbf16> to vector<16x128xbf16>
    %cst_215 = arith.constant dense<0.000000e+00> : vector<16x128xf32>
    %253 = tpu.matmul %252, %169, %cst_215 {dimension_numbers = #tpu.dot_dimension_numbers<[1], [0], [0], [1], [0, 0, 1, 1], [], []>} : vector<16x128xbf16>, vector<128x128xbf16>, vector<16x128xf32> -> vector<16x128xf32>
    %254 = arith.truncf %253 : vector<16x128xf32> to vector<16x128xbf16>
    %c10_216 = arith.constant 10 : index
    %c0_217 = arith.constant 0 : index
    %c0_218 = arith.constant 0 : index
    %255 = vector.load %arg7[%c10_216, %c0_217, %c0_218] : memref<16x128x128xbf16, #tpu.memory_space<vmem>>, vector<1x128x128xbf16>
    %256 = vector.shape_cast %255 : vector<1x128x128xbf16> to vector<128x128xbf16>
    %cst_219 = arith.constant dense<0.000000e+00> : vector<16x128xf32>
    %257 = tpu.matmul %254, %256, %cst_219 {dimension_numbers = #tpu.dot_dimension_numbers<[1], [0], [0], [1], [0, 0, 1, 1], [], []>} : vector<16x128xbf16>, vector<128x128xbf16>, vector<16x128xf32> -> vector<16x128xf32>
    %258 = arith.addf %250, %257 : vector<16x128xf32>
    %c11_220 = arith.constant 11 : index
    %c0_221 = arith.constant 0 : index
    %c0_222 = arith.constant 0 : index
    %259 = vector.load %arg6[%c11_220, %c0_221, %c0_222] : memref<16x16x128xbf16, #tpu.memory_space<vmem>>, vector<1x16x128xbf16>
    %260 = vector.shape_cast %259 : vector<1x16x128xbf16> to vector<16x128xbf16>
    %cst_223 = arith.constant dense<0.000000e+00> : vector<16x128xf32>
    %261 = tpu.matmul %260, %169, %cst_223 {dimension_numbers = #tpu.dot_dimension_numbers<[1], [0], [0], [1], [0, 0, 1, 1], [], []>} : vector<16x128xbf16>, vector<128x128xbf16>, vector<16x128xf32> -> vector<16x128xf32>
    %262 = arith.truncf %261 : vector<16x128xf32> to vector<16x128xbf16>
    %c11_224 = arith.constant 11 : index
    %c0_225 = arith.constant 0 : index
    %c0_226 = arith.constant 0 : index
    %263 = vector.load %arg7[%c11_224, %c0_225, %c0_226] : memref<16x128x128xbf16, #tpu.memory_space<vmem>>, vector<1x128x128xbf16>
    %264 = vector.shape_cast %263 : vector<1x128x128xbf16> to vector<128x128xbf16>
    %cst_227 = arith.constant dense<0.000000e+00> : vector<16x128xf32>
    %265 = tpu.matmul %262, %264, %cst_227 {dimension_numbers = #tpu.dot_dimension_numbers<[1], [0], [0], [1], [0, 0, 1, 1], [], []>} : vector<16x128xbf16>, vector<128x128xbf16>, vector<16x128xf32> -> vector<16x128xf32>
    %266 = arith.addf %258, %265 : vector<16x128xf32>
    %c12_228 = arith.constant 12 : index
    %c0_229 = arith.constant 0 : index
    %c0_230 = arith.constant 0 : index
    %267 = vector.load %arg6[%c12_228, %c0_229, %c0_230] : memref<16x16x128xbf16, #tpu.memory_space<vmem>>, vector<1x16x128xbf16>
    %268 = vector.shape_cast %267 : vector<1x16x128xbf16> to vector<16x128xbf16>
    %cst_231 = arith.constant dense<0.000000e+00> : vector<16x128xf32>
    %269 = tpu.matmul %268, %169, %cst_231 {dimension_numbers = #tpu.dot_dimension_numbers<[1], [0], [0], [1], [0, 0, 1, 1], [], []>} : vector<16x128xbf16>, vector<128x128xbf16>, vector<16x128xf32> -> vector<16x128xf32>
    %270 = arith.truncf %269 : vector<16x128xf32> to vector<16x128xbf16>
    %c12_232 = arith.constant 12 : index
    %c0_233 = arith.constant 0 : index
    %c0_234 = arith.constant 0 : index
    %271 = vector.load %arg7[%c12_232, %c0_233, %c0_234] : memref<16x128x128xbf16, #tpu.memory_space<vmem>>, vector<1x128x128xbf16>
    %272 = vector.shape_cast %271 : vector<1x128x128xbf16> to vector<128x128xbf16>
    %cst_235 = arith.constant dense<0.000000e+00> : vector<16x128xf32>
    %273 = tpu.matmul %270, %272, %cst_235 {dimension_numbers = #tpu.dot_dimension_numbers<[1], [0], [0], [1], [0, 0, 1, 1], [], []>} : vector<16x128xbf16>, vector<128x128xbf16>, vector<16x128xf32> -> vector<16x128xf32>
    %274 = arith.addf %266, %273 : vector<16x128xf32>
    %c13_236 = arith.constant 13 : index
    %c0_237 = arith.constant 0 : index
    %c0_238 = arith.constant 0 : index
    %275 = vector.load %arg6[%c13_236, %c0_237, %c0_238] : memref<16x16x128xbf16, #tpu.memory_space<vmem>>, vector<1x16x128xbf16>
    %276 = vector.shape_cast %275 : vector<1x16x128xbf16> to vector<16x128xbf16>
    %cst_239 = arith.constant dense<0.000000e+00> : vector<16x128xf32>
    %277 = tpu.matmul %276, %169, %cst_239 {dimension_numbers = #tpu.dot_dimension_numbers<[1], [0], [0], [1], [0, 0, 1, 1], [], []>} : vector<16x128xbf16>, vector<128x128xbf16>, vector<16x128xf32> -> vector<16x128xf32>
    %278 = arith.truncf %277 : vector<16x128xf32> to vector<16x128xbf16>
    %c13_240 = arith.constant 13 : index
    %c0_241 = arith.constant 0 : index
    %c0_242 = arith.constant 0 : index
    %279 = vector.load %arg7[%c13_240, %c0_241, %c0_242] : memref<16x128x128xbf16, #tpu.memory_space<vmem>>, vector<1x128x128xbf16>
    %280 = vector.shape_cast %279 : vector<1x128x128xbf16> to vector<128x128xbf16>
    %cst_243 = arith.constant dense<0.000000e+00> : vector<16x128xf32>
    %281 = tpu.matmul %278, %280, %cst_243 {dimension_numbers = #tpu.dot_dimension_numbers<[1], [0], [0], [1], [0, 0, 1, 1], [], []>} : vector<16x128xbf16>, vector<128x128xbf16>, vector<16x128xf32> -> vector<16x128xf32>
    %282 = arith.addf %274, %281 : vector<16x128xf32>
    %c14_244 = arith.constant 14 : index
    %c0_245 = arith.constant 0 : index
    %c0_246 = arith.constant 0 : index
    %283 = vector.load %arg6[%c14_244, %c0_245, %c0_246] : memref<16x16x128xbf16, #tpu.memory_space<vmem>>, vector<1x16x128xbf16>
    %284 = vector.shape_cast %283 : vector<1x16x128xbf16> to vector<16x128xbf16>
    %cst_247 = arith.constant dense<0.000000e+00> : vector<16x128xf32>
    %285 = tpu.matmul %284, %169, %cst_247 {dimension_numbers = #tpu.dot_dimension_numbers<[1], [0], [0], [1], [0, 0, 1, 1], [], []>} : vector<16x128xbf16>, vector<128x128xbf16>, vector<16x128xf32> -> vector<16x128xf32>
    %286 = arith.truncf %285 : vector<16x128xf32> to vector<16x128xbf16>
    %c14_248 = arith.constant 14 : index
    %c0_249 = arith.constant 0 : index
    %c0_250 = arith.constant 0 : index
    %287 = vector.load %arg7[%c14_248, %c0_249, %c0_250] : memref<16x128x128xbf16, #tpu.memory_space<vmem>>, vector<1x128x128xbf16>
    %288 = vector.shape_cast %287 : vector<1x128x128xbf16> to vector<128x128xbf16>
    %cst_251 = arith.constant dense<0.000000e+00> : vector<16x128xf32>
    %289 = tpu.matmul %286, %288, %cst_251 {dimension_numbers = #tpu.dot_dimension_numbers<[1], [0], [0], [1], [0, 0, 1, 1], [], []>} : vector<16x128xbf16>, vector<128x128xbf16>, vector<16x128xf32> -> vector<16x128xf32>
    %290 = arith.addf %282, %289 : vector<16x128xf32>
    %c15_252 = arith.constant 15 : index
    %c0_253 = arith.constant 0 : index
    %c0_254 = arith.constant 0 : index
    %291 = vector.load %arg6[%c15_252, %c0_253, %c0_254] : memref<16x16x128xbf16, #tpu.memory_space<vmem>>, vector<1x16x128xbf16>
    %292 = vector.shape_cast %291 : vector<1x16x128xbf16> to vector<16x128xbf16>
    %cst_255 = arith.constant dense<0.000000e+00> : vector<16x128xf32>
    %293 = tpu.matmul %292, %169, %cst_255 {dimension_numbers = #tpu.dot_dimension_numbers<[1], [0], [0], [1], [0, 0, 1, 1], [], []>} : vector<16x128xbf16>, vector<128x128xbf16>, vector<16x128xf32> -> vector<16x128xf32>
    %294 = arith.truncf %293 : vector<16x128xf32> to vector<16x128xbf16>
    %c15_256 = arith.constant 15 : index
    %c0_257 = arith.constant 0 : index
    %c0_258 = arith.constant 0 : index
    %295 = vector.load %arg7[%c15_256, %c0_257, %c0_258] : memref<16x128x128xbf16, #tpu.memory_space<vmem>>, vector<1x128x128xbf16>
    %296 = vector.shape_cast %295 : vector<1x128x128xbf16> to vector<128x128xbf16>
    %cst_259 = arith.constant dense<0.000000e+00> : vector<16x128xf32>
    %297 = tpu.matmul %294, %296, %cst_259 {dimension_numbers = #tpu.dot_dimension_numbers<[1], [0], [0], [1], [0, 0, 1, 1], [], []>} : vector<16x128xbf16>, vector<128x128xbf16>, vector<16x128xf32> -> vector<16x128xf32>
    %298 = arith.addf %290, %297 : vector<16x128xf32>
    %c0_260 = arith.constant 0 : index
    %c0_261 = arith.constant 0 : index
    %299 = vector.load %arg8[%c0_260, %c0_261] : memref<16x128xf32, #tpu.memory_space<vmem>>, vector<16x128xf32>
    tpu.vector_store %arg8[%c0_260, %c0_261], %298 {strides = array<i32>} : memref<16x128xf32, #tpu.memory_space<vmem>>, vector<16x128xf32>,
    return
  }
}

</mosaic_0001>

<llo_original>
// kernel: encoder_forward.1
$region0: #{encoder_forward.1}
  #allocation0 [shape = 'u32[]', space=smem, size = 0x4, offset = 0x4, fixed_abs, tag = 'smem constant byte address 0x4 - core index']
  #allocation1 [shape = 'u32[144,128]{1,0:T(1,128)}', space=vmem, size = 0x12000, scoped, tag = 'internal scratch']
  %s0 = inlined_call_operand.vmem [shape: bf16[256,128], index: 0, kind: input, shape index: {}]
  %s1 = inlined_call_operand.vmem [shape: bf16[128,128], index: 1, kind: input, shape index: {}]
  %s2 = inlined_call_operand.vmem [shape: bf16[16,128,256], index: 2, kind: input, shape index: {}]
  %s3 = inlined_call_operand.vmem [shape: bf16[16,128,128], index: 3, kind: input, shape index: {}]
  %s4 = inlined_call_operand.vmem [shape: f32[1,128], index: 4, kind: input, shape index: {}]
  %s5 = inlined_call_operand.vmem [shape: f32[1,128], index: 5, kind: input, shape index: {}]
  %s6 = inlined_call_operand.vmem [shape: bf16[16,16,128], index: 6, kind: input, shape index: {}]
  %s7 = inlined_call_operand.vmem [shape: bf16[16,128,128], index: 7, kind: input, shape index: {}]
  %s8 = inlined_call_operand.vmem [shape: f32[16,128], index: 8, kind: output, shape index: {}]
  %s9 = sld [smem:[#allocation0]]
  $region42: #{encoder_forward.1} parent=0
    _
  %s11 = ssub.s32 1, %s9
  %s12 = scalar_select 0, %s11, %s9
  // Predicated region
  $region2: #{encoder_forward.1} parent=0 // pred_check
    _
  $region3: #{encoder_forward.1} parent=0 // pred_check_branch
    %14 = sbr.rel (0) target = $region5
  $region4: #{encoder_forward.1} parent=0 // pred_region
    _
  $region5: #{encoder_forward.1} parent=0 // pred_fallthru
    _
  // Predicated region
  $region6: #{encoder_forward.1} parent=0 // pred_check
    _
  $region7: #{encoder_forward.1} parent=0 // pred_check_branch
    %16 = sbr.rel (0) target = $region9
  $region8: #{encoder_forward.1} parent=0 // pred_region
    _
  $region9: #{encoder_forward.1} parent=0 // pred_fallthru
    _
  // Predicated region
  $region10: #{encoder_forward.1} parent=0 // pred_check
    _
  $region11: #{encoder_forward.1} parent=0 // pred_check_branch
    %18 = sbr.rel (0) target = $region13
  $region12: #{encoder_forward.1} parent=0 // pred_region
    _
  $region13: #{encoder_forward.1} parent=0 // pred_fallthru
    _
  // Predicated region
  $region14: #{encoder_forward.1} parent=0 // pred_check
    _
  $region15: #{encoder_forward.1} parent=0 // pred_check_branch
    %20 = sbr.rel (0) target = $region17
  $region16: #{encoder_forward.1} parent=0 // pred_region
    _
  $region17: #{encoder_forward.1} parent=0 // pred_fallthru
    _
  // Predicated region
  $region18: #{encoder_forward.1} parent=0 // pred_check
    _
  $region19: #{encoder_forward.1} parent=0 // pred_check_branch
    %22 = sbr.rel (0) target = $region21
  $region20: #{encoder_forward.1} parent=0 // pred_region
    _
  $region21: #{encoder_forward.1} parent=0 // pred_fallthru
    _
  // Predicated region
  $region22: #{encoder_forward.1} parent=0 // pred_check
    _
  $region23: #{encoder_forward.1} parent=0 // pred_check_branch
    %24 = sbr.rel (0) target = $region25
  $region24: #{encoder_forward.1} parent=0 // pred_region
    _
  $region25: #{encoder_forward.1} parent=0 // pred_fallthru
    _
  // Predicated region
  $region26: #{encoder_forward.1} parent=0 // pred_check
    _
  $region27: #{encoder_forward.1} parent=0 // pred_check_branch
    %26 = sbr.rel (0) target = $region29
  $region28: #{encoder_forward.1} parent=0 // pred_region
    _
  $region29: #{encoder_forward.1} parent=0 // pred_fallthru
    _
  // Predicated region
  $region30: #{encoder_forward.1} parent=0 // pred_check
    _
  $region31: #{encoder_forward.1} parent=0 // pred_check_branch
    %28 = sbr.rel (0) target = $region33
  $region32: #{encoder_forward.1} parent=0 // pred_region
    _
  $region33: #{encoder_forward.1} parent=0 // pred_fallthru
    _
  %v30 = vld [vmem:[%s0] sm:$0xf]
  %v31 = vld [vmem:[%s0 + $0x4] sm:$0xf]
  %v32 = vld [vmem:[%s0 + $0x8] sm:$0xf]
  %v33 = vld [vmem:[%s0 + $0xc] sm:$0xf]
  %v34 = vld [vmem:[%s0 + $0x10] sm:$0xf]
  %v35 = vld [vmem:[%s0 + $0x14] sm:$0xf]
  %v36 = vld [vmem:[%s0 + $0x18] sm:$0xf]
  %v37 = vld [vmem:[%s0 + $0x1c] sm:$0xf]
  %v38 = vld [vmem:[%s0 + $0x20] sm:$0xf]
  %v39 = vld [vmem:[%s0 + $0x24] sm:$0xf]
  %v40 = vld [vmem:[%s0 + $0x28] sm:$0xf]
  %v41 = vld [vmem:[%s0 + $0x2c] sm:$0xf]
  %v42 = vld [vmem:[%s0 + $0x30] sm:$0xf]
  %v43 = vld [vmem:[%s0 + $0x34] sm:$0xf]
  %v44 = vld [vmem:[%s0 + $0x38] sm:$0xf]
  %v45 = vld [vmem:[%s0 + $0x3c] sm:$0xf]
  %v46 = vld [vmem:[%s0 + $0x40] sm:$0xf]
  %v47 = vld [vmem:[%s0 + $0x44] sm:$0xf]
  %v48 = vld [vmem:[%s0 + $0x48] sm:$0xf]
  %v49 = vld [vmem:[%s0 + $0x4c] sm:$0xf]
  %v50 = vld [vmem:[%s0 + $0x50] sm:$0xf]
  %v51 = vld [vmem:[%s0 + $0x54] sm:$0xf]
  %v52 = vld [vmem:[%s0 + $0x58] sm:$0xf]
  %v53 = vld [vmem:[%s0 + $0x5c] sm:$0xf]
  %v54 = vld [vmem:[%s0 + $0x60] sm:$0xf]
  %v55 = vld [vmem:[%s0 + $0x64] sm:$0xf]
  %v56 = vld [vmem:[%s0 + $0x68] sm:$0xf]
  %v57 = vld [vmem:[%s0 + $0x6c] sm:$0xf]
  %v58 = vld [vmem:[%s0 + $0x70] sm:$0xf]
  %v59 = vld [vmem:[%s0 + $0x74] sm:$0xf]
  %v60 = vld [vmem:[%s0 + $0x78] sm:$0xf]
  %v61 = vld [vmem:[%s0 + $0x7c] sm:$0xf]
  %v62 = vld [vmem:[%s1] sm:$0xf]
  %v63 = vld [vmem:[%s1 + $0x4] sm:$0xf]
  %v64 = vld [vmem:[%s1 + $0x8] sm:$0xf]
  %v65 = vld [vmem:[%s1 + $0xc] sm:$0xf]
  %v66 = vld [vmem:[%s1 + $0x10] sm:$0xf]
  %v67 = vld [vmem:[%s1 + $0x14] sm:$0xf]
  %v68 = vld [vmem:[%s1 + $0x18] sm:$0xf]
  %v69 = vld [vmem:[%s1 + $0x1c] sm:$0xf]
  %v70 = vld [vmem:[%s1 + $0x20] sm:$0xf]
  %v71 = vld [vmem:[%s1 + $0x24] sm:$0xf]
  %v72 = vld [vmem:[%s1 + $0x28] sm:$0xf]
  %v73 = vld [vmem:[%s1 + $0x2c] sm:$0xf]
  %v74 = vld [vmem:[%s1 + $0x30] sm:$0xf]
  %v75 = vld [vmem:[%s1 + $0x34] sm:$0xf]
  %v76 = vld [vmem:[%s1 + $0x38] sm:$0xf]
  %v77 = vld [vmem:[%s1 + $0x3c] sm:$0xf]
  %v110 = vunpack.c.l.b16 %v30
  %v111 = vunpack.c.l.b16 %v31
  %v112 = vunpack.c.l.b16 %v32
  %v113 = vunpack.c.l.b16 %v33
  %v114 = vunpack.c.l.b16 %v34
  %v115 = vunpack.c.l.b16 %v35
  %v116 = vunpack.c.l.b16 %v36
  %v117 = vunpack.c.l.b16 %v37
  %v118 = vunpack.c.l.b16 %v38
  %v119 = vunpack.c.l.b16 %v39
  %v120 = vunpack.c.l.b16 %v40
  %v121 = vunpack.c.l.b16 %v41
  %v122 = vunpack.c.l.b16 %v42
  %v123 = vunpack.c.l.b16 %v43
  %v124 = vunpack.c.l.b16 %v44
  %v125 = vunpack.c.l.b16 %v45
  %v126 = vunpack.c.l.b16 %v46
  %v127 = vunpack.c.l.b16 %v47
  %v128 = vunpack.c.l.b16 %v48
  %v129 = vunpack.c.l.b16 %v49
  %v130 = vunpack.c.l.b16 %v50
  %v131 = vunpack.c.l.b16 %v51
  %v132 = vunpack.c.l.b16 %v52
  %v133 = vunpack.c.l.b16 %v53
  %v134 = vunpack.c.l.b16 %v54
  %v135 = vunpack.c.l.b16 %v55
  %v136 = vunpack.c.l.b16 %v56
  %v137 = vunpack.c.l.b16 %v57
  %v138 = vunpack.c.l.b16 %v58
  %v139 = vunpack.c.l.b16 %v59
  %v140 = vunpack.c.l.b16 %v60
  %v141 = vunpack.c.l.b16 %v61
  %v142 = vpack.c.b16 %v111, %v110
  %v143 = vpack.c.b16 %v113, %v112
  %v144 = vpack.c.b16 %v115, %v114
  %v145 = vpack.c.b16 %v117, %v116
  %v146 = vpack.c.b16 %v119, %v118
  %v147 = vpack.c.b16 %v121, %v120
  %v148 = vpack.c.b16 %v123, %v122
  %v149 = vpack.c.b16 %v125, %v124
  %v150 = vpack.c.b16 %v127, %v126
  %v151 = vpack.c.b16 %v129, %v128
  %v152 = vpack.c.b16 %v131, %v130
  %v153 = vpack.c.b16 %v133, %v132
  %v154 = vpack.c.b16 %v135, %v134
  %v155 = vpack.c.b16 %v137, %v136
  %v156 = vpack.c.b16 %v139, %v138
  %v157 = vpack.c.b16 %v141, %v140
  %v190 = vunpack.c.l.b16 %v62
  %v191 = vunpack.c.l.b16 %v63
  %v192 = vunpack.c.l.b16 %v64
  %v193 = vunpack.c.l.b16 %v65
  %v194 = vunpack.c.l.b16 %v66
  %v195 = vunpack.c.l.b16 %v67
  %v196 = vunpack.c.l.b16 %v68
  %v197 = vunpack.c.l.b16 %v69
  %v198 = vunpack.c.l.b16 %v70
  %v199 = vunpack.c.l.b16 %v71
  %v200 = vunpack.c.l.b16 %v72
  %v201 = vunpack.c.l.b16 %v73
  %v202 = vunpack.c.l.b16 %v74
  %v203 = vunpack.c.l.b16 %v75
  %v204 = vunpack.c.l.b16 %v76
  %v205 = vunpack.c.l.b16 %v77
  %v206 = vpack.c.b16 %v191, %v190
  %v207 = vpack.c.b16 %v193, %v192
  %v208 = vpack.c.b16 %v195, %v194
  %v209 = vpack.c.b16 %v197, %v196
  %v210 = vpack.c.b16 %v199, %v198
  %v211 = vpack.c.b16 %v201, %v200
  %v212 = vpack.c.b16 %v203, %v202
  %v213 = vpack.c.b16 %v205, %v204
  %222 = vmatprep.subr.bf16.mxu0 0
  %223 = vmatpush1.bf16.msra.mxu0 %v213
  %224 = vmatprep.subr.bf16.mxu0 0
  %225 = vmatpush1.bf16.msra.mxu0 %v212
  %226 = vmatprep.subr.bf16.mxu0 0
  %227 = vmatpush1.bf16.msra.mxu0 %v211
  %228 = vmatprep.subr.bf16.mxu0 0
  %229 = vmatpush1.bf16.msra.mxu0 %v210
  %230 = vmatprep.subr.bf16.mxu0 0
  %231 = vmatpush1.bf16.msra.mxu0 %v209
  %232 = vmatprep.subr.bf16.mxu0 0
  %233 = vmatpush1.bf16.msra.mxu0 %v208
  %234 = vmatprep.subr.bf16.mxu0 0
  %235 = vmatpush1.bf16.msra.mxu0 %v207
  %236 = vmatprep.subr.bf16.mxu0 0
  %237 = vmatpush1.bf16.msra.mxu0 %v206
  %238 = vmatprep.subr.bf16.mxu0 0
  %239 = vmatpush2.bf16.msra.mxu0 0
  %240 = vmatprep.subr.bf16.mxu0 0
  %241 = vmatpush2.bf16.msra.mxu0 0
  %242 = vmatprep.subr.bf16.mxu0 0
  %243 = vmatpush2.bf16.msra.mxu0 0
  %244 = vmatprep.subr.bf16.mxu0 0
  %245 = vmatpush2.bf16.msra.mxu0 0
  %246 = vmatprep.subr.bf16.mxu0 0
  %247 = vmatpush2.bf16.msra.mxu0 0
  %248 = vmatprep.subr.bf16.mxu0 0
  %249 = vmatpush2.bf16.msra.mxu0 0
  %250 = vmatprep.subr.bf16.mxu0 0
  %251 = vmatpush2.bf16.msra.mxu0 0
  %252 = vmatprep.subr.bf16.mxu0 0
  %253 = vmatpush2.bf16.msra.mxu0 0
  %254 = vmatprep.mubr.bf16.mxu0 0
  %255 = vmatmul.mubr.bf16.gmra.mxu0 %v142
  %v256 = vpop.f32.mrf.mxu0
  %v257 = vadd.f32 0.0, %v256
  %v258 = vpop.f32.mrf.mxu0
  %v259 = vpop.f32.mrf.mxu0
  %v260 = vadd.f32 0.0, %v259
  %v261 = vpop.f32.mrf.mxu0
  %262 = vmatprep.mubr.bf16.mxu0 0
  %263 = vmatmul.mubr.bf16.gmra.mxu0 %v143
  %v264 = vpop.f32.mrf.mxu0
  %v265 = vadd.f32 0.0, %v264
  %v266 = vpop.f32.mrf.mxu0
  %v267 = vpop.f32.mrf.mxu0
  %v268 = vadd.f32 0.0, %v267
  %v269 = vpop.f32.mrf.mxu0
  %270 = vmatprep.mubr.bf16.mxu0 0
  %271 = vmatmul.mubr.bf16.gmra.mxu0 %v144
  %v272 = vpop.f32.mrf.mxu0
  %v273 = vadd.f32 0.0, %v272
  %v274 = vpop.f32.mrf.mxu0
  %v275 = vpop.f32.mrf.mxu0
  %v276 = vadd.f32 0.0, %v275
  %v277 = vpop.f32.mrf.mxu0
  %278 = vmatprep.mubr.bf16.mxu0 0
  %279 = vmatmul.mubr.bf16.gmra.mxu0 %v145
  %v280 = vpop.f32.mrf.mxu0
  %v281 = vadd.f32 0.0, %v280
  %v282 = vpop.f32.mrf.mxu0
  %v283 = vpop.f32.mrf.mxu0
  %v284 = vadd.f32 0.0, %v283
  %v285 = vpop.f32.mrf.mxu0
  %286 = vmatprep.mubr.bf16.mxu0 0
  %287 = vmatmul.mubr.bf16.gmra.mxu0 %v146
  %v288 = vpop.f32.mrf.mxu0
  %v289 = vadd.f32 0.0, %v288
  %v290 = vpop.f32.mrf.mxu0
  %v291 = vpop.f32.mrf.mxu0
  %v292 = vadd.f32 0.0, %v291
  %v293 = vpop.f32.mrf.mxu0
  %294 = vmatprep.mubr.bf16.mxu0 0
  %295 = vmatmul.mubr.bf16.gmra.mxu0 %v147
  %v296 = vpop.f32.mrf.mxu0
  %v297 = vadd.f32 0.0, %v296
  %v298 = vpop.f32.mrf.mxu0
  %v299 = vpop.f32.mrf.mxu0
  %v300 = vadd.f32 0.0, %v299
  %v301 = vpop.f32.mrf.mxu0
  %302 = vmatprep.mubr.bf16.mxu0 0
  %303 = vmatmul.mubr.bf16.gmra.mxu0 %v148
  %v304 = vpop.f32.mrf.mxu0
  %v305 = vadd.f32 0.0, %v304
  %v306 = vpop.f32.mrf.mxu0
  %v307 = vpop.f32.mrf.mxu0
  %v308 = vadd.f32 0.0, %v307
  %v309 = vpop.f32.mrf.mxu0
  %310 = vmatprep.mubr.bf16.mxu0 0
  %311 = vmatmul.mubr.bf16.gmra.mxu0 %v149
  %v312 = vpop.f32.mrf.mxu0
  %v313 = vadd.f32 0.0, %v312
  %v314 = vpop.f32.mrf.mxu0
  %v315 = vpop.f32.mrf.mxu0
  %v316 = vadd.f32 0.0, %v315
  %v317 = vpop.f32.mrf.mxu0
  %318 = vmatprep.mubr.bf16.mxu0 0
  %319 = vmatmul.mubr.bf16.gmra.mxu0 %v150
  %v320 = vpop.f32.mrf.mxu0
  %v321 = vadd.f32 0.0, %v320
  %v322 = vpop.f32.mrf.mxu0
  %v323 = vpop.f32.mrf.mxu0
  %v324 = vadd.f32 0.0, %v323
  %v325 = vpop.f32.mrf.mxu0
  %326 = vmatprep.mubr.bf16.mxu0 0
  %327 = vmatmul.mubr.bf16.gmra.mxu0 %v151
  %v328 = vpop.f32.mrf.mxu0
  %v329 = vadd.f32 0.0, %v328
  %v330 = vpop.f32.mrf.mxu0
  %v331 = vpop.f32.mrf.mxu0
  %v332 = vadd.f32 0.0, %v331
  %v333 = vpop.f32.mrf.mxu0
  %334 = vmatprep.mubr.bf16.mxu0 0
  %335 = vmatmul.mubr.bf16.gmra.mxu0 %v152
  %v336 = vpop.f32.mrf.mxu0
  %v337 = vadd.f32 0.0, %v336
  %v338 = vpop.f32.mrf.mxu0
  %v339 = vpop.f32.mrf.mxu0
  %v340 = vadd.f32 0.0, %v339
  %v341 = vpop.f32.mrf.mxu0
  %342 = vmatprep.mubr.bf16.mxu0 0
  %343 = vmatmul.mubr.bf16.gmra.mxu0 %v153
  %v344 = vpop.f32.mrf.mxu0
  %v345 = vadd.f32 0.0, %v344
  %v346 = vpop.f32.mrf.mxu0
  %v347 = vpop.f32.mrf.mxu0
  %v348 = vadd.f32 0.0, %v347
  %v349 = vpop.f32.mrf.mxu0
  %350 = vmatprep.mubr.bf16.mxu0 0
  %351 = vmatmul.mubr.bf16.gmra.mxu0 %v154
  %v352 = vpop.f32.mrf.mxu0
  %v353 = vadd.f32 0.0, %v352
  %v354 = vpop.f32.mrf.mxu0
  %v355 = vpop.f32.mrf.mxu0
  %v356 = vadd.f32 0.0, %v355
  %v357 = vpop.f32.mrf.mxu0
  %358 = vmatprep.mubr.bf16.mxu0 0
  %359 = vmatmul.mubr.bf16.gmra.mxu0 %v155
  %v360 = vpop.f32.mrf.mxu0
  %v361 = vadd.f32 0.0, %v360
  %v362 = vpop.f32.mrf.mxu0
  %v363 = vpop.f32.mrf.mxu0
  %v364 = vadd.f32 0.0, %v363
  %v365 = vpop.f32.mrf.mxu0
  %366 = vmatprep.mubr.bf16.mxu0 0
  %367 = vmatmul.mubr.bf16.gmra.mxu0 %v156
  %v368 = vpop.f32.mrf.mxu0
  %v369 = vadd.f32 0.0, %v368
  %v370 = vpop.f32.mrf.mxu0
  %v371 = vpop.f32.mrf.mxu0
  %v372 = vadd.f32 0.0, %v371
  %v373 = vpop.f32.mrf.mxu0
  %374 = vmatprep.mubr.bf16.mxu0 0
  %375 = vmatmul.mubr.bf16.gmra.mxu0 %v157
  %v376 = vpop.f32.mrf.mxu0
  %v377 = vadd.f32 0.0, %v376
  %v378 = vpop.f32.mrf.mxu0
  %v379 = vpop.f32.mrf.mxu0
  %v380 = vadd.f32 0.0, %v379
  %v381 = vpop.f32.mrf.mxu0
  %382 = vdwg.mxu0
  %vm383 = vcmp.ge.f32.partialorder %v257, 0.0
  %vm384 = vcmp.ge.f32.partialorder %v260, 0.0
  %vm385 = vcmp.ge.f32.partialorder %v265, 0.0
  %vm386 = vcmp.ge.f32.partialorder %v268, 0.0
  %vm387 = vcmp.ge.f32.partialorder %v273, 0.0
  %vm388 = vcmp.ge.f32.partialorder %v276, 0.0
  %vm389 = vcmp.ge.f32.partialorder %v281, 0.0
  %vm390 = vcmp.ge.f32.partialorder %v284, 0.0
  %vm391 = vcmp.ge.f32.partialorder %v289, 0.0
  %vm392 = vcmp.ge.f32.partialorder %v292, 0.0
  %vm393 = vcmp.ge.f32.partialorder %v297, 0.0
  %vm394 = vcmp.ge.f32.partialorder %v300, 0.0
  %vm395 = vcmp.ge.f32.partialorder %v305, 0.0
  %vm396 = vcmp.ge.f32.partialorder %v308, 0.0
  %vm397 = vcmp.ge.f32.partialorder %v313, 0.0
  %vm398 = vcmp.ge.f32.partialorder %v316, 0.0
  %vm399 = vcmp.ge.f32.partialorder %v321, 0.0
  %vm400 = vcmp.ge.f32.partialorder %v324, 0.0
  %vm401 = vcmp.ge.f32.partialorder %v329, 0.0
  %vm402 = vcmp.ge.f32.partialorder %v332, 0.0
  %vm403 = vcmp.ge.f32.partialorder %v337, 0.0
  %vm404 = vcmp.ge.f32.partialorder %v340, 0.0
  %vm405 = vcmp.ge.f32.partialorder %v345, 0.0
  %vm406 = vcmp.ge.f32.partialorder %v348, 0.0
  %vm407 = vcmp.ge.f32.partialorder %v353, 0.0
  %vm408 = vcmp.ge.f32.partialorder %v356, 0.0
  %vm409 = vcmp.ge.f32.partialorder %v361, 0.0
  %vm410 = vcmp.ge.f32.partialorder %v364, 0.0
  %vm411 = vcmp.ge.f32.partialorder %v369, 0.0
  %vm412 = vcmp.ge.f32.partialorder %v372, 0.0
  %vm413 = vcmp.ge.f32.partialorder %v377, 0.0
  %vm414 = vcmp.ge.f32.partialorder %v380, 0.0
  %v415 = vmul.f32 %v257, 0.2
  %v416 = vmul.f32 %v260, 0.2
  %v417 = vmul.f32 %v265, 0.2
  %v418 = vmul.f32 %v268, 0.2
  %v419 = vmul.f32 %v273, 0.2
  %v420 = vmul.f32 %v276, 0.2
  %v421 = vmul.f32 %v281, 0.2
  %v422 = vmul.f32 %v284, 0.2
  %v423 = vmul.f32 %v289, 0.2
  %v424 = vmul.f32 %v292, 0.2
  %v425 = vmul.f32 %v297, 0.2
  %v426 = vmul.f32 %v300, 0.2
  %v427 = vmul.f32 %v305, 0.2
  %v428 = vmul.f32 %v308, 0.2
  %v429 = vmul.f32 %v313, 0.2
  %v430 = vmul.f32 %v316, 0.2
  %v431 = vmul.f32 %v321, 0.2
  %v432 = vmul.f32 %v324, 0.2
  %v433 = vmul.f32 %v329, 0.2
  %v434 = vmul.f32 %v332, 0.2
  %v435 = vmul.f32 %v337, 0.2
  %v436 = vmul.f32 %v340, 0.2
  %v437 = vmul.f32 %v345, 0.2
  %v438 = vmul.f32 %v348, 0.2
  %v439 = vmul.f32 %v353, 0.2
  %v440 = vmul.f32 %v356, 0.2
  %v441 = vmul.f32 %v361, 0.2
  %v442 = vmul.f32 %v364, 0.2
  %v443 = vmul.f32 %v369, 0.2
  %v444 = vmul.f32 %v372, 0.2
  %v445 = vmul.f32 %v377, 0.2
  %v446 = vmul.f32 %v380, 0.2
  %v447 = vsel %vm383, %v257, %v415
  %v448 = vsel %vm384, %v260, %v416
  %v449 = vsel %vm385, %v265, %v417
  %v450 = vsel %vm386, %v268, %v418
  %v451 = vsel %vm387, %v273, %v419
  %v452 = vsel %vm388, %v276, %v420
  %v453 = vsel %vm389, %v281, %v421
  %v454 = vsel %vm390, %v284, %v422
  %v455 = vsel %vm391, %v289, %v423
  %v456 = vsel %vm392, %v292, %v424
  %v457 = vsel %vm393, %v297, %v425
  %v458 = vsel %vm394, %v300, %v426
  %v459 = vsel %vm395, %v305, %v427
  %v460 = vsel %vm396, %v308, %v428
  %v461 = vsel %vm397, %v313, %v429
  %v462 = vsel %vm398, %v316, %v430
  %v463 = vsel %vm399, %v321, %v431
  %v464 = vsel %vm400, %v324, %v432
  %v465 = vsel %vm401, %v329, %v433
  %v466 = vsel %vm402, %v332, %v434
  %v467 = vsel %vm403, %v337, %v435
  %v468 = vsel %vm404, %v340, %v436
  %v469 = vsel %vm405, %v345, %v437
  %v470 = vsel %vm406, %v348, %v438
  %v471 = vsel %vm407, %v353, %v439
  %v472 = vsel %vm408, %v356, %v440
  %v473 = vsel %vm409, %v361, %v441
  %v474 = vsel %vm410, %v364, %v442
  %v475 = vsel %vm411, %v369, %v443
  %v476 = vsel %vm412, %v372, %v444
  %v477 = vsel %vm413, %v377, %v445
  %v478 = vsel %vm414, %v380, %v446
  %v479 = vpack.c.bf16 %v448, %v447
  %v480 = vpack.c.bf16 %v450, %v449
  %v481 = vpack.c.bf16 %v452, %v451
  %v482 = vpack.c.bf16 %v454, %v453
  %v483 = vpack.c.bf16 %v456, %v455
  %v484 = vpack.c.bf16 %v458, %v457
  %v485 = vpack.c.bf16 %v460, %v459
  %v486 = vpack.c.bf16 %v462, %v461
  %v487 = vpack.c.bf16 %v464, %v463
  %v488 = vpack.c.bf16 %v466, %v465
  %v489 = vpack.c.bf16 %v468, %v467
  %v490 = vpack.c.bf16 %v470, %v469
  %v491 = vpack.c.bf16 %v472, %v471
  %v492 = vpack.c.bf16 %v474, %v473
  %v493 = vpack.c.bf16 %v476, %v475
  %v494 = vpack.c.bf16 %v478, %v477
  %v495 = vld [vmem:[%s2] sm:$0xff]
  %v496 = vld [vmem:[%s2 + $0x8] sm:$0xff]
  %v497 = vld [vmem:[%s2 + $0x10] sm:$0xff]
  %v498 = vld [vmem:[%s2 + $0x18] sm:$0xff]
  %v499 = vld [vmem:[%s2 + $0x20] sm:$0xff]
  %v500 = vld [vmem:[%s2 + $0x28] sm:$0xff]
  %v501 = vld [vmem:[%s2 + $0x30] sm:$0xff]
  %v502 = vld [vmem:[%s2 + $0x38] sm:$0xff]
  %v503 = vld [vmem:[%s2 + $0x40] sm:$0xff]
  %v504 = vld [vmem:[%s2 + $0x48] sm:$0xff]
  %v505 = vld [vmem:[%s2 + $0x50] sm:$0xff]
  %v506 = vld [vmem:[%s2 + $0x58] sm:$0xff]
  %v507 = vld [vmem:[%s2 + $0x60] sm:$0xff]
  %v508 = vld [vmem:[%s2 + $0x68] sm:$0xff]
  %v509 = vld [vmem:[%s2 + $0x70] sm:$0xff]
  %v510 = vld [vmem:[%s2 + $0x78] sm:$0xff]
  %v527 = vunpack.c.l.b16 %v495
  %v528 = vunpack.c.h.b16 %v495
  %v529 = vunpack.c.l.b16 %v496
  %v530 = vunpack.c.h.b16 %v496
  %v531 = vunpack.c.l.b16 %v497
  %v532 = vunpack.c.h.b16 %v497
  %v533 = vunpack.c.l.b16 %v498
  %v534 = vunpack.c.h.b16 %v498
  %v535 = vunpack.c.l.b16 %v499
  %v536 = vunpack.c.h.b16 %v499
  %v537 = vunpack.c.l.b16 %v500
  %v538 = vunpack.c.h.b16 %v500
  %v539 = vunpack.c.l.b16 %v501
  %v540 = vunpack.c.h.b16 %v501
  %v541 = vunpack.c.l.b16 %v502
  %v542 = vunpack.c.h.b16 %v502
  %v543 = vunpack.c.l.b16 %v503
  %v544 = vunpack.c.h.b16 %v503
  %v545 = vunpack.c.l.b16 %v504
  %v546 = vunpack.c.h.b16 %v504
  %v547 = vunpack.c.l.b16 %v505
  %v548 = vunpack.c.h.b16 %v505
  %v549 = vunpack.c.l.b16 %v506
  %v550 = vunpack.c.h.b16 %v506
  %v551 = vunpack.c.l.b16 %v507
  %v552 = vunpack.c.h.b16 %v507
  %v553 = vunpack.c.l.b16 %v508
  %v554 = vunpack.c.h.b16 %v508
  %v555 = vunpack.c.l.b16 %v509
  %v556 = vunpack.c.h.b16 %v509
  %v557 = vunpack.c.l.b16 %v510
  %v558 = vunpack.c.h.b16 %v510
  %v559 = vpack.c.b16 %v529, %v527
  %v560 = vpack.c.b16 %v530, %v528
  %v561 = vpack.c.b16 %v533, %v531
  %v562 = vpack.c.b16 %v534, %v532
  %v563 = vpack.c.b16 %v537, %v535
  %v564 = vpack.c.b16 %v538, %v536
  %v565 = vpack.c.b16 %v541, %v539
  %v566 = vpack.c.b16 %v542, %v540
  %v567 = vpack.c.b16 %v545, %v543
  %v568 = vpack.c.b16 %v546, %v544
  %v569 = vpack.c.b16 %v549, %v547
  %v570 = vpack.c.b16 %v550, %v548
  %v571 = vpack.c.b16 %v553, %v551
  %v572 = vpack.c.b16 %v554, %v552
  %v573 = vpack.c.b16 %v557, %v555
  %v574 = vpack.c.b16 %v558, %v556
  %591 = vmatprep.subr.bf16.mxu0 0
  %592 = vmatpush1.bf16.msra.mxu0 %v486
  %593 = vmatprep.subr.bf16.mxu0 0
  %594 = vmatpush1.bf16.msra.mxu0 %v485
  %595 = vmatprep.subr.bf16.mxu0 0
  %596 = vmatpush1.bf16.msra.mxu0 %v484
  %597 = vmatprep.subr.bf16.mxu0 0
  %598 = vmatpush1.bf16.msra.mxu0 %v483
  %599 = vmatprep.subr.bf16.mxu0 0
  %600 = vmatpush1.bf16.msra.mxu0 %v482
  %601 = vmatprep.subr.bf16.mxu0 0
  %602 = vmatpush1.bf16.msra.mxu0 %v481
  %603 = vmatprep.subr.bf16.mxu0 0
  %604 = vmatpush1.bf16.msra.mxu0 %v480
  %605 = vmatprep.subr.bf16.mxu0 0
  %606 = vmatpush1.bf16.msra.mxu0 %v479
  %607 = vmatprep.subr.bf16.mxu0 0
  %608 = vmatpush2.bf16.msra.mxu0 %v494
  %609 = vmatprep.subr.bf16.mxu0 0
  %610 = vmatpush2.bf16.msra.mxu0 %v493
  %611 = vmatprep.subr.bf16.mxu0 0
  %612 = vmatpush2.bf16.msra.mxu0 %v492
  %613 = vmatprep.subr.bf16.mxu0 0
  %614 = vmatpush2.bf16.msra.mxu0 %v491
  %615 = vmatprep.subr.bf16.mxu0 0
  %616 = vmatpush2.bf16.msra.mxu0 %v490
  %617 = vmatprep.subr.bf16.mxu0 0
  %618 = vmatpush2.bf16.msra.mxu0 %v489
  %619 = vmatprep.subr.bf16.mxu0 0
  %620 = vmatpush2.bf16.msra.mxu0 %v488
  %621 = vmatprep.subr.bf16.mxu0 0
  %622 = vmatpush2.bf16.msra.mxu0 %v487
  %623 = vmatprep.mubr.bf16.mxu0 %v560
  %624 = vmatmul.mubr.bf16.gmra.mxu0 %v559
  %v625 = vpop.f32.mrf.mxu0
  %v626 = vadd.f32 0.0, %v625
  %v627 = vpop.f32.mrf.mxu0
  %v628 = vpop.f32.mrf.mxu0
  %v629 = vadd.f32 0.0, %v628
  %v630 = vpop.f32.mrf.mxu0
  %631 = vmatprep.mubr.bf16.mxu0 %v562
  %632 = vmatmul.mubr.bf16.gmra.mxu0 %v561
  %v633 = vpop.f32.mrf.mxu0
  %v634 = vadd.f32 0.0, %v633
  %v635 = vpop.f32.mrf.mxu0
  %v636 = vpop.f32.mrf.mxu0
  %v637 = vadd.f32 0.0, %v636
  %v638 = vpop.f32.mrf.mxu0
  %639 = vmatprep.mubr.bf16.mxu0 %v564
  %640 = vmatmul.mubr.bf16.gmra.mxu0 %v563
  %v641 = vpop.f32.mrf.mxu0
  %v642 = vadd.f32 0.0, %v641
  %v643 = vpop.f32.mrf.mxu0
  %v644 = vpop.f32.mrf.mxu0
  %v645 = vadd.f32 0.0, %v644
  %v646 = vpop.f32.mrf.mxu0
  %647 = vmatprep.mubr.bf16.mxu0 %v566
  %648 = vmatmul.mubr.bf16.gmra.mxu0 %v565
  %v649 = vpop.f32.mrf.mxu0
  %v650 = vadd.f32 0.0, %v649
  %v651 = vpop.f32.mrf.mxu0
  %v652 = vpop.f32.mrf.mxu0
  %v653 = vadd.f32 0.0, %v652
  %v654 = vpop.f32.mrf.mxu0
  %655 = vmatprep.mubr.bf16.mxu0 %v568
  %656 = vmatmul.mubr.bf16.gmra.mxu0 %v567
  %v657 = vpop.f32.mrf.mxu0
  %v658 = vadd.f32 0.0, %v657
  %v659 = vpop.f32.mrf.mxu0
  %v660 = vpop.f32.mrf.mxu0
  %v661 = vadd.f32 0.0, %v660
  %v662 = vpop.f32.mrf.mxu0
  %663 = vmatprep.mubr.bf16.mxu0 %v570
  %664 = vmatmul.mubr.bf16.gmra.mxu0 %v569
  %v665 = vpop.f32.mrf.mxu0
  %v666 = vadd.f32 0.0, %v665
  %v667 = vpop.f32.mrf.mxu0
  %v668 = vpop.f32.mrf.mxu0
  %v669 = vadd.f32 0.0, %v668
  %v670 = vpop.f32.mrf.mxu0
  %671 = vmatprep.mubr.bf16.mxu0 %v572
  %672 = vmatmul.mubr.bf16.gmra.mxu0 %v571
  %v673 = vpop.f32.mrf.mxu0
  %v674 = vadd.f32 0.0, %v673
  %v675 = vpop.f32.mrf.mxu0
  %v676 = vpop.f32.mrf.mxu0
  %v677 = vadd.f32 0.0, %v676
  %v678 = vpop.f32.mrf.mxu0
  %679 = vmatprep.mubr.bf16.mxu0 %v574
  %680 = vmatmul.mubr.bf16.gmra.mxu0 %v573
  %v681 = vpop.f32.mrf.mxu0
  %v682 = vadd.f32 0.0, %v681
  %v683 = vpop.f32.mrf.mxu0
  %v684 = vpop.f32.mrf.mxu0
  %v685 = vadd.f32 0.0, %v684
  %v686 = vpop.f32.mrf.mxu0
  %687 = vdwg.mxu0
  %v688 = vpack.c.bf16 %v629, %v626
  %v689 = vpack.c.bf16 %v637, %v634
  %v690 = vpack.c.bf16 %v645, %v642
  %v691 = vpack.c.bf16 %v653, %v650
  %v692 = vpack.c.bf16 %v661, %v658
  %v693 = vpack.c.bf16 %v669, %v666
  %v694 = vpack.c.bf16 %v677, %v674
  %v695 = vpack.c.bf16 %v685, %v682
  %v696 = vld [vmem:[%s3] sm:$0xf]
  %v697 = vld [vmem:[%s3 + $0x4] sm:$0xf]
  %v698 = vld [vmem:[%s3 + $0x8] sm:$0xf]
  %v699 = vld [vmem:[%s3 + $0xc] sm:$0xf]
  %v700 = vld [vmem:[%s3 + $0x10] sm:$0xf]
  %v701 = vld [vmem:[%s3 + $0x14] sm:$0xf]
  %v702 = vld [vmem:[%s3 + $0x18] sm:$0xf]
  %v703 = vld [vmem:[%s3 + $0x1c] sm:$0xf]
  %v704 = vld [vmem:[%s3 + $0x20] sm:$0xf]
  %v705 = vld [vmem:[%s3 + $0x24] sm:$0xf]
  %v706 = vld [vmem:[%s3 + $0x28] sm:$0xf]
  %v707 = vld [vmem:[%s3 + $0x2c] sm:$0xf]
  %v708 = vld [vmem:[%s3 + $0x30] sm:$0xf]
  %v709 = vld [vmem:[%s3 + $0x34] sm:$0xf]
  %v710 = vld [vmem:[%s3 + $0x38] sm:$0xf]
  %v711 = vld [vmem:[%s3 + $0x3c] sm:$0xf]
  %s712 = scalar_lea.vmem %s2, 128
  %v713 = vld [vmem:[%s712] sm:$0xff]
  %v714 = vld [vmem:[%s712 + $0x8] sm:$0xff]
  %v715 = vld [vmem:[%s712 + $0x10] sm:$0xff]
  %v716 = vld [vmem:[%s712 + $0x18] sm:$0xff]
  %v717 = vld [vmem:[%s712 + $0x20] sm:$0xff]
  %v718 = vld [vmem:[%s712 + $0x28] sm:$0xff]
  %v719 = vld [vmem:[%s712 + $0x30] sm:$0xff]
  %v720 = vld [vmem:[%s712 + $0x38] sm:$0xff]
  %v721 = vld [vmem:[%s712 + $0x40] sm:$0xff]
  %v722 = vld [vmem:[%s712 + $0x48] sm:$0xff]
  %v723 = vld [vmem:[%s712 + $0x50] sm:$0xff]
  %v724 = vld [vmem:[%s712 + $0x58] sm:$0xff]
  %v725 = vld [vmem:[%s712 + $0x60] sm:$0xff]
  %v726 = vld [vmem:[%s712 + $0x68] sm:$0xff]
  %v727 = vld [vmem:[%s712 + $0x70] sm:$0xff]
  %v728 = vld [vmem:[%s712 + $0x78] sm:$0xff]
  %v745 = vunpack.c.l.b16 %v713
  %v746 = vunpack.c.h.b16 %v713
  %v747 = vunpack.c.l.b16 %v714
  %v748 = vunpack.c.h.b16 %v714
  %v749 = vunpack.c.l.b16 %v715
  %v750 = vunpack.c.h.b16 %v715
  %v751 = vunpack.c.l.b16 %v716
  %v752 = vunpack.c.h.b16 %v716
  %v753 = vunpack.c.l.b16 %v717
  %v754 = vunpack.c.h.b16 %v717
  %v755 = vunpack.c.l.b16 %v718
  %v756 = vunpack.c.h.b16 %v718
  %v757 = vunpack.c.l.b16 %v719
  %v758 = vunpack.c.h.b16 %v719
  %v759 = vunpack.c.l.b16 %v720
  %v760 = vunpack.c.h.b16 %v720
  %v761 = vunpack.c.l.b16 %v721
  %v762 = vunpack.c.h.b16 %v721
  %v763 = vunpack.c.l.b16 %v722
  %v764 = vunpack.c.h.b16 %v722
  %v765 = vunpack.c.l.b16 %v723
  %v766 = vunpack.c.h.b16 %v723
  %v767 = vunpack.c.l.b16 %v724
  %v768 = vunpack.c.h.b16 %v724
  %v769 = vunpack.c.l.b16 %v725
  %v770 = vunpack.c.h.b16 %v725
  %v771 = vunpack.c.l.b16 %v726
  %v772 = vunpack.c.h.b16 %v726
  %v773 = vunpack.c.l.b16 %v727
  %v774 = vunpack.c.h.b16 %v727
  %v775 = vunpack.c.l.b16 %v728
  %v776 = vunpack.c.h.b16 %v728
  %v777 = vpack.c.b16 %v747, %v745
  %v778 = vpack.c.b16 %v748, %v746
  %v779 = vpack.c.b16 %v751, %v749
  %v780 = vpack.c.b16 %v752, %v750
  %v781 = vpack.c.b16 %v755, %v753
  %v782 = vpack.c.b16 %v756, %v754
  %v783 = vpack.c.b16 %v759, %v757
  %v784 = vpack.c.b16 %v760, %v758
  %v785 = vpack.c.b16 %v763, %v761
  %v786 = vpack.c.b16 %v764, %v762
  %v787 = vpack.c.b16 %v767, %v765
  %v788 = vpack.c.b16 %v768, %v766
  %v789 = vpack.c.b16 %v771, %v769
  %v790 = vpack.c.b16 %v772, %v770
  %v791 = vpack.c.b16 %v775, %v773
  %v792 = vpack.c.b16 %v776, %v774
  %809 = vmatprep.subr.bf16.mxu0 0
  %810 = vmatpush1.bf16.msra.mxu0 %v486
  %811 = vmatprep.subr.bf16.mxu0 0
  %812 = vmatpush1.bf16.msra.mxu0 %v485
  %813 = vmatprep.subr.bf16.mxu0 0
  %814 = vmatpush1.bf16.msra.mxu0 %v484
  %815 = vmatprep.subr.bf16.mxu0 0
  %816 = vmatpush1.bf16.msra.mxu0 %v483
  %817 = vmatprep.subr.bf16.mxu0 0
  %818 = vmatpush1.bf16.msra.mxu0 %v482
  %819 = vmatprep.subr.bf16.mxu0 0
  %820 = vmatpush1.bf16.msra.mxu0 %v481
  %821 = vmatprep.subr.bf16.mxu0 0
  %822 = vmatpush1.bf16.msra.mxu0 %v480
  %823 = vmatprep.subr.bf16.mxu0 0
  %824 = vmatpush1.bf16.msra.mxu0 %v479
  %825 = vmatprep.subr.bf16.mxu0 0
  %826 = vmatpush2.bf16.msra.mxu0 %v494
  %827 = vmatprep.subr.bf16.mxu0 0
  %828 = vmatpush2.bf16.msra.mxu0 %v493
  %829 = vmatprep.subr.bf16.mxu0 0
  %830 = vmatpush2.bf16.msra.mxu0 %v492
  %831 = vmatprep.subr.bf16.mxu0 0
  %832 = vmatpush2.bf16.msra.mxu0 %v491
  %833 = vmatprep.subr.bf16.mxu0 0
  %834 = vmatpush2.bf16.msra.mxu0 %v490
  %835 = vmatprep.subr.bf16.mxu0 0
  %836 = vmatpush2.bf16.msra.mxu0 %v489
  %837 = vmatprep.subr.bf16.mxu0 0
  %838 = vmatpush2.bf16.msra.mxu0 %v488
  %839 = vmatprep.subr.bf16.mxu0 0
  %840 = vmatpush2.bf16.msra.mxu0 %v487
  %841 = vmatprep.mubr.bf16.mxu0 %v778
  %842 = vmatmul.mubr.bf16.gmra.mxu0 %v777
  %v843 = vpop.f32.mrf.mxu0
  %v844 = vadd.f32 0.0, %v843
  %v845 = vpop.f32.mrf.mxu0
  %v846 = vpop.f32.mrf.mxu0
  %v847 = vadd.f32 0.0, %v846
  %v848 = vpop.f32.mrf.mxu0
  %849 = vmatprep.mubr.bf16.mxu0 %v780
  %850 = vmatmul.mubr.bf16.gmra.mxu0 %v779
  %v851 = vpop.f32.mrf.mxu0
  %v852 = vadd.f32 0.0, %v851
  %v853 = vpop.f32.mrf.mxu0
  %v854 = vpop.f32.mrf.mxu0
  %v855 = vadd.f32 0.0, %v854
  %v856 = vpop.f32.mrf.mxu0
  %857 = vmatprep.mubr.bf16.mxu0 %v782
  %858 = vmatmul.mubr.bf16.gmra.mxu0 %v781
  %v859 = vpop.f32.mrf.mxu0
  %v860 = vadd.f32 0.0, %v859
  %v861 = vpop.f32.mrf.mxu0
  %v862 = vpop.f32.mrf.mxu0
  %v863 = vadd.f32 0.0, %v862
  %v864 = vpop.f32.mrf.mxu0
  %865 = vmatprep.mubr.bf16.mxu0 %v784
  %866 = vmatmul.mubr.bf16.gmra.mxu0 %v783
  %v867 = vpop.f32.mrf.mxu0
  %v868 = vadd.f32 0.0, %v867
  %v869 = vpop.f32.mrf.mxu0
  %v870 = vpop.f32.mrf.mxu0
  %v871 = vadd.f32 0.0, %v870
  %v872 = vpop.f32.mrf.mxu0
  %873 = vmatprep.mubr.bf16.mxu0 %v786
  %874 = vmatmul.mubr.bf16.gmra.mxu0 %v785
  %v875 = vpop.f32.mrf.mxu0
  %v876 = vadd.f32 0.0, %v875
  %v877 = vpop.f32.mrf.mxu0
  %v878 = vpop.f32.mrf.mxu0
  %v879 = vadd.f32 0.0, %v878
  %v880 = vpop.f32.mrf.mxu0
  %881 = vmatprep.mubr.bf16.mxu0 %v788
  %882 = vmatmul.mubr.bf16.gmra.mxu0 %v787
  %v883 = vpop.f32.mrf.mxu0
  %v884 = vadd.f32 0.0, %v883
  %v885 = vpop.f32.mrf.mxu0
  %v886 = vpop.f32.mrf.mxu0
  %v887 = vadd.f32 0.0, %v886
  %v888 = vpop.f32.mrf.mxu0
  %889 = vmatprep.mubr.bf16.mxu0 %v790
  %890 = vmatmul.mubr.bf16.gmra.mxu0 %v789
  %v891 = vpop.f32.mrf.mxu0
  %v892 = vadd.f32 0.0, %v891
  %v893 = vpop.f32.mrf.mxu0
  %v894 = vpop.f32.mrf.mxu0
  %v895 = vadd.f32 0.0, %v894
  %v896 = vpop.f32.mrf.mxu0
  %897 = vmatprep.mubr.bf16.mxu0 %v792
  %898 = vmatmul.mubr.bf16.gmra.mxu0 %v791
  %v899 = vpop.f32.mrf.mxu0
  %v900 = vadd.f32 0.0, %v899
  %v901 = vpop.f32.mrf.mxu0
  %v902 = vpop.f32.mrf.mxu0
  %v903 = vadd.f32 0.0, %v902
  %v904 = vpop.f32.mrf.mxu0
  %905 = vdwg.mxu0
  %v906 = vpack.c.bf16 %v847, %v844
  %v907 = vpack.c.bf16 %v855, %v852
  %v908 = vpack.c.bf16 %v863, %v860
  %v909 = vpack.c.bf16 %v871, %v868
  %v910 = vpack.c.bf16 %v879, %v876
  %v911 = vpack.c.bf16 %v887, %v884
  %v912 = vpack.c.bf16 %v895, %v892
  %v913 = vpack.c.bf16 %v903, %v900
  %s914 = scalar_lea.vmem %s3, 64
  %v915 = vld [vmem:[%s914] sm:$0xf]
  %v916 = vld [vmem:[%s914 + $0x4] sm:$0xf]
  %v917 = vld [vmem:[%s914 + $0x8] sm:$0xf]
  %v918 = vld [vmem:[%s914 + $0xc] sm:$0xf]
  %v919 = vld [vmem:[%s914 + $0x10] sm:$0xf]
  %v920 = vld [vmem:[%s914 + $0x14] sm:$0xf]
  %v921 = vld [vmem:[%s914 + $0x18] sm:$0xf]
  %v922 = vld [vmem:[%s914 + $0x1c] sm:$0xf]
  %v923 = vld [vmem:[%s914 + $0x20] sm:$0xf]
  %v924 = vld [vmem:[%s914 + $0x24] sm:$0xf]
  %v925 = vld [vmem:[%s914 + $0x28] sm:$0xf]
  %v926 = vld [vmem:[%s914 + $0x2c] sm:$0xf]
  %v927 = vld [vmem:[%s914 + $0x30] sm:$0xf]
  %v928 = vld [vmem:[%s914 + $0x34] sm:$0xf]
  %v929 = vld [vmem:[%s914 + $0x38] sm:$0xf]
  %v930 = vld [vmem:[%s914 + $0x3c] sm:$0xf]
  %v947 = vunpack.c.l.b16 %v915
  %v948 = vunpack.c.l.b16 %v916
  %v949 = vunpack.c.l.b16 %v917
  %v950 = vunpack.c.l.b16 %v918
  %v951 = vunpack.c.l.b16 %v919
  %v952 = vunpack.c.l.b16 %v920
  %v953 = vunpack.c.l.b16 %v921
  %v954 = vunpack.c.l.b16 %v922
  %v955 = vunpack.c.l.b16 %v923
  %v956 = vunpack.c.l.b16 %v924
  %v957 = vunpack.c.l.b16 %v925
  %v958 = vunpack.c.l.b16 %v926
  %v959 = vunpack.c.l.b16 %v927
  %v960 = vunpack.c.l.b16 %v928
  %v961 = vunpack.c.l.b16 %v929
  %v962 = vunpack.c.l.b16 %v930
  %v963 = vpack.c.b16 %v948, %v947
  %v964 = vpack.c.b16 %v950, %v949
  %v965 = vpack.c.b16 %v952, %v951
  %v966 = vpack.c.b16 %v954, %v953
  %v967 = vpack.c.b16 %v956, %v955
  %v968 = vpack.c.b16 %v958, %v957
  %v969 = vpack.c.b16 %v960, %v959
  %v970 = vpack.c.b16 %v962, %v961
  %979 = vmatprep.subr.bf16.mxu0 0
  %980 = vmatpush1.bf16.msra.mxu0 %v970
  %981 = vmatprep.subr.bf16.mxu0 0
  %982 = vmatpush1.bf16.msra.mxu0 %v969
  %983 = vmatprep.subr.bf16.mxu0 0
  %984 = vmatpush1.bf16.msra.mxu0 %v968
  %985 = vmatprep.subr.bf16.mxu0 0
  %986 = vmatpush1.bf16.msra.mxu0 %v967
  %987 = vmatprep.subr.bf16.mxu0 0
  %988 = vmatpush1.bf16.msra.mxu0 %v966
  %989 = vmatprep.subr.bf16.mxu0 0
  %990 = vmatpush1.bf16.msra.mxu0 %v965
  %991 = vmatprep.subr.bf16.mxu0 0
  %992 = vmatpush1.bf16.msra.mxu0 %v964
  %993 = vmatprep.subr.bf16.mxu0 0
  %994 = vmatpush1.bf16.msra.mxu0 %v963
  %995 = vmatprep.subr.bf16.mxu0 0
  %996 = vmatpush2.bf16.msra.mxu0 0
  %997 = vmatprep.subr.bf16.mxu0 0
  %998 = vmatpush2.bf16.msra.mxu0 0
  %999 = vmatprep.subr.bf16.mxu0 0
  %1000 = vmatpush2.bf16.msra.mxu0 0
  %1001 = vmatprep.subr.bf16.mxu0 0
  %1002 = vmatpush2.bf16.msra.mxu0 0
  %1003 = vmatprep.subr.bf16.mxu0 0
  %1004 = vmatpush2.bf16.msra.mxu0 0
  %1005 = vmatprep.subr.bf16.mxu0 0
  %1006 = vmatpush2.bf16.msra.mxu0 0
  %1007 = vmatprep.subr.bf16.mxu0 0
  %1008 = vmatpush2.bf16.msra.mxu0 0
  %1009 = vmatprep.subr.bf16.mxu0 0
  %1010 = vmatpush2.bf16.msra.mxu0 0
  %1011 = vmatprep.mubr.bf16.mxu0 0
  %1012 = vmatmul.mubr.bf16.gmra.mxu0 %v906
  %v1013 = vpop.f32.mrf.mxu0
  %v1014 = vadd.f32 0.0, %v1013
  %v1015 = vpop.f32.mrf.mxu0
  %v1016 = vpop.f32.mrf.mxu0
  %v1017 = vadd.f32 0.0, %v1016
  %v1018 = vpop.f32.mrf.mxu0
  %1019 = vmatprep.mubr.bf16.mxu0 0
  %1020 = vmatmul.mubr.bf16.gmra.mxu0 %v907
  %v1021 = vpop.f32.mrf.mxu0
  %v1022 = vadd.f32 0.0, %v1021
  %v1023 = vpop.f32.mrf.mxu0
  %v1024 = vpop.f32.mrf.mxu0
  %v1025 = vadd.f32 0.0, %v1024
  %v1026 = vpop.f32.mrf.mxu0
  %1027 = vmatprep.mubr.bf16.mxu0 0
  %1028 = vmatmul.mubr.bf16.gmra.mxu0 %v908
  %v1029 = vpop.f32.mrf.mxu0
  %v1030 = vadd.f32 0.0, %v1029
  %v1031 = vpop.f32.mrf.mxu0
  %v1032 = vpop.f32.mrf.mxu0
  %v1033 = vadd.f32 0.0, %v1032
  %v1034 = vpop.f32.mrf.mxu0
  %1035 = vmatprep.mubr.bf16.mxu0 0
  %1036 = vmatmul.mubr.bf16.gmra.mxu0 %v909
  %v1037 = vpop.f32.mrf.mxu0
  %v1038 = vadd.f32 0.0, %v1037
  %v1039 = vpop.f32.mrf.mxu0
  %v1040 = vpop.f32.mrf.mxu0
  %v1041 = vadd.f32 0.0, %v1040
  %v1042 = vpop.f32.mrf.mxu0
  %1043 = vmatprep.mubr.bf16.mxu0 0
  %1044 = vmatmul.mubr.bf16.gmra.mxu0 %v910
  %v1045 = vpop.f32.mrf.mxu0
  %v1046 = vadd.f32 0.0, %v1045
  %v1047 = vpop.f32.mrf.mxu0
  %v1048 = vpop.f32.mrf.mxu0
  %v1049 = vadd.f32 0.0, %v1048
  %v1050 = vpop.f32.mrf.mxu0
  %1051 = vmatprep.mubr.bf16.mxu0 0
  %1052 = vmatmul.mubr.bf16.gmra.mxu0 %v911
  %v1053 = vpop.f32.mrf.mxu0
  %v1054 = vadd.f32 0.0, %v1053
  %v1055 = vpop.f32.mrf.mxu0
  %v1056 = vpop.f32.mrf.mxu0
  %v1057 = vadd.f32 0.0, %v1056
  %v1058 = vpop.f32.mrf.mxu0
  %1059 = vmatprep.mubr.bf16.mxu0 0
  %1060 = vmatmul.mubr.bf16.gmra.mxu0 %v912
  %v1061 = vpop.f32.mrf.mxu0
  %v1062 = vadd.f32 0.0, %v1061
  %v1063 = vpop.f32.mrf.mxu0
  %v1064 = vpop.f32.mrf.mxu0
  %v1065 = vadd.f32 0.0, %v1064
  %v1066 = vpop.f32.mrf.mxu0
  %1067 = vmatprep.mubr.bf16.mxu0 0
  %1068 = vmatmul.mubr.bf16.gmra.mxu0 %v913
  %v1069 = vpop.f32.mrf.mxu0
  %v1070 = vadd.f32 0.0, %v1069
  %v1071 = vpop.f32.mrf.mxu0
  %v1072 = vpop.f32.mrf.mxu0
  %v1073 = vadd.f32 0.0, %v1072
  %v1074 = vpop.f32.mrf.mxu0
  %1075 = vdwg.mxu0
  %v1092 = vunpack.c.l.b16 %v696
  %v1093 = vunpack.c.l.b16 %v697
  %v1094 = vunpack.c.l.b16 %v698
  %v1095 = vunpack.c.l.b16 %v699
  %v1096 = vunpack.c.l.b16 %v700
  %v1097 = vunpack.c.l.b16 %v701
  %v1098 = vunpack.c.l.b16 %v702
  %v1099 = vunpack.c.l.b16 %v703
  %v1100 = vunpack.c.l.b16 %v704
  %v1101 = vunpack.c.l.b16 %v705
  %v1102 = vunpack.c.l.b16 %v706
  %v1103 = vunpack.c.l.b16 %v707
  %v1104 = vunpack.c.l.b16 %v708
  %v1105 = vunpack.c.l.b16 %v709
  %v1106 = vunpack.c.l.b16 %v710
  %v1107 = vunpack.c.l.b16 %v711
  %v1108 = vpack.c.b16 %v1093, %v1092
  %v1109 = vpack.c.b16 %v1095, %v1094
  %v1110 = vpack.c.b16 %v1097, %v1096
  %v1111 = vpack.c.b16 %v1099, %v1098
  %v1112 = vpack.c.b16 %v1101, %v1100
  %v1113 = vpack.c.b16 %v1103, %v1102
  %v1114 = vpack.c.b16 %v1105, %v1104
  %v1115 = vpack.c.b16 %v1107, %v1106
  %1124 = vmatprep.subr.bf16.mxu0 0
  %1125 = vmatpush1.bf16.msra.mxu0 %v1115
  %1126 = vmatprep.subr.bf16.mxu0 0
  %1127 = vmatpush1.bf16.msra.mxu0 %v1114
  %1128 = vmatprep.subr.bf16.mxu0 0
  %1129 = vmatpush1.bf16.msra.mxu0 %v1113
  %1130 = vmatprep.subr.bf16.mxu0 0
  %1131 = vmatpush1.bf16.msra.mxu0 %v1112
  %1132 = vmatprep.subr.bf16.mxu0 0
  %1133 = vmatpush1.bf16.msra.mxu0 %v1111
  %1134 = vmatprep.subr.bf16.mxu0 0
  %1135 = vmatpush1.bf16.msra.mxu0 %v1110
  %1136 = vmatprep.subr.bf16.mxu0 0
  %1137 = vmatpush1.bf16.msra.mxu0 %v1109
  %1138 = vmatprep.subr.bf16.mxu0 0
  %1139 = vmatpush1.bf16.msra.mxu0 %v1108
  %1140 = vmatprep.subr.bf16.mxu0 0
  %1141 = vmatpush2.bf16.msra.mxu0 0
  %1142 = vmatprep.subr.bf16.mxu0 0
  %1143 = vmatpush2.bf16.msra.mxu0 0
  %1144 = vmatprep.subr.bf16.mxu0 0
  %1145 = vmatpush2.bf16.msra.mxu0 0
  %1146 = vmatprep.subr.bf16.mxu0 0
  %1147 = vmatpush2.bf16.msra.mxu0 0
  %1148 = vmatprep.subr.bf16.mxu0 0
  %1149 = vmatpush2.bf16.msra.mxu0 0
  %1150 = vmatprep.subr.bf16.mxu0 0
  %1151 = vmatpush2.bf16.msra.mxu0 0
  %1152 = vmatprep.subr.bf16.mxu0 0
  %1153 = vmatpush2.bf16.msra.mxu0 0
  %1154 = vmatprep.subr.bf16.mxu0 0
  %1155 = vmatpush2.bf16.msra.mxu0 0
  %1156 = vmatprep.mubr.bf16.mxu0 0
  %1157 = vmatmul.mubr.bf16.gmra.mxu0 %v688
  %v1158 = vpop.f32.mrf.mxu0
  %v1159 = vadd.f32 %v1014, %v1158
  %v1160 = vpop.f32.mrf.mxu0
  %v1161 = vpop.f32.mrf.mxu0
  %v1162 = vadd.f32 %v1017, %v1161
  %v1163 = vpop.f32.mrf.mxu0
  %1164 = vmatprep.mubr.bf16.mxu0 0
  %1165 = vmatmul.mubr.bf16.gmra.mxu0 %v689
  %v1166 = vpop.f32.mrf.mxu0
  %v1167 = vadd.f32 %v1022, %v1166
  %v1168 = vpop.f32.mrf.mxu0
  %v1169 = vpop.f32.mrf.mxu0
  %v1170 = vadd.f32 %v1025, %v1169
  %v1171 = vpop.f32.mrf.mxu0
  %1172 = vmatprep.mubr.bf16.mxu0 0
  %1173 = vmatmul.mubr.bf16.gmra.mxu0 %v690
  %v1174 = vpop.f32.mrf.mxu0
  %v1175 = vadd.f32 %v1030, %v1174
  %v1176 = vpop.f32.mrf.mxu0
  %v1177 = vpop.f32.mrf.mxu0
  %v1178 = vadd.f32 %v1033, %v1177
  %v1179 = vpop.f32.mrf.mxu0
  %1180 = vmatprep.mubr.bf16.mxu0 0
  %1181 = vmatmul.mubr.bf16.gmra.mxu0 %v691
  %v1182 = vpop.f32.mrf.mxu0
  %v1183 = vadd.f32 %v1038, %v1182
  %v1184 = vpop.f32.mrf.mxu0
  %v1185 = vpop.f32.mrf.mxu0
  %v1186 = vadd.f32 %v1041, %v1185
  %v1187 = vpop.f32.mrf.mxu0
  %1188 = vmatprep.mubr.bf16.mxu0 0
  %1189 = vmatmul.mubr.bf16.gmra.mxu0 %v692
  %v1190 = vpop.f32.mrf.mxu0
  %v1191 = vadd.f32 %v1046, %v1190
  %v1192 = vpop.f32.mrf.mxu0
  %v1193 = vpop.f32.mrf.mxu0
  %v1194 = vadd.f32 %v1049, %v1193
  %v1195 = vpop.f32.mrf.mxu0
  %1196 = vmatprep.mubr.bf16.mxu0 0
  %1197 = vmatmul.mubr.bf16.gmra.mxu0 %v693
  %v1198 = vpop.f32.mrf.mxu0
  %v1199 = vadd.f32 %v1054, %v1198
  %v1200 = vpop.f32.mrf.mxu0
  %v1201 = vpop.f32.mrf.mxu0
  %v1202 = vadd.f32 %v1057, %v1201
  %v1203 = vpop.f32.mrf.mxu0
  %1204 = vmatprep.mubr.bf16.mxu0 0
  %1205 = vmatmul.mubr.bf16.gmra.mxu0 %v694
  %v1206 = vpop.f32.mrf.mxu0
  %v1207 = vadd.f32 %v1062, %v1206
  %v1208 = vpop.f32.mrf.mxu0
  %v1209 = vpop.f32.mrf.mxu0
  %v1210 = vadd.f32 %v1065, %v1209
  %v1211 = vpop.f32.mrf.mxu0
  %1212 = vmatprep.mubr.bf16.mxu0 0
  %1213 = vmatmul.mubr.bf16.gmra.mxu0 %v695
  %v1214 = vpop.f32.mrf.mxu0
  %v1215 = vadd.f32 %v1070, %v1214
  %v1216 = vpop.f32.mrf.mxu0
  %v1217 = vpop.f32.mrf.mxu0
  %v1218 = vadd.f32 %v1073, %v1217
  %v1219 = vpop.f32.mrf.mxu0
  %1220 = vdwg.mxu0
  %s1221 = scalar_lea.vmem %s2, 256
  %v1222 = vld [vmem:[%s1221] sm:$0xff]
  %v1223 = vld [vmem:[%s1221 + $0x8] sm:$0xff]
  %v1224 = vld [vmem:[%s1221 + $0x10] sm:$0xff]
  %v1225 = vld [vmem:[%s1221 + $0x18] sm:$0xff]
  %v1226 = vld [vmem:[%s1221 + $0x20] sm:$0xff]
  %v1227 = vld [vmem:[%s1221 + $0x28] sm:$0xff]
  %v1228 = vld [vmem:[%s1221 + $0x30] sm:$0xff]
  %v1229 = vld [vmem:[%s1221 + $0x38] sm:$0xff]
  %v1230 = vld [vmem:[%s1221 + $0x40] sm:$0xff]
  %v1231 = vld [vmem:[%s1221 + $0x48] sm:$0xff]
  %v1232 = vld [vmem:[%s1221 + $0x50] sm:$0xff]
  %v1233 = vld [vmem:[%s1221 + $0x58] sm:$0xff]
  %v1234 = vld [vmem:[%s1221 + $0x60] sm:$0xff]
  %v1235 = vld [vmem:[%s1221 + $0x68] sm:$0xff]
  %v1236 = vld [vmem:[%s1221 + $0x70] sm:$0xff]
  %v1237 = vld [vmem:[%s1221 + $0x78] sm:$0xff]
  %v1254 = vunpack.c.l.b16 %v1222
  %v1255 = vunpack.c.h.b16 %v1222
  %v1256 = vunpack.c.l.b16 %v1223
  %v1257 = vunpack.c.h.b16 %v1223
  %v1258 = vunpack.c.l.b16 %v1224
  %v1259 = vunpack.c.h.b16 %v1224
  %v1260 = vunpack.c.l.b16 %v1225
  %v1261 = vunpack.c.h.b16 %v1225
  %v1262 = vunpack.c.l.b16 %v1226
  %v1263 = vunpack.c.h.b16 %v1226
  %v1264 = vunpack.c.l.b16 %v1227
  %v1265 = vunpack.c.h.b16 %v1227
  %v1266 = vunpack.c.l.b16 %v1228
  %v1267 = vunpack.c.h.b16 %v1228
  %v1268 = vunpack.c.l.b16 %v1229
  %v1269 = vunpack.c.h.b16 %v1229
  %v1270 = vunpack.c.l.b16 %v1230
  %v1271 = vunpack.c.h.b16 %v1230
  %v1272 = vunpack.c.l.b16 %v1231
  %v1273 = vunpack.c.h.b16 %v1231
  %v1274 = vunpack.c.l.b16 %v1232
  %v1275 = vunpack.c.h.b16 %v1232
  %v1276 = vunpack.c.l.b16 %v1233
  %v1277 = vunpack.c.h.b16 %v1233
  %v1278 = vunpack.c.l.b16 %v1234
  %v1279 = vunpack.c.h.b16 %v1234
  %v1280 = vunpack.c.l.b16 %v1235
  %v1281 = vunpack.c.h.b16 %v1235
  %v1282 = vunpack.c.l.b16 %v1236
  %v1283 = vunpack.c.h.b16 %v1236
  %v1284 = vunpack.c.l.b16 %v1237
  %v1285 = vunpack.c.h.b16 %v1237
  %v1286 = vpack.c.b16 %v1256, %v1254
  %v1287 = vpack.c.b16 %v1257, %v1255
  %v1288 = vpack.c.b16 %v1260, %v1258
  %v1289 = vpack.c.b16 %v1261, %v1259
  %v1290 = vpack.c.b16 %v1264, %v1262
  %v1291 = vpack.c.b16 %v1265, %v1263
  %v1292 = vpack.c.b16 %v1268, %v1266
  %v1293 = vpack.c.b16 %v1269, %v1267
  %v1294 = vpack.c.b16 %v1272, %v1270
  %v1295 = vpack.c.b16 %v1273, %v1271
  %v1296 = vpack.c.b16 %v1276, %v1274
  %v1297 = vpack.c.b16 %v1277, %v1275
  %v1298 = vpack.c.b16 %v1280, %v1278
  %v1299 = vpack.c.b16 %v1281, %v1279
  %v1300 = vpack.c.b16 %v1284, %v1282
  %v1301 = vpack.c.b16 %v1285, %v1283
  %1318 = vmatprep.subr.bf16.mxu0 0
  %1319 = vmatpush1.bf16.msra.mxu0 %v486
  %1320 = vmatprep.subr.bf16.mxu0 0
  %1321 = vmatpush1.bf16.msra.mxu0 %v485
  %1322 = vmatprep.subr.bf16.mxu0 0
  %1323 = vmatpush1.bf16.msra.mxu0 %v484
  %1324 = vmatprep.subr.bf16.mxu0 0
  %1325 = vmatpush1.bf16.msra.mxu0 %v483
  %1326 = vmatprep.subr.bf16.mxu0 0
  %1327 = vmatpush1.bf16.msra.mxu0 %v482
  %1328 = vmatprep.subr.bf16.mxu0 0
  %1329 = vmatpush1.bf16.msra.mxu0 %v481
  %1330 = vmatprep.subr.bf16.mxu0 0
  %1331 = vmatpush1.bf16.msra.mxu0 %v480
  %1332 = vmatprep.subr.bf16.mxu0 0
  %1333 = vmatpush1.bf16.msra.mxu0 %v479
  %1334 = vmatprep.subr.bf16.mxu0 0
  %1335 = vmatpush2.bf16.msra.mxu0 %v494
  %1336 = vmatprep.subr.bf16.mxu0 0
  %1337 = vmatpush2.bf16.msra.mxu0 %v493
  %1338 = vmatprep.subr.bf16.mxu0 0
  %1339 = vmatpush2.bf16.msra.mxu0 %v492
  %1340 = vmatprep.subr.bf16.mxu0 0
  %1341 = vmatpush2.bf16.msra.mxu0 %v491
  %1342 = vmatprep.subr.bf16.mxu0 0
  %1343 = vmatpush2.bf16.msra.mxu0 %v490
  %1344 = vmatprep.subr.bf16.mxu0 0
  %1345 = vmatpush2.bf16.msra.mxu0 %v489
  %1346 = vmatprep.subr.bf16.mxu0 0
  %1347 = vmatpush2.bf16.msra.mxu0 %v488
  %1348 = vmatprep.subr.bf16.mxu0 0
  %1349 = vmatpush2.bf16.msra.mxu0 %v487
  %1350 = vmatprep.mubr.bf16.mxu0 %v1287
  %1351 = vmatmul.mubr.bf16.gmra.mxu0 %v1286
  %v1352 = vpop.f32.mrf.mxu0
  %v1353 = vadd.f32 0.0, %v1352
  %v1354 = vpop.f32.mrf.mxu0
  %v1355 = vpop.f32.mrf.mxu0
  %v1356 = vadd.f32 0.0, %v1355
  %v1357 = vpop.f32.mrf.mxu0
  %1358 = vmatprep.mubr.bf16.mxu0 %v1289
  %1359 = vmatmul.mubr.bf16.gmra.mxu0 %v1288
  %v1360 = vpop.f32.mrf.mxu0
  %v1361 = vadd.f32 0.0, %v1360
  %v1362 = vpop.f32.mrf.mxu0
  %v1363 = vpop.f32.mrf.mxu0
  %v1364 = vadd.f32 0.0, %v1363
  %v1365 = vpop.f32.mrf.mxu0
  %1366 = vmatprep.mubr.bf16.mxu0 %v1291
  %1367 = vmatmul.mubr.bf16.gmra.mxu0 %v1290
  %v1368 = vpop.f32.mrf.mxu0
  %v1369 = vadd.f32 0.0, %v1368
  %v1370 = vpop.f32.mrf.mxu0
  %v1371 = vpop.f32.mrf.mxu0
  %v1372 = vadd.f32 0.0, %v1371
  %v1373 = vpop.f32.mrf.mxu0
  %1374 = vmatprep.mubr.bf16.mxu0 %v1293
  %1375 = vmatmul.mubr.bf16.gmra.mxu0 %v1292
  %v1376 = vpop.f32.mrf.mxu0
  %v1377 = vadd.f32 0.0, %v1376
  %v1378 = vpop.f32.mrf.mxu0
  %v1379 = vpop.f32.mrf.mxu0
  %v1380 = vadd.f32 0.0, %v1379
  %v1381 = vpop.f32.mrf.mxu0
  %1382 = vmatprep.mubr.bf16.mxu0 %v1295
  %1383 = vmatmul.mubr.bf16.gmra.mxu0 %v1294
  %v1384 = vpop.f32.mrf.mxu0
  %v1385 = vadd.f32 0.0, %v1384
  %v1386 = vpop.f32.mrf.mxu0
  %v1387 = vpop.f32.mrf.mxu0
  %v1388 = vadd.f32 0.0, %v1387
  %v1389 = vpop.f32.mrf.mxu0
  %1390 = vmatprep.mubr.bf16.mxu0 %v1297
  %1391 = vmatmul.mubr.bf16.gmra.mxu0 %v1296
  %v1392 = vpop.f32.mrf.mxu0
  %v1393 = vadd.f32 0.0, %v1392
  %v1394 = vpop.f32.mrf.mxu0
  %v1395 = vpop.f32.mrf.mxu0
  %v1396 = vadd.f32 0.0, %v1395
  %v1397 = vpop.f32.mrf.mxu0
  %1398 = vmatprep.mubr.bf16.mxu0 %v1299
  %1399 = vmatmul.mubr.bf16.gmra.mxu0 %v1298
  %v1400 = vpop.f32.mrf.mxu0
  %v1401 = vadd.f32 0.0, %v1400
  %v1402 = vpop.f32.mrf.mxu0
  %v1403 = vpop.f32.mrf.mxu0
  %v1404 = vadd.f32 0.0, %v1403
  %v1405 = vpop.f32.mrf.mxu0
  %1406 = vmatprep.mubr.bf16.mxu0 %v1301
  %1407 = vmatmul.mubr.bf16.gmra.mxu0 %v1300
  %v1408 = vpop.f32.mrf.mxu0
  %v1409 = vadd.f32 0.0, %v1408
  %v1410 = vpop.f32.mrf.mxu0
  %v1411 = vpop.f32.mrf.mxu0
  %v1412 = vadd.f32 0.0, %v1411
  %v1413 = vpop.f32.mrf.mxu0
  %1414 = vdwg.mxu0
  %v1415 = vpack.c.bf16 %v1356, %v1353
  %v1416 = vpack.c.bf16 %v1364, %v1361
  %v1417 = vpack.c.bf16 %v1372, %v1369
  %v1418 = vpack.c.bf16 %v1380, %v1377
  %v1419 = vpack.c.bf16 %v1388, %v1385
  %v1420 = vpack.c.bf16 %v1396, %v1393
  %v1421 = vpack.c.bf16 %v1404, %v1401
  %v1422 = vpack.c.bf16 %v1412, %v1409
  %s1423 = scalar_lea.vmem %s3, 128
  %v1424 = vld [vmem:[%s1423] sm:$0xf]
  %v1425 = vld [vmem:[%s1423 + $0x4] sm:$0xf]
  %v1426 = vld [vmem:[%s1423 + $0x8] sm:$0xf]
  %v1427 = vld [vmem:[%s1423 + $0xc] sm:$0xf]
  %v1428 = vld [vmem:[%s1423 + $0x10] sm:$0xf]
  %v1429 = vld [vmem:[%s1423 + $0x14] sm:$0xf]
  %v1430 = vld [vmem:[%s1423 + $0x18] sm:$0xf]
  %v1431 = vld [vmem:[%s1423 + $0x1c] sm:$0xf]
  %v1432 = vld [vmem:[%s1423 + $0x20] sm:$0xf]
  %v1433 = vld [vmem:[%s1423 + $0x24] sm:$0xf]
  %v1434 = vld [vmem:[%s1423 + $0x28] sm:$0xf]
  %v1435 = vld [vmem:[%s1423 + $0x2c] sm:$0xf]
  %v1436 = vld [vmem:[%s1423 + $0x30] sm:$0xf]
  %v1437 = vld [vmem:[%s1423 + $0x34] sm:$0xf]
  %v1438 = vld [vmem:[%s1423 + $0x38] sm:$0xf]
  %v1439 = vld [vmem:[%s1423 + $0x3c] sm:$0xf]
  %v1456 = vunpack.c.l.b16 %v1424
  %v1457 = vunpack.c.l.b16 %v1425
  %v1458 = vunpack.c.l.b16 %v1426
  %v1459 = vunpack.c.l.b16 %v1427
  %v1460 = vunpack.c.l.b16 %v1428
  %v1461 = vunpack.c.l.b16 %v1429
  %v1462 = vunpack.c.l.b16 %v1430
  %v1463 = vunpack.c.l.b16 %v1431
  %v1464 = vunpack.c.l.b16 %v1432
  %v1465 = vunpack.c.l.b16 %v1433
  %v1466 = vunpack.c.l.b16 %v1434
  %v1467 = vunpack.c.l.b16 %v1435
  %v1468 = vunpack.c.l.b16 %v1436
  %v1469 = vunpack.c.l.b16 %v1437
  %v1470 = vunpack.c.l.b16 %v1438
  %v1471 = vunpack.c.l.b16 %v1439
  %v1472 = vpack.c.b16 %v1457, %v1456
  %v1473 = vpack.c.b16 %v1459, %v1458
  %v1474 = vpack.c.b16 %v1461, %v1460
  %v1475 = vpack.c.b16 %v1463, %v1462
  %v1476 = vpack.c.b16 %v1465, %v1464
  %v1477 = vpack.c.b16 %v1467, %v1466
  %v1478 = vpack.c.b16 %v1469, %v1468
  %v1479 = vpack.c.b16 %v1471, %v1470
  %1488 = vmatprep.subr.bf16.mxu0 0
  %1489 = vmatpush1.bf16.msra.mxu0 %v1479
  %1490 = vmatprep.subr.bf16.mxu0 0
  %1491 = vmatpush1.bf16.msra.mxu0 %v1478
  %1492 = vmatprep.subr.bf16.mxu0 0
  %1493 = vmatpush1.bf16.msra.mxu0 %v1477
  %1494 = vmatprep.subr.bf16.mxu0 0
  %1495 = vmatpush1.bf16.msra.mxu0 %v1476
  %1496 = vmatprep.subr.bf16.mxu0 0
  %1497 = vmatpush1.bf16.msra.mxu0 %v1475
  %1498 = vmatprep.subr.bf16.mxu0 0
  %1499 = vmatpush1.bf16.msra.mxu0 %v1474
  %1500 = vmatprep.subr.bf16.mxu0 0
  %1501 = vmatpush1.bf16.msra.mxu0 %v1473
  %1502 = vmatprep.subr.bf16.mxu0 0
  %1503 = vmatpush1.bf16.msra.mxu0 %v1472
  %1504 = vmatprep.subr.bf16.mxu0 0
  %1505 = vmatpush2.bf16.msra.mxu0 0
  %1506 = vmatprep.subr.bf16.mxu0 0
  %1507 = vmatpush2.bf16.msra.mxu0 0
  %1508 = vmatprep.subr.bf16.mxu0 0
  %1509 = vmatpush2.bf16.msra.mxu0 0
  %1510 = vmatprep.subr.bf16.mxu0 0
  %1511 = vmatpush2.bf16.msra.mxu0 0
  %1512 = vmatprep.subr.bf16.mxu0 0
  %1513 = vmatpush2.bf16.msra.mxu0 0
  %1514 = vmatprep.subr.bf16.mxu0 0
  %1515 = vmatpush2.bf16.msra.mxu0 0
  %1516 = vmatprep.subr.bf16.mxu0 0
  %1517 = vmatpush2.bf16.msra.mxu0 0
  %1518 = vmatprep.subr.bf16.mxu0 0
  %1519 = vmatpush2.bf16.msra.mxu0 0
  %1520 = vmatprep.mubr.bf16.mxu0 0
  %1521 = vmatmul.mubr.bf16.gmra.mxu0 %v1415
  %v1522 = vpop.f32.mrf.mxu0
  %v1523 = vadd.f32 0.0, %v1522
  %v1524 = vpop.f32.mrf.mxu0
  %v1525 = vpop.f32.mrf.mxu0
  %v1526 = vadd.f32 0.0, %v1525
  %v1527 = vpop.f32.mrf.mxu0
  %1528 = vmatprep.mubr.bf16.mxu0 0
  %1529 = vmatmul.mubr.bf16.gmra.mxu0 %v1416
  %v1530 = vpop.f32.mrf.mxu0
  %v1531 = vadd.f32 0.0, %v1530
  %v1532 = vpop.f32.mrf.mxu0
  %v1533 = vpop.f32.mrf.mxu0
  %v1534 = vadd.f32 0.0, %v1533
  %v1535 = vpop.f32.mrf.mxu0
  %1536 = vmatprep.mubr.bf16.mxu0 0
  %1537 = vmatmul.mubr.bf16.gmra.mxu0 %v1417
  %v1538 = vpop.f32.mrf.mxu0
  %v1539 = vadd.f32 0.0, %v1538
  %v1540 = vpop.f32.mrf.mxu0
  %v1541 = vpop.f32.mrf.mxu0
  %v1542 = vadd.f32 0.0, %v1541
  %v1543 = vpop.f32.mrf.mxu0
  %1544 = vmatprep.mubr.bf16.mxu0 0
  %1545 = vmatmul.mubr.bf16.gmra.mxu0 %v1418
  %v1546 = vpop.f32.mrf.mxu0
  %v1547 = vadd.f32 0.0, %v1546
  %v1548 = vpop.f32.mrf.mxu0
  %v1549 = vpop.f32.mrf.mxu0
  %v1550 = vadd.f32 0.0, %v1549
  %v1551 = vpop.f32.mrf.mxu0
  %1552 = vmatprep.mubr.bf16.mxu0 0
  %1553 = vmatmul.mubr.bf16.gmra.mxu0 %v1419
  %v1554 = vpop.f32.mrf.mxu0
  %v1555 = vadd.f32 0.0, %v1554
  %v1556 = vpop.f32.mrf.mxu0
  %v1557 = vpop.f32.mrf.mxu0
  %v1558 = vadd.f32 0.0, %v1557
  %v1559 = vpop.f32.mrf.mxu0
  %1560 = vmatprep.mubr.bf16.mxu0 0
  %1561 = vmatmul.mubr.bf16.gmra.mxu0 %v1420
  %v1562 = vpop.f32.mrf.mxu0
  %v1563 = vadd.f32 0.0, %v1562
  %v1564 = vpop.f32.mrf.mxu0
  %v1565 = vpop.f32.mrf.mxu0
  %v1566 = vadd.f32 0.0, %v1565
  %v1567 = vpop.f32.mrf.mxu0
  %1568 = vmatprep.mubr.bf16.mxu0 0
  %1569 = vmatmul.mubr.bf16.gmra.mxu0 %v1421
  %v1570 = vpop.f32.mrf.mxu0
  %v1571 = vadd.f32 0.0, %v1570
  %v1572 = vpop.f32.mrf.mxu0
  %v1573 = vpop.f32.mrf.mxu0
  %v1574 = vadd.f32 0.0, %v1573
  %v1575 = vpop.f32.mrf.mxu0
  %1576 = vmatprep.mubr.bf16.mxu0 0
  %1577 = vmatmul.mubr.bf16.gmra.mxu0 %v1422
  %v1578 = vpop.f32.mrf.mxu0
  %v1579 = vadd.f32 0.0, %v1578
  %v1580 = vpop.f32.mrf.mxu0
  %v1581 = vpop.f32.mrf.mxu0
  %v1582 = vadd.f32 0.0, %v1581
  %v1583 = vpop.f32.mrf.mxu0
  %1584 = vdwg.mxu0
  %v1585 = vadd.f32 %v1159, %v1523
  %v1586 = vadd.f32 %v1162, %v1526
  %v1587 = vadd.f32 %v1167, %v1531
  %v1588 = vadd.f32 %v1170, %v1534
  %v1589 = vadd.f32 %v1175, %v1539
  %v1590 = vadd.f32 %v1178, %v1542
  %v1591 = vadd.f32 %v1183, %v1547
  %v1592 = vadd.f32 %v1186, %v1550
  %v1593 = vadd.f32 %v1191, %v1555
  %v1594 = vadd.f32 %v1194, %v1558
  %v1595 = vadd.f32 %v1199, %v1563
  %v1596 = vadd.f32 %v1202, %v1566
  %v1597 = vadd.f32 %v1207, %v1571
  %v1598 = vadd.f32 %v1210, %v1574
  %v1599 = vadd.f32 %v1215, %v1579
  %v1600 = vadd.f32 %v1218, %v1582
  %s1601 = scalar_lea.vmem %s2, 384
  %v1602 = vld [vmem:[%s1601] sm:$0xff]
  %v1603 = vld [vmem:[%s1601 + $0x8] sm:$0xff]
  %v1604 = vld [vmem:[%s1601 + $0x10] sm:$0xff]
  %v1605 = vld [vmem:[%s1601 + $0x18] sm:$0xff]
  %v1606 = vld [vmem:[%s1601 + $0x20] sm:$0xff]
  %v1607 = vld [vmem:[%s1601 + $0x28] sm:$0xff]
  %v1608 = vld [vmem:[%s1601 + $0x30] sm:$0xff]
  %v1609 = vld [vmem:[%s1601 + $0x38] sm:$0xff]
  %v1610 = vld [vmem:[%s1601 + $0x40] sm:$0xff]
  %v1611 = vld [vmem:[%s1601 + $0x48] sm:$0xff]
  %v1612 = vld [vmem:[%s1601 + $0x50] sm:$0xff]
  %v1613 = vld [vmem:[%s1601 + $0x58] sm:$0xff]
  %v1614 = vld [vmem:[%s1601 + $0x60] sm:$0xff]
  %v1615 = vld [vmem:[%s1601 + $0x68] sm:$0xff]
  %v1616 = vld [vmem:[%s1601 + $0x70] sm:$0xff]
  %v1617 = vld [vmem:[%s1601 + $0x78] sm:$0xff]
  %v1634 = vunpack.c.l.b16 %v1602
  %v1635 = vunpack.c.h.b16 %v1602
  %v1636 = vunpack.c.l.b16 %v1603
  %v1637 = vunpack.c.h.b16 %v1603
  %v1638 = vunpack.c.l.b16 %v1604
  %v1639 = vunpack.c.h.b16 %v1604
  %v1640 = vunpack.c.l.b16 %v1605
  %v1641 = vunpack.c.h.b16 %v1605
  %v1642 = vunpack.c.l.b16 %v1606
  %v1643 = vunpack.c.h.b16 %v1606
  %v1644 = vunpack.c.l.b16 %v1607
  %v1645 = vunpack.c.h.b16 %v1607
  %v1646 = vunpack.c.l.b16 %v1608
  %v1647 = vunpack.c.h.b16 %v1608
  %v1648 = vunpack.c.l.b16 %v1609
  %v1649 = vunpack.c.h.b16 %v1609
  %v1650 = vunpack.c.l.b16 %v1610
  %v1651 = vunpack.c.h.b16 %v1610
  %v1652 = vunpack.c.l.b16 %v1611
  %v1653 = vunpack.c.h.b16 %v1611
  %v1654 = vunpack.c.l.b16 %v1612
  %v1655 = vunpack.c.h.b16 %v1612
  %v1656 = vunpack.c.l.b16 %v1613
  %v1657 = vunpack.c.h.b16 %v1613
  %v1658 = vunpack.c.l.b16 %v1614
  %v1659 = vunpack.c.h.b16 %v1614
  %v1660 = vunpack.c.l.b16 %v1615
  %v1661 = vunpack.c.h.b16 %v1615
  %v1662 = vunpack.c.l.b16 %v1616
  %v1663 = vunpack.c.h.b16 %v1616
  %v1664 = vunpack.c.l.b16 %v1617
  %v1665 = vunpack.c.h.b16 %v1617
  %v1666 = vpack.c.b16 %v1636, %v1634
  %v1667 = vpack.c.b16 %v1637, %v1635
  %v1668 = vpack.c.b16 %v1640, %v1638
  %v1669 = vpack.c.b16 %v1641, %v1639
  %v1670 = vpack.c.b16 %v1644, %v1642
  %v1671 = vpack.c.b16 %v1645, %v1643
  %v1672 = vpack.c.b16 %v1648, %v1646
  %v1673 = vpack.c.b16 %v1649, %v1647
  %v1674 = vpack.c.b16 %v1652, %v1650
  %v1675 = vpack.c.b16 %v1653, %v1651
  %v1676 = vpack.c.b16 %v1656, %v1654
  %v1677 = vpack.c.b16 %v1657, %v1655
  %v1678 = vpack.c.b16 %v1660, %v1658
  %v1679 = vpack.c.b16 %v1661, %v1659
  %v1680 = vpack.c.b16 %v1664, %v1662
  %v1681 = vpack.c.b16 %v1665, %v1663
  %1698 = vmatprep.subr.bf16.mxu0 0
  %1699 = vmatpush1.bf16.msra.mxu0 %v486
  %1700 = vmatprep.subr.bf16.mxu0 0
  %1701 = vmatpush1.bf16.msra.mxu0 %v485
  %1702 = vmatprep.subr.bf16.mxu0 0
  %1703 = vmatpush1.bf16.msra.mxu0 %v484
  %1704 = vmatprep.subr.bf16.mxu0 0
  %1705 = vmatpush1.bf16.msra.mxu0 %v483
  %1706 = vmatprep.subr.bf16.mxu0 0
  %1707 = vmatpush1.bf16.msra.mxu0 %v482
  %1708 = vmatprep.subr.bf16.mxu0 0
  %1709 = vmatpush1.bf16.msra.mxu0 %v481
  %1710 = vmatprep.subr.bf16.mxu0 0
  %1711 = vmatpush1.bf16.msra.mxu0 %v480
  %1712 = vmatprep.subr.bf16.mxu0 0
  %1713 = vmatpush1.bf16.msra.mxu0 %v479
  %1714 = vmatprep.subr.bf16.mxu0 0
  %1715 = vmatpush2.bf16.msra.mxu0 %v494
  %1716 = vmatprep.subr.bf16.mxu0 0
  %1717 = vmatpush2.bf16.msra.mxu0 %v493
  %1718 = vmatprep.subr.bf16.mxu0 0
  %1719 = vmatpush2.bf16.msra.mxu0 %v492
  %1720 = vmatprep.subr.bf16.mxu0 0
  %1721 = vmatpush2.bf16.msra.mxu0 %v491
  %1722 = vmatprep.subr.bf16.mxu0 0
  %1723 = vmatpush2.bf16.msra.mxu0 %v490
  %1724 = vmatprep.subr.bf16.mxu0 0
  %1725 = vmatpush2.bf16.msra.mxu0 %v489
  %1726 = vmatprep.subr.bf16.mxu0 0
  %1727 = vmatpush2.bf16.msra.mxu0 %v488
  %1728 = vmatprep.subr.bf16.mxu0 0
  %1729 = vmatpush2.bf16.msra.mxu0 %v487
  %1730 = vmatprep.mubr.bf16.mxu0 %v1667
  %1731 = vmatmul.mubr.bf16.gmra.mxu0 %v1666
  %v1732 = vpop.f32.mrf.mxu0
  %v1733 = vadd.f32 0.0, %v1732
  %v1734 = vpop.f32.mrf.mxu0
  %v1735 = vpop.f32.mrf.mxu0
  %v1736 = vadd.f32 0.0, %v1735
  %v1737 = vpop.f32.mrf.mxu0
  %1738 = vmatprep.mubr.bf16.mxu0 %v1669
  %1739 = vmatmul.mubr.bf16.gmra.mxu0 %v1668
  %v1740 = vpop.f32.mrf.mxu0
  %v1741 = vadd.f32 0.0, %v1740
  %v1742 = vpop.f32.mrf.mxu0
  %v1743 = vpop.f32.mrf.mxu0
  %v1744 = vadd.f32 0.0, %v1743
  %v1745 = vpop.f32.mrf.mxu0
  %1746 = vmatprep.mubr.bf16.mxu0 %v1671
  %1747 = vmatmul.mubr.bf16.gmra.mxu0 %v1670
  %v1748 = vpop.f32.mrf.mxu0
  %v1749 = vadd.f32 0.0, %v1748
  %v1750 = vpop.f32.mrf.mxu0
  %v1751 = vpop.f32.mrf.mxu0
  %v1752 = vadd.f32 0.0, %v1751
  %v1753 = vpop.f32.mrf.mxu0
  %1754 = vmatprep.mubr.bf16.mxu0 %v1673
  %1755 = vmatmul.mubr.bf16.gmra.mxu0 %v1672
  %v1756 = vpop.f32.mrf.mxu0
  %v1757 = vadd.f32 0.0, %v1756
  %v1758 = vpop.f32.mrf.mxu0
  %v1759 = vpop.f32.mrf.mxu0
  %v1760 = vadd.f32 0.0, %v1759
  %v1761 = vpop.f32.mrf.mxu0
  %1762 = vmatprep.mubr.bf16.mxu0 %v1675
  %1763 = vmatmul.mubr.bf16.gmra.mxu0 %v1674
  %v1764 = vpop.f32.mrf.mxu0
  %v1765 = vadd.f32 0.0, %v1764
  %v1766 = vpop.f32.mrf.mxu0
  %v1767 = vpop.f32.mrf.mxu0
  %v1768 = vadd.f32 0.0, %v1767
  %v1769 = vpop.f32.mrf.mxu0
  %1770 = vmatprep.mubr.bf16.mxu0 %v1677
  %1771 = vmatmul.mubr.bf16.gmra.mxu0 %v1676
  %v1772 = vpop.f32.mrf.mxu0
  %v1773 = vadd.f32 0.0, %v1772
  %v1774 = vpop.f32.mrf.mxu0
  %v1775 = vpop.f32.mrf.mxu0
  %v1776 = vadd.f32 0.0, %v1775
  %v1777 = vpop.f32.mrf.mxu0
  %1778 = vmatprep.mubr.bf16.mxu0 %v1679
  %1779 = vmatmul.mubr.bf16.gmra.mxu0 %v1678
  %v1780 = vpop.f32.mrf.mxu0
  %v1781 = vadd.f32 0.0, %v1780
  %v1782 = vpop.f32.mrf.mxu0
  %v1783 = vpop.f32.mrf.mxu0
  %v1784 = vadd.f32 0.0, %v1783
  %v1785 = vpop.f32.mrf.mxu0
  %1786 = vmatprep.mubr.bf16.mxu0 %v1681
  %1787 = vmatmul.mubr.bf16.gmra.mxu0 %v1680
  %v1788 = vpop.f32.mrf.mxu0
  %v1789 = vadd.f32 0.0, %v1788
  %v1790 = vpop.f32.mrf.mxu0
  %v1791 = vpop.f32.mrf.mxu0
  %v1792 = vadd.f32 0.0, %v1791
  %v1793 = vpop.f32.mrf.mxu0
  %1794 = vdwg.mxu0
  %v1795 = vpack.c.bf16 %v1736, %v1733
  %v1796 = vpack.c.bf16 %v1744, %v1741
  %v1797 = vpack.c.bf16 %v1752, %v1749
  %v1798 = vpack.c.bf16 %v1760, %v1757
  %v1799 = vpack.c.bf16 %v1768, %v1765
  %v1800 = vpack.c.bf16 %v1776, %v1773
  %v1801 = vpack.c.bf16 %v1784, %v1781
  %v1802 = vpack.c.bf16 %v1792, %v1789
  %s1803 = scalar_lea.vmem %s3, 192
  %v1804 = vld [vmem:[%s1803] sm:$0xf]
  %v1805 = vld [vmem:[%s1803 + $0x4] sm:$0xf]
  %v1806 = vld [vmem:[%s1803 + $0x8] sm:$0xf]
  %v1807 = vld [vmem:[%s1803 + $0xc] sm:$0xf]
  %v1808 = vld [vmem:[%s1803 + $0x10] sm:$0xf]
  %v1809 = vld [vmem:[%s1803 + $0x14] sm:$0xf]
  %v1810 = vld [vmem:[%s1803 + $0x18] sm:$0xf]
  %v1811 = vld [vmem:[%s1803 + $0x1c] sm:$0xf]
  %v1812 = vld [vmem:[%s1803 + $0x20] sm:$0xf]
  %v1813 = vld [vmem:[%s1803 + $0x24] sm:$0xf]
  %v1814 = vld [vmem:[%s1803 + $0x28] sm:$0xf]
  %v1815 = vld [vmem:[%s1803 + $0x2c] sm:$0xf]
  %v1816 = vld [vmem:[%s1803 + $0x30] sm:$0xf]
  %v1817 = vld [vmem:[%s1803 + $0x34] sm:$0xf]
  %v1818 = vld [vmem:[%s1803 + $0x38] sm:$0xf]
  %v1819 = vld [vmem:[%s1803 + $0x3c] sm:$0xf]
  %v1836 = vunpack.c.l.b16 %v1804
  %v1837 = vunpack.c.l.b16 %v1805
  %v1838 = vunpack.c.l.b16 %v1806
  %v1839 = vunpack.c.l.b16 %v1807
  %v1840 = vunpack.c.l.b16 %v1808
  %v1841 = vunpack.c.l.b16 %v1809
  %v1842 = vunpack.c.l.b16 %v1810
  %v1843 = vunpack.c.l.b16 %v1811
  %v1844 = vunpack.c.l.b16 %v1812
  %v1845 = vunpack.c.l.b16 %v1813
  %v1846 = vunpack.c.l.b16 %v1814
  %v1847 = vunpack.c.l.b16 %v1815
  %v1848 = vunpack.c.l.b16 %v1816
  %v1849 = vunpack.c.l.b16 %v1817
  %v1850 = vunpack.c.l.b16 %v1818
  %v1851 = vunpack.c.l.b16 %v1819
  %v1852 = vpack.c.b16 %v1837, %v1836
  %v1853 = vpack.c.b16 %v1839, %v1838
  %v1854 = vpack.c.b16 %v1841, %v1840
  %v1855 = vpack.c.b16 %v1843, %v1842
  %v1856 = vpack.c.b16 %v1845, %v1844
  %v1857 = vpack.c.b16 %v1847, %v1846
  %v1858 = vpack.c.b16 %v1849, %v1848
  %v1859 = vpack.c.b16 %v1851, %v1850
  %1868 = vmatprep.subr.bf16.mxu0 0
  %1869 = vmatpush1.bf16.msra.mxu0 %v1859
  %1870 = vmatprep.subr.bf16.mxu0 0
  %1871 = vmatpush1.bf16.msra.mxu0 %v1858
  %1872 = vmatprep.subr.bf16.mxu0 0
  %1873 = vmatpush1.bf16.msra.mxu0 %v1857
  %1874 = vmatprep.subr.bf16.mxu0 0
  %1875 = vmatpush1.bf16.msra.mxu0 %v1856
  %1876 = vmatprep.subr.bf16.mxu0 0
  %1877 = vmatpush1.bf16.msra.mxu0 %v1855
  %1878 = vmatprep.subr.bf16.mxu0 0
  %1879 = vmatpush1.bf16.msra.mxu0 %v1854
  %1880 = vmatprep.subr.bf16.mxu0 0
  %1881 = vmatpush1.bf16.msra.mxu0 %v1853
  %1882 = vmatprep.subr.bf16.mxu0 0
  %1883 = vmatpush1.bf16.msra.mxu0 %v1852
  %1884 = vmatprep.subr.bf16.mxu0 0
  %1885 = vmatpush2.bf16.msra.mxu0 0
  %1886 = vmatprep.subr.bf16.mxu0 0
  %1887 = vmatpush2.bf16.msra.mxu0 0
  %1888 = vmatprep.subr.bf16.mxu0 0
  %1889 = vmatpush2.bf16.msra.mxu0 0
  %1890 = vmatprep.subr.bf16.mxu0 0
  %1891 = vmatpush2.bf16.msra.mxu0 0
  %1892 = vmatprep.subr.bf16.mxu0 0
  %1893 = vmatpush2.bf16.msra.mxu0 0
  %1894 = vmatprep.subr.bf16.mxu0 0
  %1895 = vmatpush2.bf16.msra.mxu0 0
  %1896 = vmatprep.subr.bf16.mxu0 0
  %1897 = vmatpush2.bf16.msra.mxu0 0
  %1898 = vmatprep.subr.bf16.mxu0 0
  %1899 = vmatpush2.bf16.msra.mxu0 0
  %1900 = vmatprep.mubr.bf16.mxu0 0
  %1901 = vmatmul.mubr.bf16.gmra.mxu0 %v1795
  %v1902 = vpop.f32.mrf.mxu0
  %v1903 = vadd.f32 0.0, %v1902
  %v1904 = vpop.f32.mrf.mxu0
  %v1905 = vpop.f32.mrf.mxu0
  %v1906 = vadd.f32 0.0, %v1905
  %v1907 = vpop.f32.mrf.mxu0
  %1908 = vmatprep.mubr.bf16.mxu0 0
  %1909 = vmatmul.mubr.bf16.gmra.mxu0 %v1796
  %v1910 = vpop.f32.mrf.mxu0
  %v1911 = vadd.f32 0.0, %v1910
  %v1912 = vpop.f32.mrf.mxu0
  %v1913 = vpop.f32.mrf.mxu0
  %v1914 = vadd.f32 0.0, %v1913
  %v1915 = vpop.f32.mrf.mxu0
  %1916 = vmatprep.mubr.bf16.mxu0 0
  %1917 = vmatmul.mubr.bf16.gmra.mxu0 %v1797
  %v1918 = vpop.f32.mrf.mxu0
  %v1919 = vadd.f32 0.0, %v1918
  %v1920 = vpop.f32.mrf.mxu0
  %v1921 = vpop.f32.mrf.mxu0
  %v1922 = vadd.f32 0.0, %v1921
  %v1923 = vpop.f32.mrf.mxu0
  %1924 = vmatprep.mubr.bf16.mxu0 0
  %1925 = vmatmul.mubr.bf16.gmra.mxu0 %v1798
  %v1926 = vpop.f32.mrf.mxu0
  %v1927 = vadd.f32 0.0, %v1926
  %v1928 = vpop.f32.mrf.mxu0
  %v1929 = vpop.f32.mrf.mxu0
  %v1930 = vadd.f32 0.0, %v1929
  %v1931 = vpop.f32.mrf.mxu0
  %1932 = vmatprep.mubr.bf16.mxu0 0
  %1933 = vmatmul.mubr.bf16.gmra.mxu0 %v1799
  %v1934 = vpop.f32.mrf.mxu0
  %v1935 = vadd.f32 0.0, %v1934
  %v1936 = vpop.f32.mrf.mxu0
  %v1937 = vpop.f32.mrf.mxu0
  %v1938 = vadd.f32 0.0, %v1937
  %v1939 = vpop.f32.mrf.mxu0
  %1940 = vmatprep.mubr.bf16.mxu0 0
  %1941 = vmatmul.mubr.bf16.gmra.mxu0 %v1800
  %v1942 = vpop.f32.mrf.mxu0
  %v1943 = vadd.f32 0.0, %v1942
  %v1944 = vpop.f32.mrf.mxu0
  %v1945 = vpop.f32.mrf.mxu0
  %v1946 = vadd.f32 0.0, %v1945
  %v1947 = vpop.f32.mrf.mxu0
  %1948 = vmatprep.mubr.bf16.mxu0 0
  %1949 = vmatmul.mubr.bf16.gmra.mxu0 %v1801
  %v1950 = vpop.f32.mrf.mxu0
  %v1951 = vadd.f32 0.0, %v1950
  %v1952 = vpop.f32.mrf.mxu0
  %v1953 = vpop.f32.mrf.mxu0
  %v1954 = vadd.f32 0.0, %v1953
  %v1955 = vpop.f32.mrf.mxu0
  %1956 = vmatprep.mubr.bf16.mxu0 0
  %1957 = vmatmul.mubr.bf16.gmra.mxu0 %v1802
  %v1958 = vpop.f32.mrf.mxu0
  %v1959 = vadd.f32 0.0, %v1958
  %v1960 = vpop.f32.mrf.mxu0
  %v1961 = vpop.f32.mrf.mxu0
  %v1962 = vadd.f32 0.0, %v1961
  %v1963 = vpop.f32.mrf.mxu0
  %1964 = vdwg.mxu0
  %v1965 = vadd.f32 %v1585, %v1903
  %v1966 = vadd.f32 %v1586, %v1906
  %v1967 = vadd.f32 %v1587, %v1911
  %v1968 = vadd.f32 %v1588, %v1914
  %v1969 = vadd.f32 %v1589, %v1919
  %v1970 = vadd.f32 %v1590, %v1922
  %v1971 = vadd.f32 %v1591, %v1927
  %v1972 = vadd.f32 %v1592, %v1930
  %v1973 = vadd.f32 %v1593, %v1935
  %v1974 = vadd.f32 %v1594, %v1938
  %v1975 = vadd.f32 %v1595, %v1943
  %v1976 = vadd.f32 %v1596, %v1946
  %v1977 = vadd.f32 %v1597, %v1951
  %v1978 = vadd.f32 %v1598, %v1954
  %v1979 = vadd.f32 %v1599, %v1959
  %v1980 = vadd.f32 %v1600, %v1962
  %s1981 = scalar_lea.vmem %s2, 512
  %v1982 = vld [vmem:[%s1981] sm:$0xff]
  %v1983 = vld [vmem:[%s1981 + $0x8] sm:$0xff]
  %v1984 = vld [vmem:[%s1981 + $0x10] sm:$0xff]
  %v1985 = vld [vmem:[%s1981 + $0x18] sm:$0xff]
  %v1986 = vld [vmem:[%s1981 + $0x20] sm:$0xff]
  %v1987 = vld [vmem:[%s1981 + $0x28] sm:$0xff]
  %v1988 = vld [vmem:[%s1981 + $0x30] sm:$0xff]
  %v1989 = vld [vmem:[%s1981 + $0x38] sm:$0xff]
  %v1990 = vld [vmem:[%s1981 + $0x40] sm:$0xff]
  %v1991 = vld [vmem:[%s1981 + $0x48] sm:$0xff]
  %v1992 = vld [vmem:[%s1981 + $0x50] sm:$0xff]
  %v1993 = vld [vmem:[%s1981 + $0x58] sm:$0xff]
  %v1994 = vld [vmem:[%s1981 + $0x60] sm:$0xff]
  %v1995 = vld [vmem:[%s1981 + $0x68] sm:$0xff]
  %v1996 = vld [vmem:[%s1981 + $0x70] sm:$0xff]
  %v1997 = vld [vmem:[%s1981 + $0x78] sm:$0xff]
  %v2014 = vunpack.c.l.b16 %v1982
  %v2015 = vunpack.c.h.b16 %v1982
  %v2016 = vunpack.c.l.b16 %v1983
  %v2017 = vunpack.c.h.b16 %v1983
  %v2018 = vunpack.c.l.b16 %v1984
  %v2019 = vunpack.c.h.b16 %v1984
  %v2020 = vunpack.c.l.b16 %v1985
  %v2021 = vunpack.c.h.b16 %v1985
  %v2022 = vunpack.c.l.b16 %v1986
  %v2023 = vunpack.c.h.b16 %v1986
  %v2024 = vunpack.c.l.b16 %v1987
  %v2025 = vunpack.c.h.b16 %v1987
  %v2026 = vunpack.c.l.b16 %v1988
  %v2027 = vunpack.c.h.b16 %v1988
  %v2028 = vunpack.c.l.b16 %v1989
  %v2029 = vunpack.c.h.b16 %v1989
  %v2030 = vunpack.c.l.b16 %v1990
  %v2031 = vunpack.c.h.b16 %v1990
  %v2032 = vunpack.c.l.b16 %v1991
  %v2033 = vunpack.c.h.b16 %v1991
  %v2034 = vunpack.c.l.b16 %v1992
  %v2035 = vunpack.c.h.b16 %v1992
  %v2036 = vunpack.c.l.b16 %v1993
  %v2037 = vunpack.c.h.b16 %v1993
  %v2038 = vunpack.c.l.b16 %v1994
  %v2039 = vunpack.c.h.b16 %v1994
  %v2040 = vunpack.c.l.b16 %v1995
  %v2041 = vunpack.c.h.b16 %v1995
  %v2042 = vunpack.c.l.b16 %v1996
  %v2043 = vunpack.c.h.b16 %v1996
  %v2044 = vunpack.c.l.b16 %v1997
  %v2045 = vunpack.c.h.b16 %v1997
  %v2046 = vpack.c.b16 %v2016, %v2014
  %v2047 = vpack.c.b16 %v2017, %v2015
  %v2048 = vpack.c.b16 %v2020, %v2018
  %v2049 = vpack.c.b16 %v2021, %v2019
  %v2050 = vpack.c.b16 %v2024, %v2022
  %v2051 = vpack.c.b16 %v2025, %v2023
  %v2052 = vpack.c.b16 %v2028, %v2026
  %v2053 = vpack.c.b16 %v2029, %v2027
  %v2054 = vpack.c.b16 %v2032, %v2030
  %v2055 = vpack.c.b16 %v2033, %v2031
  %v2056 = vpack.c.b16 %v2036, %v2034
  %v2057 = vpack.c.b16 %v2037, %v2035
  %v2058 = vpack.c.b16 %v2040, %v2038
  %v2059 = vpack.c.b16 %v2041, %v2039
  %v2060 = vpack.c.b16 %v2044, %v2042
  %v2061 = vpack.c.b16 %v2045, %v2043
  %2078 = vmatprep.subr.bf16.mxu0 0
  %2079 = vmatpush1.bf16.msra.mxu0 %v486
  %2080 = vmatprep.subr.bf16.mxu0 0
  %2081 = vmatpush1.bf16.msra.mxu0 %v485
  %2082 = vmatprep.subr.bf16.mxu0 0
  %2083 = vmatpush1.bf16.msra.mxu0 %v484
  %2084 = vmatprep.subr.bf16.mxu0 0
  %2085 = vmatpush1.bf16.msra.mxu0 %v483
  %2086 = vmatprep.subr.bf16.mxu0 0
  %2087 = vmatpush1.bf16.msra.mxu0 %v482
  %2088 = vmatprep.subr.bf16.mxu0 0
  %2089 = vmatpush1.bf16.msra.mxu0 %v481
  %2090 = vmatprep.subr.bf16.mxu0 0
  %2091 = vmatpush1.bf16.msra.mxu0 %v480
  %2092 = vmatprep.subr.bf16.mxu0 0
  %2093 = vmatpush1.bf16.msra.mxu0 %v479
  %2094 = vmatprep.subr.bf16.mxu0 0
  %2095 = vmatpush2.bf16.msra.mxu0 %v494
  %2096 = vmatprep.subr.bf16.mxu0 0
  %2097 = vmatpush2.bf16.msra.mxu0 %v493
  %2098 = vmatprep.subr.bf16.mxu0 0
  %2099 = vmatpush2.bf16.msra.mxu0 %v492
  %2100 = vmatprep.subr.bf16.mxu0 0
  %2101 = vmatpush2.bf16.msra.mxu0 %v491
  %2102 = vmatprep.subr.bf16.mxu0 0
  %2103 = vmatpush2.bf16.msra.mxu0 %v490
  %2104 = vmatprep.subr.bf16.mxu0 0
  %2105 = vmatpush2.bf16.msra.mxu0 %v489
  %2106 = vmatprep.subr.bf16.mxu0 0
  %2107 = vmatpush2.bf16.msra.mxu0 %v488
  %2108 = vmatprep.subr.bf16.mxu0 0
  %2109 = vmatpush2.bf16.msra.mxu0 %v487
  %2110 = vmatprep.mubr.bf16.mxu0 %v2047
  %2111 = vmatmul.mubr.bf16.gmra.mxu0 %v2046
  %v2112 = vpop.f32.mrf.mxu0
  %v2113 = vadd.f32 0.0, %v2112
  %v2114 = vpop.f32.mrf.mxu0
  %v2115 = vpop.f32.mrf.mxu0
  %v2116 = vadd.f32 0.0, %v2115
  %v2117 = vpop.f32.mrf.mxu0
  %2118 = vmatprep.mubr.bf16.mxu0 %v2049
  %2119 = vmatmul.mubr.bf16.gmra.mxu0 %v2048
  %v2120 = vpop.f32.mrf.mxu0
  %v2121 = vadd.f32 0.0, %v2120
  %v2122 = vpop.f32.mrf.mxu0
  %v2123 = vpop.f32.mrf.mxu0
  %v2124 = vadd.f32 0.0, %v2123
  %v2125 = vpop.f32.mrf.mxu0
  %2126 = vmatprep.mubr.bf16.mxu0 %v2051
  %2127 = vmatmul.mubr.bf16.gmra.mxu0 %v2050
  %v2128 = vpop.f32.mrf.mxu0
  %v2129 = vadd.f32 0.0, %v2128
  %v2130 = vpop.f32.mrf.mxu0
  %v2131 = vpop.f32.mrf.mxu0
  %v2132 = vadd.f32 0.0, %v2131
  %v2133 = vpop.f32.mrf.mxu0
  %2134 = vmatprep.mubr.bf16.mxu0 %v2053
  %2135 = vmatmul.mubr.bf16.gmra.mxu0 %v2052
  %v2136 = vpop.f32.mrf.mxu0
  %v2137 = vadd.f32 0.0, %v2136
  %v2138 = vpop.f32.mrf.mxu0
  %v2139 = vpop.f32.mrf.mxu0
  %v2140 = vadd.f32 0.0, %v2139
  %v2141 = vpop.f32.mrf.mxu0
  %2142 = vmatprep.mubr.bf16.mxu0 %v2055
  %2143 = vmatmul.mubr.bf16.gmra.mxu0 %v2054
  %v2144 = vpop.f32.mrf.mxu0
  %v2145 = vadd.f32 0.0, %v2144
  %v2146 = vpop.f32.mrf.mxu0
  %v2147 = vpop.f32.mrf.mxu0
  %v2148 = vadd.f32 0.0, %v2147
  %v2149 = vpop.f32.mrf.mxu0
  %2150 = vmatprep.mubr.bf16.mxu0 %v2057
  %2151 = vmatmul.mubr.bf16.gmra.mxu0 %v2056
  %v2152 = vpop.f32.mrf.mxu0
  %v2153 = vadd.f32 0.0, %v2152
  %v2154 = vpop.f32.mrf.mxu0
  %v2155 = vpop.f32.mrf.mxu0
  %v2156 = vadd.f32 0.0, %v2155
  %v2157 = vpop.f32.mrf.mxu0
  %2158 = vmatprep.mubr.bf16.mxu0 %v2059
  %2159 = vmatmul.mubr.bf16.gmra.mxu0 %v2058
  %v2160 = vpop.f32.mrf.mxu0
  %v2161 = vadd.f32 0.0, %v2160
  %v2162 = vpop.f32.mrf.mxu0
  %v2163 = vpop.f32.mrf.mxu0
  %v2164 = vadd.f32 0.0, %v2163
  %v2165 = vpop.f32.mrf.mxu0
  %2166 = vmatprep.mubr.bf16.mxu0 %v2061
  %2167 = vmatmul.mubr.bf16.gmra.mxu0 %v2060
  %v2168 = vpop.f32.mrf.mxu0
  %v2169 = vadd.f32 0.0, %v2168
  %v2170 = vpop.f32.mrf.mxu0
  %v2171 = vpop.f32.mrf.mxu0
  %v2172 = vadd.f32 0.0, %v2171
  %v2173 = vpop.f32.mrf.mxu0
  %2174 = vdwg.mxu0
  %v2175 = vpack.c.bf16 %v2116, %v2113
  %v2176 = vpack.c.bf16 %v2124, %v2121
  %v2177 = vpack.c.bf16 %v2132, %v2129
  %v2178 = vpack.c.bf16 %v2140, %v2137
  %v2179 = vpack.c.bf16 %v2148, %v2145
  %v2180 = vpack.c.bf16 %v2156, %v2153
  %v2181 = vpack.c.bf16 %v2164, %v2161
  %v2182 = vpack.c.bf16 %v2172, %v2169
  %s2183 = scalar_lea.vmem %s3, 256
  %v2184 = vld [vmem:[%s2183] sm:$0xf]
  %v2185 = vld [vmem:[%s2183 + $0x4] sm:$0xf]
  %v2186 = vld [vmem:[%s2183 + $0x8] sm:$0xf]
  %v2187 = vld [vmem:[%s2183 + $0xc] sm:$0xf]
  %v2188 = vld [vmem:[%s2183 + $0x10] sm:$0xf]
  %v2189 = vld [vmem:[%s2183 + $0x14] sm:$0xf]
  %v2190 = vld [vmem:[%s2183 + $0x18] sm:$0xf]
  %v2191 = vld [vmem:[%s2183 + $0x1c] sm:$0xf]
  %v2192 = vld [vmem:[%s2183 + $0x20] sm:$0xf]
  %v2193 = vld [vmem:[%s2183 + $0x24] sm:$0xf]
  %v2194 = vld [vmem:[%s2183 + $0x28] sm:$0xf]
  %v2195 = vld [vmem:[%s2183 + $0x2c] sm:$0xf]
  %v2196 = vld [vmem:[%s2183 + $0x30] sm:$0xf]
  %v2197 = vld [vmem:[%s2183 + $0x34] sm:$0xf]
  %v2198 = vld [vmem:[%s2183 + $0x38] sm:$0xf]
  %v2199 = vld [vmem:[%s2183 + $0x3c] sm:$0xf]
  %v2216 = vunpack.c.l.b16 %v2184
  %v2217 = vunpack.c.l.b16 %v2185
  %v2218 = vunpack.c.l.b16 %v2186
  %v2219 = vunpack.c.l.b16 %v2187
  %v2220 = vunpack.c.l.b16 %v2188
  %v2221 = vunpack.c.l.b16 %v2189
  %v2222 = vunpack.c.l.b16 %v2190
  %v2223 = vunpack.c.l.b16 %v2191
  %v2224 = vunpack.c.l.b16 %v2192
  %v2225 = vunpack.c.l.b16 %v2193
  %v2226 = vunpack.c.l.b16 %v2194
  %v2227 = vunpack.c.l.b16 %v2195
  %v2228 = vunpack.c.l.b16 %v2196
  %v2229 = vunpack.c.l.b16 %v2197
  %v2230 = vunpack.c.l.b16 %v2198
  %v2231 = vunpack.c.l.b16 %v2199
  %v2232 = vpack.c.b16 %v2217, %v2216
  %v2233 = vpack.c.b16 %v2219, %v2218
  %v2234 = vpack.c.b16 %v2221, %v2220
  %v2235 = vpack.c.b16 %v2223, %v2222
  %v2236 = vpack.c.b16 %v2225, %v2224
  %v2237 = vpack.c.b16 %v2227, %v2226
  %v2238 = vpack.c.b16 %v2229, %v2228
  %v2239 = vpack.c.b16 %v2231, %v2230
  %2248 = vmatprep.subr.bf16.mxu0 0
  %2249 = vmatpush1.bf16.msra.mxu0 %v2239
  %2250 = vmatprep.subr.bf16.mxu0 0
  %2251 = vmatpush1.bf16.msra.mxu0 %v2238
  %2252 = vmatprep.subr.bf16.mxu0 0
  %2253 = vmatpush1.bf16.msra.mxu0 %v2237
  %2254 = vmatprep.subr.bf16.mxu0 0
  %2255 = vmatpush1.bf16.msra.mxu0 %v2236
  %2256 = vmatprep.subr.bf16.mxu0 0
  %2257 = vmatpush1.bf16.msra.mxu0 %v2235
  %2258 = vmatprep.subr.bf16.mxu0 0
  %2259 = vmatpush1.bf16.msra.mxu0 %v2234
  %2260 = vmatprep.subr.bf16.mxu0 0
  %2261 = vmatpush1.bf16.msra.mxu0 %v2233
  %2262 = vmatprep.subr.bf16.mxu0 0
  %2263 = vmatpush1.bf16.msra.mxu0 %v2232
  %2264 = vmatprep.subr.bf16.mxu0 0
  %2265 = vmatpush2.bf16.msra.mxu0 0
  %2266 = vmatprep.subr.bf16.mxu0 0
  %2267 = vmatpush2.bf16.msra.mxu0 0
  %2268 = vmatprep.subr.bf16.mxu0 0
  %2269 = vmatpush2.bf16.msra.mxu0 0
  %2270 = vmatprep.subr.bf16.mxu0 0
  %2271 = vmatpush2.bf16.msra.mxu0 0
  %2272 = vmatprep.subr.bf16.mxu0 0
  %2273 = vmatpush2.bf16.msra.mxu0 0
  %2274 = vmatprep.subr.bf16.mxu0 0
  %2275 = vmatpush2.bf16.msra.mxu0 0
  %2276 = vmatprep.subr.bf16.mxu0 0
  %2277 = vmatpush2.bf16.msra.mxu0 0
  %2278 = vmatprep.subr.bf16.mxu0 0
  %2279 = vmatpush2.bf16.msra.mxu0 0
  %2280 = vmatprep.mubr.bf16.mxu0 0
  %2281 = vmatmul.mubr.bf16.gmra.mxu0 %v2175
  %v2282 = vpop.f32.mrf.mxu0
  %v2283 = vadd.f32 0.0, %v2282
  %v2284 = vpop.f32.mrf.mxu0
  %v2285 = vpop.f32.mrf.mxu0
  %v2286 = vadd.f32 0.0, %v2285
  %v2287 = vpop.f32.mrf.mxu0
  %2288 = vmatprep.mubr.bf16.mxu0 0
  %2289 = vmatmul.mubr.bf16.gmra.mxu0 %v2176
  %v2290 = vpop.f32.mrf.mxu0
  %v2291 = vadd.f32 0.0, %v2290
  %v2292 = vpop.f32.mrf.mxu0
  %v2293 = vpop.f32.mrf.mxu0
  %v2294 = vadd.f32 0.0, %v2293
  %v2295 = vpop.f32.mrf.mxu0
  %2296 = vmatprep.mubr.bf16.mxu0 0
  %2297 = vmatmul.mubr.bf16.gmra.mxu0 %v2177
  %v2298 = vpop.f32.mrf.mxu0
  %v2299 = vadd.f32 0.0, %v2298
  %v2300 = vpop.f32.mrf.mxu0
  %v2301 = vpop.f32.mrf.mxu0
  %v2302 = vadd.f32 0.0, %v2301
  %v2303 = vpop.f32.mrf.mxu0
  %2304 = vmatprep.mubr.bf16.mxu0 0
  %2305 = vmatmul.mubr.bf16.gmra.mxu0 %v2178
  %v2306 = vpop.f32.mrf.mxu0
  %v2307 = vadd.f32 0.0, %v2306
  %v2308 = vpop.f32.mrf.mxu0
  %v2309 = vpop.f32.mrf.mxu0
  %v2310 = vadd.f32 0.0, %v2309
  %v2311 = vpop.f32.mrf.mxu0
  %2312 = vmatprep.mubr.bf16.mxu0 0
  %2313 = vmatmul.mubr.bf16.gmra.mxu0 %v2179
  %v2314 = vpop.f32.mrf.mxu0
  %v2315 = vadd.f32 0.0, %v2314
  %v2316 = vpop.f32.mrf.mxu0
  %v2317 = vpop.f32.mrf.mxu0
  %v2318 = vadd.f32 0.0, %v2317
  %v2319 = vpop.f32.mrf.mxu0
  %2320 = vmatprep.mubr.bf16.mxu0 0
  %2321 = vmatmul.mubr.bf16.gmra.mxu0 %v2180
  %v2322 = vpop.f32.mrf.mxu0
  %v2323 = vadd.f32 0.0, %v2322
  %v2324 = vpop.f32.mrf.mxu0
  %v2325 = vpop.f32.mrf.mxu0
  %v2326 = vadd.f32 0.0, %v2325
  %v2327 = vpop.f32.mrf.mxu0
  %2328 = vmatprep.mubr.bf16.mxu0 0
  %2329 = vmatmul.mubr.bf16.gmra.mxu0 %v2181
  %v2330 = vpop.f32.mrf.mxu0
  %v2331 = vadd.f32 0.0, %v2330
  %v2332 = vpop.f32.mrf.mxu0
  %v2333 = vpop.f32.mrf.mxu0
  %v2334 = vadd.f32 0.0, %v2333
  %v2335 = vpop.f32.mrf.mxu0
  %2336 = vmatprep.mubr.bf16.mxu0 0
  %2337 = vmatmul.mubr.bf16.gmra.mxu0 %v2182
  %v2338 = vpop.f32.mrf.mxu0
  %v2339 = vadd.f32 0.0, %v2338
  %v2340 = vpop.f32.mrf.mxu0
  %v2341 = vpop.f32.mrf.mxu0
  %v2342 = vadd.f32 0.0, %v2341
  %v2343 = vpop.f32.mrf.mxu0
  %2344 = vdwg.mxu0
  %v2345 = vadd.f32 %v1965, %v2283
  %v2346 = vadd.f32 %v1966, %v2286
  %v2347 = vadd.f32 %v1967, %v2291
  %v2348 = vadd.f32 %v1968, %v2294
  %v2349 = vadd.f32 %v1969, %v2299
  %v2350 = vadd.f32 %v1970, %v2302
  %v2351 = vadd.f32 %v1971, %v2307
  %v2352 = vadd.f32 %v1972, %v2310
  %v2353 = vadd.f32 %v1973, %v2315
  %v2354 = vadd.f32 %v1974, %v2318
  %v2355 = vadd.f32 %v1975, %v2323
  %v2356 = vadd.f32 %v1976, %v2326
  %v2357 = vadd.f32 %v1977, %v2331
  %v2358 = vadd.f32 %v1978, %v2334
  %v2359 = vadd.f32 %v1979, %v2339
  %v2360 = vadd.f32 %v1980, %v2342
  %s2361 = scalar_lea.vmem %s2, 640
  %v2362 = vld [vmem:[%s2361] sm:$0xff]
  %v2363 = vld [vmem:[%s2361 + $0x8] sm:$0xff]
  %v2364 = vld [vmem:[%s2361 + $0x10] sm:$0xff]
  %v2365 = vld [vmem:[%s2361 + $0x18] sm:$0xff]
  %v2366 = vld [vmem:[%s2361 + $0x20] sm:$0xff]
  %v2367 = vld [vmem:[%s2361 + $0x28] sm:$0xff]
  %v2368 = vld [vmem:[%s2361 + $0x30] sm:$0xff]
  %v2369 = vld [vmem:[%s2361 + $0x38] sm:$0xff]
  %v2370 = vld [vmem:[%s2361 + $0x40] sm:$0xff]
  %v2371 = vld [vmem:[%s2361 + $0x48] sm:$0xff]
  %v2372 = vld [vmem:[%s2361 + $0x50] sm:$0xff]
  %v2373 = vld [vmem:[%s2361 + $0x58] sm:$0xff]
  %v2374 = vld [vmem:[%s2361 + $0x60] sm:$0xff]
  %v2375 = vld [vmem:[%s2361 + $0x68] sm:$0xff]
  %v2376 = vld [vmem:[%s2361 + $0x70] sm:$0xff]
  %v2377 = vld [vmem:[%s2361 + $0x78] sm:$0xff]
  %v2394 = vunpack.c.l.b16 %v2362
  %v2395 = vunpack.c.h.b16 %v2362
  %v2396 = vunpack.c.l.b16 %v2363
  %v2397 = vunpack.c.h.b16 %v2363
  %v2398 = vunpack.c.l.b16 %v2364
  %v2399 = vunpack.c.h.b16 %v2364
  %v2400 = vunpack.c.l.b16 %v2365
  %v2401 = vunpack.c.h.b16 %v2365
  %v2402 = vunpack.c.l.b16 %v2366
  %v2403 = vunpack.c.h.b16 %v2366
  %v2404 = vunpack.c.l.b16 %v2367
  %v2405 = vunpack.c.h.b16 %v2367
  %v2406 = vunpack.c.l.b16 %v2368
  %v2407 = vunpack.c.h.b16 %v2368
  %v2408 = vunpack.c.l.b16 %v2369
  %v2409 = vunpack.c.h.b16 %v2369
  %v2410 = vunpack.c.l.b16 %v2370
  %v2411 = vunpack.c.h.b16 %v2370
  %v2412 = vunpack.c.l.b16 %v2371
  %v2413 = vunpack.c.h.b16 %v2371
  %v2414 = vunpack.c.l.b16 %v2372
  %v2415 = vunpack.c.h.b16 %v2372
  %v2416 = vunpack.c.l.b16 %v2373
  %v2417 = vunpack.c.h.b16 %v2373
  %v2418 = vunpack.c.l.b16 %v2374
  %v2419 = vunpack.c.h.b16 %v2374
  %v2420 = vunpack.c.l.b16 %v2375
  %v2421 = vunpack.c.h.b16 %v2375
  %v2422 = vunpack.c.l.b16 %v2376
  %v2423 = vunpack.c.h.b16 %v2376
  %v2424 = vunpack.c.l.b16 %v2377
  %v2425 = vunpack.c.h.b16 %v2377
  %v2426 = vpack.c.b16 %v2396, %v2394
  %v2427 = vpack.c.b16 %v2397, %v2395
  %v2428 = vpack.c.b16 %v2400, %v2398
  %v2429 = vpack.c.b16 %v2401, %v2399
  %v2430 = vpack.c.b16 %v2404, %v2402
  %v2431 = vpack.c.b16 %v2405, %v2403
  %v2432 = vpack.c.b16 %v2408, %v2406
  %v2433 = vpack.c.b16 %v2409, %v2407
  %v2434 = vpack.c.b16 %v2412, %v2410
  %v2435 = vpack.c.b16 %v2413, %v2411
  %v2436 = vpack.c.b16 %v2416, %v2414
  %v2437 = vpack.c.b16 %v2417, %v2415
  %v2438 = vpack.c.b16 %v2420, %v2418
  %v2439 = vpack.c.b16 %v2421, %v2419
  %v2440 = vpack.c.b16 %v2424, %v2422
  %v2441 = vpack.c.b16 %v2425, %v2423
  %2458 = vmatprep.subr.bf16.mxu0 0
  %2459 = vmatpush1.bf16.msra.mxu0 %v486
  %2460 = vmatprep.subr.bf16.mxu0 0
  %2461 = vmatpush1.bf16.msra.mxu0 %v485
  %2462 = vmatprep.subr.bf16.mxu0 0
  %2463 = vmatpush1.bf16.msra.mxu0 %v484
  %2464 = vmatprep.subr.bf16.mxu0 0
  %2465 = vmatpush1.bf16.msra.mxu0 %v483
  %2466 = vmatprep.subr.bf16.mxu0 0
  %2467 = vmatpush1.bf16.msra.mxu0 %v482
  %2468 = vmatprep.subr.bf16.mxu0 0
  %2469 = vmatpush1.bf16.msra.mxu0 %v481
  %2470 = vmatprep.subr.bf16.mxu0 0
  %2471 = vmatpush1.bf16.msra.mxu0 %v480
  %2472 = vmatprep.subr.bf16.mxu0 0
  %2473 = vmatpush1.bf16.msra.mxu0 %v479
  %2474 = vmatprep.subr.bf16.mxu0 0
  %2475 = vmatpush2.bf16.msra.mxu0 %v494
  %2476 = vmatprep.subr.bf16.mxu0 0
  %2477 = vmatpush2.bf16.msra.mxu0 %v493
  %2478 = vmatprep.subr.bf16.mxu0 0
  %2479 = vmatpush2.bf16.msra.mxu0 %v492
  %2480 = vmatprep.subr.bf16.mxu0 0
  %2481 = vmatpush2.bf16.msra.mxu0 %v491
  %2482 = vmatprep.subr.bf16.mxu0 0
  %2483 = vmatpush2.bf16.msra.mxu0 %v490
  %2484 = vmatprep.subr.bf16.mxu0 0
  %2485 = vmatpush2.bf16.msra.mxu0 %v489
  %2486 = vmatprep.subr.bf16.mxu0 0
  %2487 = vmatpush2.bf16.msra.mxu0 %v488
  %2488 = vmatprep.subr.bf16.mxu0 0
  %2489 = vmatpush2.bf16.msra.mxu0 %v487
  %2490 = vmatprep.mubr.bf16.mxu0 %v2427
  %2491 = vmatmul.mubr.bf16.gmra.mxu0 %v2426
  %v2492 = vpop.f32.mrf.mxu0
  %v2493 = vadd.f32 0.0, %v2492
  %v2494 = vpop.f32.mrf.mxu0
  %v2495 = vpop.f32.mrf.mxu0
  %v2496 = vadd.f32 0.0, %v2495
  %v2497 = vpop.f32.mrf.mxu0
  %2498 = vmatprep.mubr.bf16.mxu0 %v2429
  %2499 = vmatmul.mubr.bf16.gmra.mxu0 %v2428
  %v2500 = vpop.f32.mrf.mxu0
  %v2501 = vadd.f32 0.0, %v2500
  %v2502 = vpop.f32.mrf.mxu0
  %v2503 = vpop.f32.mrf.mxu0
  %v2504 = vadd.f32 0.0, %v2503
  %v2505 = vpop.f32.mrf.mxu0
  %2506 = vmatprep.mubr.bf16.mxu0 %v2431
  %2507 = vmatmul.mubr.bf16.gmra.mxu0 %v2430
  %v2508 = vpop.f32.mrf.mxu0
  %v2509 = vadd.f32 0.0, %v2508
  %v2510 = vpop.f32.mrf.mxu0
  %v2511 = vpop.f32.mrf.mxu0
  %v2512 = vadd.f32 0.0, %v2511
  %v2513 = vpop.f32.mrf.mxu0
  %2514 = vmatprep.mubr.bf16.mxu0 %v2433
  %2515 = vmatmul.mubr.bf16.gmra.mxu0 %v2432
  %v2516 = vpop.f32.mrf.mxu0
  %v2517 = vadd.f32 0.0, %v2516
  %v2518 = vpop.f32.mrf.mxu0
  %v2519 = vpop.f32.mrf.mxu0
  %v2520 = vadd.f32 0.0, %v2519
  %v2521 = vpop.f32.mrf.mxu0
  %2522 = vmatprep.mubr.bf16.mxu0 %v2435
  %2523 = vmatmul.mubr.bf16.gmra.mxu0 %v2434
  %v2524 = vpop.f32.mrf.mxu0
  %v2525 = vadd.f32 0.0, %v2524
  %v2526 = vpop.f32.mrf.mxu0
  %v2527 = vpop.f32.mrf.mxu0
  %v2528 = vadd.f32 0.0, %v2527
  %v2529 = vpop.f32.mrf.mxu0
  %2530 = vmatprep.mubr.bf16.mxu0 %v2437
  %2531 = vmatmul.mubr.bf16.gmra.mxu0 %v2436
  %v2532 = vpop.f32.mrf.mxu0
  %v2533 = vadd.f32 0.0, %v2532
  %v2534 = vpop.f32.mrf.mxu0
  %v2535 = vpop.f32.mrf.mxu0
  %v2536 = vadd.f32 0.0, %v2535
  %v2537 = vpop.f32.mrf.mxu0
  %2538 = vmatprep.mubr.bf16.mxu0 %v2439
  %2539 = vmatmul.mubr.bf16.gmra.mxu0 %v2438
  %v2540 = vpop.f32.mrf.mxu0
  %v2541 = vadd.f32 0.0, %v2540
  %v2542 = vpop.f32.mrf.mxu0
  %v2543 = vpop.f32.mrf.mxu0
  %v2544 = vadd.f32 0.0, %v2543
  %v2545 = vpop.f32.mrf.mxu0
  %2546 = vmatprep.mubr.bf16.mxu0 %v2441
  %2547 = vmatmul.mubr.bf16.gmra.mxu0 %v2440
  %v2548 = vpop.f32.mrf.mxu0
  %v2549 = vadd.f32 0.0, %v2548
  %v2550 = vpop.f32.mrf.mxu0
  %v2551 = vpop.f32.mrf.mxu0
  %v2552 = vadd.f32 0.0, %v2551
  %v2553 = vpop.f32.mrf.mxu0
  %2554 = vdwg.mxu0
  %v2555 = vpack.c.bf16 %v2496, %v2493
  %v2556 = vpack.c.bf16 %v2504, %v2501
  %v2557 = vpack.c.bf16 %v2512, %v2509
  %v2558 = vpack.c.bf16 %v2520, %v2517
  %v2559 = vpack.c.bf16 %v2528, %v2525
  %v2560 = vpack.c.bf16 %v2536, %v2533
  %v2561 = vpack.c.bf16 %v2544, %v2541
  %v2562 = vpack.c.bf16 %v2552, %v2549
  %s2563 = scalar_lea.vmem %s3, 320
  %v2564 = vld [vmem:[%s2563] sm:$0xf]
  %v2565 = vld [vmem:[%s2563 + $0x4] sm:$0xf]
  %v2566 = vld [vmem:[%s2563 + $0x8] sm:$0xf]
  %v2567 = vld [vmem:[%s2563 + $0xc] sm:$0xf]
  %v2568 = vld [vmem:[%s2563 + $0x10] sm:$0xf]
  %v2569 = vld [vmem:[%s2563 + $0x14] sm:$0xf]
  %v2570 = vld [vmem:[%s2563 + $0x18] sm:$0xf]
  %v2571 = vld [vmem:[%s2563 + $0x1c] sm:$0xf]
  %v2572 = vld [vmem:[%s2563 + $0x20] sm:$0xf]
  %v2573 = vld [vmem:[%s2563 + $0x24] sm:$0xf]
  %v2574 = vld [vmem:[%s2563 + $0x28] sm:$0xf]
  %v2575 = vld [vmem:[%s2563 + $0x2c] sm:$0xf]
  %v2576 = vld [vmem:[%s2563 + $0x30] sm:$0xf]
  %v2577 = vld [vmem:[%s2563 + $0x34] sm:$0xf]
  %v2578 = vld [vmem:[%s2563 + $0x38] sm:$0xf]
  %v2579 = vld [vmem:[%s2563 + $0x3c] sm:$0xf]
  %v2596 = vunpack.c.l.b16 %v2564
  %v2597 = vunpack.c.l.b16 %v2565
  %v2598 = vunpack.c.l.b16 %v2566
  %v2599 = vunpack.c.l.b16 %v2567
  %v2600 = vunpack.c.l.b16 %v2568
  %v2601 = vunpack.c.l.b16 %v2569
  %v2602 = vunpack.c.l.b16 %v2570
  %v2603 = vunpack.c.l.b16 %v2571
  %v2604 = vunpack.c.l.b16 %v2572
  %v2605 = vunpack.c.l.b16 %v2573
  %v2606 = vunpack.c.l.b16 %v2574
  %v2607 = vunpack.c.l.b16 %v2575
  %v2608 = vunpack.c.l.b16 %v2576
  %v2609 = vunpack.c.l.b16 %v2577
  %v2610 = vunpack.c.l.b16 %v2578
  %v2611 = vunpack.c.l.b16 %v2579
  %v2612 = vpack.c.b16 %v2597, %v2596
  %v2613 = vpack.c.b16 %v2599, %v2598
  %v2614 = vpack.c.b16 %v2601, %v2600
  %v2615 = vpack.c.b16 %v2603, %v2602
  %v2616 = vpack.c.b16 %v2605, %v2604
  %v2617 = vpack.c.b16 %v2607, %v2606
  %v2618 = vpack.c.b16 %v2609, %v2608
  %v2619 = vpack.c.b16 %v2611, %v2610
  %2628 = vmatprep.subr.bf16.mxu0 0
  %2629 = vmatpush1.bf16.msra.mxu0 %v2619
  %2630 = vmatprep.subr.bf16.mxu0 0
  %2631 = vmatpush1.bf16.msra.mxu0 %v2618
  %2632 = vmatprep.subr.bf16.mxu0 0
  %2633 = vmatpush1.bf16.msra.mxu0 %v2617
  %2634 = vmatprep.subr.bf16.mxu0 0
  %2635 = vmatpush1.bf16.msra.mxu0 %v2616
  %2636 = vmatprep.subr.bf16.mxu0 0
  %2637 = vmatpush1.bf16.msra.mxu0 %v2615
  %2638 = vmatprep.subr.bf16.mxu0 0
  %2639 = vmatpush1.bf16.msra.mxu0 %v2614
  %2640 = vmatprep.subr.bf16.mxu0 0
  %2641 = vmatpush1.bf16.msra.mxu0 %v2613
  %2642 = vmatprep.subr.bf16.mxu0 0
  %2643 = vmatpush1.bf16.msra.mxu0 %v2612
  %2644 = vmatprep.subr.bf16.mxu0 0
  %2645 = vmatpush2.bf16.msra.mxu0 0
  %2646 = vmatprep.subr.bf16.mxu0 0
  %2647 = vmatpush2.bf16.msra.mxu0 0
  %2648 = vmatprep.subr.bf16.mxu0 0
  %2649 = vmatpush2.bf16.msra.mxu0 0
  %2650 = vmatprep.subr.bf16.mxu0 0
  %2651 = vmatpush2.bf16.msra.mxu0 0
  %2652 = vmatprep.subr.bf16.mxu0 0
  %2653 = vmatpush2.bf16.msra.mxu0 0
  %2654 = vmatprep.subr.bf16.mxu0 0
  %2655 = vmatpush2.bf16.msra.mxu0 0
  %2656 = vmatprep.subr.bf16.mxu0 0
  %2657 = vmatpush2.bf16.msra.mxu0 0
  %2658 = vmatprep.subr.bf16.mxu0 0
  %2659 = vmatpush2.bf16.msra.mxu0 0
  %2660 = vmatprep.mubr.bf16.mxu0 0
  %2661 = vmatmul.mubr.bf16.gmra.mxu0 %v2555
  %v2662 = vpop.f32.mrf.mxu0
  %v2663 = vadd.f32 0.0, %v2662
  %v2664 = vpop.f32.mrf.mxu0
  %v2665 = vpop.f32.mrf.mxu0
  %v2666 = vadd.f32 0.0, %v2665
  %v2667 = vpop.f32.mrf.mxu0
  %2668 = vmatprep.mubr.bf16.mxu0 0
  %2669 = vmatmul.mubr.bf16.gmra.mxu0 %v2556
  %v2670 = vpop.f32.mrf.mxu0
  %v2671 = vadd.f32 0.0, %v2670
  %v2672 = vpop.f32.mrf.mxu0
  %v2673 = vpop.f32.mrf.mxu0
  %v2674 = vadd.f32 0.0, %v2673
  %v2675 = vpop.f32.mrf.mxu0
  %2676 = vmatprep.mubr.bf16.mxu0 0
  %2677 = vmatmul.mubr.bf16.gmra.mxu0 %v2557
  %v2678 = vpop.f32.mrf.mxu0
  %v2679 = vadd.f32 0.0, %v2678
  %v2680 = vpop.f32.mrf.mxu0
  %v2681 = vpop.f32.mrf.mxu0
  %v2682 = vadd.f32 0.0, %v2681
  %v2683 = vpop.f32.mrf.mxu0
  %2684 = vmatprep.mubr.bf16.mxu0 0
  %2685 = vmatmul.mubr.bf16.gmra.mxu0 %v2558
  %v2686 = vpop.f32.mrf.mxu0
  %v2687 = vadd.f32 0.0, %v2686
  %v2688 = vpop.f32.mrf.mxu0
  %v2689 = vpop.f32.mrf.mxu0
  %v2690 = vadd.f32 0.0, %v2689
  %v2691 = vpop.f32.mrf.mxu0
  %2692 = vmatprep.mubr.bf16.mxu0 0
  %2693 = vmatmul.mubr.bf16.gmra.mxu0 %v2559
  %v2694 = vpop.f32.mrf.mxu0
  %v2695 = vadd.f32 0.0, %v2694
  %v2696 = vpop.f32.mrf.mxu0
  %v2697 = vpop.f32.mrf.mxu0
  %v2698 = vadd.f32 0.0, %v2697
  %v2699 = vpop.f32.mrf.mxu0
  %2700 = vmatprep.mubr.bf16.mxu0 0
  %2701 = vmatmul.mubr.bf16.gmra.mxu0 %v2560
  %v2702 = vpop.f32.mrf.mxu0
  %v2703 = vadd.f32 0.0, %v2702
  %v2704 = vpop.f32.mrf.mxu0
  %v2705 = vpop.f32.mrf.mxu0
  %v2706 = vadd.f32 0.0, %v2705
  %v2707 = vpop.f32.mrf.mxu0
  %2708 = vmatprep.mubr.bf16.mxu0 0
  %2709 = vmatmul.mubr.bf16.gmra.mxu0 %v2561
  %v2710 = vpop.f32.mrf.mxu0
  %v2711 = vadd.f32 0.0, %v2710
  %v2712 = vpop.f32.mrf.mxu0
  %v2713 = vpop.f32.mrf.mxu0
  %v2714 = vadd.f32 0.0, %v2713
  %v2715 = vpop.f32.mrf.mxu0
  %2716 = vmatprep.mubr.bf16.mxu0 0
  %2717 = vmatmul.mubr.bf16.gmra.mxu0 %v2562
  %v2718 = vpop.f32.mrf.mxu0
  %v2719 = vadd.f32 0.0, %v2718
  %v2720 = vpop.f32.mrf.mxu0
  %v2721 = vpop.f32.mrf.mxu0
  %v2722 = vadd.f32 0.0, %v2721
  %v2723 = vpop.f32.mrf.mxu0
  %2724 = vdwg.mxu0
  %v2725 = vadd.f32 %v2345, %v2663
  %v2726 = vadd.f32 %v2346, %v2666
  %v2727 = vadd.f32 %v2347, %v2671
  %v2728 = vadd.f32 %v2348, %v2674
  %v2729 = vadd.f32 %v2349, %v2679
  %v2730 = vadd.f32 %v2350, %v2682
  %v2731 = vadd.f32 %v2351, %v2687
  %v2732 = vadd.f32 %v2352, %v2690
  %v2733 = vadd.f32 %v2353, %v2695
  %v2734 = vadd.f32 %v2354, %v2698
  %v2735 = vadd.f32 %v2355, %v2703
  %v2736 = vadd.f32 %v2356, %v2706
  %v2737 = vadd.f32 %v2357, %v2711
  %v2738 = vadd.f32 %v2358, %v2714
  %v2739 = vadd.f32 %v2359, %v2719
  %v2740 = vadd.f32 %v2360, %v2722
  %s2741 = scalar_lea.vmem %s2, 768
  %v2742 = vld [vmem:[%s2741] sm:$0xff]
  %v2743 = vld [vmem:[%s2741 + $0x8] sm:$0xff]
  %v2744 = vld [vmem:[%s2741 + $0x10] sm:$0xff]
  %v2745 = vld [vmem:[%s2741 + $0x18] sm:$0xff]
  %v2746 = vld [vmem:[%s2741 + $0x20] sm:$0xff]
  %v2747 = vld [vmem:[%s2741 + $0x28] sm:$0xff]
  %v2748 = vld [vmem:[%s2741 + $0x30] sm:$0xff]
  %v2749 = vld [vmem:[%s2741 + $0x38] sm:$0xff]
  %v2750 = vld [vmem:[%s2741 + $0x40] sm:$0xff]
  %v2751 = vld [vmem:[%s2741 + $0x48] sm:$0xff]
  %v2752 = vld [vmem:[%s2741 + $0x50] sm:$0xff]
  %v2753 = vld [vmem:[%s2741 + $0x58] sm:$0xff]
  %v2754 = vld [vmem:[%s2741 + $0x60] sm:$0xff]
  %v2755 = vld [vmem:[%s2741 + $0x68] sm:$0xff]
  %v2756 = vld [vmem:[%s2741 + $0x70] sm:$0xff]
  %v2757 = vld [vmem:[%s2741 + $0x78] sm:$0xff]
  %v2774 = vunpack.c.l.b16 %v2742
  %v2775 = vunpack.c.h.b16 %v2742
  %v2776 = vunpack.c.l.b16 %v2743
  %v2777 = vunpack.c.h.b16 %v2743
  %v2778 = vunpack.c.l.b16 %v2744
  %v2779 = vunpack.c.h.b16 %v2744
  %v2780 = vunpack.c.l.b16 %v2745
  %v2781 = vunpack.c.h.b16 %v2745
  %v2782 = vunpack.c.l.b16 %v2746
  %v2783 = vunpack.c.h.b16 %v2746
  %v2784 = vunpack.c.l.b16 %v2747
  %v2785 = vunpack.c.h.b16 %v2747
  %v2786 = vunpack.c.l.b16 %v2748
  %v2787 = vunpack.c.h.b16 %v2748
  %v2788 = vunpack.c.l.b16 %v2749
  %v2789 = vunpack.c.h.b16 %v2749
  %v2790 = vunpack.c.l.b16 %v2750
  %v2791 = vunpack.c.h.b16 %v2750
  %v2792 = vunpack.c.l.b16 %v2751
  %v2793 = vunpack.c.h.b16 %v2751
  %v2794 = vunpack.c.l.b16 %v2752
  %v2795 = vunpack.c.h.b16 %v2752
  %v2796 = vunpack.c.l.b16 %v2753
  %v2797 = vunpack.c.h.b16 %v2753
  %v2798 = vunpack.c.l.b16 %v2754
  %v2799 = vunpack.c.h.b16 %v2754
  %v2800 = vunpack.c.l.b16 %v2755
  %v2801 = vunpack.c.h.b16 %v2755
  %v2802 = vunpack.c.l.b16 %v2756
  %v2803 = vunpack.c.h.b16 %v2756
  %v2804 = vunpack.c.l.b16 %v2757
  %v2805 = vunpack.c.h.b16 %v2757
  %v2806 = vpack.c.b16 %v2776, %v2774
  %v2807 = vpack.c.b16 %v2777, %v2775
  %v2808 = vpack.c.b16 %v2780, %v2778
  %v2809 = vpack.c.b16 %v2781, %v2779
  %v2810 = vpack.c.b16 %v2784, %v2782
  %v2811 = vpack.c.b16 %v2785, %v2783
  %v2812 = vpack.c.b16 %v2788, %v2786
  %v2813 = vpack.c.b16 %v2789, %v2787
  %v2814 = vpack.c.b16 %v2792, %v2790
  %v2815 = vpack.c.b16 %v2793, %v2791
  %v2816 = vpack.c.b16 %v2796, %v2794
  %v2817 = vpack.c.b16 %v2797, %v2795
  %v2818 = vpack.c.b16 %v2800, %v2798
  %v2819 = vpack.c.b16 %v2801, %v2799
  %v2820 = vpack.c.b16 %v2804, %v2802
  %v2821 = vpack.c.b16 %v2805, %v2803
  %2838 = vmatprep.subr.bf16.mxu0 0
  %2839 = vmatpush1.bf16.msra.mxu0 %v486
  %2840 = vmatprep.subr.bf16.mxu0 0
  %2841 = vmatpush1.bf16.msra.mxu0 %v485
  %2842 = vmatprep.subr.bf16.mxu0 0
  %2843 = vmatpush1.bf16.msra.mxu0 %v484
  %2844 = vmatprep.subr.bf16.mxu0 0
  %2845 = vmatpush1.bf16.msra.mxu0 %v483
  %2846 = vmatprep.subr.bf16.mxu0 0
  %2847 = vmatpush1.bf16.msra.mxu0 %v482
  %2848 = vmatprep.subr.bf16.mxu0 0
  %2849 = vmatpush1.bf16.msra.mxu0 %v481
  %2850 = vmatprep.subr.bf16.mxu0 0
  %2851 = vmatpush1.bf16.msra.mxu0 %v480
  %2852 = vmatprep.subr.bf16.mxu0 0
  %2853 = vmatpush1.bf16.msra.mxu0 %v479
  %2854 = vmatprep.subr.bf16.mxu0 0
  %2855 = vmatpush2.bf16.msra.mxu0 %v494
  %2856 = vmatprep.subr.bf16.mxu0 0
  %2857 = vmatpush2.bf16.msra.mxu0 %v493
  %2858 = vmatprep.subr.bf16.mxu0 0
  %2859 = vmatpush2.bf16.msra.mxu0 %v492
  %2860 = vmatprep.subr.bf16.mxu0 0
  %2861 = vmatpush2.bf16.msra.mxu0 %v491
  %2862 = vmatprep.subr.bf16.mxu0 0
  %2863 = vmatpush2.bf16.msra.mxu0 %v490
  %2864 = vmatprep.subr.bf16.mxu0 0
  %2865 = vmatpush2.bf16.msra.mxu0 %v489
  %2866 = vmatprep.subr.bf16.mxu0 0
  %2867 = vmatpush2.bf16.msra.mxu0 %v488
  %2868 = vmatprep.subr.bf16.mxu0 0
  %2869 = vmatpush2.bf16.msra.mxu0 %v487
  %2870 = vmatprep.mubr.bf16.mxu0 %v2807
  %2871 = vmatmul.mubr.bf16.gmra.mxu0 %v2806
  %v2872 = vpop.f32.mrf.mxu0
  %v2873 = vadd.f32 0.0, %v2872
  %v2874 = vpop.f32.mrf.mxu0
  %v2875 = vpop.f32.mrf.mxu0
  %v2876 = vadd.f32 0.0, %v2875
  %v2877 = vpop.f32.mrf.mxu0
  %2878 = vmatprep.mubr.bf16.mxu0 %v2809
  %2879 = vmatmul.mubr.bf16.gmra.mxu0 %v2808
  %v2880 = vpop.f32.mrf.mxu0
  %v2881 = vadd.f32 0.0, %v2880
  %v2882 = vpop.f32.mrf.mxu0
  %v2883 = vpop.f32.mrf.mxu0
  %v2884 = vadd.f32 0.0, %v2883
  %v2885 = vpop.f32.mrf.mxu0
  %2886 = vmatprep.mubr.bf16.mxu0 %v2811
  %2887 = vmatmul.mubr.bf16.gmra.mxu0 %v2810
  %v2888 = vpop.f32.mrf.mxu0
  %v2889 = vadd.f32 0.0, %v2888
  %v2890 = vpop.f32.mrf.mxu0
  %v2891 = vpop.f32.mrf.mxu0
  %v2892 = vadd.f32 0.0, %v2891
  %v2893 = vpop.f32.mrf.mxu0
  %2894 = vmatprep.mubr.bf16.mxu0 %v2813
  %2895 = vmatmul.mubr.bf16.gmra.mxu0 %v2812
  %v2896 = vpop.f32.mrf.mxu0
  %v2897 = vadd.f32 0.0, %v2896
  %v2898 = vpop.f32.mrf.mxu0
  %v2899 = vpop.f32.mrf.mxu0
  %v2900 = vadd.f32 0.0, %v2899
  %v2901 = vpop.f32.mrf.mxu0
  %2902 = vmatprep.mubr.bf16.mxu0 %v2815
  %2903 = vmatmul.mubr.bf16.gmra.mxu0 %v2814
  %v2904 = vpop.f32.mrf.mxu0
  %v2905 = vadd.f32 0.0, %v2904
  %v2906 = vpop.f32.mrf.mxu0
  %v2907 = vpop.f32.mrf.mxu0
  %v2908 = vadd.f32 0.0, %v2907
  %v2909 = vpop.f32.mrf.mxu0
  %2910 = vmatprep.mubr.bf16.mxu0 %v2817
  %2911 = vmatmul.mubr.bf16.gmra.mxu0 %v2816
  %v2912 = vpop.f32.mrf.mxu0
  %v2913 = vadd.f32 0.0, %v2912
  %v2914 = vpop.f32.mrf.mxu0
  %v2915 = vpop.f32.mrf.mxu0
  %v2916 = vadd.f32 0.0, %v2915
  %v2917 = vpop.f32.mrf.mxu0
  %2918 = vmatprep.mubr.bf16.mxu0 %v2819
  %2919 = vmatmul.mubr.bf16.gmra.mxu0 %v2818
  %v2920 = vpop.f32.mrf.mxu0
  %v2921 = vadd.f32 0.0, %v2920
  %v2922 = vpop.f32.mrf.mxu0
  %v2923 = vpop.f32.mrf.mxu0
  %v2924 = vadd.f32 0.0, %v2923
  %v2925 = vpop.f32.mrf.mxu0
  %2926 = vmatprep.mubr.bf16.mxu0 %v2821
  %2927 = vmatmul.mubr.bf16.gmra.mxu0 %v2820
  %v2928 = vpop.f32.mrf.mxu0
  %v2929 = vadd.f32 0.0, %v2928
  %v2930 = vpop.f32.mrf.mxu0
  %v2931 = vpop.f32.mrf.mxu0
  %v2932 = vadd.f32 0.0, %v2931
  %v2933 = vpop.f32.mrf.mxu0
  %2934 = vdwg.mxu0
  %v2935 = vpack.c.bf16 %v2876, %v2873
  %v2936 = vpack.c.bf16 %v2884, %v2881
  %v2937 = vpack.c.bf16 %v2892, %v2889
  %v2938 = vpack.c.bf16 %v2900, %v2897
  %v2939 = vpack.c.bf16 %v2908, %v2905
  %v2940 = vpack.c.bf16 %v2916, %v2913
  %v2941 = vpack.c.bf16 %v2924, %v2921
  %v2942 = vpack.c.bf16 %v2932, %v2929
  %s2943 = scalar_lea.vmem %s3, 384
  %v2944 = vld [vmem:[%s2943] sm:$0xf]
  %v2945 = vld [vmem:[%s2943 + $0x4] sm:$0xf]
  %v2946 = vld [vmem:[%s2943 + $0x8] sm:$0xf]
  %v2947 = vld [vmem:[%s2943 + $0xc] sm:$0xf]
  %v2948 = vld [vmem:[%s2943 + $0x10] sm:$0xf]
  %v2949 = vld [vmem:[%s2943 + $0x14] sm:$0xf]
  %v2950 = vld [vmem:[%s2943 + $0x18] sm:$0xf]
  %v2951 = vld [vmem:[%s2943 + $0x1c] sm:$0xf]
  %v2952 = vld [vmem:[%s2943 + $0x20] sm:$0xf]
  %v2953 = vld [vmem:[%s2943 + $0x24] sm:$0xf]
  %v2954 = vld [vmem:[%s2943 + $0x28] sm:$0xf]
  %v2955 = vld [vmem:[%s2943 + $0x2c] sm:$0xf]
  %v2956 = vld [vmem:[%s2943 + $0x30] sm:$0xf]
  %v2957 = vld [vmem:[%s2943 + $0x34] sm:$0xf]
  %v2958 = vld [vmem:[%s2943 + $0x38] sm:$0xf]
  %v2959 = vld [vmem:[%s2943 + $0x3c] sm:$0xf]
  %v2976 = vunpack.c.l.b16 %v2944
  %v2977 = vunpack.c.l.b16 %v2945
  %v2978 = vunpack.c.l.b16 %v2946
  %v2979 = vunpack.c.l.b16 %v2947
  %v2980 = vunpack.c.l.b16 %v2948
  %v2981 = vunpack.c.l.b16 %v2949
  %v2982 = vunpack.c.l.b16 %v2950
  %v2983 = vunpack.c.l.b16 %v2951
  %v2984 = vunpack.c.l.b16 %v2952
  %v2985 = vunpack.c.l.b16 %v2953
  %v2986 = vunpack.c.l.b16 %v2954
  %v2987 = vunpack.c.l.b16 %v2955
  %v2988 = vunpack.c.l.b16 %v2956
  %v2989 = vunpack.c.l.b16 %v2957
  %v2990 = vunpack.c.l.b16 %v2958
  %v2991 = vunpack.c.l.b16 %v2959
  %v2992 = vpack.c.b16 %v2977, %v2976
  %v2993 = vpack.c.b16 %v2979, %v2978
  %v2994 = vpack.c.b16 %v2981, %v2980
  %v2995 = vpack.c.b16 %v2983, %v2982
  %v2996 = vpack.c.b16 %v2985, %v2984
  %v2997 = vpack.c.b16 %v2987, %v2986
  %v2998 = vpack.c.b16 %v2989, %v2988
  %v2999 = vpack.c.b16 %v2991, %v2990
  %3008 = vmatprep.subr.bf16.mxu0 0
  %3009 = vmatpush1.bf16.msra.mxu0 %v2999
  %3010 = vmatprep.subr.bf16.mxu0 0
  %3011 = vmatpush1.bf16.msra.mxu0 %v2998
  %3012 = vmatprep.subr.bf16.mxu0 0
  %3013 = vmatpush1.bf16.msra.mxu0 %v2997
  %3014 = vmatprep.subr.bf16.mxu0 0
  %3015 = vmatpush1.bf16.msra.mxu0 %v2996
  %3016 = vmatprep.subr.bf16.mxu0 0
  %3017 = vmatpush1.bf16.msra.mxu0 %v2995
  %3018 = vmatprep.subr.bf16.mxu0 0
  %3019 = vmatpush1.bf16.msra.mxu0 %v2994
  %3020 = vmatprep.subr.bf16.mxu0 0
  %3021 = vmatpush1.bf16.msra.mxu0 %v2993
  %3022 = vmatprep.subr.bf16.mxu0 0
  %3023 = vmatpush1.bf16.msra.mxu0 %v2992
  %3024 = vmatprep.subr.bf16.mxu0 0
  %3025 = vmatpush2.bf16.msra.mxu0 0
  %3026 = vmatprep.subr.bf16.mxu0 0
  %3027 = vmatpush2.bf16.msra.mxu0 0
  %3028 = vmatprep.subr.bf16.mxu0 0
  %3029 = vmatpush2.bf16.msra.mxu0 0
  %3030 = vmatprep.subr.bf16.mxu0 0
  %3031 = vmatpush2.bf16.msra.mxu0 0
  %3032 = vmatprep.subr.bf16.mxu0 0
  %3033 = vmatpush2.bf16.msra.mxu0 0
  %3034 = vmatprep.subr.bf16.mxu0 0
  %3035 = vmatpush2.bf16.msra.mxu0 0
  %3036 = vmatprep.subr.bf16.mxu0 0
  %3037 = vmatpush2.bf16.msra.mxu0 0
  %3038 = vmatprep.subr.bf16.mxu0 0
  %3039 = vmatpush2.bf16.msra.mxu0 0
  %3040 = vmatprep.mubr.bf16.mxu0 0
  %3041 = vmatmul.mubr.bf16.gmra.mxu0 %v2935
  %v3042 = vpop.f32.mrf.mxu0
  %v3043 = vadd.f32 0.0, %v3042
  %v3044 = vpop.f32.mrf.mxu0
  %v3045 = vpop.f32.mrf.mxu0
  %v3046 = vadd.f32 0.0, %v3045
  %v3047 = vpop.f32.mrf.mxu0
  %3048 = vmatprep.mubr.bf16.mxu0 0
  %3049 = vmatmul.mubr.bf16.gmra.mxu0 %v2936
  %v3050 = vpop.f32.mrf.mxu0
  %v3051 = vadd.f32 0.0, %v3050
  %v3052 = vpop.f32.mrf.mxu0
  %v3053 = vpop.f32.mrf.mxu0
  %v3054 = vadd.f32 0.0, %v3053
  %v3055 = vpop.f32.mrf.mxu0
  %3056 = vmatprep.mubr.bf16.mxu0 0
  %3057 = vmatmul.mubr.bf16.gmra.mxu0 %v2937
  %v3058 = vpop.f32.mrf.mxu0
  %v3059 = vadd.f32 0.0, %v3058
  %v3060 = vpop.f32.mrf.mxu0
  %v3061 = vpop.f32.mrf.mxu0
  %v3062 = vadd.f32 0.0, %v3061
  %v3063 = vpop.f32.mrf.mxu0
  %3064 = vmatprep.mubr.bf16.mxu0 0
  %3065 = vmatmul.mubr.bf16.gmra.mxu0 %v2938
  %v3066 = vpop.f32.mrf.mxu0
  %v3067 = vadd.f32 0.0, %v3066
  %v3068 = vpop.f32.mrf.mxu0
  %v3069 = vpop.f32.mrf.mxu0
  %v3070 = vadd.f32 0.0, %v3069
  %v3071 = vpop.f32.mrf.mxu0
  %3072 = vmatprep.mubr.bf16.mxu0 0
  %3073 = vmatmul.mubr.bf16.gmra.mxu0 %v2939
  %v3074 = vpop.f32.mrf.mxu0
  %v3075 = vadd.f32 0.0, %v3074
  %v3076 = vpop.f32.mrf.mxu0
  %v3077 = vpop.f32.mrf.mxu0
  %v3078 = vadd.f32 0.0, %v3077
  %v3079 = vpop.f32.mrf.mxu0
  %3080 = vmatprep.mubr.bf16.mxu0 0
  %3081 = vmatmul.mubr.bf16.gmra.mxu0 %v2940
  %v3082 = vpop.f32.mrf.mxu0
  %v3083 = vadd.f32 0.0, %v3082
  %v3084 = vpop.f32.mrf.mxu0
  %v3085 = vpop.f32.mrf.mxu0
  %v3086 = vadd.f32 0.0, %v3085
  %v3087 = vpop.f32.mrf.mxu0
  %3088 = vmatprep.mubr.bf16.mxu0 0
  %3089 = vmatmul.mubr.bf16.gmra.mxu0 %v2941
  %v3090 = vpop.f32.mrf.mxu0
  %v3091 = vadd.f32 0.0, %v3090
  %v3092 = vpop.f32.mrf.mxu0
  %v3093 = vpop.f32.mrf.mxu0
  %v3094 = vadd.f32 0.0, %v3093
  %v3095 = vpop.f32.mrf.mxu0
  %3096 = vmatprep.mubr.bf16.mxu0 0
  %3097 = vmatmul.mubr.bf16.gmra.mxu0 %v2942
  %v3098 = vpop.f32.mrf.mxu0
  %v3099 = vadd.f32 0.0, %v3098
  %v3100 = vpop.f32.mrf.mxu0
  %v3101 = vpop.f32.mrf.mxu0
  %v3102 = vadd.f32 0.0, %v3101
  %v3103 = vpop.f32.mrf.mxu0
  %3104 = vdwg.mxu0
  %v3105 = vadd.f32 %v2725, %v3043
  %v3106 = vadd.f32 %v2726, %v3046
  %v3107 = vadd.f32 %v2727, %v3051
  %v3108 = vadd.f32 %v2728, %v3054
  %v3109 = vadd.f32 %v2729, %v3059
  %v3110 = vadd.f32 %v2730, %v3062
  %v3111 = vadd.f32 %v2731, %v3067
  %v3112 = vadd.f32 %v2732, %v3070
  %v3113 = vadd.f32 %v2733, %v3075
  %v3114 = vadd.f32 %v2734, %v3078
  %v3115 = vadd.f32 %v2735, %v3083
  %v3116 = vadd.f32 %v2736, %v3086
  %v3117 = vadd.f32 %v2737, %v3091
  %v3118 = vadd.f32 %v2738, %v3094
  %v3119 = vadd.f32 %v2739, %v3099
  %v3120 = vadd.f32 %v2740, %v3102
  %s3121 = scalar_lea.vmem %s2, 896
  %v3122 = vld [vmem:[%s3121] sm:$0xff]
  %v3123 = vld [vmem:[%s3121 + $0x8] sm:$0xff]
  %v3124 = vld [vmem:[%s3121 + $0x10] sm:$0xff]
  %v3125 = vld [vmem:[%s3121 + $0x18] sm:$0xff]
  %v3126 = vld [vmem:[%s3121 + $0x20] sm:$0xff]
  %v3127 = vld [vmem:[%s3121 + $0x28] sm:$0xff]
  %v3128 = vld [vmem:[%s3121 + $0x30] sm:$0xff]
  %v3129 = vld [vmem:[%s3121 + $0x38] sm:$0xff]
  %v3130 = vld [vmem:[%s3121 + $0x40] sm:$0xff]
  %v3131 = vld [vmem:[%s3121 + $0x48] sm:$0xff]
  %v3132 = vld [vmem:[%s3121 + $0x50] sm:$0xff]
  %v3133 = vld [vmem:[%s3121 + $0x58] sm:$0xff]
  %v3134 = vld [vmem:[%s3121 + $0x60] sm:$0xff]
  %v3135 = vld [vmem:[%s3121 + $0x68] sm:$0xff]
  %v3136 = vld [vmem:[%s3121 + $0x70] sm:$0xff]
  %v3137 = vld [vmem:[%s3121 + $0x78] sm:$0xff]
  %v3154 = vunpack.c.l.b16 %v3122
  %v3155 = vunpack.c.h.b16 %v3122
  %v3156 = vunpack.c.l.b16 %v3123
  %v3157 = vunpack.c.h.b16 %v3123
  %v3158 = vunpack.c.l.b16 %v3124
  %v3159 = vunpack.c.h.b16 %v3124
  %v3160 = vunpack.c.l.b16 %v3125
  %v3161 = vunpack.c.h.b16 %v3125
  %v3162 = vunpack.c.l.b16 %v3126
  %v3163 = vunpack.c.h.b16 %v3126
  %v3164 = vunpack.c.l.b16 %v3127
  %v3165 = vunpack.c.h.b16 %v3127
  %v3166 = vunpack.c.l.b16 %v3128
  %v3167 = vunpack.c.h.b16 %v3128
  %v3168 = vunpack.c.l.b16 %v3129
  %v3169 = vunpack.c.h.b16 %v3129
  %v3170 = vunpack.c.l.b16 %v3130
  %v3171 = vunpack.c.h.b16 %v3130
  %v3172 = vunpack.c.l.b16 %v3131
  %v3173 = vunpack.c.h.b16 %v3131
  %v3174 = vunpack.c.l.b16 %v3132
  %v3175 = vunpack.c.h.b16 %v3132
  %v3176 = vunpack.c.l.b16 %v3133
  %v3177 = vunpack.c.h.b16 %v3133
  %v3178 = vunpack.c.l.b16 %v3134
  %v3179 = vunpack.c.h.b16 %v3134
  %v3180 = vunpack.c.l.b16 %v3135
  %v3181 = vunpack.c.h.b16 %v3135
  %v3182 = vunpack.c.l.b16 %v3136
  %v3183 = vunpack.c.h.b16 %v3136
  %v3184 = vunpack.c.l.b16 %v3137
  %v3185 = vunpack.c.h.b16 %v3137
  %v3186 = vpack.c.b16 %v3156, %v3154
  %v3187 = vpack.c.b16 %v3157, %v3155
  %v3188 = vpack.c.b16 %v3160, %v3158
  %v3189 = vpack.c.b16 %v3161, %v3159
  %v3190 = vpack.c.b16 %v3164, %v3162
  %v3191 = vpack.c.b16 %v3165, %v3163
  %v3192 = vpack.c.b16 %v3168, %v3166
  %v3193 = vpack.c.b16 %v3169, %v3167
  %v3194 = vpack.c.b16 %v3172, %v3170
  %v3195 = vpack.c.b16 %v3173, %v3171
  %v3196 = vpack.c.b16 %v3176, %v3174
  %v3197 = vpack.c.b16 %v3177, %v3175
  %v3198 = vpack.c.b16 %v3180, %v3178
  %v3199 = vpack.c.b16 %v3181, %v3179
  %v3200 = vpack.c.b16 %v3184, %v3182
  %v3201 = vpack.c.b16 %v3185, %v3183
  %3218 = vmatprep.subr.bf16.mxu0 0
  %3219 = vmatpush1.bf16.msra.mxu0 %v486
  %3220 = vmatprep.subr.bf16.mxu0 0
  %3221 = vmatpush1.bf16.msra.mxu0 %v485
  %3222 = vmatprep.subr.bf16.mxu0 0
  %3223 = vmatpush1.bf16.msra.mxu0 %v484
  %3224 = vmatprep.subr.bf16.mxu0 0
  %3225 = vmatpush1.bf16.msra.mxu0 %v483
  %3226 = vmatprep.subr.bf16.mxu0 0
  %3227 = vmatpush1.bf16.msra.mxu0 %v482
  %3228 = vmatprep.subr.bf16.mxu0 0
  %3229 = vmatpush1.bf16.msra.mxu0 %v481
  %3230 = vmatprep.subr.bf16.mxu0 0
  %3231 = vmatpush1.bf16.msra.mxu0 %v480
  %3232 = vmatprep.subr.bf16.mxu0 0
  %3233 = vmatpush1.bf16.msra.mxu0 %v479
  %3234 = vmatprep.subr.bf16.mxu0 0
  %3235 = vmatpush2.bf16.msra.mxu0 %v494
  %3236 = vmatprep.subr.bf16.mxu0 0
  %3237 = vmatpush2.bf16.msra.mxu0 %v493
  %3238 = vmatprep.subr.bf16.mxu0 0
  %3239 = vmatpush2.bf16.msra.mxu0 %v492
  %3240 = vmatprep.subr.bf16.mxu0 0
  %3241 = vmatpush2.bf16.msra.mxu0 %v491
  %3242 = vmatprep.subr.bf16.mxu0 0
  %3243 = vmatpush2.bf16.msra.mxu0 %v490
  %3244 = vmatprep.subr.bf16.mxu0 0
  %3245 = vmatpush2.bf16.msra.mxu0 %v489
  %3246 = vmatprep.subr.bf16.mxu0 0
  %3247 = vmatpush2.bf16.msra.mxu0 %v488
  %3248 = vmatprep.subr.bf16.mxu0 0
  %3249 = vmatpush2.bf16.msra.mxu0 %v487
  %3250 = vmatprep.mubr.bf16.mxu0 %v3187
  %3251 = vmatmul.mubr.bf16.gmra.mxu0 %v3186
  %v3252 = vpop.f32.mrf.mxu0
  %v3253 = vadd.f32 0.0, %v3252
  %v3254 = vpop.f32.mrf.mxu0
  %v3255 = vpop.f32.mrf.mxu0
  %v3256 = vadd.f32 0.0, %v3255
  %v3257 = vpop.f32.mrf.mxu0
  %3258 = vmatprep.mubr.bf16.mxu0 %v3189
  %3259 = vmatmul.mubr.bf16.gmra.mxu0 %v3188
  %v3260 = vpop.f32.mrf.mxu0
  %v3261 = vadd.f32 0.0, %v3260
  %v3262 = vpop.f32.mrf.mxu0
  %v3263 = vpop.f32.mrf.mxu0
  %v3264 = vadd.f32 0.0, %v3263
  %v3265 = vpop.f32.mrf.mxu0
  %3266 = vmatprep.mubr.bf16.mxu0 %v3191
  %3267 = vmatmul.mubr.bf16.gmra.mxu0 %v3190
  %v3268 = vpop.f32.mrf.mxu0
  %v3269 = vadd.f32 0.0, %v3268
  %v3270 = vpop.f32.mrf.mxu0
  %v3271 = vpop.f32.mrf.mxu0
  %v3272 = vadd.f32 0.0, %v3271
  %v3273 = vpop.f32.mrf.mxu0
  %3274 = vmatprep.mubr.bf16.mxu0 %v3193
  %3275 = vmatmul.mubr.bf16.gmra.mxu0 %v3192
  %v3276 = vpop.f32.mrf.mxu0
  %v3277 = vadd.f32 0.0, %v3276
  %v3278 = vpop.f32.mrf.mxu0
  %v3279 = vpop.f32.mrf.mxu0
  %v3280 = vadd.f32 0.0, %v3279
  %v3281 = vpop.f32.mrf.mxu0
  %3282 = vmatprep.mubr.bf16.mxu0 %v3195
  %3283 = vmatmul.mubr.bf16.gmra.mxu0 %v3194
  %v3284 = vpop.f32.mrf.mxu0
  %v3285 = vadd.f32 0.0, %v3284
  %v3286 = vpop.f32.mrf.mxu0
  %v3287 = vpop.f32.mrf.mxu0
  %v3288 = vadd.f32 0.0, %v3287
  %v3289 = vpop.f32.mrf.mxu0
  %3290 = vmatprep.mubr.bf16.mxu0 %v3197
  %3291 = vmatmul.mubr.bf16.gmra.mxu0 %v3196
  %v3292 = vpop.f32.mrf.mxu0
  %v3293 = vadd.f32 0.0, %v3292
  %v3294 = vpop.f32.mrf.mxu0
  %v3295 = vpop.f32.mrf.mxu0
  %v3296 = vadd.f32 0.0, %v3295
  %v3297 = vpop.f32.mrf.mxu0
  %3298 = vmatprep.mubr.bf16.mxu0 %v3199
  %3299 = vmatmul.mubr.bf16.gmra.mxu0 %v3198
  %v3300 = vpop.f32.mrf.mxu0
  %v3301 = vadd.f32 0.0, %v3300
  %v3302 = vpop.f32.mrf.mxu0
  %v3303 = vpop.f32.mrf.mxu0
  %v3304 = vadd.f32 0.0, %v3303
  %v3305 = vpop.f32.mrf.mxu0
  %3306 = vmatprep.mubr.bf16.mxu0 %v3201
  %3307 = vmatmul.mubr.bf16.gmra.mxu0 %v3200
  %v3308 = vpop.f32.mrf.mxu0
  %v3309 = vadd.f32 0.0, %v3308
  %v3310 = vpop.f32.mrf.mxu0
  %v3311 = vpop.f32.mrf.mxu0
  %v3312 = vadd.f32 0.0, %v3311
  %v3313 = vpop.f32.mrf.mxu0
  %3314 = vdwg.mxu0
  %v3315 = vpack.c.bf16 %v3256, %v3253
  %v3316 = vpack.c.bf16 %v3264, %v3261
  %v3317 = vpack.c.bf16 %v3272, %v3269
  %v3318 = vpack.c.bf16 %v3280, %v3277
  %v3319 = vpack.c.bf16 %v3288, %v3285
  %v3320 = vpack.c.bf16 %v3296, %v3293
  %v3321 = vpack.c.bf16 %v3304, %v3301
  %v3322 = vpack.c.bf16 %v3312, %v3309
  %s3323 = scalar_lea.vmem %s3, 448
  %v3324 = vld [vmem:[%s3323] sm:$0xf]
  %v3325 = vld [vmem:[%s3323 + $0x4] sm:$0xf]
  %v3326 = vld [vmem:[%s3323 + $0x8] sm:$0xf]
  %v3327 = vld [vmem:[%s3323 + $0xc] sm:$0xf]
  %v3328 = vld [vmem:[%s3323 + $0x10] sm:$0xf]
  %v3329 = vld [vmem:[%s3323 + $0x14] sm:$0xf]
  %v3330 = vld [vmem:[%s3323 + $0x18] sm:$0xf]
  %v3331 = vld [vmem:[%s3323 + $0x1c] sm:$0xf]
  %v3332 = vld [vmem:[%s3323 + $0x20] sm:$0xf]
  %v3333 = vld [vmem:[%s3323 + $0x24] sm:$0xf]
  %v3334 = vld [vmem:[%s3323 + $0x28] sm:$0xf]
  %v3335 = vld [vmem:[%s3323 + $0x2c] sm:$0xf]
  %v3336 = vld [vmem:[%s3323 + $0x30] sm:$0xf]
  %v3337 = vld [vmem:[%s3323 + $0x34] sm:$0xf]
  %v3338 = vld [vmem:[%s3323 + $0x38] sm:$0xf]
  %v3339 = vld [vmem:[%s3323 + $0x3c] sm:$0xf]
  %v3356 = vunpack.c.l.b16 %v3324
  %v3357 = vunpack.c.l.b16 %v3325
  %v3358 = vunpack.c.l.b16 %v3326
  %v3359 = vunpack.c.l.b16 %v3327
  %v3360 = vunpack.c.l.b16 %v3328
  %v3361 = vunpack.c.l.b16 %v3329
  %v3362 = vunpack.c.l.b16 %v3330
  %v3363 = vunpack.c.l.b16 %v3331
  %v3364 = vunpack.c.l.b16 %v3332
  %v3365 = vunpack.c.l.b16 %v3333
  %v3366 = vunpack.c.l.b16 %v3334
  %v3367 = vunpack.c.l.b16 %v3335
  %v3368 = vunpack.c.l.b16 %v3336
  %v3369 = vunpack.c.l.b16 %v3337
  %v3370 = vunpack.c.l.b16 %v3338
  %v3371 = vunpack.c.l.b16 %v3339
  %v3372 = vpack.c.b16 %v3357, %v3356
  %v3373 = vpack.c.b16 %v3359, %v3358
  %v3374 = vpack.c.b16 %v3361, %v3360
  %v3375 = vpack.c.b16 %v3363, %v3362
  %v3376 = vpack.c.b16 %v3365, %v3364
  %v3377 = vpack.c.b16 %v3367, %v3366
  %v3378 = vpack.c.b16 %v3369, %v3368
  %v3379 = vpack.c.b16 %v3371, %v3370
  %3388 = vmatprep.subr.bf16.mxu0 0
  %3389 = vmatpush1.bf16.msra.mxu0 %v3379
  %3390 = vmatprep.subr.bf16.mxu0 0
  %3391 = vmatpush1.bf16.msra.mxu0 %v3378
  %3392 = vmatprep.subr.bf16.mxu0 0
  %3393 = vmatpush1.bf16.msra.mxu0 %v3377
  %3394 = vmatprep.subr.bf16.mxu0 0
  %3395 = vmatpush1.bf16.msra.mxu0 %v3376
  %3396 = vmatprep.subr.bf16.mxu0 0
  %3397 = vmatpush1.bf16.msra.mxu0 %v3375
  %3398 = vmatprep.subr.bf16.mxu0 0
  %3399 = vmatpush1.bf16.msra.mxu0 %v3374
  %3400 = vmatprep.subr.bf16.mxu0 0
  %3401 = vmatpush1.bf16.msra.mxu0 %v3373
  %3402 = vmatprep.subr.bf16.mxu0 0
  %3403 = vmatpush1.bf16.msra.mxu0 %v3372
  %3404 = vmatprep.subr.bf16.mxu0 0
  %3405 = vmatpush2.bf16.msra.mxu0 0
  %3406 = vmatprep.subr.bf16.mxu0 0
  %3407 = vmatpush2.bf16.msra.mxu0 0
  %3408 = vmatprep.subr.bf16.mxu0 0
  %3409 = vmatpush2.bf16.msra.mxu0 0
  %3410 = vmatprep.subr.bf16.mxu0 0
  %3411 = vmatpush2.bf16.msra.mxu0 0
  %3412 = vmatprep.subr.bf16.mxu0 0
  %3413 = vmatpush2.bf16.msra.mxu0 0
  %3414 = vmatprep.subr.bf16.mxu0 0
  %3415 = vmatpush2.bf16.msra.mxu0 0
  %3416 = vmatprep.subr.bf16.mxu0 0
  %3417 = vmatpush2.bf16.msra.mxu0 0
  %3418 = vmatprep.subr.bf16.mxu0 0
  %3419 = vmatpush2.bf16.msra.mxu0 0
  %3420 = vmatprep.mubr.bf16.mxu0 0
  %3421 = vmatmul.mubr.bf16.gmra.mxu0 %v3315
  %v3422 = vpop.f32.mrf.mxu0
  %v3423 = vadd.f32 0.0, %v3422
  %v3424 = vpop.f32.mrf.mxu0
  %v3425 = vpop.f32.mrf.mxu0
  %v3426 = vadd.f32 0.0, %v3425
  %v3427 = vpop.f32.mrf.mxu0
  %3428 = vmatprep.mubr.bf16.mxu0 0
  %3429 = vmatmul.mubr.bf16.gmra.mxu0 %v3316
  %v3430 = vpop.f32.mrf.mxu0
  %v3431 = vadd.f32 0.0, %v3430
  %v3432 = vpop.f32.mrf.mxu0
  %v3433 = vpop.f32.mrf.mxu0
  %v3434 = vadd.f32 0.0, %v3433
  %v3435 = vpop.f32.mrf.mxu0
  %3436 = vmatprep.mubr.bf16.mxu0 0
  %3437 = vmatmul.mubr.bf16.gmra.mxu0 %v3317
  %v3438 = vpop.f32.mrf.mxu0
  %v3439 = vadd.f32 0.0, %v3438
  %v3440 = vpop.f32.mrf.mxu0
  %v3441 = vpop.f32.mrf.mxu0
  %v3442 = vadd.f32 0.0, %v3441
  %v3443 = vpop.f32.mrf.mxu0
  %3444 = vmatprep.mubr.bf16.mxu0 0
  %3445 = vmatmul.mubr.bf16.gmra.mxu0 %v3318
  %v3446 = vpop.f32.mrf.mxu0
  %v3447 = vadd.f32 0.0, %v3446
  %v3448 = vpop.f32.mrf.mxu0
  %v3449 = vpop.f32.mrf.mxu0
  %v3450 = vadd.f32 0.0, %v3449
  %v3451 = vpop.f32.mrf.mxu0
  %3452 = vmatprep.mubr.bf16.mxu0 0
  %3453 = vmatmul.mubr.bf16.gmra.mxu0 %v3319
  %v3454 = vpop.f32.mrf.mxu0
  %v3455 = vadd.f32 0.0, %v3454
  %v3456 = vpop.f32.mrf.mxu0
  %v3457 = vpop.f32.mrf.mxu0
  %v3458 = vadd.f32 0.0, %v3457
  %v3459 = vpop.f32.mrf.mxu0
  %3460 = vmatprep.mubr.bf16.mxu0 0
  %3461 = vmatmul.mubr.bf16.gmra.mxu0 %v3320
  %v3462 = vpop.f32.mrf.mxu0
  %v3463 = vadd.f32 0.0, %v3462
  %v3464 = vpop.f32.mrf.mxu0
  %v3465 = vpop.f32.mrf.mxu0
  %v3466 = vadd.f32 0.0, %v3465
  %v3467 = vpop.f32.mrf.mxu0
  %3468 = vmatprep.mubr.bf16.mxu0 0
  %3469 = vmatmul.mubr.bf16.gmra.mxu0 %v3321
  %v3470 = vpop.f32.mrf.mxu0
  %v3471 = vadd.f32 0.0, %v3470
  %v3472 = vpop.f32.mrf.mxu0
  %v3473 = vpop.f32.mrf.mxu0
  %v3474 = vadd.f32 0.0, %v3473
  %v3475 = vpop.f32.mrf.mxu0
  %3476 = vmatprep.mubr.bf16.mxu0 0
  %3477 = vmatmul.mubr.bf16.gmra.mxu0 %v3322
  %v3478 = vpop.f32.mrf.mxu0
  %v3479 = vadd.f32 0.0, %v3478
  %v3480 = vpop.f32.mrf.mxu0
  %v3481 = vpop.f32.mrf.mxu0
  %v3482 = vadd.f32 0.0, %v3481
  %v3483 = vpop.f32.mrf.mxu0
  %3484 = vdwg.mxu0
  %v3485 = vadd.f32 %v3105, %v3423
  %v3486 = vadd.f32 %v3106, %v3426
  %v3487 = vadd.f32 %v3107, %v3431
  %v3488 = vadd.f32 %v3108, %v3434
  %v3489 = vadd.f32 %v3109, %v3439
  %v3490 = vadd.f32 %v3110, %v3442
  %v3491 = vadd.f32 %v3111, %v3447
  %v3492 = vadd.f32 %v3112, %v3450
  %v3493 = vadd.f32 %v3113, %v3455
  %v3494 = vadd.f32 %v3114, %v3458
  %v3495 = vadd.f32 %v3115, %v3463
  %v3496 = vadd.f32 %v3116, %v3466
  %v3497 = vadd.f32 %v3117, %v3471
  %v3498 = vadd.f32 %v3118, %v3474
  %v3499 = vadd.f32 %v3119, %v3479
  %v3500 = vadd.f32 %v3120, %v3482
  %s3501 = scalar_lea.vmem %s2, 1024
  %v3502 = vld [vmem:[%s3501] sm:$0xff]
  %v3503 = vld [vmem:[%s3501 + $0x8] sm:$0xff]
  %v3504 = vld [vmem:[%s3501 + $0x10] sm:$0xff]
  %v3505 = vld [vmem:[%s3501 + $0x18] sm:$0xff]
  %v3506 = vld [vmem:[%s3501 + $0x20] sm:$0xff]
  %v3507 = vld [vmem:[%s3501 + $0x28] sm:$0xff]
  %v3508 = vld [vmem:[%s3501 + $0x30] sm:$0xff]
  %v3509 = vld [vmem:[%s3501 + $0x38] sm:$0xff]
  %v3510 = vld [vmem:[%s3501 + $0x40] sm:$0xff]
  %v3511 = vld [vmem:[%s3501 + $0x48] sm:$0xff]
  %v3512 = vld [vmem:[%s3501 + $0x50] sm:$0xff]
  %v3513 = vld [vmem:[%s3501 + $0x58] sm:$0xff]
  %v3514 = vld [vmem:[%s3501 + $0x60] sm:$0xff]
  %v3515 = vld [vmem:[%s3501 + $0x68] sm:$0xff]
  %v3516 = vld [vmem:[%s3501 + $0x70] sm:$0xff]
  %v3517 = vld [vmem:[%s3501 + $0x78] sm:$0xff]
  %v3534 = vunpack.c.l.b16 %v3502
  %v3535 = vunpack.c.h.b16 %v3502
  %v3536 = vunpack.c.l.b16 %v3503
  %v3537 = vunpack.c.h.b16 %v3503
  %v3538 = vunpack.c.l.b16 %v3504
  %v3539 = vunpack.c.h.b16 %v3504
  %v3540 = vunpack.c.l.b16 %v3505
  %v3541 = vunpack.c.h.b16 %v3505
  %v3542 = vunpack.c.l.b16 %v3506
  %v3543 = vunpack.c.h.b16 %v3506
  %v3544 = vunpack.c.l.b16 %v3507
  %v3545 = vunpack.c.h.b16 %v3507
  %v3546 = vunpack.c.l.b16 %v3508
  %v3547 = vunpack.c.h.b16 %v3508
  %v3548 = vunpack.c.l.b16 %v3509
  %v3549 = vunpack.c.h.b16 %v3509
  %v3550 = vunpack.c.l.b16 %v3510
  %v3551 = vunpack.c.h.b16 %v3510
  %v3552 = vunpack.c.l.b16 %v3511
  %v3553 = vunpack.c.h.b16 %v3511
  %v3554 = vunpack.c.l.b16 %v3512
  %v3555 = vunpack.c.h.b16 %v3512
  %v3556 = vunpack.c.l.b16 %v3513
  %v3557 = vunpack.c.h.b16 %v3513
  %v3558 = vunpack.c.l.b16 %v3514
  %v3559 = vunpack.c.h.b16 %v3514
  %v3560 = vunpack.c.l.b16 %v3515
  %v3561 = vunpack.c.h.b16 %v3515
  %v3562 = vunpack.c.l.b16 %v3516
  %v3563 = vunpack.c.h.b16 %v3516
  %v3564 = vunpack.c.l.b16 %v3517
  %v3565 = vunpack.c.h.b16 %v3517
  %v3566 = vpack.c.b16 %v3536, %v3534
  %v3567 = vpack.c.b16 %v3537, %v3535
  %v3568 = vpack.c.b16 %v3540, %v3538
  %v3569 = vpack.c.b16 %v3541, %v3539
  %v3570 = vpack.c.b16 %v3544, %v3542
  %v3571 = vpack.c.b16 %v3545, %v3543
  %v3572 = vpack.c.b16 %v3548, %v3546
  %v3573 = vpack.c.b16 %v3549, %v3547
  %v3574 = vpack.c.b16 %v3552, %v3550
  %v3575 = vpack.c.b16 %v3553, %v3551
  %v3576 = vpack.c.b16 %v3556, %v3554
  %v3577 = vpack.c.b16 %v3557, %v3555
  %v3578 = vpack.c.b16 %v3560, %v3558
  %v3579 = vpack.c.b16 %v3561, %v3559
  %v3580 = vpack.c.b16 %v3564, %v3562
  %v3581 = vpack.c.b16 %v3565, %v3563
  %3598 = vmatprep.subr.bf16.mxu0 0
  %3599 = vmatpush1.bf16.msra.mxu0 %v486
  %3600 = vmatprep.subr.bf16.mxu0 0
  %3601 = vmatpush1.bf16.msra.mxu0 %v485
  %3602 = vmatprep.subr.bf16.mxu0 0
  %3603 = vmatpush1.bf16.msra.mxu0 %v484
  %3604 = vmatprep.subr.bf16.mxu0 0
  %3605 = vmatpush1.bf16.msra.mxu0 %v483
  %3606 = vmatprep.subr.bf16.mxu0 0
  %3607 = vmatpush1.bf16.msra.mxu0 %v482
  %3608 = vmatprep.subr.bf16.mxu0 0
  %3609 = vmatpush1.bf16.msra.mxu0 %v481
  %3610 = vmatprep.subr.bf16.mxu0 0
  %3611 = vmatpush1.bf16.msra.mxu0 %v480
  %3612 = vmatprep.subr.bf16.mxu0 0
  %3613 = vmatpush1.bf16.msra.mxu0 %v479
  %3614 = vmatprep.subr.bf16.mxu0 0
  %3615 = vmatpush2.bf16.msra.mxu0 %v494
  %3616 = vmatprep.subr.bf16.mxu0 0
  %3617 = vmatpush2.bf16.msra.mxu0 %v493
  %3618 = vmatprep.subr.bf16.mxu0 0
  %3619 = vmatpush2.bf16.msra.mxu0 %v492
  %3620 = vmatprep.subr.bf16.mxu0 0
  %3621 = vmatpush2.bf16.msra.mxu0 %v491
  %3622 = vmatprep.subr.bf16.mxu0 0
  %3623 = vmatpush2.bf16.msra.mxu0 %v490
  %3624 = vmatprep.subr.bf16.mxu0 0
  %3625 = vmatpush2.bf16.msra.mxu0 %v489
  %3626 = vmatprep.subr.bf16.mxu0 0
  %3627 = vmatpush2.bf16.msra.mxu0 %v488
  %3628 = vmatprep.subr.bf16.mxu0 0
  %3629 = vmatpush2.bf16.msra.mxu0 %v487
  %3630 = vmatprep.mubr.bf16.mxu0 %v3567
  %3631 = vmatmul.mubr.bf16.gmra.mxu0 %v3566
  %v3632 = vpop.f32.mrf.mxu0
  %v3633 = vadd.f32 0.0, %v3632
  %v3634 = vpop.f32.mrf.mxu0
  %v3635 = vpop.f32.mrf.mxu0
  %v3636 = vadd.f32 0.0, %v3635
  %v3637 = vpop.f32.mrf.mxu0
  %3638 = vmatprep.mubr.bf16.mxu0 %v3569
  %3639 = vmatmul.mubr.bf16.gmra.mxu0 %v3568
  %v3640 = vpop.f32.mrf.mxu0
  %v3641 = vadd.f32 0.0, %v3640
  %v3642 = vpop.f32.mrf.mxu0
  %v3643 = vpop.f32.mrf.mxu0
  %v3644 = vadd.f32 0.0, %v3643
  %v3645 = vpop.f32.mrf.mxu0
  %3646 = vmatprep.mubr.bf16.mxu0 %v3571
  %3647 = vmatmul.mubr.bf16.gmra.mxu0 %v3570
  %v3648 = vpop.f32.mrf.mxu0
  %v3649 = vadd.f32 0.0, %v3648
  %v3650 = vpop.f32.mrf.mxu0
  %v3651 = vpop.f32.mrf.mxu0
  %v3652 = vadd.f32 0.0, %v3651
  %v3653 = vpop.f32.mrf.mxu0
  %3654 = vmatprep.mubr.bf16.mxu0 %v3573
  %3655 = vmatmul.mubr.bf16.gmra.mxu0 %v3572
  %v3656 = vpop.f32.mrf.mxu0
  %v3657 = vadd.f32 0.0, %v3656
  %v3658 = vpop.f32.mrf.mxu0
  %v3659 = vpop.f32.mrf.mxu0
  %v3660 = vadd.f32 0.0, %v3659
  %v3661 = vpop.f32.mrf.mxu0
  %3662 = vmatprep.mubr.bf16.mxu0 %v3575
  %3663 = vmatmul.mubr.bf16.gmra.mxu0 %v3574
  %v3664 = vpop.f32.mrf.mxu0
  %v3665 = vadd.f32 0.0, %v3664
  %v3666 = vpop.f32.mrf.mxu0
  %v3667 = vpop.f32.mrf.mxu0
  %v3668 = vadd.f32 0.0, %v3667
  %v3669 = vpop.f32.mrf.mxu0
  %3670 = vmatprep.mubr.bf16.mxu0 %v3577
  %3671 = vmatmul.mubr.bf16.gmra.mxu0 %v3576
  %v3672 = vpop.f32.mrf.mxu0
  %v3673 = vadd.f32 0.0, %v3672
  %v3674 = vpop.f32.mrf.mxu0
  %v3675 = vpop.f32.mrf.mxu0
  %v3676 = vadd.f32 0.0, %v3675
  %v3677 = vpop.f32.mrf.mxu0
  %3678 = vmatprep.mubr.bf16.mxu0 %v3579
  %3679 = vmatmul.mubr.bf16.gmra.mxu0 %v3578
  %v3680 = vpop.f32.mrf.mxu0
  %v3681 = vadd.f32 0.0, %v3680
  %v3682 = vpop.f32.mrf.mxu0
  %v3683 = vpop.f32.mrf.mxu0
  %v3684 = vadd.f32 0.0, %v3683
  %v3685 = vpop.f32.mrf.mxu0
  %3686 = vmatprep.mubr.bf16.mxu0 %v3581
  %3687 = vmatmul.mubr.bf16.gmra.mxu0 %v3580
  %v3688 = vpop.f32.mrf.mxu0
  %v3689 = vadd.f32 0.0, %v3688
  %v3690 = vpop.f32.mrf.mxu0
  %v3691 = vpop.f32.mrf.mxu0
  %v3692 = vadd.f32 0.0, %v3691
  %v3693 = vpop.f32.mrf.mxu0
  %3694 = vdwg.mxu0
  %v3695 = vpack.c.bf16 %v3636, %v3633
  %v3696 = vpack.c.bf16 %v3644, %v3641
  %v3697 = vpack.c.bf16 %v3652, %v3649
  %v3698 = vpack.c.bf16 %v3660, %v3657
  %v3699 = vpack.c.bf16 %v3668, %v3665
  %v3700 = vpack.c.bf16 %v3676, %v3673
  %v3701 = vpack.c.bf16 %v3684, %v3681
  %v3702 = vpack.c.bf16 %v3692, %v3689
  %s3703 = scalar_lea.vmem %s3, 512
  %v3704 = vld [vmem:[%s3703] sm:$0xf]
  %v3705 = vld [vmem:[%s3703 + $0x4] sm:$0xf]
  %v3706 = vld [vmem:[%s3703 + $0x8] sm:$0xf]
  %v3707 = vld [vmem:[%s3703 + $0xc] sm:$0xf]
  %v3708 = vld [vmem:[%s3703 + $0x10] sm:$0xf]
  %v3709 = vld [vmem:[%s3703 + $0x14] sm:$0xf]
  %v3710 = vld [vmem:[%s3703 + $0x18] sm:$0xf]
  %v3711 = vld [vmem:[%s3703 + $0x1c] sm:$0xf]
  %v3712 = vld [vmem:[%s3703 + $0x20] sm:$0xf]
  %v3713 = vld [vmem:[%s3703 + $0x24] sm:$0xf]
  %v3714 = vld [vmem:[%s3703 + $0x28] sm:$0xf]
  %v3715 = vld [vmem:[%s3703 + $0x2c] sm:$0xf]
  %v3716 = vld [vmem:[%s3703 + $0x30] sm:$0xf]
  %v3717 = vld [vmem:[%s3703 + $0x34] sm:$0xf]
  %v3718 = vld [vmem:[%s3703 + $0x38] sm:$0xf]
  %v3719 = vld [vmem:[%s3703 + $0x3c] sm:$0xf]
  %v3736 = vunpack.c.l.b16 %v3704
  %v3737 = vunpack.c.l.b16 %v3705
  %v3738 = vunpack.c.l.b16 %v3706
  %v3739 = vunpack.c.l.b16 %v3707
  %v3740 = vunpack.c.l.b16 %v3708
  %v3741 = vunpack.c.l.b16 %v3709
  %v3742 = vunpack.c.l.b16 %v3710
  %v3743 = vunpack.c.l.b16 %v3711
  %v3744 = vunpack.c.l.b16 %v3712
  %v3745 = vunpack.c.l.b16 %v3713
  %v3746 = vunpack.c.l.b16 %v3714
  %v3747 = vunpack.c.l.b16 %v3715
  %v3748 = vunpack.c.l.b16 %v3716
  %v3749 = vunpack.c.l.b16 %v3717
  %v3750 = vunpack.c.l.b16 %v3718
  %v3751 = vunpack.c.l.b16 %v3719
  %v3752 = vpack.c.b16 %v3737, %v3736
  %v3753 = vpack.c.b16 %v3739, %v3738
  %v3754 = vpack.c.b16 %v3741, %v3740
  %v3755 = vpack.c.b16 %v3743, %v3742
  %v3756 = vpack.c.b16 %v3745, %v3744
  %v3757 = vpack.c.b16 %v3747, %v3746
  %v3758 = vpack.c.b16 %v3749, %v3748
  %v3759 = vpack.c.b16 %v3751, %v3750
  %3768 = vmatprep.subr.bf16.mxu0 0
  %3769 = vmatpush1.bf16.msra.mxu0 %v3759
  %3770 = vmatprep.subr.bf16.mxu0 0
  %3771 = vmatpush1.bf16.msra.mxu0 %v3758
  %3772 = vmatprep.subr.bf16.mxu0 0
  %3773 = vmatpush1.bf16.msra.mxu0 %v3757
  %3774 = vmatprep.subr.bf16.mxu0 0
  %3775 = vmatpush1.bf16.msra.mxu0 %v3756
  %3776 = vmatprep.subr.bf16.mxu0 0
  %3777 = vmatpush1.bf16.msra.mxu0 %v3755
  %3778 = vmatprep.subr.bf16.mxu0 0
  %3779 = vmatpush1.bf16.msra.mxu0 %v3754
  %3780 = vmatprep.subr.bf16.mxu0 0
  %3781 = vmatpush1.bf16.msra.mxu0 %v3753
  %3782 = vmatprep.subr.bf16.mxu0 0
  %3783 = vmatpush1.bf16.msra.mxu0 %v3752
  %3784 = vmatprep.subr.bf16.mxu0 0
  %3785 = vmatpush2.bf16.msra.mxu0 0
  %3786 = vmatprep.subr.bf16.mxu0 0
  %3787 = vmatpush2.bf16.msra.mxu0 0
  %3788 = vmatprep.subr.bf16.mxu0 0
  %3789 = vmatpush2.bf16.msra.mxu0 0
  %3790 = vmatprep.subr.bf16.mxu0 0
  %3791 = vmatpush2.bf16.msra.mxu0 0
  %3792 = vmatprep.subr.bf16.mxu0 0
  %3793 = vmatpush2.bf16.msra.mxu0 0
  %3794 = vmatprep.subr.bf16.mxu0 0
  %3795 = vmatpush2.bf16.msra.mxu0 0
  %3796 = vmatprep.subr.bf16.mxu0 0
  %3797 = vmatpush2.bf16.msra.mxu0 0
  %3798 = vmatprep.subr.bf16.mxu0 0
  %3799 = vmatpush2.bf16.msra.mxu0 0
  %3800 = vmatprep.mubr.bf16.mxu0 0
  %3801 = vmatmul.mubr.bf16.gmra.mxu0 %v3695
  %v3802 = vpop.f32.mrf.mxu0
  %v3803 = vadd.f32 0.0, %v3802
  %v3804 = vpop.f32.mrf.mxu0
  %v3805 = vpop.f32.mrf.mxu0
  %v3806 = vadd.f32 0.0, %v3805
  %v3807 = vpop.f32.mrf.mxu0
  %3808 = vmatprep.mubr.bf16.mxu0 0
  %3809 = vmatmul.mubr.bf16.gmra.mxu0 %v3696
  %v3810 = vpop.f32.mrf.mxu0
  %v3811 = vadd.f32 0.0, %v3810
  %v3812 = vpop.f32.mrf.mxu0
  %v3813 = vpop.f32.mrf.mxu0
  %v3814 = vadd.f32 0.0, %v3813
  %v3815 = vpop.f32.mrf.mxu0
  %3816 = vmatprep.mubr.bf16.mxu0 0
  %3817 = vmatmul.mubr.bf16.gmra.mxu0 %v3697
  %v3818 = vpop.f32.mrf.mxu0
  %v3819 = vadd.f32 0.0, %v3818
  %v3820 = vpop.f32.mrf.mxu0
  %v3821 = vpop.f32.mrf.mxu0
  %v3822 = vadd.f32 0.0, %v3821
  %v3823 = vpop.f32.mrf.mxu0
  %3824 = vmatprep.mubr.bf16.mxu0 0
  %3825 = vmatmul.mubr.bf16.gmra.mxu0 %v3698
  %v3826 = vpop.f32.mrf.mxu0
  %v3827 = vadd.f32 0.0, %v3826
  %v3828 = vpop.f32.mrf.mxu0
  %v3829 = vpop.f32.mrf.mxu0
  %v3830 = vadd.f32 0.0, %v3829
  %v3831 = vpop.f32.mrf.mxu0
  %3832 = vmatprep.mubr.bf16.mxu0 0
  %3833 = vmatmul.mubr.bf16.gmra.mxu0 %v3699
  %v3834 = vpop.f32.mrf.mxu0
  %v3835 = vadd.f32 0.0, %v3834
  %v3836 = vpop.f32.mrf.mxu0
  %v3837 = vpop.f32.mrf.mxu0
  %v3838 = vadd.f32 0.0, %v3837
  %v3839 = vpop.f32.mrf.mxu0
  %3840 = vmatprep.mubr.bf16.mxu0 0
  %3841 = vmatmul.mubr.bf16.gmra.mxu0 %v3700
  %v3842 = vpop.f32.mrf.mxu0
  %v3843 = vadd.f32 0.0, %v3842
  %v3844 = vpop.f32.mrf.mxu0
  %v3845 = vpop.f32.mrf.mxu0
  %v3846 = vadd.f32 0.0, %v3845
  %v3847 = vpop.f32.mrf.mxu0
  %3848 = vmatprep.mubr.bf16.mxu0 0
  %3849 = vmatmul.mubr.bf16.gmra.mxu0 %v3701
  %v3850 = vpop.f32.mrf.mxu0
  %v3851 = vadd.f32 0.0, %v3850
  %v3852 = vpop.f32.mrf.mxu0
  %v3853 = vpop.f32.mrf.mxu0
  %v3854 = vadd.f32 0.0, %v3853
  %v3855 = vpop.f32.mrf.mxu0
  %3856 = vmatprep.mubr.bf16.mxu0 0
  %3857 = vmatmul.mubr.bf16.gmra.mxu0 %v3702
  %v3858 = vpop.f32.mrf.mxu0
  %v3859 = vadd.f32 0.0, %v3858
  %v3860 = vpop.f32.mrf.mxu0
  %v3861 = vpop.f32.mrf.mxu0
  %v3862 = vadd.f32 0.0, %v3861
  %v3863 = vpop.f32.mrf.mxu0
  %3864 = vdwg.mxu0
  %v3865 = vadd.f32 %v3485, %v3803
  %v3866 = vadd.f32 %v3486, %v3806
  %v3867 = vadd.f32 %v3487, %v3811
  %v3868 = vadd.f32 %v3488, %v3814
  %v3869 = vadd.f32 %v3489, %v3819
  %v3870 = vadd.f32 %v3490, %v3822
  %v3871 = vadd.f32 %v3491, %v3827
  %v3872 = vadd.f32 %v3492, %v3830
  %v3873 = vadd.f32 %v3493, %v3835
  %v3874 = vadd.f32 %v3494, %v3838
  %v3875 = vadd.f32 %v3495, %v3843
  %v3876 = vadd.f32 %v3496, %v3846
  %v3877 = vadd.f32 %v3497, %v3851
  %v3878 = vadd.f32 %v3498, %v3854
  %v3879 = vadd.f32 %v3499, %v3859
  %v3880 = vadd.f32 %v3500, %v3862
  %s3881 = scalar_lea.vmem %s2, 1152
  %v3882 = vld [vmem:[%s3881] sm:$0xff]
  %v3883 = vld [vmem:[%s3881 + $0x8] sm:$0xff]
  %v3884 = vld [vmem:[%s3881 + $0x10] sm:$0xff]
  %v3885 = vld [vmem:[%s3881 + $0x18] sm:$0xff]
  %v3886 = vld [vmem:[%s3881 + $0x20] sm:$0xff]
  %v3887 = vld [vmem:[%s3881 + $0x28] sm:$0xff]
  %v3888 = vld [vmem:[%s3881 + $0x30] sm:$0xff]
  %v3889 = vld [vmem:[%s3881 + $0x38] sm:$0xff]
  %v3890 = vld [vmem:[%s3881 + $0x40] sm:$0xff]
  %v3891 = vld [vmem:[%s3881 + $0x48] sm:$0xff]
  %v3892 = vld [vmem:[%s3881 + $0x50] sm:$0xff]
  %v3893 = vld [vmem:[%s3881 + $0x58] sm:$0xff]
  %v3894 = vld [vmem:[%s3881 + $0x60] sm:$0xff]
  %v3895 = vld [vmem:[%s3881 + $0x68] sm:$0xff]
  %v3896 = vld [vmem:[%s3881 + $0x70] sm:$0xff]
  %v3897 = vld [vmem:[%s3881 + $0x78] sm:$0xff]
  %v3914 = vunpack.c.l.b16 %v3882
  %v3915 = vunpack.c.h.b16 %v3882
  %v3916 = vunpack.c.l.b16 %v3883
  %v3917 = vunpack.c.h.b16 %v3883
  %v3918 = vunpack.c.l.b16 %v3884
  %v3919 = vunpack.c.h.b16 %v3884
  %v3920 = vunpack.c.l.b16 %v3885
  %v3921 = vunpack.c.h.b16 %v3885
  %v3922 = vunpack.c.l.b16 %v3886
  %v3923 = vunpack.c.h.b16 %v3886
  %v3924 = vunpack.c.l.b16 %v3887
  %v3925 = vunpack.c.h.b16 %v3887
  %v3926 = vunpack.c.l.b16 %v3888
  %v3927 = vunpack.c.h.b16 %v3888
  %v3928 = vunpack.c.l.b16 %v3889
  %v3929 = vunpack.c.h.b16 %v3889
  %v3930 = vunpack.c.l.b16 %v3890
  %v3931 = vunpack.c.h.b16 %v3890
  %v3932 = vunpack.c.l.b16 %v3891
  %v3933 = vunpack.c.h.b16 %v3891
  %v3934 = vunpack.c.l.b16 %v3892
  %v3935 = vunpack.c.h.b16 %v3892
  %v3936 = vunpack.c.l.b16 %v3893
  %v3937 = vunpack.c.h.b16 %v3893
  %v3938 = vunpack.c.l.b16 %v3894
  %v3939 = vunpack.c.h.b16 %v3894
  %v3940 = vunpack.c.l.b16 %v3895
  %v3941 = vunpack.c.h.b16 %v3895
  %v3942 = vunpack.c.l.b16 %v3896
  %v3943 = vunpack.c.h.b16 %v3896
  %v3944 = vunpack.c.l.b16 %v3897
  %v3945 = vunpack.c.h.b16 %v3897
  %v3946 = vpack.c.b16 %v3916, %v3914
  %v3947 = vpack.c.b16 %v3917, %v3915
  %v3948 = vpack.c.b16 %v3920, %v3918
  %v3949 = vpack.c.b16 %v3921, %v3919
  %v3950 = vpack.c.b16 %v3924, %v3922
  %v3951 = vpack.c.b16 %v3925, %v3923
  %v3952 = vpack.c.b16 %v3928, %v3926
  %v3953 = vpack.c.b16 %v3929, %v3927
  %v3954 = vpack.c.b16 %v3932, %v3930
  %v3955 = vpack.c.b16 %v3933, %v3931
  %v3956 = vpack.c.b16 %v3936, %v3934
  %v3957 = vpack.c.b16 %v3937, %v3935
  %v3958 = vpack.c.b16 %v3940, %v3938
  %v3959 = vpack.c.b16 %v3941, %v3939
  %v3960 = vpack.c.b16 %v3944, %v3942
  %v3961 = vpack.c.b16 %v3945, %v3943
  %3978 = vmatprep.subr.bf16.mxu0 0
  %3979 = vmatpush1.bf16.msra.mxu0 %v486
  %3980 = vmatprep.subr.bf16.mxu0 0
  %3981 = vmatpush1.bf16.msra.mxu0 %v485
  %3982 = vmatprep.subr.bf16.mxu0 0
  %3983 = vmatpush1.bf16.msra.mxu0 %v484
  %3984 = vmatprep.subr.bf16.mxu0 0
  %3985 = vmatpush1.bf16.msra.mxu0 %v483
  %3986 = vmatprep.subr.bf16.mxu0 0
  %3987 = vmatpush1.bf16.msra.mxu0 %v482
  %3988 = vmatprep.subr.bf16.mxu0 0
  %3989 = vmatpush1.bf16.msra.mxu0 %v481
  %3990 = vmatprep.subr.bf16.mxu0 0
  %3991 = vmatpush1.bf16.msra.mxu0 %v480
  %3992 = vmatprep.subr.bf16.mxu0 0
  %3993 = vmatpush1.bf16.msra.mxu0 %v479
  %3994 = vmatprep.subr.bf16.mxu0 0
  %3995 = vmatpush2.bf16.msra.mxu0 %v494
  %3996 = vmatprep.subr.bf16.mxu0 0
  %3997 = vmatpush2.bf16.msra.mxu0 %v493
  %3998 = vmatprep.subr.bf16.mxu0 0
  %3999 = vmatpush2.bf16.msra.mxu0 %v492
  %4000 = vmatprep.subr.bf16.mxu0 0
  %4001 = vmatpush2.bf16.msra.mxu0 %v491
  %4002 = vmatprep.subr.bf16.mxu0 0
  %4003 = vmatpush2.bf16.msra.mxu0 %v490
  %4004 = vmatprep.subr.bf16.mxu0 0
  %4005 = vmatpush2.bf16.msra.mxu0 %v489
  %4006 = vmatprep.subr.bf16.mxu0 0
  %4007 = vmatpush2.bf16.msra.mxu0 %v488
  %4008 = vmatprep.subr.bf16.mxu0 0
  %4009 = vmatpush2.bf16.msra.mxu0 %v487
  %4010 = vmatprep.mubr.bf16.mxu0 %v3947
  %4011 = vmatmul.mubr.bf16.gmra.mxu0 %v3946
  %v4012 = vpop.f32.mrf.mxu0
  %v4013 = vadd.f32 0.0, %v4012
  %v4014 = vpop.f32.mrf.mxu0
  %v4015 = vpop.f32.mrf.mxu0
  %v4016 = vadd.f32 0.0, %v4015
  %v4017 = vpop.f32.mrf.mxu0
  %4018 = vmatprep.mubr.bf16.mxu0 %v3949
  %4019 = vmatmul.mubr.bf16.gmra.mxu0 %v3948
  %v4020 = vpop.f32.mrf.mxu0
  %v4021 = vadd.f32 0.0, %v4020
  %v4022 = vpop.f32.mrf.mxu0
  %v4023 = vpop.f32.mrf.mxu0
  %v4024 = vadd.f32 0.0, %v4023
  %v4025 = vpop.f32.mrf.mxu0
  %4026 = vmatprep.mubr.bf16.mxu0 %v3951
  %4027 = vmatmul.mubr.bf16.gmra.mxu0 %v3950
  %v4028 = vpop.f32.mrf.mxu0
  %v4029 = vadd.f32 0.0, %v4028
  %v4030 = vpop.f32.mrf.mxu0
  %v4031 = vpop.f32.mrf.mxu0
  %v4032 = vadd.f32 0.0, %v4031
  %v4033 = vpop.f32.mrf.mxu0
  %4034 = vmatprep.mubr.bf16.mxu0 %v3953
  %4035 = vmatmul.mubr.bf16.gmra.mxu0 %v3952
  %v4036 = vpop.f32.mrf.mxu0
  %v4037 = vadd.f32 0.0, %v4036
  %v4038 = vpop.f32.mrf.mxu0
  %v4039 = vpop.f32.mrf.mxu0
  %v4040 = vadd.f32 0.0, %v4039
  %v4041 = vpop.f32.mrf.mxu0
  %4042 = vmatprep.mubr.bf16.mxu0 %v3955
  %4043 = vmatmul.mubr.bf16.gmra.mxu0 %v3954
  %v4044 = vpop.f32.mrf.mxu0
  %v4045 = vadd.f32 0.0, %v4044
  %v4046 = vpop.f32.mrf.mxu0
  %v4047 = vpop.f32.mrf.mxu0
  %v4048 = vadd.f32 0.0, %v4047
  %v4049 = vpop.f32.mrf.mxu0
  %4050 = vmatprep.mubr.bf16.mxu0 %v3957
  %4051 = vmatmul.mubr.bf16.gmra.mxu0 %v3956
  %v4052 = vpop.f32.mrf.mxu0
  %v4053 = vadd.f32 0.0, %v4052
  %v4054 = vpop.f32.mrf.mxu0
  %v4055 = vpop.f32.mrf.mxu0
  %v4056 = vadd.f32 0.0, %v4055
  %v4057 = vpop.f32.mrf.mxu0
  %4058 = vmatprep.mubr.bf16.mxu0 %v3959
  %4059 = vmatmul.mubr.bf16.gmra.mxu0 %v3958
  %v4060 = vpop.f32.mrf.mxu0
  %v4061 = vadd.f32 0.0, %v4060
  %v4062 = vpop.f32.mrf.mxu0
  %v4063 = vpop.f32.mrf.mxu0
  %v4064 = vadd.f32 0.0, %v4063
  %v4065 = vpop.f32.mrf.mxu0
  %4066 = vmatprep.mubr.bf16.mxu0 %v3961
  %4067 = vmatmul.mubr.bf16.gmra.mxu0 %v3960
  %v4068 = vpop.f32.mrf.mxu0
  %v4069 = vadd.f32 0.0, %v4068
  %v4070 = vpop.f32.mrf.mxu0
  %v4071 = vpop.f32.mrf.mxu0
  %v4072 = vadd.f32 0.0, %v4071
  %v4073 = vpop.f32.mrf.mxu0
  %4074 = vdwg.mxu0
  %v4075 = vpack.c.bf16 %v4016, %v4013
  %v4076 = vpack.c.bf16 %v4024, %v4021
  %v4077 = vpack.c.bf16 %v4032, %v4029
  %v4078 = vpack.c.bf16 %v4040, %v4037
  %v4079 = vpack.c.bf16 %v4048, %v4045
  %v4080 = vpack.c.bf16 %v4056, %v4053
  %v4081 = vpack.c.bf16 %v4064, %v4061
  %v4082 = vpack.c.bf16 %v4072, %v4069
  %s4083 = scalar_lea.vmem %s3, 576
  %v4084 = vld [vmem:[%s4083] sm:$0xf]
  %v4085 = vld [vmem:[%s4083 + $0x4] sm:$0xf]
  %v4086 = vld [vmem:[%s4083 + $0x8] sm:$0xf]
  %v4087 = vld [vmem:[%s4083 + $0xc] sm:$0xf]
  %v4088 = vld [vmem:[%s4083 + $0x10] sm:$0xf]
  %v4089 = vld [vmem:[%s4083 + $0x14] sm:$0xf]
  %v4090 = vld [vmem:[%s4083 + $0x18] sm:$0xf]
  %v4091 = vld [vmem:[%s4083 + $0x1c] sm:$0xf]
  %v4092 = vld [vmem:[%s4083 + $0x20] sm:$0xf]
  %v4093 = vld [vmem:[%s4083 + $0x24] sm:$0xf]
  %v4094 = vld [vmem:[%s4083 + $0x28] sm:$0xf]
  %v4095 = vld [vmem:[%s4083 + $0x2c] sm:$0xf]
  %v4096 = vld [vmem:[%s4083 + $0x30] sm:$0xf]
  %v4097 = vld [vmem:[%s4083 + $0x34] sm:$0xf]
  %v4098 = vld [vmem:[%s4083 + $0x38] sm:$0xf]
  %v4099 = vld [vmem:[%s4083 + $0x3c] sm:$0xf]
  %v4116 = vunpack.c.l.b16 %v4084
  %v4117 = vunpack.c.l.b16 %v4085
  %v4118 = vunpack.c.l.b16 %v4086
  %v4119 = vunpack.c.l.b16 %v4087
  %v4120 = vunpack.c.l.b16 %v4088
  %v4121 = vunpack.c.l.b16 %v4089
  %v4122 = vunpack.c.l.b16 %v4090
  %v4123 = vunpack.c.l.b16 %v4091
  %v4124 = vunpack.c.l.b16 %v4092
  %v4125 = vunpack.c.l.b16 %v4093
  %v4126 = vunpack.c.l.b16 %v4094
  %v4127 = vunpack.c.l.b16 %v4095
  %v4128 = vunpack.c.l.b16 %v4096
  %v4129 = vunpack.c.l.b16 %v4097
  %v4130 = vunpack.c.l.b16 %v4098
  %v4131 = vunpack.c.l.b16 %v4099
  %v4132 = vpack.c.b16 %v4117, %v4116
  %v4133 = vpack.c.b16 %v4119, %v4118
  %v4134 = vpack.c.b16 %v4121, %v4120
  %v4135 = vpack.c.b16 %v4123, %v4122
  %v4136 = vpack.c.b16 %v4125, %v4124
  %v4137 = vpack.c.b16 %v4127, %v4126
  %v4138 = vpack.c.b16 %v4129, %v4128
  %v4139 = vpack.c.b16 %v4131, %v4130
  %4148 = vmatprep.subr.bf16.mxu0 0
  %4149 = vmatpush1.bf16.msra.mxu0 %v4139
  %4150 = vmatprep.subr.bf16.mxu0 0
  %4151 = vmatpush1.bf16.msra.mxu0 %v4138
  %4152 = vmatprep.subr.bf16.mxu0 0
  %4153 = vmatpush1.bf16.msra.mxu0 %v4137
  %4154 = vmatprep.subr.bf16.mxu0 0
  %4155 = vmatpush1.bf16.msra.mxu0 %v4136
  %4156 = vmatprep.subr.bf16.mxu0 0
  %4157 = vmatpush1.bf16.msra.mxu0 %v4135
  %4158 = vmatprep.subr.bf16.mxu0 0
  %4159 = vmatpush1.bf16.msra.mxu0 %v4134
  %4160 = vmatprep.subr.bf16.mxu0 0
  %4161 = vmatpush1.bf16.msra.mxu0 %v4133
  %4162 = vmatprep.subr.bf16.mxu0 0
  %4163 = vmatpush1.bf16.msra.mxu0 %v4132
  %4164 = vmatprep.subr.bf16.mxu0 0
  %4165 = vmatpush2.bf16.msra.mxu0 0
  %4166 = vmatprep.subr.bf16.mxu0 0
  %4167 = vmatpush2.bf16.msra.mxu0 0
  %4168 = vmatprep.subr.bf16.mxu0 0
  %4169 = vmatpush2.bf16.msra.mxu0 0
  %4170 = vmatprep.subr.bf16.mxu0 0
  %4171 = vmatpush2.bf16.msra.mxu0 0
  %4172 = vmatprep.subr.bf16.mxu0 0
  %4173 = vmatpush2.bf16.msra.mxu0 0
  %4174 = vmatprep.subr.bf16.mxu0 0
  %4175 = vmatpush2.bf16.msra.mxu0 0
  %4176 = vmatprep.subr.bf16.mxu0 0
  %4177 = vmatpush2.bf16.msra.mxu0 0
  %4178 = vmatprep.subr.bf16.mxu0 0
  %4179 = vmatpush2.bf16.msra.mxu0 0
  %4180 = vmatprep.mubr.bf16.mxu0 0
  %4181 = vmatmul.mubr.bf16.gmra.mxu0 %v4075
  %v4182 = vpop.f32.mrf.mxu0
  %v4183 = vadd.f32 0.0, %v4182
  %v4184 = vpop.f32.mrf.mxu0
  %v4185 = vpop.f32.mrf.mxu0
  %v4186 = vadd.f32 0.0, %v4185
  %v4187 = vpop.f32.mrf.mxu0
  %4188 = vmatprep.mubr.bf16.mxu0 0
  %4189 = vmatmul.mubr.bf16.gmra.mxu0 %v4076
  %v4190 = vpop.f32.mrf.mxu0
  %v4191 = vadd.f32 0.0, %v4190
  %v4192 = vpop.f32.mrf.mxu0
  %v4193 = vpop.f32.mrf.mxu0
  %v4194 = vadd.f32 0.0, %v4193
  %v4195 = vpop.f32.mrf.mxu0
  %4196 = vmatprep.mubr.bf16.mxu0 0
  %4197 = vmatmul.mubr.bf16.gmra.mxu0 %v4077
  %v4198 = vpop.f32.mrf.mxu0
  %v4199 = vadd.f32 0.0, %v4198
  %v4200 = vpop.f32.mrf.mxu0
  %v4201 = vpop.f32.mrf.mxu0
  %v4202 = vadd.f32 0.0, %v4201
  %v4203 = vpop.f32.mrf.mxu0
  %4204 = vmatprep.mubr.bf16.mxu0 0
  %4205 = vmatmul.mubr.bf16.gmra.mxu0 %v4078
  %v4206 = vpop.f32.mrf.mxu0
  %v4207 = vadd.f32 0.0, %v4206
  %v4208 = vpop.f32.mrf.mxu0
  %v4209 = vpop.f32.mrf.mxu0
  %v4210 = vadd.f32 0.0, %v4209
  %v4211 = vpop.f32.mrf.mxu0
  %4212 = vmatprep.mubr.bf16.mxu0 0
  %4213 = vmatmul.mubr.bf16.gmra.mxu0 %v4079
  %v4214 = vpop.f32.mrf.mxu0
  %v4215 = vadd.f32 0.0, %v4214
  %v4216 = vpop.f32.mrf.mxu0
  %v4217 = vpop.f32.mrf.mxu0
  %v4218 = vadd.f32 0.0, %v4217
  %v4219 = vpop.f32.mrf.mxu0
  %4220 = vmatprep.mubr.bf16.mxu0 0
  %4221 = vmatmul.mubr.bf16.gmra.mxu0 %v4080
  %v4222 = vpop.f32.mrf.mxu0
  %v4223 = vadd.f32 0.0, %v4222
  %v4224 = vpop.f32.mrf.mxu0
  %v4225 = vpop.f32.mrf.mxu0
  %v4226 = vadd.f32 0.0, %v4225
  %v4227 = vpop.f32.mrf.mxu0
  %4228 = vmatprep.mubr.bf16.mxu0 0
  %4229 = vmatmul.mubr.bf16.gmra.mxu0 %v4081
  %v4230 = vpop.f32.mrf.mxu0
  %v4231 = vadd.f32 0.0, %v4230
  %v4232 = vpop.f32.mrf.mxu0
  %v4233 = vpop.f32.mrf.mxu0
  %v4234 = vadd.f32 0.0, %v4233
  %v4235 = vpop.f32.mrf.mxu0
  %4236 = vmatprep.mubr.bf16.mxu0 0
  %4237 = vmatmul.mubr.bf16.gmra.mxu0 %v4082
  %v4238 = vpop.f32.mrf.mxu0
  %v4239 = vadd.f32 0.0, %v4238
  %v4240 = vpop.f32.mrf.mxu0
  %v4241 = vpop.f32.mrf.mxu0
  %v4242 = vadd.f32 0.0, %v4241
  %v4243 = vpop.f32.mrf.mxu0
  %4244 = vdwg.mxu0
  %v4245 = vadd.f32 %v3865, %v4183
  %v4246 = vadd.f32 %v3866, %v4186
  %v4247 = vadd.f32 %v3867, %v4191
  %v4248 = vadd.f32 %v3868, %v4194
  %v4249 = vadd.f32 %v3869, %v4199
  %v4250 = vadd.f32 %v3870, %v4202
  %v4251 = vadd.f32 %v3871, %v4207
  %v4252 = vadd.f32 %v3872, %v4210
  %v4253 = vadd.f32 %v3873, %v4215
  %v4254 = vadd.f32 %v3874, %v4218
  %v4255 = vadd.f32 %v3875, %v4223
  %v4256 = vadd.f32 %v3876, %v4226
  %v4257 = vadd.f32 %v3877, %v4231
  %v4258 = vadd.f32 %v3878, %v4234
  %v4259 = vadd.f32 %v3879, %v4239
  %v4260 = vadd.f32 %v3880, %v4242
  %s4261 = scalar_lea.vmem %s2, 1280
  %v4262 = vld [vmem:[%s4261] sm:$0xff]
  %v4263 = vld [vmem:[%s4261 + $0x8] sm:$0xff]
  %v4264 = vld [vmem:[%s4261 + $0x10] sm:$0xff]
  %v4265 = vld [vmem:[%s4261 + $0x18] sm:$0xff]
  %v4266 = vld [vmem:[%s4261 + $0x20] sm:$0xff]
  %v4267 = vld [vmem:[%s4261 + $0x28] sm:$0xff]
  %v4268 = vld [vmem:[%s4261 + $0x30] sm:$0xff]
  %v4269 = vld [vmem:[%s4261 + $0x38] sm:$0xff]
  %v4270 = vld [vmem:[%s4261 + $0x40] sm:$0xff]
  %v4271 = vld [vmem:[%s4261 + $0x48] sm:$0xff]
  %v4272 = vld [vmem:[%s4261 + $0x50] sm:$0xff]
  %v4273 = vld [vmem:[%s4261 + $0x58] sm:$0xff]
  %v4274 = vld [vmem:[%s4261 + $0x60] sm:$0xff]
  %v4275 = vld [vmem:[%s4261 + $0x68] sm:$0xff]
  %v4276 = vld [vmem:[%s4261 + $0x70] sm:$0xff]
  %v4277 = vld [vmem:[%s4261 + $0x78] sm:$0xff]
  %v4294 = vunpack.c.l.b16 %v4262
  %v4295 = vunpack.c.h.b16 %v4262
  %v4296 = vunpack.c.l.b16 %v4263
  %v4297 = vunpack.c.h.b16 %v4263
  %v4298 = vunpack.c.l.b16 %v4264
  %v4299 = vunpack.c.h.b16 %v4264
  %v4300 = vunpack.c.l.b16 %v4265
  %v4301 = vunpack.c.h.b16 %v4265
  %v4302 = vunpack.c.l.b16 %v4266
  %v4303 = vunpack.c.h.b16 %v4266
  %v4304 = vunpack.c.l.b16 %v4267
  %v4305 = vunpack.c.h.b16 %v4267
  %v4306 = vunpack.c.l.b16 %v4268
  %v4307 = vunpack.c.h.b16 %v4268
  %v4308 = vunpack.c.l.b16 %v4269
  %v4309 = vunpack.c.h.b16 %v4269
  %v4310 = vunpack.c.l.b16 %v4270
  %v4311 = vunpack.c.h.b16 %v4270
  %v4312 = vunpack.c.l.b16 %v4271
  %v4313 = vunpack.c.h.b16 %v4271
  %v4314 = vunpack.c.l.b16 %v4272
  %v4315 = vunpack.c.h.b16 %v4272
  %v4316 = vunpack.c.l.b16 %v4273
  %v4317 = vunpack.c.h.b16 %v4273
  %v4318 = vunpack.c.l.b16 %v4274
  %v4319 = vunpack.c.h.b16 %v4274
  %v4320 = vunpack.c.l.b16 %v4275
  %v4321 = vunpack.c.h.b16 %v4275
  %v4322 = vunpack.c.l.b16 %v4276
  %v4323 = vunpack.c.h.b16 %v4276
  %v4324 = vunpack.c.l.b16 %v4277
  %v4325 = vunpack.c.h.b16 %v4277
  %v4326 = vpack.c.b16 %v4296, %v4294
  %v4327 = vpack.c.b16 %v4297, %v4295
  %v4328 = vpack.c.b16 %v4300, %v4298
  %v4329 = vpack.c.b16 %v4301, %v4299
  %v4330 = vpack.c.b16 %v4304, %v4302
  %v4331 = vpack.c.b16 %v4305, %v4303
  %v4332 = vpack.c.b16 %v4308, %v4306
  %v4333 = vpack.c.b16 %v4309, %v4307
  %v4334 = vpack.c.b16 %v4312, %v4310
  %v4335 = vpack.c.b16 %v4313, %v4311
  %v4336 = vpack.c.b16 %v4316, %v4314
  %v4337 = vpack.c.b16 %v4317, %v4315
  %v4338 = vpack.c.b16 %v4320, %v4318
  %v4339 = vpack.c.b16 %v4321, %v4319
  %v4340 = vpack.c.b16 %v4324, %v4322
  %v4341 = vpack.c.b16 %v4325, %v4323
  %4358 = vmatprep.subr.bf16.mxu0 0
  %4359 = vmatpush1.bf16.msra.mxu0 %v486
  %4360 = vmatprep.subr.bf16.mxu0 0
  %4361 = vmatpush1.bf16.msra.mxu0 %v485
  %4362 = vmatprep.subr.bf16.mxu0 0
  %4363 = vmatpush1.bf16.msra.mxu0 %v484
  %4364 = vmatprep.subr.bf16.mxu0 0
  %4365 = vmatpush1.bf16.msra.mxu0 %v483
  %4366 = vmatprep.subr.bf16.mxu0 0
  %4367 = vmatpush1.bf16.msra.mxu0 %v482
  %4368 = vmatprep.subr.bf16.mxu0 0
  %4369 = vmatpush1.bf16.msra.mxu0 %v481
  %4370 = vmatprep.subr.bf16.mxu0 0
  %4371 = vmatpush1.bf16.msra.mxu0 %v480
  %4372 = vmatprep.subr.bf16.mxu0 0
  %4373 = vmatpush1.bf16.msra.mxu0 %v479
  %4374 = vmatprep.subr.bf16.mxu0 0
  %4375 = vmatpush2.bf16.msra.mxu0 %v494
  %4376 = vmatprep.subr.bf16.mxu0 0
  %4377 = vmatpush2.bf16.msra.mxu0 %v493
  %4378 = vmatprep.subr.bf16.mxu0 0
  %4379 = vmatpush2.bf16.msra.mxu0 %v492
  %4380 = vmatprep.subr.bf16.mxu0 0
  %4381 = vmatpush2.bf16.msra.mxu0 %v491
  %4382 = vmatprep.subr.bf16.mxu0 0
  %4383 = vmatpush2.bf16.msra.mxu0 %v490
  %4384 = vmatprep.subr.bf16.mxu0 0
  %4385 = vmatpush2.bf16.msra.mxu0 %v489
  %4386 = vmatprep.subr.bf16.mxu0 0
  %4387 = vmatpush2.bf16.msra.mxu0 %v488
  %4388 = vmatprep.subr.bf16.mxu0 0
  %4389 = vmatpush2.bf16.msra.mxu0 %v487
  %4390 = vmatprep.mubr.bf16.mxu0 %v4327
  %4391 = vmatmul.mubr.bf16.gmra.mxu0 %v4326
  %v4392 = vpop.f32.mrf.mxu0
  %v4393 = vadd.f32 0.0, %v4392
  %v4394 = vpop.f32.mrf.mxu0
  %v4395 = vpop.f32.mrf.mxu0
  %v4396 = vadd.f32 0.0, %v4395
  %v4397 = vpop.f32.mrf.mxu0
  %4398 = vmatprep.mubr.bf16.mxu0 %v4329
  %4399 = vmatmul.mubr.bf16.gmra.mxu0 %v4328
  %v4400 = vpop.f32.mrf.mxu0
  %v4401 = vadd.f32 0.0, %v4400
  %v4402 = vpop.f32.mrf.mxu0
  %v4403 = vpop.f32.mrf.mxu0
  %v4404 = vadd.f32 0.0, %v4403
  %v4405 = vpop.f32.mrf.mxu0
  %4406 = vmatprep.mubr.bf16.mxu0 %v4331
  %4407 = vmatmul.mubr.bf16.gmra.mxu0 %v4330
  %v4408 = vpop.f32.mrf.mxu0
  %v4409 = vadd.f32 0.0, %v4408
  %v4410 = vpop.f32.mrf.mxu0
  %v4411 = vpop.f32.mrf.mxu0
  %v4412 = vadd.f32 0.0, %v4411
  %v4413 = vpop.f32.mrf.mxu0
  %4414 = vmatprep.mubr.bf16.mxu0 %v4333
  %4415 = vmatmul.mubr.bf16.gmra.mxu0 %v4332
  %v4416 = vpop.f32.mrf.mxu0
  %v4417 = vadd.f32 0.0, %v4416
  %v4418 = vpop.f32.mrf.mxu0
  %v4419 = vpop.f32.mrf.mxu0
  %v4420 = vadd.f32 0.0, %v4419
  %v4421 = vpop.f32.mrf.mxu0
  %4422 = vmatprep.mubr.bf16.mxu0 %v4335
  %4423 = vmatmul.mubr.bf16.gmra.mxu0 %v4334
  %v4424 = vpop.f32.mrf.mxu0
  %v4425 = vadd.f32 0.0, %v4424
  %v4426 = vpop.f32.mrf.mxu0
  %v4427 = vpop.f32.mrf.mxu0
  %v4428 = vadd.f32 0.0, %v4427
  %v4429 = vpop.f32.mrf.mxu0
  %4430 = vmatprep.mubr.bf16.mxu0 %v4337
  %4431 = vmatmul.mubr.bf16.gmra.mxu0 %v4336
  %v4432 = vpop.f32.mrf.mxu0
  %v4433 = vadd.f32 0.0, %v4432
  %v4434 = vpop.f32.mrf.mxu0
  %v4435 = vpop.f32.mrf.mxu0
  %v4436 = vadd.f32 0.0, %v4435
  %v4437 = vpop.f32.mrf.mxu0
  %4438 = vmatprep.mubr.bf16.mxu0 %v4339
  %4439 = vmatmul.mubr.bf16.gmra.mxu0 %v4338
  %v4440 = vpop.f32.mrf.mxu0
  %v4441 = vadd.f32 0.0, %v4440
  %v4442 = vpop.f32.mrf.mxu0
  %v4443 = vpop.f32.mrf.mxu0
  %v4444 = vadd.f32 0.0, %v4443
  %v4445 = vpop.f32.mrf.mxu0
  %4446 = vmatprep.mubr.bf16.mxu0 %v4341
  %4447 = vmatmul.mubr.bf16.gmra.mxu0 %v4340
  %v4448 = vpop.f32.mrf.mxu0
  %v4449 = vadd.f32 0.0, %v4448
  %v4450 = vpop.f32.mrf.mxu0
  %v4451 = vpop.f32.mrf.mxu0
  %v4452 = vadd.f32 0.0, %v4451
  %v4453 = vpop.f32.mrf.mxu0
  %4454 = vdwg.mxu0
  %v4455 = vpack.c.bf16 %v4396, %v4393
  %v4456 = vpack.c.bf16 %v4404, %v4401
  %v4457 = vpack.c.bf16 %v4412, %v4409
  %v4458 = vpack.c.bf16 %v4420, %v4417
  %v4459 = vpack.c.bf16 %v4428, %v4425
  %v4460 = vpack.c.bf16 %v4436, %v4433
  %v4461 = vpack.c.bf16 %v4444, %v4441
  %v4462 = vpack.c.bf16 %v4452, %v4449
  %s4463 = scalar_lea.vmem %s3, 640
  %v4464 = vld [vmem:[%s4463] sm:$0xf]
  %v4465 = vld [vmem:[%s4463 + $0x4] sm:$0xf]
  %v4466 = vld [vmem:[%s4463 + $0x8] sm:$0xf]
  %v4467 = vld [vmem:[%s4463 + $0xc] sm:$0xf]
  %v4468 = vld [vmem:[%s4463 + $0x10] sm:$0xf]
  %v4469 = vld [vmem:[%s4463 + $0x14] sm:$0xf]
  %v4470 = vld [vmem:[%s4463 + $0x18] sm:$0xf]
  %v4471 = vld [vmem:[%s4463 + $0x1c] sm:$0xf]
  %v4472 = vld [vmem:[%s4463 + $0x20] sm:$0xf]
  %v4473 = vld [vmem:[%s4463 + $0x24] sm:$0xf]
  %v4474 = vld [vmem:[%s4463 + $0x28] sm:$0xf]
  %v4475 = vld [vmem:[%s4463 + $0x2c] sm:$0xf]
  %v4476 = vld [vmem:[%s4463 + $0x30] sm:$0xf]
  %v4477 = vld [vmem:[%s4463 + $0x34] sm:$0xf]
  %v4478 = vld [vmem:[%s4463 + $0x38] sm:$0xf]
  %v4479 = vld [vmem:[%s4463 + $0x3c] sm:$0xf]
  %v4496 = vunpack.c.l.b16 %v4464
  %v4497 = vunpack.c.l.b16 %v4465
  %v4498 = vunpack.c.l.b16 %v4466
  %v4499 = vunpack.c.l.b16 %v4467
  %v4500 = vunpack.c.l.b16 %v4468
  %v4501 = vunpack.c.l.b16 %v4469
  %v4502 = vunpack.c.l.b16 %v4470
  %v4503 = vunpack.c.l.b16 %v4471
  %v4504 = vunpack.c.l.b16 %v4472
  %v4505 = vunpack.c.l.b16 %v4473
  %v4506 = vunpack.c.l.b16 %v4474
  %v4507 = vunpack.c.l.b16 %v4475
  %v4508 = vunpack.c.l.b16 %v4476
  %v4509 = vunpack.c.l.b16 %v4477
  %v4510 = vunpack.c.l.b16 %v4478
  %v4511 = vunpack.c.l.b16 %v4479
  %v4512 = vpack.c.b16 %v4497, %v4496
  %v4513 = vpack.c.b16 %v4499, %v4498
  %v4514 = vpack.c.b16 %v4501, %v4500
  %v4515 = vpack.c.b16 %v4503, %v4502
  %v4516 = vpack.c.b16 %v4505, %v4504
  %v4517 = vpack.c.b16 %v4507, %v4506
  %v4518 = vpack.c.b16 %v4509, %v4508
  %v4519 = vpack.c.b16 %v4511, %v4510
  %4528 = vmatprep.subr.bf16.mxu0 0
  %4529 = vmatpush1.bf16.msra.mxu0 %v4519
  %4530 = vmatprep.subr.bf16.mxu0 0
  %4531 = vmatpush1.bf16.msra.mxu0 %v4518
  %4532 = vmatprep.subr.bf16.mxu0 0
  %4533 = vmatpush1.bf16.msra.mxu0 %v4517
  %4534 = vmatprep.subr.bf16.mxu0 0
  %4535 = vmatpush1.bf16.msra.mxu0 %v4516
  %4536 = vmatprep.subr.bf16.mxu0 0
  %4537 = vmatpush1.bf16.msra.mxu0 %v4515
  %4538 = vmatprep.subr.bf16.mxu0 0
  %4539 = vmatpush1.bf16.msra.mxu0 %v4514
  %4540 = vmatprep.subr.bf16.mxu0 0
  %4541 = vmatpush1.bf16.msra.mxu0 %v4513
  %4542 = vmatprep.subr.bf16.mxu0 0
  %4543 = vmatpush1.bf16.msra.mxu0 %v4512
  %4544 = vmatprep.subr.bf16.mxu0 0
  %4545 = vmatpush2.bf16.msra.mxu0 0
  %4546 = vmatprep.subr.bf16.mxu0 0
  %4547 = vmatpush2.bf16.msra.mxu0 0
  %4548 = vmatprep.subr.bf16.mxu0 0
  %4549 = vmatpush2.bf16.msra.mxu0 0
  %4550 = vmatprep.subr.bf16.mxu0 0
  %4551 = vmatpush2.bf16.msra.mxu0 0
  %4552 = vmatprep.subr.bf16.mxu0 0
  %4553 = vmatpush2.bf16.msra.mxu0 0
  %4554 = vmatprep.subr.bf16.mxu0 0
  %4555 = vmatpush2.bf16.msra.mxu0 0
  %4556 = vmatprep.subr.bf16.mxu0 0
  %4557 = vmatpush2.bf16.msra.mxu0 0
  %4558 = vmatprep.subr.bf16.mxu0 0
  %4559 = vmatpush2.bf16.msra.mxu0 0
  %4560 = vmatprep.mubr.bf16.mxu0 0
  %4561 = vmatmul.mubr.bf16.gmra.mxu0 %v4455
  %v4562 = vpop.f32.mrf.mxu0
  %v4563 = vadd.f32 0.0, %v4562
  %v4564 = vpop.f32.mrf.mxu0
  %v4565 = vpop.f32.mrf.mxu0
  %v4566 = vadd.f32 0.0, %v4565
  %v4567 = vpop.f32.mrf.mxu0
  %4568 = vmatprep.mubr.bf16.mxu0 0
  %4569 = vmatmul.mubr.bf16.gmra.mxu0 %v4456
  %v4570 = vpop.f32.mrf.mxu0
  %v4571 = vadd.f32 0.0, %v4570
  %v4572 = vpop.f32.mrf.mxu0
  %v4573 = vpop.f32.mrf.mxu0
  %v4574 = vadd.f32 0.0, %v4573
  %v4575 = vpop.f32.mrf.mxu0
  %4576 = vmatprep.mubr.bf16.mxu0 0
  %4577 = vmatmul.mubr.bf16.gmra.mxu0 %v4457
  %v4578 = vpop.f32.mrf.mxu0
  %v4579 = vadd.f32 0.0, %v4578
  %v4580 = vpop.f32.mrf.mxu0
  %v4581 = vpop.f32.mrf.mxu0
  %v4582 = vadd.f32 0.0, %v4581
  %v4583 = vpop.f32.mrf.mxu0
  %4584 = vmatprep.mubr.bf16.mxu0 0
  %4585 = vmatmul.mubr.bf16.gmra.mxu0 %v4458
  %v4586 = vpop.f32.mrf.mxu0
  %v4587 = vadd.f32 0.0, %v4586
  %v4588 = vpop.f32.mrf.mxu0
  %v4589 = vpop.f32.mrf.mxu0
  %v4590 = vadd.f32 0.0, %v4589
  %v4591 = vpop.f32.mrf.mxu0
  %4592 = vmatprep.mubr.bf16.mxu0 0
  %4593 = vmatmul.mubr.bf16.gmra.mxu0 %v4459
  %v4594 = vpop.f32.mrf.mxu0
  %v4595 = vadd.f32 0.0, %v4594
  %v4596 = vpop.f32.mrf.mxu0
  %v4597 = vpop.f32.mrf.mxu0
  %v4598 = vadd.f32 0.0, %v4597
  %v4599 = vpop.f32.mrf.mxu0
  %4600 = vmatprep.mubr.bf16.mxu0 0
  %4601 = vmatmul.mubr.bf16.gmra.mxu0 %v4460
  %v4602 = vpop.f32.mrf.mxu0
  %v4603 = vadd.f32 0.0, %v4602
  %v4604 = vpop.f32.mrf.mxu0
  %v4605 = vpop.f32.mrf.mxu0
  %v4606 = vadd.f32 0.0, %v4605
  %v4607 = vpop.f32.mrf.mxu0
  %4608 = vmatprep.mubr.bf16.mxu0 0
  %4609 = vmatmul.mubr.bf16.gmra.mxu0 %v4461
  %v4610 = vpop.f32.mrf.mxu0
  %v4611 = vadd.f32 0.0, %v4610
  %v4612 = vpop.f32.mrf.mxu0
  %v4613 = vpop.f32.mrf.mxu0
  %v4614 = vadd.f32 0.0, %v4613
  %v4615 = vpop.f32.mrf.mxu0
  %4616 = vmatprep.mubr.bf16.mxu0 0
  %4617 = vmatmul.mubr.bf16.gmra.mxu0 %v4462
  %v4618 = vpop.f32.mrf.mxu0
  %v4619 = vadd.f32 0.0, %v4618
  %v4620 = vpop.f32.mrf.mxu0
  %v4621 = vpop.f32.mrf.mxu0
  %v4622 = vadd.f32 0.0, %v4621
  %v4623 = vpop.f32.mrf.mxu0
  %4624 = vdwg.mxu0
  %v4625 = vadd.f32 %v4245, %v4563
  %v4626 = vadd.f32 %v4246, %v4566
  %v4627 = vadd.f32 %v4247, %v4571
  %v4628 = vadd.f32 %v4248, %v4574
  %v4629 = vadd.f32 %v4249, %v4579
  %v4630 = vadd.f32 %v4250, %v4582
  %v4631 = vadd.f32 %v4251, %v4587
  %v4632 = vadd.f32 %v4252, %v4590
  %v4633 = vadd.f32 %v4253, %v4595
  %v4634 = vadd.f32 %v4254, %v4598
  %v4635 = vadd.f32 %v4255, %v4603
  %v4636 = vadd.f32 %v4256, %v4606
  %v4637 = vadd.f32 %v4257, %v4611
  %v4638 = vadd.f32 %v4258, %v4614
  %v4639 = vadd.f32 %v4259, %v4619
  %v4640 = vadd.f32 %v4260, %v4622
  %s4641 = scalar_lea.vmem %s2, 1408
  %v4642 = vld [vmem:[%s4641] sm:$0xff]
  %v4643 = vld [vmem:[%s4641 + $0x8] sm:$0xff]
  %v4644 = vld [vmem:[%s4641 + $0x10] sm:$0xff]
  %v4645 = vld [vmem:[%s4641 + $0x18] sm:$0xff]
  %v4646 = vld [vmem:[%s4641 + $0x20] sm:$0xff]
  %v4647 = vld [vmem:[%s4641 + $0x28] sm:$0xff]
  %v4648 = vld [vmem:[%s4641 + $0x30] sm:$0xff]
  %v4649 = vld [vmem:[%s4641 + $0x38] sm:$0xff]
  %v4650 = vld [vmem:[%s4641 + $0x40] sm:$0xff]
  %v4651 = vld [vmem:[%s4641 + $0x48] sm:$0xff]
  %v4652 = vld [vmem:[%s4641 + $0x50] sm:$0xff]
  %v4653 = vld [vmem:[%s4641 + $0x58] sm:$0xff]
  %v4654 = vld [vmem:[%s4641 + $0x60] sm:$0xff]
  %v4655 = vld [vmem:[%s4641 + $0x68] sm:$0xff]
  %v4656 = vld [vmem:[%s4641 + $0x70] sm:$0xff]
  %v4657 = vld [vmem:[%s4641 + $0x78] sm:$0xff]
  %v4674 = vunpack.c.l.b16 %v4642
  %v4675 = vunpack.c.h.b16 %v4642
  %v4676 = vunpack.c.l.b16 %v4643
  %v4677 = vunpack.c.h.b16 %v4643
  %v4678 = vunpack.c.l.b16 %v4644
  %v4679 = vunpack.c.h.b16 %v4644
  %v4680 = vunpack.c.l.b16 %v4645
  %v4681 = vunpack.c.h.b16 %v4645
  %v4682 = vunpack.c.l.b16 %v4646
  %v4683 = vunpack.c.h.b16 %v4646
  %v4684 = vunpack.c.l.b16 %v4647
  %v4685 = vunpack.c.h.b16 %v4647
  %v4686 = vunpack.c.l.b16 %v4648
  %v4687 = vunpack.c.h.b16 %v4648
  %v4688 = vunpack.c.l.b16 %v4649
  %v4689 = vunpack.c.h.b16 %v4649
  %v4690 = vunpack.c.l.b16 %v4650
  %v4691 = vunpack.c.h.b16 %v4650
  %v4692 = vunpack.c.l.b16 %v4651
  %v4693 = vunpack.c.h.b16 %v4651
  %v4694 = vunpack.c.l.b16 %v4652
  %v4695 = vunpack.c.h.b16 %v4652
  %v4696 = vunpack.c.l.b16 %v4653
  %v4697 = vunpack.c.h.b16 %v4653
  %v4698 = vunpack.c.l.b16 %v4654
  %v4699 = vunpack.c.h.b16 %v4654
  %v4700 = vunpack.c.l.b16 %v4655
  %v4701 = vunpack.c.h.b16 %v4655
  %v4702 = vunpack.c.l.b16 %v4656
  %v4703 = vunpack.c.h.b16 %v4656
  %v4704 = vunpack.c.l.b16 %v4657
  %v4705 = vunpack.c.h.b16 %v4657
  %v4706 = vpack.c.b16 %v4676, %v4674
  %v4707 = vpack.c.b16 %v4677, %v4675
  %v4708 = vpack.c.b16 %v4680, %v4678
  %v4709 = vpack.c.b16 %v4681, %v4679
  %v4710 = vpack.c.b16 %v4684, %v4682
  %v4711 = vpack.c.b16 %v4685, %v4683
  %v4712 = vpack.c.b16 %v4688, %v4686
  %v4713 = vpack.c.b16 %v4689, %v4687
  %v4714 = vpack.c.b16 %v4692, %v4690
  %v4715 = vpack.c.b16 %v4693, %v4691
  %v4716 = vpack.c.b16 %v4696, %v4694
  %v4717 = vpack.c.b16 %v4697, %v4695
  %v4718 = vpack.c.b16 %v4700, %v4698
  %v4719 = vpack.c.b16 %v4701, %v4699
  %v4720 = vpack.c.b16 %v4704, %v4702
  %v4721 = vpack.c.b16 %v4705, %v4703
  %4738 = vmatprep.subr.bf16.mxu0 0
  %4739 = vmatpush1.bf16.msra.mxu0 %v486
  %4740 = vmatprep.subr.bf16.mxu0 0
  %4741 = vmatpush1.bf16.msra.mxu0 %v485
  %4742 = vmatprep.subr.bf16.mxu0 0
  %4743 = vmatpush1.bf16.msra.mxu0 %v484
  %4744 = vmatprep.subr.bf16.mxu0 0
  %4745 = vmatpush1.bf16.msra.mxu0 %v483
  %4746 = vmatprep.subr.bf16.mxu0 0
  %4747 = vmatpush1.bf16.msra.mxu0 %v482
  %4748 = vmatprep.subr.bf16.mxu0 0
  %4749 = vmatpush1.bf16.msra.mxu0 %v481
  %4750 = vmatprep.subr.bf16.mxu0 0
  %4751 = vmatpush1.bf16.msra.mxu0 %v480
  %4752 = vmatprep.subr.bf16.mxu0 0
  %4753 = vmatpush1.bf16.msra.mxu0 %v479
  %4754 = vmatprep.subr.bf16.mxu0 0
  %4755 = vmatpush2.bf16.msra.mxu0 %v494
  %4756 = vmatprep.subr.bf16.mxu0 0
  %4757 = vmatpush2.bf16.msra.mxu0 %v493
  %4758 = vmatprep.subr.bf16.mxu0 0
  %4759 = vmatpush2.bf16.msra.mxu0 %v492
  %4760 = vmatprep.subr.bf16.mxu0 0
  %4761 = vmatpush2.bf16.msra.mxu0 %v491
  %4762 = vmatprep.subr.bf16.mxu0 0
  %4763 = vmatpush2.bf16.msra.mxu0 %v490
  %4764 = vmatprep.subr.bf16.mxu0 0
  %4765 = vmatpush2.bf16.msra.mxu0 %v489
  %4766 = vmatprep.subr.bf16.mxu0 0
  %4767 = vmatpush2.bf16.msra.mxu0 %v488
  %4768 = vmatprep.subr.bf16.mxu0 0
  %4769 = vmatpush2.bf16.msra.mxu0 %v487
  %4770 = vmatprep.mubr.bf16.mxu0 %v4707
  %4771 = vmatmul.mubr.bf16.gmra.mxu0 %v4706
  %v4772 = vpop.f32.mrf.mxu0
  %v4773 = vadd.f32 0.0, %v4772
  %v4774 = vpop.f32.mrf.mxu0
  %v4775 = vpop.f32.mrf.mxu0
  %v4776 = vadd.f32 0.0, %v4775
  %v4777 = vpop.f32.mrf.mxu0
  %4778 = vmatprep.mubr.bf16.mxu0 %v4709
  %4779 = vmatmul.mubr.bf16.gmra.mxu0 %v4708
  %v4780 = vpop.f32.mrf.mxu0
  %v4781 = vadd.f32 0.0, %v4780
  %v4782 = vpop.f32.mrf.mxu0
  %v4783 = vpop.f32.mrf.mxu0
  %v4784 = vadd.f32 0.0, %v4783
  %v4785 = vpop.f32.mrf.mxu0
  %4786 = vmatprep.mubr.bf16.mxu0 %v4711
  %4787 = vmatmul.mubr.bf16.gmra.mxu0 %v4710
  %v4788 = vpop.f32.mrf.mxu0
  %v4789 = vadd.f32 0.0, %v4788
  %v4790 = vpop.f32.mrf.mxu0
  %v4791 = vpop.f32.mrf.mxu0
  %v4792 = vadd.f32 0.0, %v4791
  %v4793 = vpop.f32.mrf.mxu0
  %4794 = vmatprep.mubr.bf16.mxu0 %v4713
  %4795 = vmatmul.mubr.bf16.gmra.mxu0 %v4712
  %v4796 = vpop.f32.mrf.mxu0
  %v4797 = vadd.f32 0.0, %v4796
  %v4798 = vpop.f32.mrf.mxu0
  %v4799 = vpop.f32.mrf.mxu0
  %v4800 = vadd.f32 0.0, %v4799
  %v4801 = vpop.f32.mrf.mxu0
  %4802 = vmatprep.mubr.bf16.mxu0 %v4715
  %4803 = vmatmul.mubr.bf16.gmra.mxu0 %v4714
  %v4804 = vpop.f32.mrf.mxu0
  %v4805 = vadd.f32 0.0, %v4804
  %v4806 = vpop.f32.mrf.mxu0
  %v4807 = vpop.f32.mrf.mxu0
  %v4808 = vadd.f32 0.0, %v4807
  %v4809 = vpop.f32.mrf.mxu0
  %4810 = vmatprep.mubr.bf16.mxu0 %v4717
  %4811 = vmatmul.mubr.bf16.gmra.mxu0 %v4716
  %v4812 = vpop.f32.mrf.mxu0
  %v4813 = vadd.f32 0.0, %v4812
  %v4814 = vpop.f32.mrf.mxu0
  %v4815 = vpop.f32.mrf.mxu0
  %v4816 = vadd.f32 0.0, %v4815
  %v4817 = vpop.f32.mrf.mxu0
  %4818 = vmatprep.mubr.bf16.mxu0 %v4719
  %4819 = vmatmul.mubr.bf16.gmra.mxu0 %v4718
  %v4820 = vpop.f32.mrf.mxu0
  %v4821 = vadd.f32 0.0, %v4820
  %v4822 = vpop.f32.mrf.mxu0
  %v4823 = vpop.f32.mrf.mxu0
  %v4824 = vadd.f32 0.0, %v4823
  %v4825 = vpop.f32.mrf.mxu0
  %4826 = vmatprep.mubr.bf16.mxu0 %v4721
  %4827 = vmatmul.mubr.bf16.gmra.mxu0 %v4720
  %v4828 = vpop.f32.mrf.mxu0
  %v4829 = vadd.f32 0.0, %v4828
  %v4830 = vpop.f32.mrf.mxu0
  %v4831 = vpop.f32.mrf.mxu0
  %v4832 = vadd.f32 0.0, %v4831
  %v4833 = vpop.f32.mrf.mxu0
  %4834 = vdwg.mxu0
  %v4835 = vpack.c.bf16 %v4776, %v4773
  %v4836 = vpack.c.bf16 %v4784, %v4781
  %v4837 = vpack.c.bf16 %v4792, %v4789
  %v4838 = vpack.c.bf16 %v4800, %v4797
  %v4839 = vpack.c.bf16 %v4808, %v4805
  %v4840 = vpack.c.bf16 %v4816, %v4813
  %v4841 = vpack.c.bf16 %v4824, %v4821
  %v4842 = vpack.c.bf16 %v4832, %v4829
  %s4843 = scalar_lea.vmem %s3, 704
  %v4844 = vld [vmem:[%s4843] sm:$0xf]
  %v4845 = vld [vmem:[%s4843 + $0x4] sm:$0xf]
  %v4846 = vld [vmem:[%s4843 + $0x8] sm:$0xf]
  %v4847 = vld [vmem:[%s4843 + $0xc] sm:$0xf]
  %v4848 = vld [vmem:[%s4843 + $0x10] sm:$0xf]
  %v4849 = vld [vmem:[%s4843 + $0x14] sm:$0xf]
  %v4850 = vld [vmem:[%s4843 + $0x18] sm:$0xf]
  %v4851 = vld [vmem:[%s4843 + $0x1c] sm:$0xf]
  %v4852 = vld [vmem:[%s4843 + $0x20] sm:$0xf]
  %v4853 = vld [vmem:[%s4843 + $0x24] sm:$0xf]
  %v4854 = vld [vmem:[%s4843 + $0x28] sm:$0xf]
  %v4855 = vld [vmem:[%s4843 + $0x2c] sm:$0xf]
  %v4856 = vld [vmem:[%s4843 + $0x30] sm:$0xf]
  %v4857 = vld [vmem:[%s4843 + $0x34] sm:$0xf]
  %v4858 = vld [vmem:[%s4843 + $0x38] sm:$0xf]
  %v4859 = vld [vmem:[%s4843 + $0x3c] sm:$0xf]
  %v4876 = vunpack.c.l.b16 %v4844
  %v4877 = vunpack.c.l.b16 %v4845
  %v4878 = vunpack.c.l.b16 %v4846
  %v4879 = vunpack.c.l.b16 %v4847
  %v4880 = vunpack.c.l.b16 %v4848
  %v4881 = vunpack.c.l.b16 %v4849
  %v4882 = vunpack.c.l.b16 %v4850
  %v4883 = vunpack.c.l.b16 %v4851
  %v4884 = vunpack.c.l.b16 %v4852
  %v4885 = vunpack.c.l.b16 %v4853
  %v4886 = vunpack.c.l.b16 %v4854
  %v4887 = vunpack.c.l.b16 %v4855
  %v4888 = vunpack.c.l.b16 %v4856
  %v4889 = vunpack.c.l.b16 %v4857
  %v4890 = vunpack.c.l.b16 %v4858
  %v4891 = vunpack.c.l.b16 %v4859
  %v4892 = vpack.c.b16 %v4877, %v4876
  %v4893 = vpack.c.b16 %v4879, %v4878
  %v4894 = vpack.c.b16 %v4881, %v4880
  %v4895 = vpack.c.b16 %v4883, %v4882
  %v4896 = vpack.c.b16 %v4885, %v4884
  %v4897 = vpack.c.b16 %v4887, %v4886
  %v4898 = vpack.c.b16 %v4889, %v4888
  %v4899 = vpack.c.b16 %v4891, %v4890
  %4908 = vmatprep.subr.bf16.mxu0 0
  %4909 = vmatpush1.bf16.msra.mxu0 %v4899
  %4910 = vmatprep.subr.bf16.mxu0 0
  %4911 = vmatpush1.bf16.msra.mxu0 %v4898
  %4912 = vmatprep.subr.bf16.mxu0 0
  %4913 = vmatpush1.bf16.msra.mxu0 %v4897
  %4914 = vmatprep.subr.bf16.mxu0 0
  %4915 = vmatpush1.bf16.msra.mxu0 %v4896
  %4916 = vmatprep.subr.bf16.mxu0 0
  %4917 = vmatpush1.bf16.msra.mxu0 %v4895
  %4918 = vmatprep.subr.bf16.mxu0 0
  %4919 = vmatpush1.bf16.msra.mxu0 %v4894
  %4920 = vmatprep.subr.bf16.mxu0 0
  %4921 = vmatpush1.bf16.msra.mxu0 %v4893
  %4922 = vmatprep.subr.bf16.mxu0 0
  %4923 = vmatpush1.bf16.msra.mxu0 %v4892
  %4924 = vmatprep.subr.bf16.mxu0 0
  %4925 = vmatpush2.bf16.msra.mxu0 0
  %4926 = vmatprep.subr.bf16.mxu0 0
  %4927 = vmatpush2.bf16.msra.mxu0 0
  %4928 = vmatprep.subr.bf16.mxu0 0
  %4929 = vmatpush2.bf16.msra.mxu0 0
  %4930 = vmatprep.subr.bf16.mxu0 0
  %4931 = vmatpush2.bf16.msra.mxu0 0
  %4932 = vmatprep.subr.bf16.mxu0 0
  %4933 = vmatpush2.bf16.msra.mxu0 0
  %4934 = vmatprep.subr.bf16.mxu0 0
  %4935 = vmatpush2.bf16.msra.mxu0 0
  %4936 = vmatprep.subr.bf16.mxu0 0
  %4937 = vmatpush2.bf16.msra.mxu0 0
  %4938 = vmatprep.subr.bf16.mxu0 0
  %4939 = vmatpush2.bf16.msra.mxu0 0
  %4940 = vmatprep.mubr.bf16.mxu0 0
  %4941 = vmatmul.mubr.bf16.gmra.mxu0 %v4835
  %v4942 = vpop.f32.mrf.mxu0
  %v4943 = vadd.f32 0.0, %v4942
  %v4944 = vpop.f32.mrf.mxu0
  %v4945 = vpop.f32.mrf.mxu0
  %v4946 = vadd.f32 0.0, %v4945
  %v4947 = vpop.f32.mrf.mxu0
  %4948 = vmatprep.mubr.bf16.mxu0 0
  %4949 = vmatmul.mubr.bf16.gmra.mxu0 %v4836
  %v4950 = vpop.f32.mrf.mxu0
  %v4951 = vadd.f32 0.0, %v4950
  %v4952 = vpop.f32.mrf.mxu0
  %v4953 = vpop.f32.mrf.mxu0
  %v4954 = vadd.f32 0.0, %v4953
  %v4955 = vpop.f32.mrf.mxu0
  %4956 = vmatprep.mubr.bf16.mxu0 0
  %4957 = vmatmul.mubr.bf16.gmra.mxu0 %v4837
  %v4958 = vpop.f32.mrf.mxu0
  %v4959 = vadd.f32 0.0, %v4958
  %v4960 = vpop.f32.mrf.mxu0
  %v4961 = vpop.f32.mrf.mxu0
  %v4962 = vadd.f32 0.0, %v4961
  %v4963 = vpop.f32.mrf.mxu0
  %4964 = vmatprep.mubr.bf16.mxu0 0
  %4965 = vmatmul.mubr.bf16.gmra.mxu0 %v4838
  %v4966 = vpop.f32.mrf.mxu0
  %v4967 = vadd.f32 0.0, %v4966
  %v4968 = vpop.f32.mrf.mxu0
  %v4969 = vpop.f32.mrf.mxu0
  %v4970 = vadd.f32 0.0, %v4969
  %v4971 = vpop.f32.mrf.mxu0
  %4972 = vmatprep.mubr.bf16.mxu0 0
  %4973 = vmatmul.mubr.bf16.gmra.mxu0 %v4839
  %v4974 = vpop.f32.mrf.mxu0
  %v4975 = vadd.f32 0.0, %v4974
  %v4976 = vpop.f32.mrf.mxu0
  %v4977 = vpop.f32.mrf.mxu0
  %v4978 = vadd.f32 0.0, %v4977
  %v4979 = vpop.f32.mrf.mxu0
  %4980 = vmatprep.mubr.bf16.mxu0 0
  %4981 = vmatmul.mubr.bf16.gmra.mxu0 %v4840
  %v4982 = vpop.f32.mrf.mxu0
  %v4983 = vadd.f32 0.0, %v4982
  %v4984 = vpop.f32.mrf.mxu0
  %v4985 = vpop.f32.mrf.mxu0
  %v4986 = vadd.f32 0.0, %v4985
  %v4987 = vpop.f32.mrf.mxu0
  %4988 = vmatprep.mubr.bf16.mxu0 0
  %4989 = vmatmul.mubr.bf16.gmra.mxu0 %v4841
  %v4990 = vpop.f32.mrf.mxu0
  %v4991 = vadd.f32 0.0, %v4990
  %v4992 = vpop.f32.mrf.mxu0
  %v4993 = vpop.f32.mrf.mxu0
  %v4994 = vadd.f32 0.0, %v4993
  %v4995 = vpop.f32.mrf.mxu0
  %4996 = vmatprep.mubr.bf16.mxu0 0
  %4997 = vmatmul.mubr.bf16.gmra.mxu0 %v4842
  %v4998 = vpop.f32.mrf.mxu0
  %v4999 = vadd.f32 0.0, %v4998
  %v5000 = vpop.f32.mrf.mxu0
  %v5001 = vpop.f32.mrf.mxu0
  %v5002 = vadd.f32 0.0, %v5001
  %v5003 = vpop.f32.mrf.mxu0
  %5004 = vdwg.mxu0
  %v5005 = vadd.f32 %v4625, %v4943
  %v5006 = vadd.f32 %v4626, %v4946
  %v5007 = vadd.f32 %v4627, %v4951
  %v5008 = vadd.f32 %v4628, %v4954
  %v5009 = vadd.f32 %v4629, %v4959
  %v5010 = vadd.f32 %v4630, %v4962
  %v5011 = vadd.f32 %v4631, %v4967
  %v5012 = vadd.f32 %v4632, %v4970
  %v5013 = vadd.f32 %v4633, %v4975
  %v5014 = vadd.f32 %v4634, %v4978
  %v5015 = vadd.f32 %v4635, %v4983
  %v5016 = vadd.f32 %v4636, %v4986
  %v5017 = vadd.f32 %v4637, %v4991
  %v5018 = vadd.f32 %v4638, %v4994
  %v5019 = vadd.f32 %v4639, %v4999
  %v5020 = vadd.f32 %v4640, %v5002
  %s5021 = scalar_lea.vmem %s2, 1536
  %v5022 = vld [vmem:[%s5021] sm:$0xff]
  %v5023 = vld [vmem:[%s5021 + $0x8] sm:$0xff]
  %v5024 = vld [vmem:[%s5021 + $0x10] sm:$0xff]
  %v5025 = vld [vmem:[%s5021 + $0x18] sm:$0xff]
  %v5026 = vld [vmem:[%s5021 + $0x20] sm:$0xff]
  %v5027 = vld [vmem:[%s5021 + $0x28] sm:$0xff]
  %v5028 = vld [vmem:[%s5021 + $0x30] sm:$0xff]
  %v5029 = vld [vmem:[%s5021 + $0x38] sm:$0xff]
  %v5030 = vld [vmem:[%s5021 + $0x40] sm:$0xff]
  %v5031 = vld [vmem:[%s5021 + $0x48] sm:$0xff]
  %v5032 = vld [vmem:[%s5021 + $0x50] sm:$0xff]
  %v5033 = vld [vmem:[%s5021 + $0x58] sm:$0xff]
  %v5034 = vld [vmem:[%s5021 + $0x60] sm:$0xff]
  %v5035 = vld [vmem:[%s5021 + $0x68] sm:$0xff]
  %v5036 = vld [vmem:[%s5021 + $0x70] sm:$0xff]
  %v5037 = vld [vmem:[%s5021 + $0x78] sm:$0xff]
  %v5054 = vunpack.c.l.b16 %v5022
  %v5055 = vunpack.c.h.b16 %v5022
  %v5056 = vunpack.c.l.b16 %v5023
  %v5057 = vunpack.c.h.b16 %v5023
  %v5058 = vunpack.c.l.b16 %v5024
  %v5059 = vunpack.c.h.b16 %v5024
  %v5060 = vunpack.c.l.b16 %v5025
  %v5061 = vunpack.c.h.b16 %v5025
  %v5062 = vunpack.c.l.b16 %v5026
  %v5063 = vunpack.c.h.b16 %v5026
  %v5064 = vunpack.c.l.b16 %v5027
  %v5065 = vunpack.c.h.b16 %v5027
  %v5066 = vunpack.c.l.b16 %v5028
  %v5067 = vunpack.c.h.b16 %v5028
  %v5068 = vunpack.c.l.b16 %v5029
  %v5069 = vunpack.c.h.b16 %v5029
  %v5070 = vunpack.c.l.b16 %v5030
  %v5071 = vunpack.c.h.b16 %v5030
  %v5072 = vunpack.c.l.b16 %v5031
  %v5073 = vunpack.c.h.b16 %v5031
  %v5074 = vunpack.c.l.b16 %v5032
  %v5075 = vunpack.c.h.b16 %v5032
  %v5076 = vunpack.c.l.b16 %v5033
  %v5077 = vunpack.c.h.b16 %v5033
  %v5078 = vunpack.c.l.b16 %v5034
  %v5079 = vunpack.c.h.b16 %v5034
  %v5080 = vunpack.c.l.b16 %v5035
  %v5081 = vunpack.c.h.b16 %v5035
  %v5082 = vunpack.c.l.b16 %v5036
  %v5083 = vunpack.c.h.b16 %v5036
  %v5084 = vunpack.c.l.b16 %v5037
  %v5085 = vunpack.c.h.b16 %v5037
  %v5086 = vpack.c.b16 %v5056, %v5054
  %v5087 = vpack.c.b16 %v5057, %v5055
  %v5088 = vpack.c.b16 %v5060, %v5058
  %v5089 = vpack.c.b16 %v5061, %v5059
  %v5090 = vpack.c.b16 %v5064, %v5062
  %v5091 = vpack.c.b16 %v5065, %v5063
  %v5092 = vpack.c.b16 %v5068, %v5066
  %v5093 = vpack.c.b16 %v5069, %v5067
  %v5094 = vpack.c.b16 %v5072, %v5070
  %v5095 = vpack.c.b16 %v5073, %v5071
  %v5096 = vpack.c.b16 %v5076, %v5074
  %v5097 = vpack.c.b16 %v5077, %v5075
  %v5098 = vpack.c.b16 %v5080, %v5078
  %v5099 = vpack.c.b16 %v5081, %v5079
  %v5100 = vpack.c.b16 %v5084, %v5082
  %v5101 = vpack.c.b16 %v5085, %v5083
  %5118 = vmatprep.subr.bf16.mxu0 0
  %5119 = vmatpush1.bf16.msra.mxu0 %v486
  %5120 = vmatprep.subr.bf16.mxu0 0
  %5121 = vmatpush1.bf16.msra.mxu0 %v485
  %5122 = vmatprep.subr.bf16.mxu0 0
  %5123 = vmatpush1.bf16.msra.mxu0 %v484
  %5124 = vmatprep.subr.bf16.mxu0 0
  %5125 = vmatpush1.bf16.msra.mxu0 %v483
  %5126 = vmatprep.subr.bf16.mxu0 0
  %5127 = vmatpush1.bf16.msra.mxu0 %v482
  %5128 = vmatprep.subr.bf16.mxu0 0
  %5129 = vmatpush1.bf16.msra.mxu0 %v481
  %5130 = vmatprep.subr.bf16.mxu0 0
  %5131 = vmatpush1.bf16.msra.mxu0 %v480
  %5132 = vmatprep.subr.bf16.mxu0 0
  %5133 = vmatpush1.bf16.msra.mxu0 %v479
  %5134 = vmatprep.subr.bf16.mxu0 0
  %5135 = vmatpush2.bf16.msra.mxu0 %v494
  %5136 = vmatprep.subr.bf16.mxu0 0
  %5137 = vmatpush2.bf16.msra.mxu0 %v493
  %5138 = vmatprep.subr.bf16.mxu0 0
  %5139 = vmatpush2.bf16.msra.mxu0 %v492
  %5140 = vmatprep.subr.bf16.mxu0 0
  %5141 = vmatpush2.bf16.msra.mxu0 %v491
  %5142 = vmatprep.subr.bf16.mxu0 0
  %5143 = vmatpush2.bf16.msra.mxu0 %v490
  %5144 = vmatprep.subr.bf16.mxu0 0
  %5145 = vmatpush2.bf16.msra.mxu0 %v489
  %5146 = vmatprep.subr.bf16.mxu0 0
  %5147 = vmatpush2.bf16.msra.mxu0 %v488
  %5148 = vmatprep.subr.bf16.mxu0 0
  %5149 = vmatpush2.bf16.msra.mxu0 %v487
  %5150 = vmatprep.mubr.bf16.mxu0 %v5087
  %5151 = vmatmul.mubr.bf16.gmra.mxu0 %v5086
  %v5152 = vpop.f32.mrf.mxu0
  %v5153 = vadd.f32 0.0, %v5152
  %v5154 = vpop.f32.mrf.mxu0
  %v5155 = vpop.f32.mrf.mxu0
  %v5156 = vadd.f32 0.0, %v5155
  %v5157 = vpop.f32.mrf.mxu0
  %5158 = vmatprep.mubr.bf16.mxu0 %v5089
  %5159 = vmatmul.mubr.bf16.gmra.mxu0 %v5088
  %v5160 = vpop.f32.mrf.mxu0
  %v5161 = vadd.f32 0.0, %v5160
  %v5162 = vpop.f32.mrf.mxu0
  %v5163 = vpop.f32.mrf.mxu0
  %v5164 = vadd.f32 0.0, %v5163
  %v5165 = vpop.f32.mrf.mxu0
  %5166 = vmatprep.mubr.bf16.mxu0 %v5091
  %5167 = vmatmul.mubr.bf16.gmra.mxu0 %v5090
  %v5168 = vpop.f32.mrf.mxu0
  %v5169 = vadd.f32 0.0, %v5168
  %v5170 = vpop.f32.mrf.mxu0
  %v5171 = vpop.f32.mrf.mxu0
  %v5172 = vadd.f32 0.0, %v5171
  %v5173 = vpop.f32.mrf.mxu0
  %5174 = vmatprep.mubr.bf16.mxu0 %v5093
  %5175 = vmatmul.mubr.bf16.gmra.mxu0 %v5092
  %v5176 = vpop.f32.mrf.mxu0
  %v5177 = vadd.f32 0.0, %v5176
  %v5178 = vpop.f32.mrf.mxu0
  %v5179 = vpop.f32.mrf.mxu0
  %v5180 = vadd.f32 0.0, %v5179
  %v5181 = vpop.f32.mrf.mxu0
  %5182 = vmatprep.mubr.bf16.mxu0 %v5095
  %5183 = vmatmul.mubr.bf16.gmra.mxu0 %v5094
  %v5184 = vpop.f32.mrf.mxu0
  %v5185 = vadd.f32 0.0, %v5184
  %v5186 = vpop.f32.mrf.mxu0
  %v5187 = vpop.f32.mrf.mxu0
  %v5188 = vadd.f32 0.0, %v5187
  %v5189 = vpop.f32.mrf.mxu0
  %5190 = vmatprep.mubr.bf16.mxu0 %v5097
  %5191 = vmatmul.mubr.bf16.gmra.mxu0 %v5096
  %v5192 = vpop.f32.mrf.mxu0
  %v5193 = vadd.f32 0.0, %v5192
  %v5194 = vpop.f32.mrf.mxu0
  %v5195 = vpop.f32.mrf.mxu0
  %v5196 = vadd.f32 0.0, %v5195
  %v5197 = vpop.f32.mrf.mxu0
  %5198 = vmatprep.mubr.bf16.mxu0 %v5099
  %5199 = vmatmul.mubr.bf16.gmra.mxu0 %v5098
  %v5200 = vpop.f32.mrf.mxu0
  %v5201 = vadd.f32 0.0, %v5200
  %v5202 = vpop.f32.mrf.mxu0
  %v5203 = vpop.f32.mrf.mxu0
  %v5204 = vadd.f32 0.0, %v5203
  %v5205 = vpop.f32.mrf.mxu0
  %5206 = vmatprep.mubr.bf16.mxu0 %v5101
  %5207 = vmatmul.mubr.bf16.gmra.mxu0 %v5100
  %v5208 = vpop.f32.mrf.mxu0
  %v5209 = vadd.f32 0.0, %v5208
  %v5210 = vpop.f32.mrf.mxu0
  %v5211 = vpop.f32.mrf.mxu0
  %v5212 = vadd.f32 0.0, %v5211
  %v5213 = vpop.f32.mrf.mxu0
  %5214 = vdwg.mxu0
  %v5215 = vpack.c.bf16 %v5156, %v5153
  %v5216 = vpack.c.bf16 %v5164, %v5161
  %v5217 = vpack.c.bf16 %v5172, %v5169
  %v5218 = vpack.c.bf16 %v5180, %v5177
  %v5219 = vpack.c.bf16 %v5188, %v5185
  %v5220 = vpack.c.bf16 %v5196, %v5193
  %v5221 = vpack.c.bf16 %v5204, %v5201
  %v5222 = vpack.c.bf16 %v5212, %v5209
  %s5223 = scalar_lea.vmem %s3, 768
  %v5224 = vld [vmem:[%s5223] sm:$0xf]
  %v5225 = vld [vmem:[%s5223 + $0x4] sm:$0xf]
  %v5226 = vld [vmem:[%s5223 + $0x8] sm:$0xf]
  %v5227 = vld [vmem:[%s5223 + $0xc] sm:$0xf]
  %v5228 = vld [vmem:[%s5223 + $0x10] sm:$0xf]
  %v5229 = vld [vmem:[%s5223 + $0x14] sm:$0xf]
  %v5230 = vld [vmem:[%s5223 + $0x18] sm:$0xf]
  %v5231 = vld [vmem:[%s5223 + $0x1c] sm:$0xf]
  %v5232 = vld [vmem:[%s5223 + $0x20] sm:$0xf]
  %v5233 = vld [vmem:[%s5223 + $0x24] sm:$0xf]
  %v5234 = vld [vmem:[%s5223 + $0x28] sm:$0xf]
  %v5235 = vld [vmem:[%s5223 + $0x2c] sm:$0xf]
  %v5236 = vld [vmem:[%s5223 + $0x30] sm:$0xf]
  %v5237 = vld [vmem:[%s5223 + $0x34] sm:$0xf]
  %v5238 = vld [vmem:[%s5223 + $0x38] sm:$0xf]
  %v5239 = vld [vmem:[%s5223 + $0x3c] sm:$0xf]
  %v5256 = vunpack.c.l.b16 %v5224
  %v5257 = vunpack.c.l.b16 %v5225
  %v5258 = vunpack.c.l.b16 %v5226
  %v5259 = vunpack.c.l.b16 %v5227
  %v5260 = vunpack.c.l.b16 %v5228
  %v5261 = vunpack.c.l.b16 %v5229
  %v5262 = vunpack.c.l.b16 %v5230
  %v5263 = vunpack.c.l.b16 %v5231
  %v5264 = vunpack.c.l.b16 %v5232
  %v5265 = vunpack.c.l.b16 %v5233
  %v5266 = vunpack.c.l.b16 %v5234
  %v5267 = vunpack.c.l.b16 %v5235
  %v5268 = vunpack.c.l.b16 %v5236
  %v5269 = vunpack.c.l.b16 %v5237
  %v5270 = vunpack.c.l.b16 %v5238
  %v5271 = vunpack.c.l.b16 %v5239
  %v5272 = vpack.c.b16 %v5257, %v5256
  %v5273 = vpack.c.b16 %v5259, %v5258
  %v5274 = vpack.c.b16 %v5261, %v5260
  %v5275 = vpack.c.b16 %v5263, %v5262
  %v5276 = vpack.c.b16 %v5265, %v5264
  %v5277 = vpack.c.b16 %v5267, %v5266
  %v5278 = vpack.c.b16 %v5269, %v5268
  %v5279 = vpack.c.b16 %v5271, %v5270
  %5288 = vmatprep.subr.bf16.mxu0 0
  %5289 = vmatpush1.bf16.msra.mxu0 %v5279
  %5290 = vmatprep.subr.bf16.mxu0 0
  %5291 = vmatpush1.bf16.msra.mxu0 %v5278
  %5292 = vmatprep.subr.bf16.mxu0 0
  %5293 = vmatpush1.bf16.msra.mxu0 %v5277
  %5294 = vmatprep.subr.bf16.mxu0 0
  %5295 = vmatpush1.bf16.msra.mxu0 %v5276
  %5296 = vmatprep.subr.bf16.mxu0 0
  %5297 = vmatpush1.bf16.msra.mxu0 %v5275
  %5298 = vmatprep.subr.bf16.mxu0 0
  %5299 = vmatpush1.bf16.msra.mxu0 %v5274
  %5300 = vmatprep.subr.bf16.mxu0 0
  %5301 = vmatpush1.bf16.msra.mxu0 %v5273
  %5302 = vmatprep.subr.bf16.mxu0 0
  %5303 = vmatpush1.bf16.msra.mxu0 %v5272
  %5304 = vmatprep.subr.bf16.mxu0 0
  %5305 = vmatpush2.bf16.msra.mxu0 0
  %5306 = vmatprep.subr.bf16.mxu0 0
  %5307 = vmatpush2.bf16.msra.mxu0 0
  %5308 = vmatprep.subr.bf16.mxu0 0
  %5309 = vmatpush2.bf16.msra.mxu0 0
  %5310 = vmatprep.subr.bf16.mxu0 0
  %5311 = vmatpush2.bf16.msra.mxu0 0
  %5312 = vmatprep.subr.bf16.mxu0 0
  %5313 = vmatpush2.bf16.msra.mxu0 0
  %5314 = vmatprep.subr.bf16.mxu0 0
  %5315 = vmatpush2.bf16.msra.mxu0 0
  %5316 = vmatprep.subr.bf16.mxu0 0
  %5317 = vmatpush2.bf16.msra.mxu0 0
  %5318 = vmatprep.subr.bf16.mxu0 0
  %5319 = vmatpush2.bf16.msra.mxu0 0
  %5320 = vmatprep.mubr.bf16.mxu0 0
  %5321 = vmatmul.mubr.bf16.gmra.mxu0 %v5215
  %v5322 = vpop.f32.mrf.mxu0
  %v5323 = vadd.f32 0.0, %v5322
  %v5324 = vpop.f32.mrf.mxu0
  %v5325 = vpop.f32.mrf.mxu0
  %v5326 = vadd.f32 0.0, %v5325
  %v5327 = vpop.f32.mrf.mxu0
  %5328 = vmatprep.mubr.bf16.mxu0 0
  %5329 = vmatmul.mubr.bf16.gmra.mxu0 %v5216
  %v5330 = vpop.f32.mrf.mxu0
  %v5331 = vadd.f32 0.0, %v5330
  %v5332 = vpop.f32.mrf.mxu0
  %v5333 = vpop.f32.mrf.mxu0
  %v5334 = vadd.f32 0.0, %v5333
  %v5335 = vpop.f32.mrf.mxu0
  %5336 = vmatprep.mubr.bf16.mxu0 0
  %5337 = vmatmul.mubr.bf16.gmra.mxu0 %v5217
  %v5338 = vpop.f32.mrf.mxu0
  %v5339 = vadd.f32 0.0, %v5338
  %v5340 = vpop.f32.mrf.mxu0
  %v5341 = vpop.f32.mrf.mxu0
  %v5342 = vadd.f32 0.0, %v5341
  %v5343 = vpop.f32.mrf.mxu0
  %5344 = vmatprep.mubr.bf16.mxu0 0
  %5345 = vmatmul.mubr.bf16.gmra.mxu0 %v5218
  %v5346 = vpop.f32.mrf.mxu0
  %v5347 = vadd.f32 0.0, %v5346
  %v5348 = vpop.f32.mrf.mxu0
  %v5349 = vpop.f32.mrf.mxu0
  %v5350 = vadd.f32 0.0, %v5349
  %v5351 = vpop.f32.mrf.mxu0
  %5352 = vmatprep.mubr.bf16.mxu0 0
  %5353 = vmatmul.mubr.bf16.gmra.mxu0 %v5219
  %v5354 = vpop.f32.mrf.mxu0
  %v5355 = vadd.f32 0.0, %v5354
  %v5356 = vpop.f32.mrf.mxu0
  %v5357 = vpop.f32.mrf.mxu0
  %v5358 = vadd.f32 0.0, %v5357
  %v5359 = vpop.f32.mrf.mxu0
  %5360 = vmatprep.mubr.bf16.mxu0 0
  %5361 = vmatmul.mubr.bf16.gmra.mxu0 %v5220
  %v5362 = vpop.f32.mrf.mxu0
  %v5363 = vadd.f32 0.0, %v5362
  %v5364 = vpop.f32.mrf.mxu0
  %v5365 = vpop.f32.mrf.mxu0
  %v5366 = vadd.f32 0.0, %v5365
  %v5367 = vpop.f32.mrf.mxu0
  %5368 = vmatprep.mubr.bf16.mxu0 0
  %5369 = vmatmul.mubr.bf16.gmra.mxu0 %v5221
  %v5370 = vpop.f32.mrf.mxu0
  %v5371 = vadd.f32 0.0, %v5370
  %v5372 = vpop.f32.mrf.mxu0
  %v5373 = vpop.f32.mrf.mxu0
  %v5374 = vadd.f32 0.0, %v5373
  %v5375 = vpop.f32.mrf.mxu0
  %5376 = vmatprep.mubr.bf16.mxu0 0
  %5377 = vmatmul.mubr.bf16.gmra.mxu0 %v5222
  %v5378 = vpop.f32.mrf.mxu0
  %v5379 = vadd.f32 0.0, %v5378
  %v5380 = vpop.f32.mrf.mxu0
  %v5381 = vpop.f32.mrf.mxu0
  %v5382 = vadd.f32 0.0, %v5381
  %v5383 = vpop.f32.mrf.mxu0
  %5384 = vdwg.mxu0
  %v5385 = vadd.f32 %v5005, %v5323
  %v5386 = vadd.f32 %v5006, %v5326
  %v5387 = vadd.f32 %v5007, %v5331
  %v5388 = vadd.f32 %v5008, %v5334
  %v5389 = vadd.f32 %v5009, %v5339
  %v5390 = vadd.f32 %v5010, %v5342
  %v5391 = vadd.f32 %v5011, %v5347
  %v5392 = vadd.f32 %v5012, %v5350
  %v5393 = vadd.f32 %v5013, %v5355
  %v5394 = vadd.f32 %v5014, %v5358
  %v5395 = vadd.f32 %v5015, %v5363
  %v5396 = vadd.f32 %v5016, %v5366
  %v5397 = vadd.f32 %v5017, %v5371
  %v5398 = vadd.f32 %v5018, %v5374
  %v5399 = vadd.f32 %v5019, %v5379
  %v5400 = vadd.f32 %v5020, %v5382
  %s5401 = scalar_lea.vmem %s2, 1664
  %v5402 = vld [vmem:[%s5401] sm:$0xff]
  %v5403 = vld [vmem:[%s5401 + $0x8] sm:$0xff]
  %v5404 = vld [vmem:[%s5401 + $0x10] sm:$0xff]
  %v5405 = vld [vmem:[%s5401 + $0x18] sm:$0xff]
  %v5406 = vld [vmem:[%s5401 + $0x20] sm:$0xff]
  %v5407 = vld [vmem:[%s5401 + $0x28] sm:$0xff]
  %v5408 = vld [vmem:[%s5401 + $0x30] sm:$0xff]
  %v5409 = vld [vmem:[%s5401 + $0x38] sm:$0xff]
  %v5410 = vld [vmem:[%s5401 + $0x40] sm:$0xff]
  %v5411 = vld [vmem:[%s5401 + $0x48] sm:$0xff]
  %v5412 = vld [vmem:[%s5401 + $0x50] sm:$0xff]
  %v5413 = vld [vmem:[%s5401 + $0x58] sm:$0xff]
  %v5414 = vld [vmem:[%s5401 + $0x60] sm:$0xff]
  %v5415 = vld [vmem:[%s5401 + $0x68] sm:$0xff]
  %v5416 = vld [vmem:[%s5401 + $0x70] sm:$0xff]
  %v5417 = vld [vmem:[%s5401 + $0x78] sm:$0xff]
  %v5434 = vunpack.c.l.b16 %v5402
  %v5435 = vunpack.c.h.b16 %v5402
  %v5436 = vunpack.c.l.b16 %v5403
  %v5437 = vunpack.c.h.b16 %v5403
  %v5438 = vunpack.c.l.b16 %v5404
  %v5439 = vunpack.c.h.b16 %v5404
  %v5440 = vunpack.c.l.b16 %v5405
  %v5441 = vunpack.c.h.b16 %v5405
  %v5442 = vunpack.c.l.b16 %v5406
  %v5443 = vunpack.c.h.b16 %v5406
  %v5444 = vunpack.c.l.b16 %v5407
  %v5445 = vunpack.c.h.b16 %v5407
  %v5446 = vunpack.c.l.b16 %v5408
  %v5447 = vunpack.c.h.b16 %v5408
  %v5448 = vunpack.c.l.b16 %v5409
  %v5449 = vunpack.c.h.b16 %v5409
  %v5450 = vunpack.c.l.b16 %v5410
  %v5451 = vunpack.c.h.b16 %v5410
  %v5452 = vunpack.c.l.b16 %v5411
  %v5453 = vunpack.c.h.b16 %v5411
  %v5454 = vunpack.c.l.b16 %v5412
  %v5455 = vunpack.c.h.b16 %v5412
  %v5456 = vunpack.c.l.b16 %v5413
  %v5457 = vunpack.c.h.b16 %v5413
  %v5458 = vunpack.c.l.b16 %v5414
  %v5459 = vunpack.c.h.b16 %v5414
  %v5460 = vunpack.c.l.b16 %v5415
  %v5461 = vunpack.c.h.b16 %v5415
  %v5462 = vunpack.c.l.b16 %v5416
  %v5463 = vunpack.c.h.b16 %v5416
  %v5464 = vunpack.c.l.b16 %v5417
  %v5465 = vunpack.c.h.b16 %v5417
  %v5466 = vpack.c.b16 %v5436, %v5434
  %v5467 = vpack.c.b16 %v5437, %v5435
  %v5468 = vpack.c.b16 %v5440, %v5438
  %v5469 = vpack.c.b16 %v5441, %v5439
  %v5470 = vpack.c.b16 %v5444, %v5442
  %v5471 = vpack.c.b16 %v5445, %v5443
  %v5472 = vpack.c.b16 %v5448, %v5446
  %v5473 = vpack.c.b16 %v5449, %v5447
  %v5474 = vpack.c.b16 %v5452, %v5450
  %v5475 = vpack.c.b16 %v5453, %v5451
  %v5476 = vpack.c.b16 %v5456, %v5454
  %v5477 = vpack.c.b16 %v5457, %v5455
  %v5478 = vpack.c.b16 %v5460, %v5458
  %v5479 = vpack.c.b16 %v5461, %v5459
  %v5480 = vpack.c.b16 %v5464, %v5462
  %v5481 = vpack.c.b16 %v5465, %v5463
  %5498 = vmatprep.subr.bf16.mxu0 0
  %5499 = vmatpush1.bf16.msra.mxu0 %v486
  %5500 = vmatprep.subr.bf16.mxu0 0
  %5501 = vmatpush1.bf16.msra.mxu0 %v485
  %5502 = vmatprep.subr.bf16.mxu0 0
  %5503 = vmatpush1.bf16.msra.mxu0 %v484
  %5504 = vmatprep.subr.bf16.mxu0 0
  %5505 = vmatpush1.bf16.msra.mxu0 %v483
  %5506 = vmatprep.subr.bf16.mxu0 0
  %5507 = vmatpush1.bf16.msra.mxu0 %v482
  %5508 = vmatprep.subr.bf16.mxu0 0
  %5509 = vmatpush1.bf16.msra.mxu0 %v481
  %5510 = vmatprep.subr.bf16.mxu0 0
  %5511 = vmatpush1.bf16.msra.mxu0 %v480
  %5512 = vmatprep.subr.bf16.mxu0 0
  %5513 = vmatpush1.bf16.msra.mxu0 %v479
  %5514 = vmatprep.subr.bf16.mxu0 0
  %5515 = vmatpush2.bf16.msra.mxu0 %v494
  %5516 = vmatprep.subr.bf16.mxu0 0
  %5517 = vmatpush2.bf16.msra.mxu0 %v493
  %5518 = vmatprep.subr.bf16.mxu0 0
  %5519 = vmatpush2.bf16.msra.mxu0 %v492
  %5520 = vmatprep.subr.bf16.mxu0 0
  %5521 = vmatpush2.bf16.msra.mxu0 %v491
  %5522 = vmatprep.subr.bf16.mxu0 0
  %5523 = vmatpush2.bf16.msra.mxu0 %v490
  %5524 = vmatprep.subr.bf16.mxu0 0
  %5525 = vmatpush2.bf16.msra.mxu0 %v489
  %5526 = vmatprep.subr.bf16.mxu0 0
  %5527 = vmatpush2.bf16.msra.mxu0 %v488
  %5528 = vmatprep.subr.bf16.mxu0 0
  %5529 = vmatpush2.bf16.msra.mxu0 %v487
  %5530 = vmatprep.mubr.bf16.mxu0 %v5467
  %5531 = vmatmul.mubr.bf16.gmra.mxu0 %v5466
  %v5532 = vpop.f32.mrf.mxu0
  %v5533 = vadd.f32 0.0, %v5532
  %v5534 = vpop.f32.mrf.mxu0
  %v5535 = vpop.f32.mrf.mxu0
  %v5536 = vadd.f32 0.0, %v5535
  %v5537 = vpop.f32.mrf.mxu0
  %5538 = vmatprep.mubr.bf16.mxu0 %v5469
  %5539 = vmatmul.mubr.bf16.gmra.mxu0 %v5468
  %v5540 = vpop.f32.mrf.mxu0
  %v5541 = vadd.f32 0.0, %v5540
  %v5542 = vpop.f32.mrf.mxu0
  %v5543 = vpop.f32.mrf.mxu0
  %v5544 = vadd.f32 0.0, %v5543
  %v5545 = vpop.f32.mrf.mxu0
  %5546 = vmatprep.mubr.bf16.mxu0 %v5471
  %5547 = vmatmul.mubr.bf16.gmra.mxu0 %v5470
  %v5548 = vpop.f32.mrf.mxu0
  %v5549 = vadd.f32 0.0, %v5548
  %v5550 = vpop.f32.mrf.mxu0
  %v5551 = vpop.f32.mrf.mxu0
  %v5552 = vadd.f32 0.0, %v5551
  %v5553 = vpop.f32.mrf.mxu0
  %5554 = vmatprep.mubr.bf16.mxu0 %v5473
  %5555 = vmatmul.mubr.bf16.gmra.mxu0 %v5472
  %v5556 = vpop.f32.mrf.mxu0
  %v5557 = vadd.f32 0.0, %v5556
  %v5558 = vpop.f32.mrf.mxu0
  %v5559 = vpop.f32.mrf.mxu0
  %v5560 = vadd.f32 0.0, %v5559
  %v5561 = vpop.f32.mrf.mxu0
  %5562 = vmatprep.mubr.bf16.mxu0 %v5475
  %5563 = vmatmul.mubr.bf16.gmra.mxu0 %v5474
  %v5564 = vpop.f32.mrf.mxu0
  %v5565 = vadd.f32 0.0, %v5564
  %v5566 = vpop.f32.mrf.mxu0
  %v5567 = vpop.f32.mrf.mxu0
  %v5568 = vadd.f32 0.0, %v5567
  %v5569 = vpop.f32.mrf.mxu0
  %5570 = vmatprep.mubr.bf16.mxu0 %v5477
  %5571 = vmatmul.mubr.bf16.gmra.mxu0 %v5476
  %v5572 = vpop.f32.mrf.mxu0
  %v5573 = vadd.f32 0.0, %v5572
  %v5574 = vpop.f32.mrf.mxu0
  %v5575 = vpop.f32.mrf.mxu0
  %v5576 = vadd.f32 0.0, %v5575
  %v5577 = vpop.f32.mrf.mxu0
  %5578 = vmatprep.mubr.bf16.mxu0 %v5479
  %5579 = vmatmul.mubr.bf16.gmra.mxu0 %v5478
  %v5580 = vpop.f32.mrf.mxu0
  %v5581 = vadd.f32 0.0, %v5580
  %v5582 = vpop.f32.mrf.mxu0
  %v5583 = vpop.f32.mrf.mxu0
  %v5584 = vadd.f32 0.0, %v5583
  %v5585 = vpop.f32.mrf.mxu0
  %5586 = vmatprep.mubr.bf16.mxu0 %v5481
  %5587 = vmatmul.mubr.bf16.gmra.mxu0 %v5480
  %v5588 = vpop.f32.mrf.mxu0
  %v5589 = vadd.f32 0.0, %v5588
  %v5590 = vpop.f32.mrf.mxu0
  %v5591 = vpop.f32.mrf.mxu0
  %v5592 = vadd.f32 0.0, %v5591
  %v5593 = vpop.f32.mrf.mxu0
  %5594 = vdwg.mxu0
  %v5595 = vpack.c.bf16 %v5536, %v5533
  %v5596 = vpack.c.bf16 %v5544, %v5541
  %v5597 = vpack.c.bf16 %v5552, %v5549
  %v5598 = vpack.c.bf16 %v5560, %v5557
  %v5599 = vpack.c.bf16 %v5568, %v5565
  %v5600 = vpack.c.bf16 %v5576, %v5573
  %v5601 = vpack.c.bf16 %v5584, %v5581
  %v5602 = vpack.c.bf16 %v5592, %v5589
  %s5603 = scalar_lea.vmem %s3, 832
  %v5604 = vld [vmem:[%s5603] sm:$0xf]
  %v5605 = vld [vmem:[%s5603 + $0x4] sm:$0xf]
  %v5606 = vld [vmem:[%s5603 + $0x8] sm:$0xf]
  %v5607 = vld [vmem:[%s5603 + $0xc] sm:$0xf]
  %v5608 = vld [vmem:[%s5603 + $0x10] sm:$0xf]
  %v5609 = vld [vmem:[%s5603 + $0x14] sm:$0xf]
  %v5610 = vld [vmem:[%s5603 + $0x18] sm:$0xf]
  %v5611 = vld [vmem:[%s5603 + $0x1c] sm:$0xf]
  %v5612 = vld [vmem:[%s5603 + $0x20] sm:$0xf]
  %v5613 = vld [vmem:[%s5603 + $0x24] sm:$0xf]
  %v5614 = vld [vmem:[%s5603 + $0x28] sm:$0xf]
  %v5615 = vld [vmem:[%s5603 + $0x2c] sm:$0xf]
  %v5616 = vld [vmem:[%s5603 + $0x30] sm:$0xf]
  %v5617 = vld [vmem:[%s5603 + $0x34] sm:$0xf]
  %v5618 = vld [vmem:[%s5603 + $0x38] sm:$0xf]
  %v5619 = vld [vmem:[%s5603 + $0x3c] sm:$0xf]
  %v5636 = vunpack.c.l.b16 %v5604
  %v5637 = vunpack.c.l.b16 %v5605
  %v5638 = vunpack.c.l.b16 %v5606
  %v5639 = vunpack.c.l.b16 %v5607
  %v5640 = vunpack.c.l.b16 %v5608
  %v5641 = vunpack.c.l.b16 %v5609
  %v5642 = vunpack.c.l.b16 %v5610
  %v5643 = vunpack.c.l.b16 %v5611
  %v5644 = vunpack.c.l.b16 %v5612
  %v5645 = vunpack.c.l.b16 %v5613
  %v5646 = vunpack.c.l.b16 %v5614
  %v5647 = vunpack.c.l.b16 %v5615
  %v5648 = vunpack.c.l.b16 %v5616
  %v5649 = vunpack.c.l.b16 %v5617
  %v5650 = vunpack.c.l.b16 %v5618
  %v5651 = vunpack.c.l.b16 %v5619
  %v5652 = vpack.c.b16 %v5637, %v5636
  %v5653 = vpack.c.b16 %v5639, %v5638
  %v5654 = vpack.c.b16 %v5641, %v5640
  %v5655 = vpack.c.b16 %v5643, %v5642
  %v5656 = vpack.c.b16 %v5645, %v5644
  %v5657 = vpack.c.b16 %v5647, %v5646
  %v5658 = vpack.c.b16 %v5649, %v5648
  %v5659 = vpack.c.b16 %v5651, %v5650
  %5668 = vmatprep.subr.bf16.mxu0 0
  %5669 = vmatpush1.bf16.msra.mxu0 %v5659
  %5670 = vmatprep.subr.bf16.mxu0 0
  %5671 = vmatpush1.bf16.msra.mxu0 %v5658
  %5672 = vmatprep.subr.bf16.mxu0 0
  %5673 = vmatpush1.bf16.msra.mxu0 %v5657
  %5674 = vmatprep.subr.bf16.mxu0 0
  %5675 = vmatpush1.bf16.msra.mxu0 %v5656
  %5676 = vmatprep.subr.bf16.mxu0 0
  %5677 = vmatpush1.bf16.msra.mxu0 %v5655
  %5678 = vmatprep.subr.bf16.mxu0 0
  %5679 = vmatpush1.bf16.msra.mxu0 %v5654
  %5680 = vmatprep.subr.bf16.mxu0 0
  %5681 = vmatpush1.bf16.msra.mxu0 %v5653
  %5682 = vmatprep.subr.bf16.mxu0 0
  %5683 = vmatpush1.bf16.msra.mxu0 %v5652
  %5684 = vmatprep.subr.bf16.mxu0 0
  %5685 = vmatpush2.bf16.msra.mxu0 0
  %5686 = vmatprep.subr.bf16.mxu0 0
  %5687 = vmatpush2.bf16.msra.mxu0 0
  %5688 = vmatprep.subr.bf16.mxu0 0
  %5689 = vmatpush2.bf16.msra.mxu0 0
  %5690 = vmatprep.subr.bf16.mxu0 0
  %5691 = vmatpush2.bf16.msra.mxu0 0
  %5692 = vmatprep.subr.bf16.mxu0 0
  %5693 = vmatpush2.bf16.msra.mxu0 0
  %5694 = vmatprep.subr.bf16.mxu0 0
  %5695 = vmatpush2.bf16.msra.mxu0 0
  %5696 = vmatprep.subr.bf16.mxu0 0
  %5697 = vmatpush2.bf16.msra.mxu0 0
  %5698 = vmatprep.subr.bf16.mxu0 0
  %5699 = vmatpush2.bf16.msra.mxu0 0
  %5700 = vmatprep.mubr.bf16.mxu0 0
  %5701 = vmatmul.mubr.bf16.gmra.mxu0 %v5595
  %v5702 = vpop.f32.mrf.mxu0
  %v5703 = vadd.f32 0.0, %v5702
  %v5704 = vpop.f32.mrf.mxu0
  %v5705 = vpop.f32.mrf.mxu0
  %v5706 = vadd.f32 0.0, %v5705
  %v5707 = vpop.f32.mrf.mxu0
  %5708 = vmatprep.mubr.bf16.mxu0 0
  %5709 = vmatmul.mubr.bf16.gmra.mxu0 %v5596
  %v5710 = vpop.f32.mrf.mxu0
  %v5711 = vadd.f32 0.0, %v5710
  %v5712 = vpop.f32.mrf.mxu0
  %v5713 = vpop.f32.mrf.mxu0
  %v5714 = vadd.f32 0.0, %v5713
  %v5715 = vpop.f32.mrf.mxu0
  %5716 = vmatprep.mubr.bf16.mxu0 0
  %5717 = vmatmul.mubr.bf16.gmra.mxu0 %v5597
  %v5718 = vpop.f32.mrf.mxu0
  %v5719 = vadd.f32 0.0, %v5718
  %v5720 = vpop.f32.mrf.mxu0
  %v5721 = vpop.f32.mrf.mxu0
  %v5722 = vadd.f32 0.0, %v5721
  %v5723 = vpop.f32.mrf.mxu0
  %5724 = vmatprep.mubr.bf16.mxu0 0
  %5725 = vmatmul.mubr.bf16.gmra.mxu0 %v5598
  %v5726 = vpop.f32.mrf.mxu0
  %v5727 = vadd.f32 0.0, %v5726
  %v5728 = vpop.f32.mrf.mxu0
  %v5729 = vpop.f32.mrf.mxu0
  %v5730 = vadd.f32 0.0, %v5729
  %v5731 = vpop.f32.mrf.mxu0
  %5732 = vmatprep.mubr.bf16.mxu0 0
  %5733 = vmatmul.mubr.bf16.gmra.mxu0 %v5599
  %v5734 = vpop.f32.mrf.mxu0
  %v5735 = vadd.f32 0.0, %v5734
  %v5736 = vpop.f32.mrf.mxu0
  %v5737 = vpop.f32.mrf.mxu0
  %v5738 = vadd.f32 0.0, %v5737
  %v5739 = vpop.f32.mrf.mxu0
  %5740 = vmatprep.mubr.bf16.mxu0 0
  %5741 = vmatmul.mubr.bf16.gmra.mxu0 %v5600
  %v5742 = vpop.f32.mrf.mxu0
  %v5743 = vadd.f32 0.0, %v5742
  %v5744 = vpop.f32.mrf.mxu0
  %v5745 = vpop.f32.mrf.mxu0
  %v5746 = vadd.f32 0.0, %v5745
  %v5747 = vpop.f32.mrf.mxu0
  %5748 = vmatprep.mubr.bf16.mxu0 0
  %5749 = vmatmul.mubr.bf16.gmra.mxu0 %v5601
  %v5750 = vpop.f32.mrf.mxu0
  %v5751 = vadd.f32 0.0, %v5750
  %v5752 = vpop.f32.mrf.mxu0
  %v5753 = vpop.f32.mrf.mxu0
  %v5754 = vadd.f32 0.0, %v5753
  %v5755 = vpop.f32.mrf.mxu0
  %5756 = vmatprep.mubr.bf16.mxu0 0
  %5757 = vmatmul.mubr.bf16.gmra.mxu0 %v5602
  %v5758 = vpop.f32.mrf.mxu0
  %v5759 = vadd.f32 0.0, %v5758
  %v5760 = vpop.f32.mrf.mxu0
  %v5761 = vpop.f32.mrf.mxu0
  %v5762 = vadd.f32 0.0, %v5761
  %v5763 = vpop.f32.mrf.mxu0
  %5764 = vdwg.mxu0
  %v5765 = vadd.f32 %v5385, %v5703
  %v5766 = vadd.f32 %v5386, %v5706
  %v5767 = vadd.f32 %v5387, %v5711
  %v5768 = vadd.f32 %v5388, %v5714
  %v5769 = vadd.f32 %v5389, %v5719
  %v5770 = vadd.f32 %v5390, %v5722
  %v5771 = vadd.f32 %v5391, %v5727
  %v5772 = vadd.f32 %v5392, %v5730
  %v5773 = vadd.f32 %v5393, %v5735
  %v5774 = vadd.f32 %v5394, %v5738
  %v5775 = vadd.f32 %v5395, %v5743
  %v5776 = vadd.f32 %v5396, %v5746
  %v5777 = vadd.f32 %v5397, %v5751
  %v5778 = vadd.f32 %v5398, %v5754
  %v5779 = vadd.f32 %v5399, %v5759
  %v5780 = vadd.f32 %v5400, %v5762
  %s5781 = scalar_lea.vmem %s2, 1792
  %v5782 = vld [vmem:[%s5781] sm:$0xff]
  %v5783 = vld [vmem:[%s5781 + $0x8] sm:$0xff]
  %v5784 = vld [vmem:[%s5781 + $0x10] sm:$0xff]
  %v5785 = vld [vmem:[%s5781 + $0x18] sm:$0xff]
  %v5786 = vld [vmem:[%s5781 + $0x20] sm:$0xff]
  %v5787 = vld [vmem:[%s5781 + $0x28] sm:$0xff]
  %v5788 = vld [vmem:[%s5781 + $0x30] sm:$0xff]
  %v5789 = vld [vmem:[%s5781 + $0x38] sm:$0xff]
  %v5790 = vld [vmem:[%s5781 + $0x40] sm:$0xff]
  %v5791 = vld [vmem:[%s5781 + $0x48] sm:$0xff]
  %v5792 = vld [vmem:[%s5781 + $0x50] sm:$0xff]
  %v5793 = vld [vmem:[%s5781 + $0x58] sm:$0xff]
  %v5794 = vld [vmem:[%s5781 + $0x60] sm:$0xff]
  %v5795 = vld [vmem:[%s5781 + $0x68] sm:$0xff]
  %v5796 = vld [vmem:[%s5781 + $0x70] sm:$0xff]
  %v5797 = vld [vmem:[%s5781 + $0x78] sm:$0xff]
  %v5814 = vunpack.c.l.b16 %v5782
  %v5815 = vunpack.c.h.b16 %v5782
  %v5816 = vunpack.c.l.b16 %v5783
  %v5817 = vunpack.c.h.b16 %v5783
  %v5818 = vunpack.c.l.b16 %v5784
  %v5819 = vunpack.c.h.b16 %v5784
  %v5820 = vunpack.c.l.b16 %v5785
  %v5821 = vunpack.c.h.b16 %v5785
  %v5822 = vunpack.c.l.b16 %v5786
  %v5823 = vunpack.c.h.b16 %v5786
  %v5824 = vunpack.c.l.b16 %v5787
  %v5825 = vunpack.c.h.b16 %v5787
  %v5826 = vunpack.c.l.b16 %v5788
  %v5827 = vunpack.c.h.b16 %v5788
  %v5828 = vunpack.c.l.b16 %v5789
  %v5829 = vunpack.c.h.b16 %v5789
  %v5830 = vunpack.c.l.b16 %v5790
  %v5831 = vunpack.c.h.b16 %v5790
  %v5832 = vunpack.c.l.b16 %v5791
  %v5833 = vunpack.c.h.b16 %v5791
  %v5834 = vunpack.c.l.b16 %v5792
  %v5835 = vunpack.c.h.b16 %v5792
  %v5836 = vunpack.c.l.b16 %v5793
  %v5837 = vunpack.c.h.b16 %v5793
  %v5838 = vunpack.c.l.b16 %v5794
  %v5839 = vunpack.c.h.b16 %v5794
  %v5840 = vunpack.c.l.b16 %v5795
  %v5841 = vunpack.c.h.b16 %v5795
  %v5842 = vunpack.c.l.b16 %v5796
  %v5843 = vunpack.c.h.b16 %v5796
  %v5844 = vunpack.c.l.b16 %v5797
  %v5845 = vunpack.c.h.b16 %v5797
  %v5846 = vpack.c.b16 %v5816, %v5814
  %v5847 = vpack.c.b16 %v5817, %v5815
  %v5848 = vpack.c.b16 %v5820, %v5818
  %v5849 = vpack.c.b16 %v5821, %v5819
  %v5850 = vpack.c.b16 %v5824, %v5822
  %v5851 = vpack.c.b16 %v5825, %v5823
  %v5852 = vpack.c.b16 %v5828, %v5826
  %v5853 = vpack.c.b16 %v5829, %v5827
  %v5854 = vpack.c.b16 %v5832, %v5830
  %v5855 = vpack.c.b16 %v5833, %v5831
  %v5856 = vpack.c.b16 %v5836, %v5834
  %v5857 = vpack.c.b16 %v5837, %v5835
  %v5858 = vpack.c.b16 %v5840, %v5838
  %v5859 = vpack.c.b16 %v5841, %v5839
  %v5860 = vpack.c.b16 %v5844, %v5842
  %v5861 = vpack.c.b16 %v5845, %v5843
  %5878 = vmatprep.subr.bf16.mxu0 0
  %5879 = vmatpush1.bf16.msra.mxu0 %v486
  %5880 = vmatprep.subr.bf16.mxu0 0
  %5881 = vmatpush1.bf16.msra.mxu0 %v485
  %5882 = vmatprep.subr.bf16.mxu0 0
  %5883 = vmatpush1.bf16.msra.mxu0 %v484
  %5884 = vmatprep.subr.bf16.mxu0 0
  %5885 = vmatpush1.bf16.msra.mxu0 %v483
  %5886 = vmatprep.subr.bf16.mxu0 0
  %5887 = vmatpush1.bf16.msra.mxu0 %v482
  %5888 = vmatprep.subr.bf16.mxu0 0
  %5889 = vmatpush1.bf16.msra.mxu0 %v481
  %5890 = vmatprep.subr.bf16.mxu0 0
  %5891 = vmatpush1.bf16.msra.mxu0 %v480
  %5892 = vmatprep.subr.bf16.mxu0 0
  %5893 = vmatpush1.bf16.msra.mxu0 %v479
  %5894 = vmatprep.subr.bf16.mxu0 0
  %5895 = vmatpush2.bf16.msra.mxu0 %v494
  %5896 = vmatprep.subr.bf16.mxu0 0
  %5897 = vmatpush2.bf16.msra.mxu0 %v493
  %5898 = vmatprep.subr.bf16.mxu0 0
  %5899 = vmatpush2.bf16.msra.mxu0 %v492
  %5900 = vmatprep.subr.bf16.mxu0 0
  %5901 = vmatpush2.bf16.msra.mxu0 %v491
  %5902 = vmatprep.subr.bf16.mxu0 0
  %5903 = vmatpush2.bf16.msra.mxu0 %v490
  %5904 = vmatprep.subr.bf16.mxu0 0
  %5905 = vmatpush2.bf16.msra.mxu0 %v489
  %5906 = vmatprep.subr.bf16.mxu0 0
  %5907 = vmatpush2.bf16.msra.mxu0 %v488
  %5908 = vmatprep.subr.bf16.mxu0 0
  %5909 = vmatpush2.bf16.msra.mxu0 %v487
  %5910 = vmatprep.mubr.bf16.mxu0 %v5847
  %5911 = vmatmul.mubr.bf16.gmra.mxu0 %v5846
  %v5912 = vpop.f32.mrf.mxu0
  %v5913 = vadd.f32 0.0, %v5912
  %v5914 = vpop.f32.mrf.mxu0
  %v5915 = vpop.f32.mrf.mxu0
  %v5916 = vadd.f32 0.0, %v5915
  %v5917 = vpop.f32.mrf.mxu0
  %5918 = vmatprep.mubr.bf16.mxu0 %v5849
  %5919 = vmatmul.mubr.bf16.gmra.mxu0 %v5848
  %v5920 = vpop.f32.mrf.mxu0
  %v5921 = vadd.f32 0.0, %v5920
  %v5922 = vpop.f32.mrf.mxu0
  %v5923 = vpop.f32.mrf.mxu0
  %v5924 = vadd.f32 0.0, %v5923
  %v5925 = vpop.f32.mrf.mxu0
  %5926 = vmatprep.mubr.bf16.mxu0 %v5851
  %5927 = vmatmul.mubr.bf16.gmra.mxu0 %v5850
  %v5928 = vpop.f32.mrf.mxu0
  %v5929 = vadd.f32 0.0, %v5928
  %v5930 = vpop.f32.mrf.mxu0
  %v5931 = vpop.f32.mrf.mxu0
  %v5932 = vadd.f32 0.0, %v5931
  %v5933 = vpop.f32.mrf.mxu0
  %5934 = vmatprep.mubr.bf16.mxu0 %v5853
  %5935 = vmatmul.mubr.bf16.gmra.mxu0 %v5852
  %v5936 = vpop.f32.mrf.mxu0
  %v5937 = vadd.f32 0.0, %v5936
  %v5938 = vpop.f32.mrf.mxu0
  %v5939 = vpop.f32.mrf.mxu0
  %v5940 = vadd.f32 0.0, %v5939
  %v5941 = vpop.f32.mrf.mxu0
  %5942 = vmatprep.mubr.bf16.mxu0 %v5855
  %5943 = vmatmul.mubr.bf16.gmra.mxu0 %v5854
  %v5944 = vpop.f32.mrf.mxu0
  %v5945 = vadd.f32 0.0, %v5944
  %v5946 = vpop.f32.mrf.mxu0
  %v5947 = vpop.f32.mrf.mxu0
  %v5948 = vadd.f32 0.0, %v5947
  %v5949 = vpop.f32.mrf.mxu0
  %5950 = vmatprep.mubr.bf16.mxu0 %v5857
  %5951 = vmatmul.mubr.bf16.gmra.mxu0 %v5856
  %v5952 = vpop.f32.mrf.mxu0
  %v5953 = vadd.f32 0.0, %v5952
  %v5954 = vpop.f32.mrf.mxu0
  %v5955 = vpop.f32.mrf.mxu0
  %v5956 = vadd.f32 0.0, %v5955
  %v5957 = vpop.f32.mrf.mxu0
  %5958 = vmatprep.mubr.bf16.mxu0 %v5859
  %5959 = vmatmul.mubr.bf16.gmra.mxu0 %v5858
  %v5960 = vpop.f32.mrf.mxu0
  %v5961 = vadd.f32 0.0, %v5960
  %v5962 = vpop.f32.mrf.mxu0
  %v5963 = vpop.f32.mrf.mxu0
  %v5964 = vadd.f32 0.0, %v5963
  %v5965 = vpop.f32.mrf.mxu0
  %5966 = vmatprep.mubr.bf16.mxu0 %v5861
  %5967 = vmatmul.mubr.bf16.gmra.mxu0 %v5860
  %v5968 = vpop.f32.mrf.mxu0
  %v5969 = vadd.f32 0.0, %v5968
  %v5970 = vpop.f32.mrf.mxu0
  %v5971 = vpop.f32.mrf.mxu0
  %v5972 = vadd.f32 0.0, %v5971
  %v5973 = vpop.f32.mrf.mxu0
  %5974 = vdwg.mxu0
  %v5975 = vpack.c.bf16 %v5916, %v5913
  %v5976 = vpack.c.bf16 %v5924, %v5921
  %v5977 = vpack.c.bf16 %v5932, %v5929
  %v5978 = vpack.c.bf16 %v5940, %v5937
  %v5979 = vpack.c.bf16 %v5948, %v5945
  %v5980 = vpack.c.bf16 %v5956, %v5953
  %v5981 = vpack.c.bf16 %v5964, %v5961
  %v5982 = vpack.c.bf16 %v5972, %v5969
  %s5983 = scalar_lea.vmem %s3, 896
  %v5984 = vld [vmem:[%s5983] sm:$0xf]
  %v5985 = vld [vmem:[%s5983 + $0x4] sm:$0xf]
  %v5986 = vld [vmem:[%s5983 + $0x8] sm:$0xf]
  %v5987 = vld [vmem:[%s5983 + $0xc] sm:$0xf]
  %v5988 = vld [vmem:[%s5983 + $0x10] sm:$0xf]
  %v5989 = vld [vmem:[%s5983 + $0x14] sm:$0xf]
  %v5990 = vld [vmem:[%s5983 + $0x18] sm:$0xf]
  %v5991 = vld [vmem:[%s5983 + $0x1c] sm:$0xf]
  %v5992 = vld [vmem:[%s5983 + $0x20] sm:$0xf]
  %v5993 = vld [vmem:[%s5983 + $0x24] sm:$0xf]
  %v5994 = vld [vmem:[%s5983 + $0x28] sm:$0xf]
  %v5995 = vld [vmem:[%s5983 + $0x2c] sm:$0xf]
  %v5996 = vld [vmem:[%s5983 + $0x30] sm:$0xf]
  %v5997 = vld [vmem:[%s5983 + $0x34] sm:$0xf]
  %v5998 = vld [vmem:[%s5983 + $0x38] sm:$0xf]
  %v5999 = vld [vmem:[%s5983 + $0x3c] sm:$0xf]
  %v6016 = vunpack.c.l.b16 %v5984
  %v6017 = vunpack.c.l.b16 %v5985
  %v6018 = vunpack.c.l.b16 %v5986
  %v6019 = vunpack.c.l.b16 %v5987
  %v6020 = vunpack.c.l.b16 %v5988
  %v6021 = vunpack.c.l.b16 %v5989
  %v6022 = vunpack.c.l.b16 %v5990
  %v6023 = vunpack.c.l.b16 %v5991
  %v6024 = vunpack.c.l.b16 %v5992
  %v6025 = vunpack.c.l.b16 %v5993
  %v6026 = vunpack.c.l.b16 %v5994
  %v6027 = vunpack.c.l.b16 %v5995
  %v6028 = vunpack.c.l.b16 %v5996
  %v6029 = vunpack.c.l.b16 %v5997
  %v6030 = vunpack.c.l.b16 %v5998
  %v6031 = vunpack.c.l.b16 %v5999
  %v6032 = vpack.c.b16 %v6017, %v6016
  %v6033 = vpack.c.b16 %v6019, %v6018
  %v6034 = vpack.c.b16 %v6021, %v6020
  %v6035 = vpack.c.b16 %v6023, %v6022
  %v6036 = vpack.c.b16 %v6025, %v6024
  %v6037 = vpack.c.b16 %v6027, %v6026
  %v6038 = vpack.c.b16 %v6029, %v6028
  %v6039 = vpack.c.b16 %v6031, %v6030
  %6048 = vmatprep.subr.bf16.mxu0 0
  %6049 = vmatpush1.bf16.msra.mxu0 %v6039
  %6050 = vmatprep.subr.bf16.mxu0 0
  %6051 = vmatpush1.bf16.msra.mxu0 %v6038
  %6052 = vmatprep.subr.bf16.mxu0 0
  %6053 = vmatpush1.bf16.msra.mxu0 %v6037
  %6054 = vmatprep.subr.bf16.mxu0 0
  %6055 = vmatpush1.bf16.msra.mxu0 %v6036
  %6056 = vmatprep.subr.bf16.mxu0 0
  %6057 = vmatpush1.bf16.msra.mxu0 %v6035
  %6058 = vmatprep.subr.bf16.mxu0 0
  %6059 = vmatpush1.bf16.msra.mxu0 %v6034
  %6060 = vmatprep.subr.bf16.mxu0 0
  %6061 = vmatpush1.bf16.msra.mxu0 %v6033
  %6062 = vmatprep.subr.bf16.mxu0 0
  %6063 = vmatpush1.bf16.msra.mxu0 %v6032
  %6064 = vmatprep.subr.bf16.mxu0 0
  %6065 = vmatpush2.bf16.msra.mxu0 0
  %6066 = vmatprep.subr.bf16.mxu0 0
  %6067 = vmatpush2.bf16.msra.mxu0 0
  %6068 = vmatprep.subr.bf16.mxu0 0
  %6069 = vmatpush2.bf16.msra.mxu0 0
  %6070 = vmatprep.subr.bf16.mxu0 0
  %6071 = vmatpush2.bf16.msra.mxu0 0
  %6072 = vmatprep.subr.bf16.mxu0 0
  %6073 = vmatpush2.bf16.msra.mxu0 0
  %6074 = vmatprep.subr.bf16.mxu0 0
  %6075 = vmatpush2.bf16.msra.mxu0 0
  %6076 = vmatprep.subr.bf16.mxu0 0
  %6077 = vmatpush2.bf16.msra.mxu0 0
  %6078 = vmatprep.subr.bf16.mxu0 0
  %6079 = vmatpush2.bf16.msra.mxu0 0
  %6080 = vmatprep.mubr.bf16.mxu0 0
  %6081 = vmatmul.mubr.bf16.gmra.mxu0 %v5975
  %v6082 = vpop.f32.mrf.mxu0
  %v6083 = vadd.f32 0.0, %v6082
  %v6084 = vpop.f32.mrf.mxu0
  %v6085 = vpop.f32.mrf.mxu0
  %v6086 = vadd.f32 0.0, %v6085
  %v6087 = vpop.f32.mrf.mxu0
  %6088 = vmatprep.mubr.bf16.mxu0 0
  %6089 = vmatmul.mubr.bf16.gmra.mxu0 %v5976
  %v6090 = vpop.f32.mrf.mxu0
  %v6091 = vadd.f32 0.0, %v6090
  %v6092 = vpop.f32.mrf.mxu0
  %v6093 = vpop.f32.mrf.mxu0
  %v6094 = vadd.f32 0.0, %v6093
  %v6095 = vpop.f32.mrf.mxu0
  %6096 = vmatprep.mubr.bf16.mxu0 0
  %6097 = vmatmul.mubr.bf16.gmra.mxu0 %v5977
  %v6098 = vpop.f32.mrf.mxu0
  %v6099 = vadd.f32 0.0, %v6098
  %v6100 = vpop.f32.mrf.mxu0
  %v6101 = vpop.f32.mrf.mxu0
  %v6102 = vadd.f32 0.0, %v6101
  %v6103 = vpop.f32.mrf.mxu0
  %6104 = vmatprep.mubr.bf16.mxu0 0
  %6105 = vmatmul.mubr.bf16.gmra.mxu0 %v5978
  %v6106 = vpop.f32.mrf.mxu0
  %v6107 = vadd.f32 0.0, %v6106
  %v6108 = vpop.f32.mrf.mxu0
  %v6109 = vpop.f32.mrf.mxu0
  %v6110 = vadd.f32 0.0, %v6109
  %v6111 = vpop.f32.mrf.mxu0
  %6112 = vmatprep.mubr.bf16.mxu0 0
  %6113 = vmatmul.mubr.bf16.gmra.mxu0 %v5979
  %v6114 = vpop.f32.mrf.mxu0
  %v6115 = vadd.f32 0.0, %v6114
  %v6116 = vpop.f32.mrf.mxu0
  %v6117 = vpop.f32.mrf.mxu0
  %v6118 = vadd.f32 0.0, %v6117
  %v6119 = vpop.f32.mrf.mxu0
  %6120 = vmatprep.mubr.bf16.mxu0 0
  %6121 = vmatmul.mubr.bf16.gmra.mxu0 %v5980
  %v6122 = vpop.f32.mrf.mxu0
  %v6123 = vadd.f32 0.0, %v6122
  %v6124 = vpop.f32.mrf.mxu0
  %v6125 = vpop.f32.mrf.mxu0
  %v6126 = vadd.f32 0.0, %v6125
  %v6127 = vpop.f32.mrf.mxu0
  %6128 = vmatprep.mubr.bf16.mxu0 0
  %6129 = vmatmul.mubr.bf16.gmra.mxu0 %v5981
  %v6130 = vpop.f32.mrf.mxu0
  %v6131 = vadd.f32 0.0, %v6130
  %v6132 = vpop.f32.mrf.mxu0
  %v6133 = vpop.f32.mrf.mxu0
  %v6134 = vadd.f32 0.0, %v6133
  %v6135 = vpop.f32.mrf.mxu0
  %6136 = vmatprep.mubr.bf16.mxu0 0
  %6137 = vmatmul.mubr.bf16.gmra.mxu0 %v5982
  %v6138 = vpop.f32.mrf.mxu0
  %v6139 = vadd.f32 0.0, %v6138
  %v6140 = vpop.f32.mrf.mxu0
  %v6141 = vpop.f32.mrf.mxu0
  %v6142 = vadd.f32 0.0, %v6141
  %v6143 = vpop.f32.mrf.mxu0
  %6144 = vdwg.mxu0
  %v6145 = vadd.f32 %v5765, %v6083
  %v6146 = vadd.f32 %v5766, %v6086
  %v6147 = vadd.f32 %v5767, %v6091
  %v6148 = vadd.f32 %v5768, %v6094
  %v6149 = vadd.f32 %v5769, %v6099
  %v6150 = vadd.f32 %v5770, %v6102
  %v6151 = vadd.f32 %v5771, %v6107
  %v6152 = vadd.f32 %v5772, %v6110
  %v6153 = vadd.f32 %v5773, %v6115
  %v6154 = vadd.f32 %v5774, %v6118
  %v6155 = vadd.f32 %v5775, %v6123
  %v6156 = vadd.f32 %v5776, %v6126
  %v6157 = vadd.f32 %v5777, %v6131
  %v6158 = vadd.f32 %v5778, %v6134
  %v6159 = vadd.f32 %v5779, %v6139
  %v6160 = vadd.f32 %v5780, %v6142
  %s6161 = scalar_lea.vmem %s2, 1920
  %v6162 = vld [vmem:[%s6161] sm:$0xff]
  %v6163 = vld [vmem:[%s6161 + $0x8] sm:$0xff]
  %v6164 = vld [vmem:[%s6161 + $0x10] sm:$0xff]
  %v6165 = vld [vmem:[%s6161 + $0x18] sm:$0xff]
  %v6166 = vld [vmem:[%s6161 + $0x20] sm:$0xff]
  %v6167 = vld [vmem:[%s6161 + $0x28] sm:$0xff]
  %v6168 = vld [vmem:[%s6161 + $0x30] sm:$0xff]
  %v6169 = vld [vmem:[%s6161 + $0x38] sm:$0xff]
  %v6170 = vld [vmem:[%s6161 + $0x40] sm:$0xff]
  %v6171 = vld [vmem:[%s6161 + $0x48] sm:$0xff]
  %v6172 = vld [vmem:[%s6161 + $0x50] sm:$0xff]
  %v6173 = vld [vmem:[%s6161 + $0x58] sm:$0xff]
  %v6174 = vld [vmem:[%s6161 + $0x60] sm:$0xff]
  %v6175 = vld [vmem:[%s6161 + $0x68] sm:$0xff]
  %v6176 = vld [vmem:[%s6161 + $0x70] sm:$0xff]
  %v6177 = vld [vmem:[%s6161 + $0x78] sm:$0xff]
  %v6194 = vunpack.c.l.b16 %v6162
  %v6195 = vunpack.c.h.b16 %v6162
  %v6196 = vunpack.c.l.b16 %v6163
  %v6197 = vunpack.c.h.b16 %v6163
  %v6198 = vunpack.c.l.b16 %v6164
  %v6199 = vunpack.c.h.b16 %v6164
  %v6200 = vunpack.c.l.b16 %v6165
  %v6201 = vunpack.c.h.b16 %v6165
  %v6202 = vunpack.c.l.b16 %v6166
  %v6203 = vunpack.c.h.b16 %v6166
  %v6204 = vunpack.c.l.b16 %v6167
  %v6205 = vunpack.c.h.b16 %v6167
  %v6206 = vunpack.c.l.b16 %v6168
  %v6207 = vunpack.c.h.b16 %v6168
  %v6208 = vunpack.c.l.b16 %v6169
  %v6209 = vunpack.c.h.b16 %v6169
  %v6210 = vunpack.c.l.b16 %v6170
  %v6211 = vunpack.c.h.b16 %v6170
  %v6212 = vunpack.c.l.b16 %v6171
  %v6213 = vunpack.c.h.b16 %v6171
  %v6214 = vunpack.c.l.b16 %v6172
  %v6215 = vunpack.c.h.b16 %v6172
  %v6216 = vunpack.c.l.b16 %v6173
  %v6217 = vunpack.c.h.b16 %v6173
  %v6218 = vunpack.c.l.b16 %v6174
  %v6219 = vunpack.c.h.b16 %v6174
  %v6220 = vunpack.c.l.b16 %v6175
  %v6221 = vunpack.c.h.b16 %v6175
  %v6222 = vunpack.c.l.b16 %v6176
  %v6223 = vunpack.c.h.b16 %v6176
  %v6224 = vunpack.c.l.b16 %v6177
  %v6225 = vunpack.c.h.b16 %v6177
  %v6226 = vpack.c.b16 %v6196, %v6194
  %v6227 = vpack.c.b16 %v6197, %v6195
  %v6228 = vpack.c.b16 %v6200, %v6198
  %v6229 = vpack.c.b16 %v6201, %v6199
  %v6230 = vpack.c.b16 %v6204, %v6202
  %v6231 = vpack.c.b16 %v6205, %v6203
  %v6232 = vpack.c.b16 %v6208, %v6206
  %v6233 = vpack.c.b16 %v6209, %v6207
  %v6234 = vpack.c.b16 %v6212, %v6210
  %v6235 = vpack.c.b16 %v6213, %v6211
  %v6236 = vpack.c.b16 %v6216, %v6214
  %v6237 = vpack.c.b16 %v6217, %v6215
  %v6238 = vpack.c.b16 %v6220, %v6218
  %v6239 = vpack.c.b16 %v6221, %v6219
  %v6240 = vpack.c.b16 %v6224, %v6222
  %v6241 = vpack.c.b16 %v6225, %v6223
  %6258 = vmatprep.subr.bf16.mxu0 0
  %6259 = vmatpush1.bf16.msra.mxu0 %v486
  %6260 = vmatprep.subr.bf16.mxu0 0
  %6261 = vmatpush1.bf16.msra.mxu0 %v485
  %6262 = vmatprep.subr.bf16.mxu0 0
  %6263 = vmatpush1.bf16.msra.mxu0 %v484
  %6264 = vmatprep.subr.bf16.mxu0 0
  %6265 = vmatpush1.bf16.msra.mxu0 %v483
  %6266 = vmatprep.subr.bf16.mxu0 0
  %6267 = vmatpush1.bf16.msra.mxu0 %v482
  %6268 = vmatprep.subr.bf16.mxu0 0
  %6269 = vmatpush1.bf16.msra.mxu0 %v481
  %6270 = vmatprep.subr.bf16.mxu0 0
  %6271 = vmatpush1.bf16.msra.mxu0 %v480
  %6272 = vmatprep.subr.bf16.mxu0 0
  %6273 = vmatpush1.bf16.msra.mxu0 %v479
  %6274 = vmatprep.subr.bf16.mxu0 0
  %6275 = vmatpush2.bf16.msra.mxu0 %v494
  %6276 = vmatprep.subr.bf16.mxu0 0
  %6277 = vmatpush2.bf16.msra.mxu0 %v493
  %6278 = vmatprep.subr.bf16.mxu0 0
  %6279 = vmatpush2.bf16.msra.mxu0 %v492
  %6280 = vmatprep.subr.bf16.mxu0 0
  %6281 = vmatpush2.bf16.msra.mxu0 %v491
  %6282 = vmatprep.subr.bf16.mxu0 0
  %6283 = vmatpush2.bf16.msra.mxu0 %v490
  %6284 = vmatprep.subr.bf16.mxu0 0
  %6285 = vmatpush2.bf16.msra.mxu0 %v489
  %6286 = vmatprep.subr.bf16.mxu0 0
  %6287 = vmatpush2.bf16.msra.mxu0 %v488
  %6288 = vmatprep.subr.bf16.mxu0 0
  %6289 = vmatpush2.bf16.msra.mxu0 %v487
  %6290 = vmatprep.mubr.bf16.mxu0 %v6227
  %6291 = vmatmul.mubr.bf16.gmra.mxu0 %v6226
  %v6292 = vpop.f32.mrf.mxu0
  %v6293 = vadd.f32 0.0, %v6292
  %v6294 = vpop.f32.mrf.mxu0
  %v6295 = vpop.f32.mrf.mxu0
  %v6296 = vadd.f32 0.0, %v6295
  %v6297 = vpop.f32.mrf.mxu0
  %6298 = vmatprep.mubr.bf16.mxu0 %v6229
  %6299 = vmatmul.mubr.bf16.gmra.mxu0 %v6228
  %v6300 = vpop.f32.mrf.mxu0
  %v6301 = vadd.f32 0.0, %v6300
  %v6302 = vpop.f32.mrf.mxu0
  %v6303 = vpop.f32.mrf.mxu0
  %v6304 = vadd.f32 0.0, %v6303
  %v6305 = vpop.f32.mrf.mxu0
  %6306 = vmatprep.mubr.bf16.mxu0 %v6231
  %6307 = vmatmul.mubr.bf16.gmra.mxu0 %v6230
  %v6308 = vpop.f32.mrf.mxu0
  %v6309 = vadd.f32 0.0, %v6308
  %v6310 = vpop.f32.mrf.mxu0
  %v6311 = vpop.f32.mrf.mxu0
  %v6312 = vadd.f32 0.0, %v6311
  %v6313 = vpop.f32.mrf.mxu0
  %6314 = vmatprep.mubr.bf16.mxu0 %v6233
  %6315 = vmatmul.mubr.bf16.gmra.mxu0 %v6232
  %v6316 = vpop.f32.mrf.mxu0
  %v6317 = vadd.f32 0.0, %v6316
  %v6318 = vpop.f32.mrf.mxu0
  %v6319 = vpop.f32.mrf.mxu0
  %v6320 = vadd.f32 0.0, %v6319
  %v6321 = vpop.f32.mrf.mxu0
  %6322 = vmatprep.mubr.bf16.mxu0 %v6235
  %6323 = vmatmul.mubr.bf16.gmra.mxu0 %v6234
  %v6324 = vpop.f32.mrf.mxu0
  %v6325 = vadd.f32 0.0, %v6324
  %v6326 = vpop.f32.mrf.mxu0
  %v6327 = vpop.f32.mrf.mxu0
  %v6328 = vadd.f32 0.0, %v6327
  %v6329 = vpop.f32.mrf.mxu0
  %6330 = vmatprep.mubr.bf16.mxu0 %v6237
  %6331 = vmatmul.mubr.bf16.gmra.mxu0 %v6236
  %v6332 = vpop.f32.mrf.mxu0
  %v6333 = vadd.f32 0.0, %v6332
  %v6334 = vpop.f32.mrf.mxu0
  %v6335 = vpop.f32.mrf.mxu0
  %v6336 = vadd.f32 0.0, %v6335
  %v6337 = vpop.f32.mrf.mxu0
  %6338 = vmatprep.mubr.bf16.mxu0 %v6239
  %6339 = vmatmul.mubr.bf16.gmra.mxu0 %v6238
  %v6340 = vpop.f32.mrf.mxu0
  %v6341 = vadd.f32 0.0, %v6340
  %v6342 = vpop.f32.mrf.mxu0
  %v6343 = vpop.f32.mrf.mxu0
  %v6344 = vadd.f32 0.0, %v6343
  %v6345 = vpop.f32.mrf.mxu0
  %6346 = vmatprep.mubr.bf16.mxu0 %v6241
  %6347 = vmatmul.mubr.bf16.gmra.mxu0 %v6240
  %v6348 = vpop.f32.mrf.mxu0
  %v6349 = vadd.f32 0.0, %v6348
  %v6350 = vpop.f32.mrf.mxu0
  %v6351 = vpop.f32.mrf.mxu0
  %v6352 = vadd.f32 0.0, %v6351
  %v6353 = vpop.f32.mrf.mxu0
  %6354 = vdwg.mxu0
  %v6355 = vpack.c.bf16 %v6296, %v6293
  %v6356 = vpack.c.bf16 %v6304, %v6301
  %v6357 = vpack.c.bf16 %v6312, %v6309
  %v6358 = vpack.c.bf16 %v6320, %v6317
  %v6359 = vpack.c.bf16 %v6328, %v6325
  %v6360 = vpack.c.bf16 %v6336, %v6333
  %v6361 = vpack.c.bf16 %v6344, %v6341
  %v6362 = vpack.c.bf16 %v6352, %v6349
  %s6363 = scalar_lea.vmem %s3, 960
  %v6364 = vld [vmem:[%s6363] sm:$0xf]
  %v6365 = vld [vmem:[%s6363 + $0x4] sm:$0xf]
  %v6366 = vld [vmem:[%s6363 + $0x8] sm:$0xf]
  %v6367 = vld [vmem:[%s6363 + $0xc] sm:$0xf]
  %v6368 = vld [vmem:[%s6363 + $0x10] sm:$0xf]
  %v6369 = vld [vmem:[%s6363 + $0x14] sm:$0xf]
  %v6370 = vld [vmem:[%s6363 + $0x18] sm:$0xf]
  %v6371 = vld [vmem:[%s6363 + $0x1c] sm:$0xf]
  %v6372 = vld [vmem:[%s6363 + $0x20] sm:$0xf]
  %v6373 = vld [vmem:[%s6363 + $0x24] sm:$0xf]
  %v6374 = vld [vmem:[%s6363 + $0x28] sm:$0xf]
  %v6375 = vld [vmem:[%s6363 + $0x2c] sm:$0xf]
  %v6376 = vld [vmem:[%s6363 + $0x30] sm:$0xf]
  %v6377 = vld [vmem:[%s6363 + $0x34] sm:$0xf]
  %v6378 = vld [vmem:[%s6363 + $0x38] sm:$0xf]
  %v6379 = vld [vmem:[%s6363 + $0x3c] sm:$0xf]
  %v6396 = vunpack.c.l.b16 %v6364
  %v6397 = vunpack.c.l.b16 %v6365
  %v6398 = vunpack.c.l.b16 %v6366
  %v6399 = vunpack.c.l.b16 %v6367
  %v6400 = vunpack.c.l.b16 %v6368
  %v6401 = vunpack.c.l.b16 %v6369
  %v6402 = vunpack.c.l.b16 %v6370
  %v6403 = vunpack.c.l.b16 %v6371
  %v6404 = vunpack.c.l.b16 %v6372
  %v6405 = vunpack.c.l.b16 %v6373
  %v6406 = vunpack.c.l.b16 %v6374
  %v6407 = vunpack.c.l.b16 %v6375
  %v6408 = vunpack.c.l.b16 %v6376
  %v6409 = vunpack.c.l.b16 %v6377
  %v6410 = vunpack.c.l.b16 %v6378
  %v6411 = vunpack.c.l.b16 %v6379
  %v6412 = vpack.c.b16 %v6397, %v6396
  %v6413 = vpack.c.b16 %v6399, %v6398
  %v6414 = vpack.c.b16 %v6401, %v6400
  %v6415 = vpack.c.b16 %v6403, %v6402
  %v6416 = vpack.c.b16 %v6405, %v6404
  %v6417 = vpack.c.b16 %v6407, %v6406
  %v6418 = vpack.c.b16 %v6409, %v6408
  %v6419 = vpack.c.b16 %v6411, %v6410
  %6428 = vmatprep.subr.bf16.mxu0 0
  %6429 = vmatpush1.bf16.msra.mxu0 %v6419
  %6430 = vmatprep.subr.bf16.mxu0 0
  %6431 = vmatpush1.bf16.msra.mxu0 %v6418
  %6432 = vmatprep.subr.bf16.mxu0 0
  %6433 = vmatpush1.bf16.msra.mxu0 %v6417
  %6434 = vmatprep.subr.bf16.mxu0 0
  %6435 = vmatpush1.bf16.msra.mxu0 %v6416
  %6436 = vmatprep.subr.bf16.mxu0 0
  %6437 = vmatpush1.bf16.msra.mxu0 %v6415
  %6438 = vmatprep.subr.bf16.mxu0 0
  %6439 = vmatpush1.bf16.msra.mxu0 %v6414
  %6440 = vmatprep.subr.bf16.mxu0 0
  %6441 = vmatpush1.bf16.msra.mxu0 %v6413
  %6442 = vmatprep.subr.bf16.mxu0 0
  %6443 = vmatpush1.bf16.msra.mxu0 %v6412
  %6444 = vmatprep.subr.bf16.mxu0 0
  %6445 = vmatpush2.bf16.msra.mxu0 0
  %6446 = vmatprep.subr.bf16.mxu0 0
  %6447 = vmatpush2.bf16.msra.mxu0 0
  %6448 = vmatprep.subr.bf16.mxu0 0
  %6449 = vmatpush2.bf16.msra.mxu0 0
  %6450 = vmatprep.subr.bf16.mxu0 0
  %6451 = vmatpush2.bf16.msra.mxu0 0
  %6452 = vmatprep.subr.bf16.mxu0 0
  %6453 = vmatpush2.bf16.msra.mxu0 0
  %6454 = vmatprep.subr.bf16.mxu0 0
  %6455 = vmatpush2.bf16.msra.mxu0 0
  %6456 = vmatprep.subr.bf16.mxu0 0
  %6457 = vmatpush2.bf16.msra.mxu0 0
  %6458 = vmatprep.subr.bf16.mxu0 0
  %6459 = vmatpush2.bf16.msra.mxu0 0
  %6460 = vmatprep.mubr.bf16.mxu0 0
  %6461 = vmatmul.mubr.bf16.gmra.mxu0 %v6355
  %v6462 = vpop.f32.mrf.mxu0
  %v6463 = vadd.f32 0.0, %v6462
  %v6464 = vpop.f32.mrf.mxu0
  %v6465 = vpop.f32.mrf.mxu0
  %v6466 = vadd.f32 0.0, %v6465
  %v6467 = vpop.f32.mrf.mxu0
  %6468 = vmatprep.mubr.bf16.mxu0 0
  %6469 = vmatmul.mubr.bf16.gmra.mxu0 %v6356
  %v6470 = vpop.f32.mrf.mxu0
  %v6471 = vadd.f32 0.0, %v6470
  %v6472 = vpop.f32.mrf.mxu0
  %v6473 = vpop.f32.mrf.mxu0
  %v6474 = vadd.f32 0.0, %v6473
  %v6475 = vpop.f32.mrf.mxu0
  %6476 = vmatprep.mubr.bf16.mxu0 0
  %6477 = vmatmul.mubr.bf16.gmra.mxu0 %v6357
  %v6478 = vpop.f32.mrf.mxu0
  %v6479 = vadd.f32 0.0, %v6478
  %v6480 = vpop.f32.mrf.mxu0
  %v6481 = vpop.f32.mrf.mxu0
  %v6482 = vadd.f32 0.0, %v6481
  %v6483 = vpop.f32.mrf.mxu0
  %6484 = vmatprep.mubr.bf16.mxu0 0
  %6485 = vmatmul.mubr.bf16.gmra.mxu0 %v6358
  %v6486 = vpop.f32.mrf.mxu0
  %v6487 = vadd.f32 0.0, %v6486
  %v6488 = vpop.f32.mrf.mxu0
  %v6489 = vpop.f32.mrf.mxu0
  %v6490 = vadd.f32 0.0, %v6489
  %v6491 = vpop.f32.mrf.mxu0
  %6492 = vmatprep.mubr.bf16.mxu0 0
  %6493 = vmatmul.mubr.bf16.gmra.mxu0 %v6359
  %v6494 = vpop.f32.mrf.mxu0
  %v6495 = vadd.f32 0.0, %v6494
  %v6496 = vpop.f32.mrf.mxu0
  %v6497 = vpop.f32.mrf.mxu0
  %v6498 = vadd.f32 0.0, %v6497
  %v6499 = vpop.f32.mrf.mxu0
  %6500 = vmatprep.mubr.bf16.mxu0 0
  %6501 = vmatmul.mubr.bf16.gmra.mxu0 %v6360
  %v6502 = vpop.f32.mrf.mxu0
  %v6503 = vadd.f32 0.0, %v6502
  %v6504 = vpop.f32.mrf.mxu0
  %v6505 = vpop.f32.mrf.mxu0
  %v6506 = vadd.f32 0.0, %v6505
  %v6507 = vpop.f32.mrf.mxu0
  %6508 = vmatprep.mubr.bf16.mxu0 0
  %6509 = vmatmul.mubr.bf16.gmra.mxu0 %v6361
  %v6510 = vpop.f32.mrf.mxu0
  %v6511 = vadd.f32 0.0, %v6510
  %v6512 = vpop.f32.mrf.mxu0
  %v6513 = vpop.f32.mrf.mxu0
  %v6514 = vadd.f32 0.0, %v6513
  %v6515 = vpop.f32.mrf.mxu0
  %6516 = vmatprep.mubr.bf16.mxu0 0
  %6517 = vmatmul.mubr.bf16.gmra.mxu0 %v6362
  %v6518 = vpop.f32.mrf.mxu0
  %v6519 = vadd.f32 0.0, %v6518
  %v6520 = vpop.f32.mrf.mxu0
  %v6521 = vpop.f32.mrf.mxu0
  %v6522 = vadd.f32 0.0, %v6521
  %v6523 = vpop.f32.mrf.mxu0
  %6524 = vdwg.mxu0
  %v6525 = vadd.f32 %v6145, %v6463
  %v6526 = vadd.f32 %v6146, %v6466
  %v6527 = vadd.f32 %v6147, %v6471
  %v6528 = vadd.f32 %v6148, %v6474
  %v6529 = vadd.f32 %v6149, %v6479
  %v6530 = vadd.f32 %v6150, %v6482
  %v6531 = vadd.f32 %v6151, %v6487
  %v6532 = vadd.f32 %v6152, %v6490
  %v6533 = vadd.f32 %v6153, %v6495
  %v6534 = vadd.f32 %v6154, %v6498
  %v6535 = vadd.f32 %v6155, %v6503
  %v6536 = vadd.f32 %v6156, %v6506
  %v6537 = vadd.f32 %v6157, %v6511
  %v6538 = vadd.f32 %v6158, %v6514
  %v6539 = vadd.f32 %v6159, %v6519
  %v6540 = vadd.f32 %v6160, %v6522
  %v6541 = vadd.f32 %v6525, %v6526
  %v6542 = vadd.f32 %v6541, %v6527
  %v6543 = vadd.f32 %v6542, %v6528
  %v6544 = vadd.f32 %v6543, %v6529
  %v6545 = vadd.f32 %v6544, %v6530
  %v6546 = vadd.f32 %v6545, %v6531
  %v6547 = vadd.f32 %v6546, %v6532
  %v6548 = vadd.f32 %v6547, %v6533
  %v6549 = vadd.f32 %v6548, %v6534
  %v6550 = vadd.f32 %v6549, %v6535
  %v6551 = vadd.f32 %v6550, %v6536
  %v6552 = vadd.f32 %v6551, %v6537
  %v6553 = vadd.f32 %v6552, %v6538
  %v6554 = vadd.f32 %v6553, %v6539
  %v6555 = vadd.f32 %v6554, %v6540
  %v6556 = vrot.slane %v6555, 4
  %v6557 = vadd.f32 %v6555, %v6556
  %v6558 = vrot.slane %v6557, 2
  %v6559 = vadd.f32 %v6557, %v6558
  %v6560 = vrot.slane %v6559, 1
  %v6561 = vadd.f32 %v6559, %v6560
  %v6562 = vmul.f32 %v6561, 0.02
  %v6563 = vmul.f32 %v6525, %v6525
  %v6564 = vmul.f32 %v6526, %v6526
  %v6565 = vmul.f32 %v6527, %v6527
  %v6566 = vmul.f32 %v6528, %v6528
  %v6567 = vmul.f32 %v6529, %v6529
  %v6568 = vmul.f32 %v6530, %v6530
  %v6569 = vmul.f32 %v6531, %v6531
  %v6570 = vmul.f32 %v6532, %v6532
  %v6571 = vmul.f32 %v6533, %v6533
  %v6572 = vmul.f32 %v6534, %v6534
  %v6573 = vmul.f32 %v6535, %v6535
  %v6574 = vmul.f32 %v6536, %v6536
  %v6575 = vmul.f32 %v6537, %v6537
  %v6576 = vmul.f32 %v6538, %v6538
  %v6577 = vmul.f32 %v6539, %v6539
  %v6578 = vmul.f32 %v6540, %v6540
  %v6579 = vadd.f32 %v6563, %v6564
  %v6580 = vadd.f32 %v6579, %v6565
  %v6581 = vadd.f32 %v6580, %v6566
  %v6582 = vadd.f32 %v6581, %v6567
  %v6583 = vadd.f32 %v6582, %v6568
  %v6584 = vadd.f32 %v6583, %v6569
  %v6585 = vadd.f32 %v6584, %v6570
  %v6586 = vadd.f32 %v6585, %v6571
  %v6587 = vadd.f32 %v6586, %v6572
  %v6588 = vadd.f32 %v6587, %v6573
  %v6589 = vadd.f32 %v6588, %v6574
  %v6590 = vadd.f32 %v6589, %v6575
  %v6591 = vadd.f32 %v6590, %v6576
  %v6592 = vadd.f32 %v6591, %v6577
  %v6593 = vadd.f32 %v6592, %v6578
  %v6594 = vrot.slane %v6593, 4
  %v6595 = vadd.f32 %v6593, %v6594
  %v6596 = vrot.slane %v6595, 2
  %v6597 = vadd.f32 %v6595, %v6596
  %v6598 = vrot.slane %v6597, 1
  %v6599 = vadd.f32 %v6597, %v6598
  %v6600 = vmul.f32 %v6599, 0.02
  %v6601 = vmul.f32 %v6562, %v6562
  %v6602 = vsub.f32 %v6600, %v6601
  %v6603 = vmax.f32 %v6602, 0.0
  %v6604 = vsub.f32 %v6525, %v6562
  %v6605 = vsub.f32 %v6526, %v6562
  %v6606 = vsub.f32 %v6527, %v6562
  %v6607 = vsub.f32 %v6528, %v6562
  %v6608 = vsub.f32 %v6529, %v6562
  %v6609 = vsub.f32 %v6530, %v6562
  %v6610 = vsub.f32 %v6531, %v6562
  %v6611 = vsub.f32 %v6532, %v6562
  %v6612 = vsub.f32 %v6533, %v6562
  %v6613 = vsub.f32 %v6534, %v6562
  %v6614 = vsub.f32 %v6535, %v6562
  %v6615 = vsub.f32 %v6536, %v6562
  %v6616 = vsub.f32 %v6537, %v6562
  %v6617 = vsub.f32 %v6538, %v6562
  %v6618 = vsub.f32 %v6539, %v6562
  %v6619 = vsub.f32 %v6540, %v6562
  %v6620 = vadd.f32 %v6603, 1e-05
  %v6621 = vrsqrt.pop %v6620
  %v6622 = vmul.f32 %v6604, %v6621
  %v6623 = vmul.f32 %v6605, %v6621
  %v6624 = vmul.f32 %v6606, %v6621
  %v6625 = vmul.f32 %v6607, %v6621
  %v6626 = vmul.f32 %v6608, %v6621
  %v6627 = vmul.f32 %v6609, %v6621
  %v6628 = vmul.f32 %v6610, %v6621
  %v6629 = vmul.f32 %v6611, %v6621
  %v6630 = vmul.f32 %v6612, %v6621
  %v6631 = vmul.f32 %v6613, %v6621
  %v6632 = vmul.f32 %v6614, %v6621
  %v6633 = vmul.f32 %v6615, %v6621
  %v6634 = vmul.f32 %v6616, %v6621
  %v6635 = vmul.f32 %v6617, %v6621
  %v6636 = vmul.f32 %v6618, %v6621
  %v6637 = vmul.f32 %v6619, %v6621
  %v6638 = vld [vmem:[%s4] sm:$0x1]
  %v6640 = vlaneseq
  %v6641 = vshrl.u32 %v6640, 7
  %v6642 = vsub.s32 0, %v6641
  %v6643 = vrot.slane %v6638, %v6642
  %v6645 = vmul.f32 %v6622, %v6643
  %v6646 = vmul.f32 %v6623, %v6643
  %v6647 = vmul.f32 %v6624, %v6643
  %v6648 = vmul.f32 %v6625, %v6643
  %v6649 = vmul.f32 %v6626, %v6643
  %v6650 = vmul.f32 %v6627, %v6643
  %v6651 = vmul.f32 %v6628, %v6643
  %v6652 = vmul.f32 %v6629, %v6643
  %v6653 = vmul.f32 %v6630, %v6643
  %v6654 = vmul.f32 %v6631, %v6643
  %v6655 = vmul.f32 %v6632, %v6643
  %v6656 = vmul.f32 %v6633, %v6643
  %v6657 = vmul.f32 %v6634, %v6643
  %v6658 = vmul.f32 %v6635, %v6643
  %v6659 = vmul.f32 %v6636, %v6643
  %v6660 = vmul.f32 %v6637, %v6643
  %v6661 = vld [vmem:[%s5] sm:$0x1]
  %v6663 = vlaneseq
  %v6664 = vshrl.u32 %v6663, 7
  %v6665 = vsub.s32 0, %v6664
  %v6666 = vrot.slane %v6661, %v6665
  %v6668 = vadd.f32 %v6645, %v6666
  %v6669 = vadd.f32 %v6646, %v6666
  %v6670 = vadd.f32 %v6647, %v6666
  %v6671 = vadd.f32 %v6648, %v6666
  %v6672 = vadd.f32 %v6649, %v6666
  %v6673 = vadd.f32 %v6650, %v6666
  %v6674 = vadd.f32 %v6651, %v6666
  %v6675 = vadd.f32 %v6652, %v6666
  %v6676 = vadd.f32 %v6653, %v6666
  %v6677 = vadd.f32 %v6654, %v6666
  %v6678 = vadd.f32 %v6655, %v6666
  %v6679 = vadd.f32 %v6656, %v6666
  %v6680 = vadd.f32 %v6657, %v6666
  %v6681 = vadd.f32 %v6658, %v6666
  %v6682 = vadd.f32 %v6659, %v6666
  %v6683 = vadd.f32 %v6660, %v6666
  %vm6684 = vcmp.ge.f32.partialorder %v6668, 0.0
  %vm6685 = vcmp.ge.f32.partialorder %v6669, 0.0
  %vm6686 = vcmp.ge.f32.partialorder %v6670, 0.0
  %vm6687 = vcmp.ge.f32.partialorder %v6671, 0.0
  %vm6688 = vcmp.ge.f32.partialorder %v6672, 0.0
  %vm6689 = vcmp.ge.f32.partialorder %v6673, 0.0
  %vm6690 = vcmp.ge.f32.partialorder %v6674, 0.0
  %vm6691 = vcmp.ge.f32.partialorder %v6675, 0.0
  %vm6692 = vcmp.ge.f32.partialorder %v6676, 0.0
  %vm6693 = vcmp.ge.f32.partialorder %v6677, 0.0
  %vm6694 = vcmp.ge.f32.partialorder %v6678, 0.0
  %vm6695 = vcmp.ge.f32.partialorder %v6679, 0.0
  %vm6696 = vcmp.ge.f32.partialorder %v6680, 0.0
  %vm6697 = vcmp.ge.f32.partialorder %v6681, 0.0
  %vm6698 = vcmp.ge.f32.partialorder %v6682, 0.0
  %vm6699 = vcmp.ge.f32.partialorder %v6683, 0.0
  %v6700 = vmul.f32 %v6668, 0.2
  %v6701 = vmul.f32 %v6669, 0.2
  %v6702 = vmul.f32 %v6670, 0.2
  %v6703 = vmul.f32 %v6671, 0.2
  %v6704 = vmul.f32 %v6672, 0.2
  %v6705 = vmul.f32 %v6673, 0.2
  %v6706 = vmul.f32 %v6674, 0.2
  %v6707 = vmul.f32 %v6675, 0.2
  %v6708 = vmul.f32 %v6676, 0.2
  %v6709 = vmul.f32 %v6677, 0.2
  %v6710 = vmul.f32 %v6678, 0.2
  %v6711 = vmul.f32 %v6679, 0.2
  %v6712 = vmul.f32 %v6680, 0.2
  %v6713 = vmul.f32 %v6681, 0.2
  %v6714 = vmul.f32 %v6682, 0.2
  %v6715 = vmul.f32 %v6683, 0.2
  %v6716 = vsel %vm6684, %v6668, %v6700
  %v6717 = vsel %vm6685, %v6669, %v6701
  %v6718 = vsel %vm6686, %v6670, %v6702
  %v6719 = vsel %vm6687, %v6671, %v6703
  %v6720 = vsel %vm6688, %v6672, %v6704
  %v6721 = vsel %vm6689, %v6673, %v6705
  %v6722 = vsel %vm6690, %v6674, %v6706
  %v6723 = vsel %vm6691, %v6675, %v6707
  %v6724 = vsel %vm6692, %v6676, %v6708
  %v6725 = vsel %vm6693, %v6677, %v6709
  %v6726 = vsel %vm6694, %v6678, %v6710
  %v6727 = vsel %vm6695, %v6679, %v6711
  %v6728 = vsel %vm6696, %v6680, %v6712
  %v6729 = vsel %vm6697, %v6681, %v6713
  %v6730 = vsel %vm6698, %v6682, %v6714
  %v6731 = vsel %vm6699, %v6683, %v6715
  %v6732 = vpack.c.bf16 %v6717, %v6716
  %v6733 = vpack.c.bf16 %v6719, %v6718
  %v6734 = vpack.c.bf16 %v6721, %v6720
  %v6735 = vpack.c.bf16 %v6723, %v6722
  %v6736 = vpack.c.bf16 %v6725, %v6724
  %v6737 = vpack.c.bf16 %v6727, %v6726
  %v6738 = vpack.c.bf16 %v6729, %v6728
  %v6739 = vpack.c.bf16 %v6731, %v6730
  %v6740 = vld [vmem:[%s6] sm:$0xf]
  %v6741 = vld [vmem:[%s6 + $0x4] sm:$0xf]
  %v6744 = vunpack.c.l.b16 %v6740
  %v6745 = vunpack.c.l.b16 %v6741
  %v6746 = vpack.c.b16 %v6745, %v6744
  %6748 = vmatprep.subr.bf16.mxu0 0
  %6749 = vmatpush1.bf16.msra.mxu0 %v6739
  %6750 = vmatprep.subr.bf16.mxu0 0
  %6751 = vmatpush1.bf16.msra.mxu0 %v6738
  %6752 = vmatprep.subr.bf16.mxu0 0
  %6753 = vmatpush1.bf16.msra.mxu0 %v6737
  %6754 = vmatprep.subr.bf16.mxu0 0
  %6755 = vmatpush1.bf16.msra.mxu0 %v6736
  %6756 = vmatprep.subr.bf16.mxu0 0
  %6757 = vmatpush1.bf16.msra.mxu0 %v6735
  %6758 = vmatprep.subr.bf16.mxu0 0
  %6759 = vmatpush1.bf16.msra.mxu0 %v6734
  %6760 = vmatprep.subr.bf16.mxu0 0
  %6761 = vmatpush1.bf16.msra.mxu0 %v6733
  %6762 = vmatprep.subr.bf16.mxu0 0
  %6763 = vmatpush1.bf16.msra.mxu0 %v6732
  %6764 = vmatprep.subr.bf16.mxu0 0
  %6765 = vmatpush2.bf16.msra.mxu0 0
  %6766 = vmatprep.subr.bf16.mxu0 0
  %6767 = vmatpush2.bf16.msra.mxu0 0
  %6768 = vmatprep.subr.bf16.mxu0 0
  %6769 = vmatpush2.bf16.msra.mxu0 0
  %6770 = vmatprep.subr.bf16.mxu0 0
  %6771 = vmatpush2.bf16.msra.mxu0 0
  %6772 = vmatprep.subr.bf16.mxu0 0
  %6773 = vmatpush2.bf16.msra.mxu0 0
  %6774 = vmatprep.subr.bf16.mxu0 0
  %6775 = vmatpush2.bf16.msra.mxu0 0
  %6776 = vmatprep.subr.bf16.mxu0 0
  %6777 = vmatpush2.bf16.msra.mxu0 0
  %6778 = vmatprep.subr.bf16.mxu0 0
  %6779 = vmatpush2.bf16.msra.mxu0 0
  %6780 = vmatprep.mubr.bf16.mxu0 0
  %6781 = vmatmul.mubr.bf16.gmra.mxu0 %v6746
  %v6782 = vpop.f32.mrf.mxu0
  %v6783 = vadd.f32 0.0, %v6782
  %v6784 = vpop.f32.mrf.mxu0
  %v6785 = vpop.f32.mrf.mxu0
  %v6786 = vadd.f32 0.0, %v6785
  %v6787 = vpop.f32.mrf.mxu0
  %6788 = vdwg.mxu0
  %v6789 = vpack.c.bf16 %v6786, %v6783
  %v6790 = vld [vmem:[%s7] sm:$0xf]
  %v6791 = vld [vmem:[%s7 + $0x4] sm:$0xf]
  %v6792 = vld [vmem:[%s7 + $0x8] sm:$0xf]
  %v6793 = vld [vmem:[%s7 + $0xc] sm:$0xf]
  %v6794 = vld [vmem:[%s7 + $0x10] sm:$0xf]
  %v6795 = vld [vmem:[%s7 + $0x14] sm:$0xf]
  %v6796 = vld [vmem:[%s7 + $0x18] sm:$0xf]
  %v6797 = vld [vmem:[%s7 + $0x1c] sm:$0xf]
  %v6798 = vld [vmem:[%s7 + $0x20] sm:$0xf]
  %v6799 = vld [vmem:[%s7 + $0x24] sm:$0xf]
  %v6800 = vld [vmem:[%s7 + $0x28] sm:$0xf]
  %v6801 = vld [vmem:[%s7 + $0x2c] sm:$0xf]
  %v6802 = vld [vmem:[%s7 + $0x30] sm:$0xf]
  %v6803 = vld [vmem:[%s7 + $0x34] sm:$0xf]
  %v6804 = vld [vmem:[%s7 + $0x38] sm:$0xf]
  %v6805 = vld [vmem:[%s7 + $0x3c] sm:$0xf]
  %s6806 = scalar_lea.vmem %s6, 8
  %v6807 = vld [vmem:[%s6806] sm:$0xf]
  %v6808 = vld [vmem:[%s6806 + $0x4] sm:$0xf]
  %v6811 = vunpack.c.l.b16 %v6807
  %v6812 = vunpack.c.l.b16 %v6808
  %v6813 = vpack.c.b16 %v6812, %v6811
  %6815 = vmatprep.subr.bf16.mxu0 0
  %6816 = vmatpush1.bf16.msra.mxu0 %v6739
  %6817 = vmatprep.subr.bf16.mxu0 0
  %6818 = vmatpush1.bf16.msra.mxu0 %v6738
  %6819 = vmatprep.subr.bf16.mxu0 0
  %6820 = vmatpush1.bf16.msra.mxu0 %v6737
  %6821 = vmatprep.subr.bf16.mxu0 0
  %6822 = vmatpush1.bf16.msra.mxu0 %v6736
  %6823 = vmatprep.subr.bf16.mxu0 0
  %6824 = vmatpush1.bf16.msra.mxu0 %v6735
  %6825 = vmatprep.subr.bf16.mxu0 0
  %6826 = vmatpush1.bf16.msra.mxu0 %v6734
  %6827 = vmatprep.subr.bf16.mxu0 0
  %6828 = vmatpush1.bf16.msra.mxu0 %v6733
  %6829 = vmatprep.subr.bf16.mxu0 0
  %6830 = vmatpush1.bf16.msra.mxu0 %v6732
  %6831 = vmatprep.subr.bf16.mxu0 0
  %6832 = vmatpush2.bf16.msra.mxu0 0
  %6833 = vmatprep.subr.bf16.mxu0 0
  %6834 = vmatpush2.bf16.msra.mxu0 0
  %6835 = vmatprep.subr.bf16.mxu0 0
  %6836 = vmatpush2.bf16.msra.mxu0 0
  %6837 = vmatprep.subr.bf16.mxu0 0
  %6838 = vmatpush2.bf16.msra.mxu0 0
  %6839 = vmatprep.subr.bf16.mxu0 0
  %6840 = vmatpush2.bf16.msra.mxu0 0
  %6841 = vmatprep.subr.bf16.mxu0 0
  %6842 = vmatpush2.bf16.msra.mxu0 0
  %6843 = vmatprep.subr.bf16.mxu0 0
  %6844 = vmatpush2.bf16.msra.mxu0 0
  %6845 = vmatprep.subr.bf16.mxu0 0
  %6846 = vmatpush2.bf16.msra.mxu0 0
  %6847 = vmatprep.mubr.bf16.mxu0 0
  %6848 = vmatmul.mubr.bf16.gmra.mxu0 %v6813
  %v6849 = vpop.f32.mrf.mxu0
  %v6850 = vadd.f32 0.0, %v6849
  %v6851 = vpop.f32.mrf.mxu0
  %v6852 = vpop.f32.mrf.mxu0
  %v6853 = vadd.f32 0.0, %v6852
  %v6854 = vpop.f32.mrf.mxu0
  %6855 = vdwg.mxu0
  %v6856 = vpack.c.bf16 %v6853, %v6850
  %s6857 = scalar_lea.vmem %s7, 64
  %v6858 = vld [vmem:[%s6857] sm:$0xf]
  %v6859 = vld [vmem:[%s6857 + $0x4] sm:$0xf]
  %v6860 = vld [vmem:[%s6857 + $0x8] sm:$0xf]
  %v6861 = vld [vmem:[%s6857 + $0xc] sm:$0xf]
  %v6862 = vld [vmem:[%s6857 + $0x10] sm:$0xf]
  %v6863 = vld [vmem:[%s6857 + $0x14] sm:$0xf]
  %v6864 = vld [vmem:[%s6857 + $0x18] sm:$0xf]
  %v6865 = vld [vmem:[%s6857 + $0x1c] sm:$0xf]
  %v6866 = vld [vmem:[%s6857 + $0x20] sm:$0xf]
  %v6867 = vld [vmem:[%s6857 + $0x24] sm:$0xf]
  %v6868 = vld [vmem:[%s6857 + $0x28] sm:$0xf]
  %v6869 = vld [vmem:[%s6857 + $0x2c] sm:$0xf]
  %v6870 = vld [vmem:[%s6857 + $0x30] sm:$0xf]
  %v6871 = vld [vmem:[%s6857 + $0x34] sm:$0xf]
  %v6872 = vld [vmem:[%s6857 + $0x38] sm:$0xf]
  %v6873 = vld [vmem:[%s6857 + $0x3c] sm:$0xf]
  %v6890 = vunpack.c.l.b16 %v6858
  %v6891 = vunpack.c.l.b16 %v6859
  %v6892 = vunpack.c.l.b16 %v6860
  %v6893 = vunpack.c.l.b16 %v6861
  %v6894 = vunpack.c.l.b16 %v6862
  %v6895 = vunpack.c.l.b16 %v6863
  %v6896 = vunpack.c.l.b16 %v6864
  %v6897 = vunpack.c.l.b16 %v6865
  %v6898 = vunpack.c.l.b16 %v6866
  %v6899 = vunpack.c.l.b16 %v6867
  %v6900 = vunpack.c.l.b16 %v6868
  %v6901 = vunpack.c.l.b16 %v6869
  %v6902 = vunpack.c.l.b16 %v6870
  %v6903 = vunpack.c.l.b16 %v6871
  %v6904 = vunpack.c.l.b16 %v6872
  %v6905 = vunpack.c.l.b16 %v6873
  %v6906 = vpack.c.b16 %v6891, %v6890
  %v6907 = vpack.c.b16 %v6893, %v6892
  %v6908 = vpack.c.b16 %v6895, %v6894
  %v6909 = vpack.c.b16 %v6897, %v6896
  %v6910 = vpack.c.b16 %v6899, %v6898
  %v6911 = vpack.c.b16 %v6901, %v6900
  %v6912 = vpack.c.b16 %v6903, %v6902
  %v6913 = vpack.c.b16 %v6905, %v6904
  %6922 = vmatprep.subr.bf16.mxu0 0
  %6923 = vmatpush1.bf16.msra.mxu0 %v6913
  %6924 = vmatprep.subr.bf16.mxu0 0
  %6925 = vmatpush1.bf16.msra.mxu0 %v6912
  %6926 = vmatprep.subr.bf16.mxu0 0
  %6927 = vmatpush1.bf16.msra.mxu0 %v6911
  %6928 = vmatprep.subr.bf16.mxu0 0
  %6929 = vmatpush1.bf16.msra.mxu0 %v6910
  %6930 = vmatprep.subr.bf16.mxu0 0
  %6931 = vmatpush1.bf16.msra.mxu0 %v6909
  %6932 = vmatprep.subr.bf16.mxu0 0
  %6933 = vmatpush1.bf16.msra.mxu0 %v6908
  %6934 = vmatprep.subr.bf16.mxu0 0
  %6935 = vmatpush1.bf16.msra.mxu0 %v6907
  %6936 = vmatprep.subr.bf16.mxu0 0
  %6937 = vmatpush1.bf16.msra.mxu0 %v6906
  %6938 = vmatprep.subr.bf16.mxu0 0
  %6939 = vmatpush2.bf16.msra.mxu0 0
  %6940 = vmatprep.subr.bf16.mxu0 0
  %6941 = vmatpush2.bf16.msra.mxu0 0
  %6942 = vmatprep.subr.bf16.mxu0 0
  %6943 = vmatpush2.bf16.msra.mxu0 0
  %6944 = vmatprep.subr.bf16.mxu0 0
  %6945 = vmatpush2.bf16.msra.mxu0 0
  %6946 = vmatprep.subr.bf16.mxu0 0
  %6947 = vmatpush2.bf16.msra.mxu0 0
  %6948 = vmatprep.subr.bf16.mxu0 0
  %6949 = vmatpush2.bf16.msra.mxu0 0
  %6950 = vmatprep.subr.bf16.mxu0 0
  %6951 = vmatpush2.bf16.msra.mxu0 0
  %6952 = vmatprep.subr.bf16.mxu0 0
  %6953 = vmatpush2.bf16.msra.mxu0 0
  %6954 = vmatprep.mubr.bf16.mxu0 0
  %6955 = vmatmul.mubr.bf16.gmra.mxu0 %v6856
  %v6956 = vpop.f32.mrf.mxu0
  %v6957 = vadd.f32 0.0, %v6956
  %v6958 = vpop.f32.mrf.mxu0
  %v6959 = vpop.f32.mrf.mxu0
  %v6960 = vadd.f32 0.0, %v6959
  %v6961 = vpop.f32.mrf.mxu0
  %6962 = vdwg.mxu0
  %v6979 = vunpack.c.l.b16 %v6790
  %v6980 = vunpack.c.l.b16 %v6791
  %v6981 = vunpack.c.l.b16 %v6792
  %v6982 = vunpack.c.l.b16 %v6793
  %v6983 = vunpack.c.l.b16 %v6794
  %v6984 = vunpack.c.l.b16 %v6795
  %v6985 = vunpack.c.l.b16 %v6796
  %v6986 = vunpack.c.l.b16 %v6797
  %v6987 = vunpack.c.l.b16 %v6798
  %v6988 = vunpack.c.l.b16 %v6799
  %v6989 = vunpack.c.l.b16 %v6800
  %v6990 = vunpack.c.l.b16 %v6801
  %v6991 = vunpack.c.l.b16 %v6802
  %v6992 = vunpack.c.l.b16 %v6803
  %v6993 = vunpack.c.l.b16 %v6804
  %v6994 = vunpack.c.l.b16 %v6805
  %v6995 = vpack.c.b16 %v6980, %v6979
  %v6996 = vpack.c.b16 %v6982, %v6981
  %v6997 = vpack.c.b16 %v6984, %v6983
  %v6998 = vpack.c.b16 %v6986, %v6985
  %v6999 = vpack.c.b16 %v6988, %v6987
  %v7000 = vpack.c.b16 %v6990, %v6989
  %v7001 = vpack.c.b16 %v6992, %v6991
  %v7002 = vpack.c.b16 %v6994, %v6993
  %7011 = vmatprep.subr.bf16.mxu0 0
  %7012 = vmatpush1.bf16.msra.mxu0 %v7002
  %7013 = vmatprep.subr.bf16.mxu0 0
  %7014 = vmatpush1.bf16.msra.mxu0 %v7001
  %7015 = vmatprep.subr.bf16.mxu0 0
  %7016 = vmatpush1.bf16.msra.mxu0 %v7000
  %7017 = vmatprep.subr.bf16.mxu0 0
  %7018 = vmatpush1.bf16.msra.mxu0 %v6999
  %7019 = vmatprep.subr.bf16.mxu0 0
  %7020 = vmatpush1.bf16.msra.mxu0 %v6998
  %7021 = vmatprep.subr.bf16.mxu0 0
  %7022 = vmatpush1.bf16.msra.mxu0 %v6997
  %7023 = vmatprep.subr.bf16.mxu0 0
  %7024 = vmatpush1.bf16.msra.mxu0 %v6996
  %7025 = vmatprep.subr.bf16.mxu0 0
  %7026 = vmatpush1.bf16.msra.mxu0 %v6995
  %7027 = vmatprep.subr.bf16.mxu0 0
  %7028 = vmatpush2.bf16.msra.mxu0 0
  %7029 = vmatprep.subr.bf16.mxu0 0
  %7030 = vmatpush2.bf16.msra.mxu0 0
  %7031 = vmatprep.subr.bf16.mxu0 0
  %7032 = vmatpush2.bf16.msra.mxu0 0
  %7033 = vmatprep.subr.bf16.mxu0 0
  %7034 = vmatpush2.bf16.msra.mxu0 0
  %7035 = vmatprep.subr.bf16.mxu0 0
  %7036 = vmatpush2.bf16.msra.mxu0 0
  %7037 = vmatprep.subr.bf16.mxu0 0
  %7038 = vmatpush2.bf16.msra.mxu0 0
  %7039 = vmatprep.subr.bf16.mxu0 0
  %7040 = vmatpush2.bf16.msra.mxu0 0
  %7041 = vmatprep.subr.bf16.mxu0 0
  %7042 = vmatpush2.bf16.msra.mxu0 0
  %7043 = vmatprep.mubr.bf16.mxu0 0
  %7044 = vmatmul.mubr.bf16.gmra.mxu0 %v6789
  %v7045 = vpop.f32.mrf.mxu0
  %v7046 = vadd.f32 %v6957, %v7045
  %v7047 = vpop.f32.mrf.mxu0
  %v7048 = vpop.f32.mrf.mxu0
  %v7049 = vadd.f32 %v6960, %v7048
  %v7050 = vpop.f32.mrf.mxu0
  %7051 = vdwg.mxu0
  %s7052 = scalar_lea.vmem %s6, 16
  %v7053 = vld [vmem:[%s7052] sm:$0xf]
  %v7054 = vld [vmem:[%s7052 + $0x4] sm:$0xf]
  %v7057 = vunpack.c.l.b16 %v7053
  %v7058 = vunpack.c.l.b16 %v7054
  %v7059 = vpack.c.b16 %v7058, %v7057
  %7061 = vmatprep.subr.bf16.mxu0 0
  %7062 = vmatpush1.bf16.msra.mxu0 %v6739
  %7063 = vmatprep.subr.bf16.mxu0 0
  %7064 = vmatpush1.bf16.msra.mxu0 %v6738
  %7065 = vmatprep.subr.bf16.mxu0 0
  %7066 = vmatpush1.bf16.msra.mxu0 %v6737
  %7067 = vmatprep.subr.bf16.mxu0 0
  %7068 = vmatpush1.bf16.msra.mxu0 %v6736
  %7069 = vmatprep.subr.bf16.mxu0 0
  %7070 = vmatpush1.bf16.msra.mxu0 %v6735
  %7071 = vmatprep.subr.bf16.mxu0 0
  %7072 = vmatpush1.bf16.msra.mxu0 %v6734
  %7073 = vmatprep.subr.bf16.mxu0 0
  %7074 = vmatpush1.bf16.msra.mxu0 %v6733
  %7075 = vmatprep.subr.bf16.mxu0 0
  %7076 = vmatpush1.bf16.msra.mxu0 %v6732
  %7077 = vmatprep.subr.bf16.mxu0 0
  %7078 = vmatpush2.bf16.msra.mxu0 0
  %7079 = vmatprep.subr.bf16.mxu0 0
  %7080 = vmatpush2.bf16.msra.mxu0 0
  %7081 = vmatprep.subr.bf16.mxu0 0
  %7082 = vmatpush2.bf16.msra.mxu0 0
  %7083 = vmatprep.subr.bf16.mxu0 0
  %7084 = vmatpush2.bf16.msra.mxu0 0
  %7085 = vmatprep.subr.bf16.mxu0 0
  %7086 = vmatpush2.bf16.msra.mxu0 0
  %7087 = vmatprep.subr.bf16.mxu0 0
  %7088 = vmatpush2.bf16.msra.mxu0 0
  %7089 = vmatprep.subr.bf16.mxu0 0
  %7090 = vmatpush2.bf16.msra.mxu0 0
  %7091 = vmatprep.subr.bf16.mxu0 0
  %7092 = vmatpush2.bf16.msra.mxu0 0
  %7093 = vmatprep.mubr.bf16.mxu0 0
  %7094 = vmatmul.mubr.bf16.gmra.mxu0 %v7059
  %v7095 = vpop.f32.mrf.mxu0
  %v7096 = vadd.f32 0.0, %v7095
  %v7097 = vpop.f32.mrf.mxu0
  %v7098 = vpop.f32.mrf.mxu0
  %v7099 = vadd.f32 0.0, %v7098
  %v7100 = vpop.f32.mrf.mxu0
  %7101 = vdwg.mxu0
  %v7102 = vpack.c.bf16 %v7099, %v7096
  %s7103 = scalar_lea.vmem %s7, 128
  %v7104 = vld [vmem:[%s7103] sm:$0xf]
  %v7105 = vld [vmem:[%s7103 + $0x4] sm:$0xf]
  %v7106 = vld [vmem:[%s7103 + $0x8] sm:$0xf]
  %v7107 = vld [vmem:[%s7103 + $0xc] sm:$0xf]
  %v7108 = vld [vmem:[%s7103 + $0x10] sm:$0xf]
  %v7109 = vld [vmem:[%s7103 + $0x14] sm:$0xf]
  %v7110 = vld [vmem:[%s7103 + $0x18] sm:$0xf]
  %v7111 = vld [vmem:[%s7103 + $0x1c] sm:$0xf]
  %v7112 = vld [vmem:[%s7103 + $0x20] sm:$0xf]
  %v7113 = vld [vmem:[%s7103 + $0x24] sm:$0xf]
  %v7114 = vld [vmem:[%s7103 + $0x28] sm:$0xf]
  %v7115 = vld [vmem:[%s7103 + $0x2c] sm:$0xf]
  %v7116 = vld [vmem:[%s7103 + $0x30] sm:$0xf]
  %v7117 = vld [vmem:[%s7103 + $0x34] sm:$0xf]
  %v7118 = vld [vmem:[%s7103 + $0x38] sm:$0xf]
  %v7119 = vld [vmem:[%s7103 + $0x3c] sm:$0xf]
  %v7136 = vunpack.c.l.b16 %v7104
  %v7137 = vunpack.c.l.b16 %v7105
  %v7138 = vunpack.c.l.b16 %v7106
  %v7139 = vunpack.c.l.b16 %v7107
  %v7140 = vunpack.c.l.b16 %v7108
  %v7141 = vunpack.c.l.b16 %v7109
  %v7142 = vunpack.c.l.b16 %v7110
  %v7143 = vunpack.c.l.b16 %v7111
  %v7144 = vunpack.c.l.b16 %v7112
  %v7145 = vunpack.c.l.b16 %v7113
  %v7146 = vunpack.c.l.b16 %v7114
  %v7147 = vunpack.c.l.b16 %v7115
  %v7148 = vunpack.c.l.b16 %v7116
  %v7149 = vunpack.c.l.b16 %v7117
  %v7150 = vunpack.c.l.b16 %v7118
  %v7151 = vunpack.c.l.b16 %v7119
  %v7152 = vpack.c.b16 %v7137, %v7136
  %v7153 = vpack.c.b16 %v7139, %v7138
  %v7154 = vpack.c.b16 %v7141, %v7140
  %v7155 = vpack.c.b16 %v7143, %v7142
  %v7156 = vpack.c.b16 %v7145, %v7144
  %v7157 = vpack.c.b16 %v7147, %v7146
  %v7158 = vpack.c.b16 %v7149, %v7148
  %v7159 = vpack.c.b16 %v7151, %v7150
  %7168 = vmatprep.subr.bf16.mxu0 0
  %7169 = vmatpush1.bf16.msra.mxu0 %v7159
  %7170 = vmatprep.subr.bf16.mxu0 0
  %7171 = vmatpush1.bf16.msra.mxu0 %v7158
  %7172 = vmatprep.subr.bf16.mxu0 0
  %7173 = vmatpush1.bf16.msra.mxu0 %v7157
  %7174 = vmatprep.subr.bf16.mxu0 0
  %7175 = vmatpush1.bf16.msra.mxu0 %v7156
  %7176 = vmatprep.subr.bf16.mxu0 0
  %7177 = vmatpush1.bf16.msra.mxu0 %v7155
  %7178 = vmatprep.subr.bf16.mxu0 0
  %7179 = vmatpush1.bf16.msra.mxu0 %v7154
  %7180 = vmatprep.subr.bf16.mxu0 0
  %7181 = vmatpush1.bf16.msra.mxu0 %v7153
  %7182 = vmatprep.subr.bf16.mxu0 0
  %7183 = vmatpush1.bf16.msra.mxu0 %v7152
  %7184 = vmatprep.subr.bf16.mxu0 0
  %7185 = vmatpush2.bf16.msra.mxu0 0
  %7186 = vmatprep.subr.bf16.mxu0 0
  %7187 = vmatpush2.bf16.msra.mxu0 0
  %7188 = vmatprep.subr.bf16.mxu0 0
  %7189 = vmatpush2.bf16.msra.mxu0 0
  %7190 = vmatprep.subr.bf16.mxu0 0
  %7191 = vmatpush2.bf16.msra.mxu0 0
  %7192 = vmatprep.subr.bf16.mxu0 0
  %7193 = vmatpush2.bf16.msra.mxu0 0
  %7194 = vmatprep.subr.bf16.mxu0 0
  %7195 = vmatpush2.bf16.msra.mxu0 0
  %7196 = vmatprep.subr.bf16.mxu0 0
  %7197 = vmatpush2.bf16.msra.mxu0 0
  %7198 = vmatprep.subr.bf16.mxu0 0
  %7199 = vmatpush2.bf16.msra.mxu0 0
  %7200 = vmatprep.mubr.bf16.mxu0 0
  %7201 = vmatmul.mubr.bf16.gmra.mxu0 %v7102
  %v7202 = vpop.f32.mrf.mxu0
  %v7203 = vadd.f32 0.0, %v7202
  %v7204 = vpop.f32.mrf.mxu0
  %v7205 = vpop.f32.mrf.mxu0
  %v7206 = vadd.f32 0.0, %v7205
  %v7207 = vpop.f32.mrf.mxu0
  %7208 = vdwg.mxu0
  %v7209 = vadd.f32 %v7046, %v7203
  %v7210 = vadd.f32 %v7049, %v7206
  %s7211 = scalar_lea.vmem %s6, 24
  %v7212 = vld [vmem:[%s7211] sm:$0xf]
  %v7213 = vld [vmem:[%s7211 + $0x4] sm:$0xf]
  %v7216 = vunpack.c.l.b16 %v7212
  %v7217 = vunpack.c.l.b16 %v7213
  %v7218 = vpack.c.b16 %v7217, %v7216
  %7220 = vmatprep.subr.bf16.mxu0 0
  %7221 = vmatpush1.bf16.msra.mxu0 %v6739
  %7222 = vmatprep.subr.bf16.mxu0 0
  %7223 = vmatpush1.bf16.msra.mxu0 %v6738
  %7224 = vmatprep.subr.bf16.mxu0 0
  %7225 = vmatpush1.bf16.msra.mxu0 %v6737
  %7226 = vmatprep.subr.bf16.mxu0 0
  %7227 = vmatpush1.bf16.msra.mxu0 %v6736
  %7228 = vmatprep.subr.bf16.mxu0 0
  %7229 = vmatpush1.bf16.msra.mxu0 %v6735
  %7230 = vmatprep.subr.bf16.mxu0 0
  %7231 = vmatpush1.bf16.msra.mxu0 %v6734
  %7232 = vmatprep.subr.bf16.mxu0 0
  %7233 = vmatpush1.bf16.msra.mxu0 %v6733
  %7234 = vmatprep.subr.bf16.mxu0 0
  %7235 = vmatpush1.bf16.msra.mxu0 %v6732
  %7236 = vmatprep.subr.bf16.mxu0 0
  %7237 = vmatpush2.bf16.msra.mxu0 0
  %7238 = vmatprep.subr.bf16.mxu0 0
  %7239 = vmatpush2.bf16.msra.mxu0 0
  %7240 = vmatprep.subr.bf16.mxu0 0
  %7241 = vmatpush2.bf16.msra.mxu0 0
  %7242 = vmatprep.subr.bf16.mxu0 0
  %7243 = vmatpush2.bf16.msra.mxu0 0
  %7244 = vmatprep.subr.bf16.mxu0 0
  %7245 = vmatpush2.bf16.msra.mxu0 0
  %7246 = vmatprep.subr.bf16.mxu0 0
  %7247 = vmatpush2.bf16.msra.mxu0 0
  %7248 = vmatprep.subr.bf16.mxu0 0
  %7249 = vmatpush2.bf16.msra.mxu0 0
  %7250 = vmatprep.subr.bf16.mxu0 0
  %7251 = vmatpush2.bf16.msra.mxu0 0
  %7252 = vmatprep.mubr.bf16.mxu0 0
  %7253 = vmatmul.mubr.bf16.gmra.mxu0 %v7218
  %v7254 = vpop.f32.mrf.mxu0
  %v7255 = vadd.f32 0.0, %v7254
  %v7256 = vpop.f32.mrf.mxu0
  %v7257 = vpop.f32.mrf.mxu0
  %v7258 = vadd.f32 0.0, %v7257
  %v7259 = vpop.f32.mrf.mxu0
  %7260 = vdwg.mxu0
  %v7261 = vpack.c.bf16 %v7258, %v7255
  %s7262 = scalar_lea.vmem %s7, 192
  %v7263 = vld [vmem:[%s7262] sm:$0xf]
  %v7264 = vld [vmem:[%s7262 + $0x4] sm:$0xf]
  %v7265 = vld [vmem:[%s7262 + $0x8] sm:$0xf]
  %v7266 = vld [vmem:[%s7262 + $0xc] sm:$0xf]
  %v7267 = vld [vmem:[%s7262 + $0x10] sm:$0xf]
  %v7268 = vld [vmem:[%s7262 + $0x14] sm:$0xf]
  %v7269 = vld [vmem:[%s7262 + $0x18] sm:$0xf]
  %v7270 = vld [vmem:[%s7262 + $0x1c] sm:$0xf]
  %v7271 = vld [vmem:[%s7262 + $0x20] sm:$0xf]
  %v7272 = vld [vmem:[%s7262 + $0x24] sm:$0xf]
  %v7273 = vld [vmem:[%s7262 + $0x28] sm:$0xf]
  %v7274 = vld [vmem:[%s7262 + $0x2c] sm:$0xf]
  %v7275 = vld [vmem:[%s7262 + $0x30] sm:$0xf]
  %v7276 = vld [vmem:[%s7262 + $0x34] sm:$0xf]
  %v7277 = vld [vmem:[%s7262 + $0x38] sm:$0xf]
  %v7278 = vld [vmem:[%s7262 + $0x3c] sm:$0xf]
  %v7295 = vunpack.c.l.b16 %v7263
  %v7296 = vunpack.c.l.b16 %v7264
  %v7297 = vunpack.c.l.b16 %v7265
  %v7298 = vunpack.c.l.b16 %v7266
  %v7299 = vunpack.c.l.b16 %v7267
  %v7300 = vunpack.c.l.b16 %v7268
  %v7301 = vunpack.c.l.b16 %v7269
  %v7302 = vunpack.c.l.b16 %v7270
  %v7303 = vunpack.c.l.b16 %v7271
  %v7304 = vunpack.c.l.b16 %v7272
  %v7305 = vunpack.c.l.b16 %v7273
  %v7306 = vunpack.c.l.b16 %v7274
  %v7307 = vunpack.c.l.b16 %v7275
  %v7308 = vunpack.c.l.b16 %v7276
  %v7309 = vunpack.c.l.b16 %v7277
  %v7310 = vunpack.c.l.b16 %v7278
  %v7311 = vpack.c.b16 %v7296, %v7295
  %v7312 = vpack.c.b16 %v7298, %v7297
  %v7313 = vpack.c.b16 %v7300, %v7299
  %v7314 = vpack.c.b16 %v7302, %v7301
  %v7315 = vpack.c.b16 %v7304, %v7303
  %v7316 = vpack.c.b16 %v7306, %v7305
  %v7317 = vpack.c.b16 %v7308, %v7307
  %v7318 = vpack.c.b16 %v7310, %v7309
  %7327 = vmatprep.subr.bf16.mxu0 0
  %7328 = vmatpush1.bf16.msra.mxu0 %v7318
  %7329 = vmatprep.subr.bf16.mxu0 0
  %7330 = vmatpush1.bf16.msra.mxu0 %v7317
  %7331 = vmatprep.subr.bf16.mxu0 0
  %7332 = vmatpush1.bf16.msra.mxu0 %v7316
  %7333 = vmatprep.subr.bf16.mxu0 0
  %7334 = vmatpush1.bf16.msra.mxu0 %v7315
  %7335 = vmatprep.subr.bf16.mxu0 0
  %7336 = vmatpush1.bf16.msra.mxu0 %v7314
  %7337 = vmatprep.subr.bf16.mxu0 0
  %7338 = vmatpush1.bf16.msra.mxu0 %v7313
  %7339 = vmatprep.subr.bf16.mxu0 0
  %7340 = vmatpush1.bf16.msra.mxu0 %v7312
  %7341 = vmatprep.subr.bf16.mxu0 0
  %7342 = vmatpush1.bf16.msra.mxu0 %v7311
  %7343 = vmatprep.subr.bf16.mxu0 0
  %7344 = vmatpush2.bf16.msra.mxu0 0
  %7345 = vmatprep.subr.bf16.mxu0 0
  %7346 = vmatpush2.bf16.msra.mxu0 0
  %7347 = vmatprep.subr.bf16.mxu0 0
  %7348 = vmatpush2.bf16.msra.mxu0 0
  %7349 = vmatprep.subr.bf16.mxu0 0
  %7350 = vmatpush2.bf16.msra.mxu0 0
  %7351 = vmatprep.subr.bf16.mxu0 0
  %7352 = vmatpush2.bf16.msra.mxu0 0
  %7353 = vmatprep.subr.bf16.mxu0 0
  %7354 = vmatpush2.bf16.msra.mxu0 0
  %7355 = vmatprep.subr.bf16.mxu0 0
  %7356 = vmatpush2.bf16.msra.mxu0 0
  %7357 = vmatprep.subr.bf16.mxu0 0
  %7358 = vmatpush2.bf16.msra.mxu0 0
  %7359 = vmatprep.mubr.bf16.mxu0 0
  %7360 = vmatmul.mubr.bf16.gmra.mxu0 %v7261
  %v7361 = vpop.f32.mrf.mxu0
  %v7362 = vadd.f32 0.0, %v7361
  %v7363 = vpop.f32.mrf.mxu0
  %v7364 = vpop.f32.mrf.mxu0
  %v7365 = vadd.f32 0.0, %v7364
  %v7366 = vpop.f32.mrf.mxu0
  %7367 = vdwg.mxu0
  %v7368 = vadd.f32 %v7209, %v7362
  %v7369 = vadd.f32 %v7210, %v7365
  %s7370 = scalar_lea.vmem %s6, 32
  %v7371 = vld [vmem:[%s7370] sm:$0xf]
  %v7372 = vld [vmem:[%s7370 + $0x4] sm:$0xf]
  %v7375 = vunpack.c.l.b16 %v7371
  %v7376 = vunpack.c.l.b16 %v7372
  %v7377 = vpack.c.b16 %v7376, %v7375
  %7379 = vmatprep.subr.bf16.mxu0 0
  %7380 = vmatpush1.bf16.msra.mxu0 %v6739
  %7381 = vmatprep.subr.bf16.mxu0 0
  %7382 = vmatpush1.bf16.msra.mxu0 %v6738
  %7383 = vmatprep.subr.bf16.mxu0 0
  %7384 = vmatpush1.bf16.msra.mxu0 %v6737
  %7385 = vmatprep.subr.bf16.mxu0 0
  %7386 = vmatpush1.bf16.msra.mxu0 %v6736
  %7387 = vmatprep.subr.bf16.mxu0 0
  %7388 = vmatpush1.bf16.msra.mxu0 %v6735
  %7389 = vmatprep.subr.bf16.mxu0 0
  %7390 = vmatpush1.bf16.msra.mxu0 %v6734
  %7391 = vmatprep.subr.bf16.mxu0 0
  %7392 = vmatpush1.bf16.msra.mxu0 %v6733
  %7393 = vmatprep.subr.bf16.mxu0 0
  %7394 = vmatpush1.bf16.msra.mxu0 %v6732
  %7395 = vmatprep.subr.bf16.mxu0 0
  %7396 = vmatpush2.bf16.msra.mxu0 0
  %7397 = vmatprep.subr.bf16.mxu0 0
  %7398 = vmatpush2.bf16.msra.mxu0 0
  %7399 = vmatprep.subr.bf16.mxu0 0
  %7400 = vmatpush2.bf16.msra.mxu0 0
  %7401 = vmatprep.subr.bf16.mxu0 0
  %7402 = vmatpush2.bf16.msra.mxu0 0
  %7403 = vmatprep.subr.bf16.mxu0 0
  %7404 = vmatpush2.bf16.msra.mxu0 0
  %7405 = vmatprep.subr.bf16.mxu0 0
  %7406 = vmatpush2.bf16.msra.mxu0 0
  %7407 = vmatprep.subr.bf16.mxu0 0
  %7408 = vmatpush2.bf16.msra.mxu0 0
  %7409 = vmatprep.subr.bf16.mxu0 0
  %7410 = vmatpush2.bf16.msra.mxu0 0
  %7411 = vmatprep.mubr.bf16.mxu0 0
  %7412 = vmatmul.mubr.bf16.gmra.mxu0 %v7377
  %v7413 = vpop.f32.mrf.mxu0
  %v7414 = vadd.f32 0.0, %v7413
  %v7415 = vpop.f32.mrf.mxu0
  %v7416 = vpop.f32.mrf.mxu0
  %v7417 = vadd.f32 0.0, %v7416
  %v7418 = vpop.f32.mrf.mxu0
  %7419 = vdwg.mxu0
  %v7420 = vpack.c.bf16 %v7417, %v7414
  %s7421 = scalar_lea.vmem %s7, 256
  %v7422 = vld [vmem:[%s7421] sm:$0xf]
  %v7423 = vld [vmem:[%s7421 + $0x4] sm:$0xf]
  %v7424 = vld [vmem:[%s7421 + $0x8] sm:$0xf]
  %v7425 = vld [vmem:[%s7421 + $0xc] sm:$0xf]
  %v7426 = vld [vmem:[%s7421 + $0x10] sm:$0xf]
  %v7427 = vld [vmem:[%s7421 + $0x14] sm:$0xf]
  %v7428 = vld [vmem:[%s7421 + $0x18] sm:$0xf]
  %v7429 = vld [vmem:[%s7421 + $0x1c] sm:$0xf]
  %v7430 = vld [vmem:[%s7421 + $0x20] sm:$0xf]
  %v7431 = vld [vmem:[%s7421 + $0x24] sm:$0xf]
  %v7432 = vld [vmem:[%s7421 + $0x28] sm:$0xf]
  %v7433 = vld [vmem:[%s7421 + $0x2c] sm:$0xf]
  %v7434 = vld [vmem:[%s7421 + $0x30] sm:$0xf]
  %v7435 = vld [vmem:[%s7421 + $0x34] sm:$0xf]
  %v7436 = vld [vmem:[%s7421 + $0x38] sm:$0xf]
  %v7437 = vld [vmem:[%s7421 + $0x3c] sm:$0xf]
  %v7454 = vunpack.c.l.b16 %v7422
  %v7455 = vunpack.c.l.b16 %v7423
  %v7456 = vunpack.c.l.b16 %v7424
  %v7457 = vunpack.c.l.b16 %v7425
  %v7458 = vunpack.c.l.b16 %v7426
  %v7459 = vunpack.c.l.b16 %v7427
  %v7460 = vunpack.c.l.b16 %v7428
  %v7461 = vunpack.c.l.b16 %v7429
  %v7462 = vunpack.c.l.b16 %v7430
  %v7463 = vunpack.c.l.b16 %v7431
  %v7464 = vunpack.c.l.b16 %v7432
  %v7465 = vunpack.c.l.b16 %v7433
  %v7466 = vunpack.c.l.b16 %v7434
  %v7467 = vunpack.c.l.b16 %v7435
  %v7468 = vunpack.c.l.b16 %v7436
  %v7469 = vunpack.c.l.b16 %v7437
  %v7470 = vpack.c.b16 %v7455, %v7454
  %v7471 = vpack.c.b16 %v7457, %v7456
  %v7472 = vpack.c.b16 %v7459, %v7458
  %v7473 = vpack.c.b16 %v7461, %v7460
  %v7474 = vpack.c.b16 %v7463, %v7462
  %v7475 = vpack.c.b16 %v7465, %v7464
  %v7476 = vpack.c.b16 %v7467, %v7466
  %v7477 = vpack.c.b16 %v7469, %v7468
  %7486 = vmatprep.subr.bf16.mxu0 0
  %7487 = vmatpush1.bf16.msra.mxu0 %v7477
  %7488 = vmatprep.subr.bf16.mxu0 0
  %7489 = vmatpush1.bf16.msra.mxu0 %v7476
  %7490 = vmatprep.subr.bf16.mxu0 0
  %7491 = vmatpush1.bf16.msra.mxu0 %v7475
  %7492 = vmatprep.subr.bf16.mxu0 0
  %7493 = vmatpush1.bf16.msra.mxu0 %v7474
  %7494 = vmatprep.subr.bf16.mxu0 0
  %7495 = vmatpush1.bf16.msra.mxu0 %v7473
  %7496 = vmatprep.subr.bf16.mxu0 0
  %7497 = vmatpush1.bf16.msra.mxu0 %v7472
  %7498 = vmatprep.subr.bf16.mxu0 0
  %7499 = vmatpush1.bf16.msra.mxu0 %v7471
  %7500 = vmatprep.subr.bf16.mxu0 0
  %7501 = vmatpush1.bf16.msra.mxu0 %v7470
  %7502 = vmatprep.subr.bf16.mxu0 0
  %7503 = vmatpush2.bf16.msra.mxu0 0
  %7504 = vmatprep.subr.bf16.mxu0 0
  %7505 = vmatpush2.bf16.msra.mxu0 0
  %7506 = vmatprep.subr.bf16.mxu0 0
  %7507 = vmatpush2.bf16.msra.mxu0 0
  %7508 = vmatprep.subr.bf16.mxu0 0
  %7509 = vmatpush2.bf16.msra.mxu0 0
  %7510 = vmatprep.subr.bf16.mxu0 0
  %7511 = vmatpush2.bf16.msra.mxu0 0
  %7512 = vmatprep.subr.bf16.mxu0 0
  %7513 = vmatpush2.bf16.msra.mxu0 0
  %7514 = vmatprep.subr.bf16.mxu0 0
  %7515 = vmatpush2.bf16.msra.mxu0 0
  %7516 = vmatprep.subr.bf16.mxu0 0
  %7517 = vmatpush2.bf16.msra.mxu0 0
  %7518 = vmatprep.mubr.bf16.mxu0 0
  %7519 = vmatmul.mubr.bf16.gmra.mxu0 %v7420
  %v7520 = vpop.f32.mrf.mxu0
  %v7521 = vadd.f32 0.0, %v7520
  %v7522 = vpop.f32.mrf.mxu0
  %v7523 = vpop.f32.mrf.mxu0
  %v7524 = vadd.f32 0.0, %v7523
  %v7525 = vpop.f32.mrf.mxu0
  %7526 = vdwg.mxu0
  %v7527 = vadd.f32 %v7368, %v7521
  %v7528 = vadd.f32 %v7369, %v7524
  %s7529 = scalar_lea.vmem %s6, 40
  %v7530 = vld [vmem:[%s7529] sm:$0xf]
  %v7531 = vld [vmem:[%s7529 + $0x4] sm:$0xf]
  %v7534 = vunpack.c.l.b16 %v7530
  %v7535 = vunpack.c.l.b16 %v7531
  %v7536 = vpack.c.b16 %v7535, %v7534
  %7538 = vmatprep.subr.bf16.mxu0 0
  %7539 = vmatpush1.bf16.msra.mxu0 %v6739
  %7540 = vmatprep.subr.bf16.mxu0 0
  %7541 = vmatpush1.bf16.msra.mxu0 %v6738
  %7542 = vmatprep.subr.bf16.mxu0 0
  %7543 = vmatpush1.bf16.msra.mxu0 %v6737
  %7544 = vmatprep.subr.bf16.mxu0 0
  %7545 = vmatpush1.bf16.msra.mxu0 %v6736
  %7546 = vmatprep.subr.bf16.mxu0 0
  %7547 = vmatpush1.bf16.msra.mxu0 %v6735
  %7548 = vmatprep.subr.bf16.mxu0 0
  %7549 = vmatpush1.bf16.msra.mxu0 %v6734
  %7550 = vmatprep.subr.bf16.mxu0 0
  %7551 = vmatpush1.bf16.msra.mxu0 %v6733
  %7552 = vmatprep.subr.bf16.mxu0 0
  %7553 = vmatpush1.bf16.msra.mxu0 %v6732
  %7554 = vmatprep.subr.bf16.mxu0 0
  %7555 = vmatpush2.bf16.msra.mxu0 0
  %7556 = vmatprep.subr.bf16.mxu0 0
  %7557 = vmatpush2.bf16.msra.mxu0 0
  %7558 = vmatprep.subr.bf16.mxu0 0
  %7559 = vmatpush2.bf16.msra.mxu0 0
  %7560 = vmatprep.subr.bf16.mxu0 0
  %7561 = vmatpush2.bf16.msra.mxu0 0
  %7562 = vmatprep.subr.bf16.mxu0 0
  %7563 = vmatpush2.bf16.msra.mxu0 0
  %7564 = vmatprep.subr.bf16.mxu0 0
  %7565 = vmatpush2.bf16.msra.mxu0 0
  %7566 = vmatprep.subr.bf16.mxu0 0
  %7567 = vmatpush2.bf16.msra.mxu0 0
  %7568 = vmatprep.subr.bf16.mxu0 0
  %7569 = vmatpush2.bf16.msra.mxu0 0
  %7570 = vmatprep.mubr.bf16.mxu0 0
  %7571 = vmatmul.mubr.bf16.gmra.mxu0 %v7536
  %v7572 = vpop.f32.mrf.mxu0
  %v7573 = vadd.f32 0.0, %v7572
  %v7574 = vpop.f32.mrf.mxu0
  %v7575 = vpop.f32.mrf.mxu0
  %v7576 = vadd.f32 0.0, %v7575
  %v7577 = vpop.f32.mrf.mxu0
  %7578 = vdwg.mxu0
  %v7579 = vpack.c.bf16 %v7576, %v7573
  %s7580 = scalar_lea.vmem %s7, 320
  %v7581 = vld [vmem:[%s7580] sm:$0xf]
  %v7582 = vld [vmem:[%s7580 + $0x4] sm:$0xf]
  %v7583 = vld [vmem:[%s7580 + $0x8] sm:$0xf]
  %v7584 = vld [vmem:[%s7580 + $0xc] sm:$0xf]
  %v7585 = vld [vmem:[%s7580 + $0x10] sm:$0xf]
  %v7586 = vld [vmem:[%s7580 + $0x14] sm:$0xf]
  %v7587 = vld [vmem:[%s7580 + $0x18] sm:$0xf]
  %v7588 = vld [vmem:[%s7580 + $0x1c] sm:$0xf]
  %v7589 = vld [vmem:[%s7580 + $0x20] sm:$0xf]
  %v7590 = vld [vmem:[%s7580 + $0x24] sm:$0xf]
  %v7591 = vld [vmem:[%s7580 + $0x28] sm:$0xf]
  %v7592 = vld [vmem:[%s7580 + $0x2c] sm:$0xf]
  %v7593 = vld [vmem:[%s7580 + $0x30] sm:$0xf]
  %v7594 = vld [vmem:[%s7580 + $0x34] sm:$0xf]
  %v7595 = vld [vmem:[%s7580 + $0x38] sm:$0xf]
  %v7596 = vld [vmem:[%s7580 + $0x3c] sm:$0xf]
  %v7613 = vunpack.c.l.b16 %v7581
  %v7614 = vunpack.c.l.b16 %v7582
  %v7615 = vunpack.c.l.b16 %v7583
  %v7616 = vunpack.c.l.b16 %v7584
  %v7617 = vunpack.c.l.b16 %v7585
  %v7618 = vunpack.c.l.b16 %v7586
  %v7619 = vunpack.c.l.b16 %v7587
  %v7620 = vunpack.c.l.b16 %v7588
  %v7621 = vunpack.c.l.b16 %v7589
  %v7622 = vunpack.c.l.b16 %v7590
  %v7623 = vunpack.c.l.b16 %v7591
  %v7624 = vunpack.c.l.b16 %v7592
  %v7625 = vunpack.c.l.b16 %v7593
  %v7626 = vunpack.c.l.b16 %v7594
  %v7627 = vunpack.c.l.b16 %v7595
  %v7628 = vunpack.c.l.b16 %v7596
  %v7629 = vpack.c.b16 %v7614, %v7613
  %v7630 = vpack.c.b16 %v7616, %v7615
  %v7631 = vpack.c.b16 %v7618, %v7617
  %v7632 = vpack.c.b16 %v7620, %v7619
  %v7633 = vpack.c.b16 %v7622, %v7621
  %v7634 = vpack.c.b16 %v7624, %v7623
  %v7635 = vpack.c.b16 %v7626, %v7625
  %v7636 = vpack.c.b16 %v7628, %v7627
  %7645 = vmatprep.subr.bf16.mxu0 0
  %7646 = vmatpush1.bf16.msra.mxu0 %v7636
  %7647 = vmatprep.subr.bf16.mxu0 0
  %7648 = vmatpush1.bf16.msra.mxu0 %v7635
  %7649 = vmatprep.subr.bf16.mxu0 0
  %7650 = vmatpush1.bf16.msra.mxu0 %v7634
  %7651 = vmatprep.subr.bf16.mxu0 0
  %7652 = vmatpush1.bf16.msra.mxu0 %v7633
  %7653 = vmatprep.subr.bf16.mxu0 0
  %7654 = vmatpush1.bf16.msra.mxu0 %v7632
  %7655 = vmatprep.subr.bf16.mxu0 0
  %7656 = vmatpush1.bf16.msra.mxu0 %v7631
  %7657 = vmatprep.subr.bf16.mxu0 0
  %7658 = vmatpush1.bf16.msra.mxu0 %v7630
  %7659 = vmatprep.subr.bf16.mxu0 0
  %7660 = vmatpush1.bf16.msra.mxu0 %v7629
  %7661 = vmatprep.subr.bf16.mxu0 0
  %7662 = vmatpush2.bf16.msra.mxu0 0
  %7663 = vmatprep.subr.bf16.mxu0 0
  %7664 = vmatpush2.bf16.msra.mxu0 0
  %7665 = vmatprep.subr.bf16.mxu0 0
  %7666 = vmatpush2.bf16.msra.mxu0 0
  %7667 = vmatprep.subr.bf16.mxu0 0
  %7668 = vmatpush2.bf16.msra.mxu0 0
  %7669 = vmatprep.subr.bf16.mxu0 0
  %7670 = vmatpush2.bf16.msra.mxu0 0
  %7671 = vmatprep.subr.bf16.mxu0 0
  %7672 = vmatpush2.bf16.msra.mxu0 0
  %7673 = vmatprep.subr.bf16.mxu0 0
  %7674 = vmatpush2.bf16.msra.mxu0 0
  %7675 = vmatprep.subr.bf16.mxu0 0
  %7676 = vmatpush2.bf16.msra.mxu0 0
  %7677 = vmatprep.mubr.bf16.mxu0 0
  %7678 = vmatmul.mubr.bf16.gmra.mxu0 %v7579
  %v7679 = vpop.f32.mrf.mxu0
  %v7680 = vadd.f32 0.0, %v7679
  %v7681 = vpop.f32.mrf.mxu0
  %v7682 = vpop.f32.mrf.mxu0
  %v7683 = vadd.f32 0.0, %v7682
  %v7684 = vpop.f32.mrf.mxu0
  %7685 = vdwg.mxu0
  %v7686 = vadd.f32 %v7527, %v7680
  %v7687 = vadd.f32 %v7528, %v7683
  %s7688 = scalar_lea.vmem %s6, 48
  %v7689 = vld [vmem:[%s7688] sm:$0xf]
  %v7690 = vld [vmem:[%s7688 + $0x4] sm:$0xf]
  %v7693 = vunpack.c.l.b16 %v7689
  %v7694 = vunpack.c.l.b16 %v7690
  %v7695 = vpack.c.b16 %v7694, %v7693
  %7697 = vmatprep.subr.bf16.mxu0 0
  %7698 = vmatpush1.bf16.msra.mxu0 %v6739
  %7699 = vmatprep.subr.bf16.mxu0 0
  %7700 = vmatpush1.bf16.msra.mxu0 %v6738
  %7701 = vmatprep.subr.bf16.mxu0 0
  %7702 = vmatpush1.bf16.msra.mxu0 %v6737
  %7703 = vmatprep.subr.bf16.mxu0 0
  %7704 = vmatpush1.bf16.msra.mxu0 %v6736
  %7705 = vmatprep.subr.bf16.mxu0 0
  %7706 = vmatpush1.bf16.msra.mxu0 %v6735
  %7707 = vmatprep.subr.bf16.mxu0 0
  %7708 = vmatpush1.bf16.msra.mxu0 %v6734
  %7709 = vmatprep.subr.bf16.mxu0 0
  %7710 = vmatpush1.bf16.msra.mxu0 %v6733
  %7711 = vmatprep.subr.bf16.mxu0 0
  %7712 = vmatpush1.bf16.msra.mxu0 %v6732
  %7713 = vmatprep.subr.bf16.mxu0 0
  %7714 = vmatpush2.bf16.msra.mxu0 0
  %7715 = vmatprep.subr.bf16.mxu0 0
  %7716 = vmatpush2.bf16.msra.mxu0 0
  %7717 = vmatprep.subr.bf16.mxu0 0
  %7718 = vmatpush2.bf16.msra.mxu0 0
  %7719 = vmatprep.subr.bf16.mxu0 0
  %7720 = vmatpush2.bf16.msra.mxu0 0
  %7721 = vmatprep.subr.bf16.mxu0 0
  %7722 = vmatpush2.bf16.msra.mxu0 0
  %7723 = vmatprep.subr.bf16.mxu0 0
  %7724 = vmatpush2.bf16.msra.mxu0 0
  %7725 = vmatprep.subr.bf16.mxu0 0
  %7726 = vmatpush2.bf16.msra.mxu0 0
  %7727 = vmatprep.subr.bf16.mxu0 0
  %7728 = vmatpush2.bf16.msra.mxu0 0
  %7729 = vmatprep.mubr.bf16.mxu0 0
  %7730 = vmatmul.mubr.bf16.gmra.mxu0 %v7695
  %v7731 = vpop.f32.mrf.mxu0
  %v7732 = vadd.f32 0.0, %v7731
  %v7733 = vpop.f32.mrf.mxu0
  %v7734 = vpop.f32.mrf.mxu0
  %v7735 = vadd.f32 0.0, %v7734
  %v7736 = vpop.f32.mrf.mxu0
  %7737 = vdwg.mxu0
  %v7738 = vpack.c.bf16 %v7735, %v7732
  %s7739 = scalar_lea.vmem %s7, 384
  %v7740 = vld [vmem:[%s7739] sm:$0xf]
  %v7741 = vld [vmem:[%s7739 + $0x4] sm:$0xf]
  %v7742 = vld [vmem:[%s7739 + $0x8] sm:$0xf]
  %v7743 = vld [vmem:[%s7739 + $0xc] sm:$0xf]
  %v7744 = vld [vmem:[%s7739 + $0x10] sm:$0xf]
  %v7745 = vld [vmem:[%s7739 + $0x14] sm:$0xf]
  %v7746 = vld [vmem:[%s7739 + $0x18] sm:$0xf]
  %v7747 = vld [vmem:[%s7739 + $0x1c] sm:$0xf]
  %v7748 = vld [vmem:[%s7739 + $0x20] sm:$0xf]
  %v7749 = vld [vmem:[%s7739 + $0x24] sm:$0xf]
  %v7750 = vld [vmem:[%s7739 + $0x28] sm:$0xf]
  %v7751 = vld [vmem:[%s7739 + $0x2c] sm:$0xf]
  %v7752 = vld [vmem:[%s7739 + $0x30] sm:$0xf]
  %v7753 = vld [vmem:[%s7739 + $0x34] sm:$0xf]
  %v7754 = vld [vmem:[%s7739 + $0x38] sm:$0xf]
  %v7755 = vld [vmem:[%s7739 + $0x3c] sm:$0xf]
  %v7772 = vunpack.c.l.b16 %v7740
  %v7773 = vunpack.c.l.b16 %v7741
  %v7774 = vunpack.c.l.b16 %v7742
  %v7775 = vunpack.c.l.b16 %v7743
  %v7776 = vunpack.c.l.b16 %v7744
  %v7777 = vunpack.c.l.b16 %v7745
  %v7778 = vunpack.c.l.b16 %v7746
  %v7779 = vunpack.c.l.b16 %v7747
  %v7780 = vunpack.c.l.b16 %v7748
  %v7781 = vunpack.c.l.b16 %v7749
  %v7782 = vunpack.c.l.b16 %v7750
  %v7783 = vunpack.c.l.b16 %v7751
  %v7784 = vunpack.c.l.b16 %v7752
  %v7785 = vunpack.c.l.b16 %v7753
  %v7786 = vunpack.c.l.b16 %v7754
  %v7787 = vunpack.c.l.b16 %v7755
  %v7788 = vpack.c.b16 %v7773, %v7772
  %v7789 = vpack.c.b16 %v7775, %v7774
  %v7790 = vpack.c.b16 %v7777, %v7776
  %v7791 = vpack.c.b16 %v7779, %v7778
  %v7792 = vpack.c.b16 %v7781, %v7780
  %v7793 = vpack.c.b16 %v7783, %v7782
  %v7794 = vpack.c.b16 %v7785, %v7784
  %v7795 = vpack.c.b16 %v7787, %v7786
  %7804 = vmatprep.subr.bf16.mxu0 0
  %7805 = vmatpush1.bf16.msra.mxu0 %v7795
  %7806 = vmatprep.subr.bf16.mxu0 0
  %7807 = vmatpush1.bf16.msra.mxu0 %v7794
  %7808 = vmatprep.subr.bf16.mxu0 0
  %7809 = vmatpush1.bf16.msra.mxu0 %v7793
  %7810 = vmatprep.subr.bf16.mxu0 0
  %7811 = vmatpush1.bf16.msra.mxu0 %v7792
  %7812 = vmatprep.subr.bf16.mxu0 0
  %7813 = vmatpush1.bf16.msra.mxu0 %v7791
  %7814 = vmatprep.subr.bf16.mxu0 0
  %7815 = vmatpush1.bf16.msra.mxu0 %v7790
  %7816 = vmatprep.subr.bf16.mxu0 0
  %7817 = vmatpush1.bf16.msra.mxu0 %v7789
  %7818 = vmatprep.subr.bf16.mxu0 0
  %7819 = vmatpush1.bf16.msra.mxu0 %v7788
  %7820 = vmatprep.subr.bf16.mxu0 0
  %7821 = vmatpush2.bf16.msra.mxu0 0
  %7822 = vmatprep.subr.bf16.mxu0 0
  %7823 = vmatpush2.bf16.msra.mxu0 0
  %7824 = vmatprep.subr.bf16.mxu0 0
  %7825 = vmatpush2.bf16.msra.mxu0 0
  %7826 = vmatprep.subr.bf16.mxu0 0
  %7827 = vmatpush2.bf16.msra.mxu0 0
  %7828 = vmatprep.subr.bf16.mxu0 0
  %7829 = vmatpush2.bf16.msra.mxu0 0
  %7830 = vmatprep.subr.bf16.mxu0 0
  %7831 = vmatpush2.bf16.msra.mxu0 0
  %7832 = vmatprep.subr.bf16.mxu0 0
  %7833 = vmatpush2.bf16.msra.mxu0 0
  %7834 = vmatprep.subr.bf16.mxu0 0
  %7835 = vmatpush2.bf16.msra.mxu0 0
  %7836 = vmatprep.mubr.bf16.mxu0 0
  %7837 = vmatmul.mubr.bf16.gmra.mxu0 %v7738
  %v7838 = vpop.f32.mrf.mxu0
  %v7839 = vadd.f32 0.0, %v7838
  %v7840 = vpop.f32.mrf.mxu0
  %v7841 = vpop.f32.mrf.mxu0
  %v7842 = vadd.f32 0.0, %v7841
  %v7843 = vpop.f32.mrf.mxu0
  %7844 = vdwg.mxu0
  %v7845 = vadd.f32 %v7686, %v7839
  %v7846 = vadd.f32 %v7687, %v7842
  %s7847 = scalar_lea.vmem %s6, 56
  %v7848 = vld [vmem:[%s7847] sm:$0xf]
  %v7849 = vld [vmem:[%s7847 + $0x4] sm:$0xf]
  %v7852 = vunpack.c.l.b16 %v7848
  %v7853 = vunpack.c.l.b16 %v7849
  %v7854 = vpack.c.b16 %v7853, %v7852
  %7856 = vmatprep.subr.bf16.mxu0 0
  %7857 = vmatpush1.bf16.msra.mxu0 %v6739
  %7858 = vmatprep.subr.bf16.mxu0 0
  %7859 = vmatpush1.bf16.msra.mxu0 %v6738
  %7860 = vmatprep.subr.bf16.mxu0 0
  %7861 = vmatpush1.bf16.msra.mxu0 %v6737
  %7862 = vmatprep.subr.bf16.mxu0 0
  %7863 = vmatpush1.bf16.msra.mxu0 %v6736
  %7864 = vmatprep.subr.bf16.mxu0 0
  %7865 = vmatpush1.bf16.msra.mxu0 %v6735
  %7866 = vmatprep.subr.bf16.mxu0 0
  %7867 = vmatpush1.bf16.msra.mxu0 %v6734
  %7868 = vmatprep.subr.bf16.mxu0 0
  %7869 = vmatpush1.bf16.msra.mxu0 %v6733
  %7870 = vmatprep.subr.bf16.mxu0 0
  %7871 = vmatpush1.bf16.msra.mxu0 %v6732
  %7872 = vmatprep.subr.bf16.mxu0 0
  %7873 = vmatpush2.bf16.msra.mxu0 0
  %7874 = vmatprep.subr.bf16.mxu0 0
  %7875 = vmatpush2.bf16.msra.mxu0 0
  %7876 = vmatprep.subr.bf16.mxu0 0
  %7877 = vmatpush2.bf16.msra.mxu0 0
  %7878 = vmatprep.subr.bf16.mxu0 0
  %7879 = vmatpush2.bf16.msra.mxu0 0
  %7880 = vmatprep.subr.bf16.mxu0 0
  %7881 = vmatpush2.bf16.msra.mxu0 0
  %7882 = vmatprep.subr.bf16.mxu0 0
  %7883 = vmatpush2.bf16.msra.mxu0 0
  %7884 = vmatprep.subr.bf16.mxu0 0
  %7885 = vmatpush2.bf16.msra.mxu0 0
  %7886 = vmatprep.subr.bf16.mxu0 0
  %7887 = vmatpush2.bf16.msra.mxu0 0
  %7888 = vmatprep.mubr.bf16.mxu0 0
  %7889 = vmatmul.mubr.bf16.gmra.mxu0 %v7854
  %v7890 = vpop.f32.mrf.mxu0
  %v7891 = vadd.f32 0.0, %v7890
  %v7892 = vpop.f32.mrf.mxu0
  %v7893 = vpop.f32.mrf.mxu0
  %v7894 = vadd.f32 0.0, %v7893
  %v7895 = vpop.f32.mrf.mxu0
  %7896 = vdwg.mxu0
  %v7897 = vpack.c.bf16 %v7894, %v7891
  %s7898 = scalar_lea.vmem %s7, 448
  %v7899 = vld [vmem:[%s7898] sm:$0xf]
  %v7900 = vld [vmem:[%s7898 + $0x4] sm:$0xf]
  %v7901 = vld [vmem:[%s7898 + $0x8] sm:$0xf]
  %v7902 = vld [vmem:[%s7898 + $0xc] sm:$0xf]
  %v7903 = vld [vmem:[%s7898 + $0x10] sm:$0xf]
  %v7904 = vld [vmem:[%s7898 + $0x14] sm:$0xf]
  %v7905 = vld [vmem:[%s7898 + $0x18] sm:$0xf]
  %v7906 = vld [vmem:[%s7898 + $0x1c] sm:$0xf]
  %v7907 = vld [vmem:[%s7898 + $0x20] sm:$0xf]
  %v7908 = vld [vmem:[%s7898 + $0x24] sm:$0xf]
  %v7909 = vld [vmem:[%s7898 + $0x28] sm:$0xf]
  %v7910 = vld [vmem:[%s7898 + $0x2c] sm:$0xf]
  %v7911 = vld [vmem:[%s7898 + $0x30] sm:$0xf]
  %v7912 = vld [vmem:[%s7898 + $0x34] sm:$0xf]
  %v7913 = vld [vmem:[%s7898 + $0x38] sm:$0xf]
  %v7914 = vld [vmem:[%s7898 + $0x3c] sm:$0xf]
  %v7931 = vunpack.c.l.b16 %v7899
  %v7932 = vunpack.c.l.b16 %v7900
  %v7933 = vunpack.c.l.b16 %v7901
  %v7934 = vunpack.c.l.b16 %v7902
  %v7935 = vunpack.c.l.b16 %v7903
  %v7936 = vunpack.c.l.b16 %v7904
  %v7937 = vunpack.c.l.b16 %v7905
  %v7938 = vunpack.c.l.b16 %v7906
  %v7939 = vunpack.c.l.b16 %v7907
  %v7940 = vunpack.c.l.b16 %v7908
  %v7941 = vunpack.c.l.b16 %v7909
  %v7942 = vunpack.c.l.b16 %v7910
  %v7943 = vunpack.c.l.b16 %v7911
  %v7944 = vunpack.c.l.b16 %v7912
  %v7945 = vunpack.c.l.b16 %v7913
  %v7946 = vunpack.c.l.b16 %v7914
  %v7947 = vpack.c.b16 %v7932, %v7931
  %v7948 = vpack.c.b16 %v7934, %v7933
  %v7949 = vpack.c.b16 %v7936, %v7935
  %v7950 = vpack.c.b16 %v7938, %v7937
  %v7951 = vpack.c.b16 %v7940, %v7939
  %v7952 = vpack.c.b16 %v7942, %v7941
  %v7953 = vpack.c.b16 %v7944, %v7943
  %v7954 = vpack.c.b16 %v7946, %v7945
  %7963 = vmatprep.subr.bf16.mxu0 0
  %7964 = vmatpush1.bf16.msra.mxu0 %v7954
  %7965 = vmatprep.subr.bf16.mxu0 0
  %7966 = vmatpush1.bf16.msra.mxu0 %v7953
  %7967 = vmatprep.subr.bf16.mxu0 0
  %7968 = vmatpush1.bf16.msra.mxu0 %v7952
  %7969 = vmatprep.subr.bf16.mxu0 0
  %7970 = vmatpush1.bf16.msra.mxu0 %v7951
  %7971 = vmatprep.subr.bf16.mxu0 0
  %7972 = vmatpush1.bf16.msra.mxu0 %v7950
  %7973 = vmatprep.subr.bf16.mxu0 0
  %7974 = vmatpush1.bf16.msra.mxu0 %v7949
  %7975 = vmatprep.subr.bf16.mxu0 0
  %7976 = vmatpush1.bf16.msra.mxu0 %v7948
  %7977 = vmatprep.subr.bf16.mxu0 0
  %7978 = vmatpush1.bf16.msra.mxu0 %v7947
  %7979 = vmatprep.subr.bf16.mxu0 0
  %7980 = vmatpush2.bf16.msra.mxu0 0
  %7981 = vmatprep.subr.bf16.mxu0 0
  %7982 = vmatpush2.bf16.msra.mxu0 0
  %7983 = vmatprep.subr.bf16.mxu0 0
  %7984 = vmatpush2.bf16.msra.mxu0 0
  %7985 = vmatprep.subr.bf16.mxu0 0
  %7986 = vmatpush2.bf16.msra.mxu0 0
  %7987 = vmatprep.subr.bf16.mxu0 0
  %7988 = vmatpush2.bf16.msra.mxu0 0
  %7989 = vmatprep.subr.bf16.mxu0 0
  %7990 = vmatpush2.bf16.msra.mxu0 0
  %7991 = vmatprep.subr.bf16.mxu0 0
  %7992 = vmatpush2.bf16.msra.mxu0 0
  %7993 = vmatprep.subr.bf16.mxu0 0
  %7994 = vmatpush2.bf16.msra.mxu0 0
  %7995 = vmatprep.mubr.bf16.mxu0 0
  %7996 = vmatmul.mubr.bf16.gmra.mxu0 %v7897
  %v7997 = vpop.f32.mrf.mxu0
  %v7998 = vadd.f32 0.0, %v7997
  %v7999 = vpop.f32.mrf.mxu0
  %v8000 = vpop.f32.mrf.mxu0
  %v8001 = vadd.f32 0.0, %v8000
  %v8002 = vpop.f32.mrf.mxu0
  %8003 = vdwg.mxu0
  %v8004 = vadd.f32 %v7845, %v7998
  %v8005 = vadd.f32 %v7846, %v8001
  %s8006 = scalar_lea.vmem %s6, 64
  %v8007 = vld [vmem:[%s8006] sm:$0xf]
  %v8008 = vld [vmem:[%s8006 + $0x4] sm:$0xf]
  %v8011 = vunpack.c.l.b16 %v8007
  %v8012 = vunpack.c.l.b16 %v8008
  %v8013 = vpack.c.b16 %v8012, %v8011
  %8015 = vmatprep.subr.bf16.mxu0 0
  %8016 = vmatpush1.bf16.msra.mxu0 %v6739
  %8017 = vmatprep.subr.bf16.mxu0 0
  %8018 = vmatpush1.bf16.msra.mxu0 %v6738
  %8019 = vmatprep.subr.bf16.mxu0 0
  %8020 = vmatpush1.bf16.msra.mxu0 %v6737
  %8021 = vmatprep.subr.bf16.mxu0 0
  %8022 = vmatpush1.bf16.msra.mxu0 %v6736
  %8023 = vmatprep.subr.bf16.mxu0 0
  %8024 = vmatpush1.bf16.msra.mxu0 %v6735
  %8025 = vmatprep.subr.bf16.mxu0 0
  %8026 = vmatpush1.bf16.msra.mxu0 %v6734
  %8027 = vmatprep.subr.bf16.mxu0 0
  %8028 = vmatpush1.bf16.msra.mxu0 %v6733
  %8029 = vmatprep.subr.bf16.mxu0 0
  %8030 = vmatpush1.bf16.msra.mxu0 %v6732
  %8031 = vmatprep.subr.bf16.mxu0 0
  %8032 = vmatpush2.bf16.msra.mxu0 0
  %8033 = vmatprep.subr.bf16.mxu0 0
  %8034 = vmatpush2.bf16.msra.mxu0 0
  %8035 = vmatprep.subr.bf16.mxu0 0
  %8036 = vmatpush2.bf16.msra.mxu0 0
  %8037 = vmatprep.subr.bf16.mxu0 0
  %8038 = vmatpush2.bf16.msra.mxu0 0
  %8039 = vmatprep.subr.bf16.mxu0 0
  %8040 = vmatpush2.bf16.msra.mxu0 0
  %8041 = vmatprep.subr.bf16.mxu0 0
  %8042 = vmatpush2.bf16.msra.mxu0 0
  %8043 = vmatprep.subr.bf16.mxu0 0
  %8044 = vmatpush2.bf16.msra.mxu0 0
  %8045 = vmatprep.subr.bf16.mxu0 0
  %8046 = vmatpush2.bf16.msra.mxu0 0
  %8047 = vmatprep.mubr.bf16.mxu0 0
  %8048 = vmatmul.mubr.bf16.gmra.mxu0 %v8013
  %v8049 = vpop.f32.mrf.mxu0
  %v8050 = vadd.f32 0.0, %v8049
  %v8051 = vpop.f32.mrf.mxu0
  %v8052 = vpop.f32.mrf.mxu0
  %v8053 = vadd.f32 0.0, %v8052
  %v8054 = vpop.f32.mrf.mxu0
  %8055 = vdwg.mxu0
  %v8056 = vpack.c.bf16 %v8053, %v8050
  %s8057 = scalar_lea.vmem %s7, 512
  %v8058 = vld [vmem:[%s8057] sm:$0xf]
  %v8059 = vld [vmem:[%s8057 + $0x4] sm:$0xf]
  %v8060 = vld [vmem:[%s8057 + $0x8] sm:$0xf]
  %v8061 = vld [vmem:[%s8057 + $0xc] sm:$0xf]
  %v8062 = vld [vmem:[%s8057 + $0x10] sm:$0xf]
  %v8063 = vld [vmem:[%s8057 + $0x14] sm:$0xf]
  %v8064 = vld [vmem:[%s8057 + $0x18] sm:$0xf]
  %v8065 = vld [vmem:[%s8057 + $0x1c] sm:$0xf]
  %v8066 = vld [vmem:[%s8057 + $0x20] sm:$0xf]
  %v8067 = vld [vmem:[%s8057 + $0x24] sm:$0xf]
  %v8068 = vld [vmem:[%s8057 + $0x28] sm:$0xf]
  %v8069 = vld [vmem:[%s8057 + $0x2c] sm:$0xf]
  %v8070 = vld [vmem:[%s8057 + $0x30] sm:$0xf]
  %v8071 = vld [vmem:[%s8057 + $0x34] sm:$0xf]
  %v8072 = vld [vmem:[%s8057 + $0x38] sm:$0xf]
  %v8073 = vld [vmem:[%s8057 + $0x3c] sm:$0xf]
  %v8090 = vunpack.c.l.b16 %v8058
  %v8091 = vunpack.c.l.b16 %v8059
  %v8092 = vunpack.c.l.b16 %v8060
  %v8093 = vunpack.c.l.b16 %v8061
  %v8094 = vunpack.c.l.b16 %v8062
  %v8095 = vunpack.c.l.b16 %v8063
  %v8096 = vunpack.c.l.b16 %v8064
  %v8097 = vunpack.c.l.b16 %v8065
  %v8098 = vunpack.c.l.b16 %v8066
  %v8099 = vunpack.c.l.b16 %v8067
  %v8100 = vunpack.c.l.b16 %v8068
  %v8101 = vunpack.c.l.b16 %v8069
  %v8102 = vunpack.c.l.b16 %v8070
  %v8103 = vunpack.c.l.b16 %v8071
  %v8104 = vunpack.c.l.b16 %v8072
  %v8105 = vunpack.c.l.b16 %v8073
  %v8106 = vpack.c.b16 %v8091, %v8090
  %v8107 = vpack.c.b16 %v8093, %v8092
  %v8108 = vpack.c.b16 %v8095, %v8094
  %v8109 = vpack.c.b16 %v8097, %v8096
  %v8110 = vpack.c.b16 %v8099, %v8098
  %v8111 = vpack.c.b16 %v8101, %v8100
  %v8112 = vpack.c.b16 %v8103, %v8102
  %v8113 = vpack.c.b16 %v8105, %v8104
  %8122 = vmatprep.subr.bf16.mxu0 0
  %8123 = vmatpush1.bf16.msra.mxu0 %v8113
  %8124 = vmatprep.subr.bf16.mxu0 0
  %8125 = vmatpush1.bf16.msra.mxu0 %v8112
  %8126 = vmatprep.subr.bf16.mxu0 0
  %8127 = vmatpush1.bf16.msra.mxu0 %v8111
  %8128 = vmatprep.subr.bf16.mxu0 0
  %8129 = vmatpush1.bf16.msra.mxu0 %v8110
  %8130 = vmatprep.subr.bf16.mxu0 0
  %8131 = vmatpush1.bf16.msra.mxu0 %v8109
  %8132 = vmatprep.subr.bf16.mxu0 0
  %8133 = vmatpush1.bf16.msra.mxu0 %v8108
  %8134 = vmatprep.subr.bf16.mxu0 0
  %8135 = vmatpush1.bf16.msra.mxu0 %v8107
  %8136 = vmatprep.subr.bf16.mxu0 0
  %8137 = vmatpush1.bf16.msra.mxu0 %v8106
  %8138 = vmatprep.subr.bf16.mxu0 0
  %8139 = vmatpush2.bf16.msra.mxu0 0
  %8140 = vmatprep.subr.bf16.mxu0 0
  %8141 = vmatpush2.bf16.msra.mxu0 0
  %8142 = vmatprep.subr.bf16.mxu0 0
  %8143 = vmatpush2.bf16.msra.mxu0 0
  %8144 = vmatprep.subr.bf16.mxu0 0
  %8145 = vmatpush2.bf16.msra.mxu0 0
  %8146 = vmatprep.subr.bf16.mxu0 0
  %8147 = vmatpush2.bf16.msra.mxu0 0
  %8148 = vmatprep.subr.bf16.mxu0 0
  %8149 = vmatpush2.bf16.msra.mxu0 0
  %8150 = vmatprep.subr.bf16.mxu0 0
  %8151 = vmatpush2.bf16.msra.mxu0 0
  %8152 = vmatprep.subr.bf16.mxu0 0
  %8153 = vmatpush2.bf16.msra.mxu0 0
  %8154 = vmatprep.mubr.bf16.mxu0 0
  %8155 = vmatmul.mubr.bf16.gmra.mxu0 %v8056
  %v8156 = vpop.f32.mrf.mxu0
  %v8157 = vadd.f32 0.0, %v8156
  %v8158 = vpop.f32.mrf.mxu0
  %v8159 = vpop.f32.mrf.mxu0
  %v8160 = vadd.f32 0.0, %v8159
  %v8161 = vpop.f32.mrf.mxu0
  %8162 = vdwg.mxu0
  %v8163 = vadd.f32 %v8004, %v8157
  %v8164 = vadd.f32 %v8005, %v8160
  %s8165 = scalar_lea.vmem %s6, 72
  %v8166 = vld [vmem:[%s8165] sm:$0xf]
  %v8167 = vld [vmem:[%s8165 + $0x4] sm:$0xf]
  %v8170 = vunpack.c.l.b16 %v8166
  %v8171 = vunpack.c.l.b16 %v8167
  %v8172 = vpack.c.b16 %v8171, %v8170
  %8174 = vmatprep.subr.bf16.mxu0 0
  %8175 = vmatpush1.bf16.msra.mxu0 %v6739
  %8176 = vmatprep.subr.bf16.mxu0 0
  %8177 = vmatpush1.bf16.msra.mxu0 %v6738
  %8178 = vmatprep.subr.bf16.mxu0 0
  %8179 = vmatpush1.bf16.msra.mxu0 %v6737
  %8180 = vmatprep.subr.bf16.mxu0 0
  %8181 = vmatpush1.bf16.msra.mxu0 %v6736
  %8182 = vmatprep.subr.bf16.mxu0 0
  %8183 = vmatpush1.bf16.msra.mxu0 %v6735
  %8184 = vmatprep.subr.bf16.mxu0 0
  %8185 = vmatpush1.bf16.msra.mxu0 %v6734
  %8186 = vmatprep.subr.bf16.mxu0 0
  %8187 = vmatpush1.bf16.msra.mxu0 %v6733
  %8188 = vmatprep.subr.bf16.mxu0 0
  %8189 = vmatpush1.bf16.msra.mxu0 %v6732
  %8190 = vmatprep.subr.bf16.mxu0 0
  %8191 = vmatpush2.bf16.msra.mxu0 0
  %8192 = vmatprep.subr.bf16.mxu0 0
  %8193 = vmatpush2.bf16.msra.mxu0 0
  %8194 = vmatprep.subr.bf16.mxu0 0
  %8195 = vmatpush2.bf16.msra.mxu0 0
  %8196 = vmatprep.subr.bf16.mxu0 0
  %8197 = vmatpush2.bf16.msra.mxu0 0
  %8198 = vmatprep.subr.bf16.mxu0 0
  %8199 = vmatpush2.bf16.msra.mxu0 0
  %8200 = vmatprep.subr.bf16.mxu0 0
  %8201 = vmatpush2.bf16.msra.mxu0 0
  %8202 = vmatprep.subr.bf16.mxu0 0
  %8203 = vmatpush2.bf16.msra.mxu0 0
  %8204 = vmatprep.subr.bf16.mxu0 0
  %8205 = vmatpush2.bf16.msra.mxu0 0
  %8206 = vmatprep.mubr.bf16.mxu0 0
  %8207 = vmatmul.mubr.bf16.gmra.mxu0 %v8172
  %v8208 = vpop.f32.mrf.mxu0
  %v8209 = vadd.f32 0.0, %v8208
  %v8210 = vpop.f32.mrf.mxu0
  %v8211 = vpop.f32.mrf.mxu0
  %v8212 = vadd.f32 0.0, %v8211
  %v8213 = vpop.f32.mrf.mxu0
  %8214 = vdwg.mxu0
  %v8215 = vpack.c.bf16 %v8212, %v8209
  %s8216 = scalar_lea.vmem %s7, 576
  %v8217 = vld [vmem:[%s8216] sm:$0xf]
  %v8218 = vld [vmem:[%s8216 + $0x4] sm:$0xf]
  %v8219 = vld [vmem:[%s8216 + $0x8] sm:$0xf]
  %v8220 = vld [vmem:[%s8216 + $0xc] sm:$0xf]
  %v8221 = vld [vmem:[%s8216 + $0x10] sm:$0xf]
  %v8222 = vld [vmem:[%s8216 + $0x14] sm:$0xf]
  %v8223 = vld [vmem:[%s8216 + $0x18] sm:$0xf]
  %v8224 = vld [vmem:[%s8216 + $0x1c] sm:$0xf]
  %v8225 = vld [vmem:[%s8216 + $0x20] sm:$0xf]
  %v8226 = vld [vmem:[%s8216 + $0x24] sm:$0xf]
  %v8227 = vld [vmem:[%s8216 + $0x28] sm:$0xf]
  %v8228 = vld [vmem:[%s8216 + $0x2c] sm:$0xf]
  %v8229 = vld [vmem:[%s8216 + $0x30] sm:$0xf]
  %v8230 = vld [vmem:[%s8216 + $0x34] sm:$0xf]
  %v8231 = vld [vmem:[%s8216 + $0x38] sm:$0xf]
  %v8232 = vld [vmem:[%s8216 + $0x3c] sm:$0xf]
  %v8249 = vunpack.c.l.b16 %v8217
  %v8250 = vunpack.c.l.b16 %v8218
  %v8251 = vunpack.c.l.b16 %v8219
  %v8252 = vunpack.c.l.b16 %v8220
  %v8253 = vunpack.c.l.b16 %v8221
  %v8254 = vunpack.c.l.b16 %v8222
  %v8255 = vunpack.c.l.b16 %v8223
  %v8256 = vunpack.c.l.b16 %v8224
  %v8257 = vunpack.c.l.b16 %v8225
  %v8258 = vunpack.c.l.b16 %v8226
  %v8259 = vunpack.c.l.b16 %v8227
  %v8260 = vunpack.c.l.b16 %v8228
  %v8261 = vunpack.c.l.b16 %v8229
  %v8262 = vunpack.c.l.b16 %v8230
  %v8263 = vunpack.c.l.b16 %v8231
  %v8264 = vunpack.c.l.b16 %v8232
  %v8265 = vpack.c.b16 %v8250, %v8249
  %v8266 = vpack.c.b16 %v8252, %v8251
  %v8267 = vpack.c.b16 %v8254, %v8253
  %v8268 = vpack.c.b16 %v8256, %v8255
  %v8269 = vpack.c.b16 %v8258, %v8257
  %v8270 = vpack.c.b16 %v8260, %v8259
  %v8271 = vpack.c.b16 %v8262, %v8261
  %v8272 = vpack.c.b16 %v8264, %v8263
  %8281 = vmatprep.subr.bf16.mxu0 0
  %8282 = vmatpush1.bf16.msra.mxu0 %v8272
  %8283 = vmatprep.subr.bf16.mxu0 0
  %8284 = vmatpush1.bf16.msra.mxu0 %v8271
  %8285 = vmatprep.subr.bf16.mxu0 0
  %8286 = vmatpush1.bf16.msra.mxu0 %v8270
  %8287 = vmatprep.subr.bf16.mxu0 0
  %8288 = vmatpush1.bf16.msra.mxu0 %v8269
  %8289 = vmatprep.subr.bf16.mxu0 0
  %8290 = vmatpush1.bf16.msra.mxu0 %v8268
  %8291 = vmatprep.subr.bf16.mxu0 0
  %8292 = vmatpush1.bf16.msra.mxu0 %v8267
  %8293 = vmatprep.subr.bf16.mxu0 0
  %8294 = vmatpush1.bf16.msra.mxu0 %v8266
  %8295 = vmatprep.subr.bf16.mxu0 0
  %8296 = vmatpush1.bf16.msra.mxu0 %v8265
  %8297 = vmatprep.subr.bf16.mxu0 0
  %8298 = vmatpush2.bf16.msra.mxu0 0
  %8299 = vmatprep.subr.bf16.mxu0 0
  %8300 = vmatpush2.bf16.msra.mxu0 0
  %8301 = vmatprep.subr.bf16.mxu0 0
  %8302 = vmatpush2.bf16.msra.mxu0 0
  %8303 = vmatprep.subr.bf16.mxu0 0
  %8304 = vmatpush2.bf16.msra.mxu0 0
  %8305 = vmatprep.subr.bf16.mxu0 0
  %8306 = vmatpush2.bf16.msra.mxu0 0
  %8307 = vmatprep.subr.bf16.mxu0 0
  %8308 = vmatpush2.bf16.msra.mxu0 0
  %8309 = vmatprep.subr.bf16.mxu0 0
  %8310 = vmatpush2.bf16.msra.mxu0 0
  %8311 = vmatprep.subr.bf16.mxu0 0
  %8312 = vmatpush2.bf16.msra.mxu0 0
  %8313 = vmatprep.mubr.bf16.mxu0 0
  %8314 = vmatmul.mubr.bf16.gmra.mxu0 %v8215
  %v8315 = vpop.f32.mrf.mxu0
  %v8316 = vadd.f32 0.0, %v8315
  %v8317 = vpop.f32.mrf.mxu0
  %v8318 = vpop.f32.mrf.mxu0
  %v8319 = vadd.f32 0.0, %v8318
  %v8320 = vpop.f32.mrf.mxu0
  %8321 = vdwg.mxu0
  %v8322 = vadd.f32 %v8163, %v8316
  %v8323 = vadd.f32 %v8164, %v8319
  %s8324 = scalar_lea.vmem %s6, 80
  %v8325 = vld [vmem:[%s8324] sm:$0xf]
  %v8326 = vld [vmem:[%s8324 + $0x4] sm:$0xf]
  %v8329 = vunpack.c.l.b16 %v8325
  %v8330 = vunpack.c.l.b16 %v8326
  %v8331 = vpack.c.b16 %v8330, %v8329
  %8333 = vmatprep.subr.bf16.mxu0 0
  %8334 = vmatpush1.bf16.msra.mxu0 %v6739
  %8335 = vmatprep.subr.bf16.mxu0 0
  %8336 = vmatpush1.bf16.msra.mxu0 %v6738
  %8337 = vmatprep.subr.bf16.mxu0 0
  %8338 = vmatpush1.bf16.msra.mxu0 %v6737
  %8339 = vmatprep.subr.bf16.mxu0 0
  %8340 = vmatpush1.bf16.msra.mxu0 %v6736
  %8341 = vmatprep.subr.bf16.mxu0 0
  %8342 = vmatpush1.bf16.msra.mxu0 %v6735
  %8343 = vmatprep.subr.bf16.mxu0 0
  %8344 = vmatpush1.bf16.msra.mxu0 %v6734
  %8345 = vmatprep.subr.bf16.mxu0 0
  %8346 = vmatpush1.bf16.msra.mxu0 %v6733
  %8347 = vmatprep.subr.bf16.mxu0 0
  %8348 = vmatpush1.bf16.msra.mxu0 %v6732
  %8349 = vmatprep.subr.bf16.mxu0 0
  %8350 = vmatpush2.bf16.msra.mxu0 0
  %8351 = vmatprep.subr.bf16.mxu0 0
  %8352 = vmatpush2.bf16.msra.mxu0 0
  %8353 = vmatprep.subr.bf16.mxu0 0
  %8354 = vmatpush2.bf16.msra.mxu0 0
  %8355 = vmatprep.subr.bf16.mxu0 0
  %8356 = vmatpush2.bf16.msra.mxu0 0
  %8357 = vmatprep.subr.bf16.mxu0 0
  %8358 = vmatpush2.bf16.msra.mxu0 0
  %8359 = vmatprep.subr.bf16.mxu0 0
  %8360 = vmatpush2.bf16.msra.mxu0 0
  %8361 = vmatprep.subr.bf16.mxu0 0
  %8362 = vmatpush2.bf16.msra.mxu0 0
  %8363 = vmatprep.subr.bf16.mxu0 0
  %8364 = vmatpush2.bf16.msra.mxu0 0
  %8365 = vmatprep.mubr.bf16.mxu0 0
  %8366 = vmatmul.mubr.bf16.gmra.mxu0 %v8331
  %v8367 = vpop.f32.mrf.mxu0
  %v8368 = vadd.f32 0.0, %v8367
  %v8369 = vpop.f32.mrf.mxu0
  %v8370 = vpop.f32.mrf.mxu0
  %v8371 = vadd.f32 0.0, %v8370
  %v8372 = vpop.f32.mrf.mxu0
  %8373 = vdwg.mxu0
  %v8374 = vpack.c.bf16 %v8371, %v8368
  %s8375 = scalar_lea.vmem %s7, 640
  %v8376 = vld [vmem:[%s8375] sm:$0xf]
  %v8377 = vld [vmem:[%s8375 + $0x4] sm:$0xf]
  %v8378 = vld [vmem:[%s8375 + $0x8] sm:$0xf]
  %v8379 = vld [vmem:[%s8375 + $0xc] sm:$0xf]
  %v8380 = vld [vmem:[%s8375 + $0x10] sm:$0xf]
  %v8381 = vld [vmem:[%s8375 + $0x14] sm:$0xf]
  %v8382 = vld [vmem:[%s8375 + $0x18] sm:$0xf]
  %v8383 = vld [vmem:[%s8375 + $0x1c] sm:$0xf]
  %v8384 = vld [vmem:[%s8375 + $0x20] sm:$0xf]
  %v8385 = vld [vmem:[%s8375 + $0x24] sm:$0xf]
  %v8386 = vld [vmem:[%s8375 + $0x28] sm:$0xf]
  %v8387 = vld [vmem:[%s8375 + $0x2c] sm:$0xf]
  %v8388 = vld [vmem:[%s8375 + $0x30] sm:$0xf]
  %v8389 = vld [vmem:[%s8375 + $0x34] sm:$0xf]
  %v8390 = vld [vmem:[%s8375 + $0x38] sm:$0xf]
  %v8391 = vld [vmem:[%s8375 + $0x3c] sm:$0xf]
  %v8408 = vunpack.c.l.b16 %v8376
  %v8409 = vunpack.c.l.b16 %v8377
  %v8410 = vunpack.c.l.b16 %v8378
  %v8411 = vunpack.c.l.b16 %v8379
  %v8412 = vunpack.c.l.b16 %v8380
  %v8413 = vunpack.c.l.b16 %v8381
  %v8414 = vunpack.c.l.b16 %v8382
  %v8415 = vunpack.c.l.b16 %v8383
  %v8416 = vunpack.c.l.b16 %v8384
  %v8417 = vunpack.c.l.b16 %v8385
  %v8418 = vunpack.c.l.b16 %v8386
  %v8419 = vunpack.c.l.b16 %v8387
  %v8420 = vunpack.c.l.b16 %v8388
  %v8421 = vunpack.c.l.b16 %v8389
  %v8422 = vunpack.c.l.b16 %v8390
  %v8423 = vunpack.c.l.b16 %v8391
  %v8424 = vpack.c.b16 %v8409, %v8408
  %v8425 = vpack.c.b16 %v8411, %v8410
  %v8426 = vpack.c.b16 %v8413, %v8412
  %v8427 = vpack.c.b16 %v8415, %v8414
  %v8428 = vpack.c.b16 %v8417, %v8416
  %v8429 = vpack.c.b16 %v8419, %v8418
  %v8430 = vpack.c.b16 %v8421, %v8420
  %v8431 = vpack.c.b16 %v8423, %v8422
  %8440 = vmatprep.subr.bf16.mxu0 0
  %8441 = vmatpush1.bf16.msra.mxu0 %v8431
  %8442 = vmatprep.subr.bf16.mxu0 0
  %8443 = vmatpush1.bf16.msra.mxu0 %v8430
  %8444 = vmatprep.subr.bf16.mxu0 0
  %8445 = vmatpush1.bf16.msra.mxu0 %v8429
  %8446 = vmatprep.subr.bf16.mxu0 0
  %8447 = vmatpush1.bf16.msra.mxu0 %v8428
  %8448 = vmatprep.subr.bf16.mxu0 0
  %8449 = vmatpush1.bf16.msra.mxu0 %v8427
  %8450 = vmatprep.subr.bf16.mxu0 0
  %8451 = vmatpush1.bf16.msra.mxu0 %v8426
  %8452 = vmatprep.subr.bf16.mxu0 0
  %8453 = vmatpush1.bf16.msra.mxu0 %v8425
  %8454 = vmatprep.subr.bf16.mxu0 0
  %8455 = vmatpush1.bf16.msra.mxu0 %v8424
  %8456 = vmatprep.subr.bf16.mxu0 0
  %8457 = vmatpush2.bf16.msra.mxu0 0
  %8458 = vmatprep.subr.bf16.mxu0 0
  %8459 = vmatpush2.bf16.msra.mxu0 0
  %8460 = vmatprep.subr.bf16.mxu0 0
  %8461 = vmatpush2.bf16.msra.mxu0 0
  %8462 = vmatprep.subr.bf16.mxu0 0
  %8463 = vmatpush2.bf16.msra.mxu0 0
  %8464 = vmatprep.subr.bf16.mxu0 0
  %8465 = vmatpush2.bf16.msra.mxu0 0
  %8466 = vmatprep.subr.bf16.mxu0 0
  %8467 = vmatpush2.bf16.msra.mxu0 0
  %8468 = vmatprep.subr.bf16.mxu0 0
  %8469 = vmatpush2.bf16.msra.mxu0 0
  %8470 = vmatprep.subr.bf16.mxu0 0
  %8471 = vmatpush2.bf16.msra.mxu0 0
  %8472 = vmatprep.mubr.bf16.mxu0 0
  %8473 = vmatmul.mubr.bf16.gmra.mxu0 %v8374
  %v8474 = vpop.f32.mrf.mxu0
  %v8475 = vadd.f32 0.0, %v8474
  %v8476 = vpop.f32.mrf.mxu0
  %v8477 = vpop.f32.mrf.mxu0
  %v8478 = vadd.f32 0.0, %v8477
  %v8479 = vpop.f32.mrf.mxu0
  %8480 = vdwg.mxu0
  %v8481 = vadd.f32 %v8322, %v8475
  %v8482 = vadd.f32 %v8323, %v8478
  %s8483 = scalar_lea.vmem %s6, 88
  %v8484 = vld [vmem:[%s8483] sm:$0xf]
  %v8485 = vld [vmem:[%s8483 + $0x4] sm:$0xf]
  %v8488 = vunpack.c.l.b16 %v8484
  %v8489 = vunpack.c.l.b16 %v8485
  %v8490 = vpack.c.b16 %v8489, %v8488
  %8492 = vmatprep.subr.bf16.mxu0 0
  %8493 = vmatpush1.bf16.msra.mxu0 %v6739
  %8494 = vmatprep.subr.bf16.mxu0 0
  %8495 = vmatpush1.bf16.msra.mxu0 %v6738
  %8496 = vmatprep.subr.bf16.mxu0 0
  %8497 = vmatpush1.bf16.msra.mxu0 %v6737
  %8498 = vmatprep.subr.bf16.mxu0 0
  %8499 = vmatpush1.bf16.msra.mxu0 %v6736
  %8500 = vmatprep.subr.bf16.mxu0 0
  %8501 = vmatpush1.bf16.msra.mxu0 %v6735
  %8502 = vmatprep.subr.bf16.mxu0 0
  %8503 = vmatpush1.bf16.msra.mxu0 %v6734
  %8504 = vmatprep.subr.bf16.mxu0 0
  %8505 = vmatpush1.bf16.msra.mxu0 %v6733
  %8506 = vmatprep.subr.bf16.mxu0 0
  %8507 = vmatpush1.bf16.msra.mxu0 %v6732
  %8508 = vmatprep.subr.bf16.mxu0 0
  %8509 = vmatpush2.bf16.msra.mxu0 0
  %8510 = vmatprep.subr.bf16.mxu0 0
  %8511 = vmatpush2.bf16.msra.mxu0 0
  %8512 = vmatprep.subr.bf16.mxu0 0
  %8513 = vmatpush2.bf16.msra.mxu0 0
  %8514 = vmatprep.subr.bf16.mxu0 0
  %8515 = vmatpush2.bf16.msra.mxu0 0
  %8516 = vmatprep.subr.bf16.mxu0 0
  %8517 = vmatpush2.bf16.msra.mxu0 0
  %8518 = vmatprep.subr.bf16.mxu0 0
  %8519 = vmatpush2.bf16.msra.mxu0 0
  %8520 = vmatprep.subr.bf16.mxu0 0
  %8521 = vmatpush2.bf16.msra.mxu0 0
  %8522 = vmatprep.subr.bf16.mxu0 0
  %8523 = vmatpush2.bf16.msra.mxu0 0
  %8524 = vmatprep.mubr.bf16.mxu0 0
  %8525 = vmatmul.mubr.bf16.gmra.mxu0 %v8490
  %v8526 = vpop.f32.mrf.mxu0
  %v8527 = vadd.f32 0.0, %v8526
  %v8528 = vpop.f32.mrf.mxu0
  %v8529 = vpop.f32.mrf.mxu0
  %v8530 = vadd.f32 0.0, %v8529
  %v8531 = vpop.f32.mrf.mxu0
  %8532 = vdwg.mxu0
  %v8533 = vpack.c.bf16 %v8530, %v8527
  %s8534 = scalar_lea.vmem %s7, 704
  %v8535 = vld [vmem:[%s8534] sm:$0xf]
  %v8536 = vld [vmem:[%s8534 + $0x4] sm:$0xf]
  %v8537 = vld [vmem:[%s8534 + $0x8] sm:$0xf]
  %v8538 = vld [vmem:[%s8534 + $0xc] sm:$0xf]
  %v8539 = vld [vmem:[%s8534 + $0x10] sm:$0xf]
  %v8540 = vld [vmem:[%s8534 + $0x14] sm:$0xf]
  %v8541 = vld [vmem:[%s8534 + $0x18] sm:$0xf]
  %v8542 = vld [vmem:[%s8534 + $0x1c] sm:$0xf]
  %v8543 = vld [vmem:[%s8534 + $0x20] sm:$0xf]
  %v8544 = vld [vmem:[%s8534 + $0x24] sm:$0xf]
  %v8545 = vld [vmem:[%s8534 + $0x28] sm:$0xf]
  %v8546 = vld [vmem:[%s8534 + $0x2c] sm:$0xf]
  %v8547 = vld [vmem:[%s8534 + $0x30] sm:$0xf]
  %v8548 = vld [vmem:[%s8534 + $0x34] sm:$0xf]
  %v8549 = vld [vmem:[%s8534 + $0x38] sm:$0xf]
  %v8550 = vld [vmem:[%s8534 + $0x3c] sm:$0xf]
  %v8567 = vunpack.c.l.b16 %v8535
  %v8568 = vunpack.c.l.b16 %v8536
  %v8569 = vunpack.c.l.b16 %v8537
  %v8570 = vunpack.c.l.b16 %v8538
  %v8571 = vunpack.c.l.b16 %v8539
  %v8572 = vunpack.c.l.b16 %v8540
  %v8573 = vunpack.c.l.b16 %v8541
  %v8574 = vunpack.c.l.b16 %v8542
  %v8575 = vunpack.c.l.b16 %v8543
  %v8576 = vunpack.c.l.b16 %v8544
  %v8577 = vunpack.c.l.b16 %v8545
  %v8578 = vunpack.c.l.b16 %v8546
  %v8579 = vunpack.c.l.b16 %v8547
  %v8580 = vunpack.c.l.b16 %v8548
  %v8581 = vunpack.c.l.b16 %v8549
  %v8582 = vunpack.c.l.b16 %v8550
  %v8583 = vpack.c.b16 %v8568, %v8567
  %v8584 = vpack.c.b16 %v8570, %v8569
  %v8585 = vpack.c.b16 %v8572, %v8571
  %v8586 = vpack.c.b16 %v8574, %v8573
  %v8587 = vpack.c.b16 %v8576, %v8575
  %v8588 = vpack.c.b16 %v8578, %v8577
  %v8589 = vpack.c.b16 %v8580, %v8579
  %v8590 = vpack.c.b16 %v8582, %v8581
  %8599 = vmatprep.subr.bf16.mxu0 0
  %8600 = vmatpush1.bf16.msra.mxu0 %v8590
  %8601 = vmatprep.subr.bf16.mxu0 0
  %8602 = vmatpush1.bf16.msra.mxu0 %v8589
  %8603 = vmatprep.subr.bf16.mxu0 0
  %8604 = vmatpush1.bf16.msra.mxu0 %v8588
  %8605 = vmatprep.subr.bf16.mxu0 0
  %8606 = vmatpush1.bf16.msra.mxu0 %v8587
  %8607 = vmatprep.subr.bf16.mxu0 0
  %8608 = vmatpush1.bf16.msra.mxu0 %v8586
  %8609 = vmatprep.subr.bf16.mxu0 0
  %8610 = vmatpush1.bf16.msra.mxu0 %v8585
  %8611 = vmatprep.subr.bf16.mxu0 0
  %8612 = vmatpush1.bf16.msra.mxu0 %v8584
  %8613 = vmatprep.subr.bf16.mxu0 0
  %8614 = vmatpush1.bf16.msra.mxu0 %v8583
  %8615 = vmatprep.subr.bf16.mxu0 0
  %8616 = vmatpush2.bf16.msra.mxu0 0
  %8617 = vmatprep.subr.bf16.mxu0 0
  %8618 = vmatpush2.bf16.msra.mxu0 0
  %8619 = vmatprep.subr.bf16.mxu0 0
  %8620 = vmatpush2.bf16.msra.mxu0 0
  %8621 = vmatprep.subr.bf16.mxu0 0
  %8622 = vmatpush2.bf16.msra.mxu0 0
  %8623 = vmatprep.subr.bf16.mxu0 0
  %8624 = vmatpush2.bf16.msra.mxu0 0
  %8625 = vmatprep.subr.bf16.mxu0 0
  %8626 = vmatpush2.bf16.msra.mxu0 0
  %8627 = vmatprep.subr.bf16.mxu0 0
  %8628 = vmatpush2.bf16.msra.mxu0 0
  %8629 = vmatprep.subr.bf16.mxu0 0
  %8630 = vmatpush2.bf16.msra.mxu0 0
  %8631 = vmatprep.mubr.bf16.mxu0 0
  %8632 = vmatmul.mubr.bf16.gmra.mxu0 %v8533
  %v8633 = vpop.f32.mrf.mxu0
  %v8634 = vadd.f32 0.0, %v8633
  %v8635 = vpop.f32.mrf.mxu0
  %v8636 = vpop.f32.mrf.mxu0
  %v8637 = vadd.f32 0.0, %v8636
  %v8638 = vpop.f32.mrf.mxu0
  %8639 = vdwg.mxu0
  %v8640 = vadd.f32 %v8481, %v8634
  %v8641 = vadd.f32 %v8482, %v8637
  %s8642 = scalar_lea.vmem %s6, 96
  %v8643 = vld [vmem:[%s8642] sm:$0xf]
  %v8644 = vld [vmem:[%s8642 + $0x4] sm:$0xf]
  %v8647 = vunpack.c.l.b16 %v8643
  %v8648 = vunpack.c.l.b16 %v8644
  %v8649 = vpack.c.b16 %v8648, %v8647
  %8651 = vmatprep.subr.bf16.mxu0 0
  %8652 = vmatpush1.bf16.msra.mxu0 %v6739
  %8653 = vmatprep.subr.bf16.mxu0 0
  %8654 = vmatpush1.bf16.msra.mxu0 %v6738
  %8655 = vmatprep.subr.bf16.mxu0 0
  %8656 = vmatpush1.bf16.msra.mxu0 %v6737
  %8657 = vmatprep.subr.bf16.mxu0 0
  %8658 = vmatpush1.bf16.msra.mxu0 %v6736
  %8659 = vmatprep.subr.bf16.mxu0 0
  %8660 = vmatpush1.bf16.msra.mxu0 %v6735
  %8661 = vmatprep.subr.bf16.mxu0 0
  %8662 = vmatpush1.bf16.msra.mxu0 %v6734
  %8663 = vmatprep.subr.bf16.mxu0 0
  %8664 = vmatpush1.bf16.msra.mxu0 %v6733
  %8665 = vmatprep.subr.bf16.mxu0 0
  %8666 = vmatpush1.bf16.msra.mxu0 %v6732
  %8667 = vmatprep.subr.bf16.mxu0 0
  %8668 = vmatpush2.bf16.msra.mxu0 0
  %8669 = vmatprep.subr.bf16.mxu0 0
  %8670 = vmatpush2.bf16.msra.mxu0 0
  %8671 = vmatprep.subr.bf16.mxu0 0
  %8672 = vmatpush2.bf16.msra.mxu0 0
  %8673 = vmatprep.subr.bf16.mxu0 0
  %8674 = vmatpush2.bf16.msra.mxu0 0
  %8675 = vmatprep.subr.bf16.mxu0 0
  %8676 = vmatpush2.bf16.msra.mxu0 0
  %8677 = vmatprep.subr.bf16.mxu0 0
  %8678 = vmatpush2.bf16.msra.mxu0 0
  %8679 = vmatprep.subr.bf16.mxu0 0
  %8680 = vmatpush2.bf16.msra.mxu0 0
  %8681 = vmatprep.subr.bf16.mxu0 0
  %8682 = vmatpush2.bf16.msra.mxu0 0
  %8683 = vmatprep.mubr.bf16.mxu0 0
  %8684 = vmatmul.mubr.bf16.gmra.mxu0 %v8649
  %v8685 = vpop.f32.mrf.mxu0
  %v8686 = vadd.f32 0.0, %v8685
  %v8687 = vpop.f32.mrf.mxu0
  %v8688 = vpop.f32.mrf.mxu0
  %v8689 = vadd.f32 0.0, %v8688
  %v8690 = vpop.f32.mrf.mxu0
  %8691 = vdwg.mxu0
  %v8692 = vpack.c.bf16 %v8689, %v8686
  %s8693 = scalar_lea.vmem %s7, 768
  %v8694 = vld [vmem:[%s8693] sm:$0xf]
  %v8695 = vld [vmem:[%s8693 + $0x4] sm:$0xf]
  %v8696 = vld [vmem:[%s8693 + $0x8] sm:$0xf]
  %v8697 = vld [vmem:[%s8693 + $0xc] sm:$0xf]
  %v8698 = vld [vmem:[%s8693 + $0x10] sm:$0xf]
  %v8699 = vld [vmem:[%s8693 + $0x14] sm:$0xf]
  %v8700 = vld [vmem:[%s8693 + $0x18] sm:$0xf]
  %v8701 = vld [vmem:[%s8693 + $0x1c] sm:$0xf]
  %v8702 = vld [vmem:[%s8693 + $0x20] sm:$0xf]
  %v8703 = vld [vmem:[%s8693 + $0x24] sm:$0xf]
  %v8704 = vld [vmem:[%s8693 + $0x28] sm:$0xf]
  %v8705 = vld [vmem:[%s8693 + $0x2c] sm:$0xf]
  %v8706 = vld [vmem:[%s8693 + $0x30] sm:$0xf]
  %v8707 = vld [vmem:[%s8693 + $0x34] sm:$0xf]
  %v8708 = vld [vmem:[%s8693 + $0x38] sm:$0xf]
  %v8709 = vld [vmem:[%s8693 + $0x3c] sm:$0xf]
  %v8726 = vunpack.c.l.b16 %v8694
  %v8727 = vunpack.c.l.b16 %v8695
  %v8728 = vunpack.c.l.b16 %v8696
  %v8729 = vunpack.c.l.b16 %v8697
  %v8730 = vunpack.c.l.b16 %v8698
  %v8731 = vunpack.c.l.b16 %v8699
  %v8732 = vunpack.c.l.b16 %v8700
  %v8733 = vunpack.c.l.b16 %v8701
  %v8734 = vunpack.c.l.b16 %v8702
  %v8735 = vunpack.c.l.b16 %v8703
  %v8736 = vunpack.c.l.b16 %v8704
  %v8737 = vunpack.c.l.b16 %v8705
  %v8738 = vunpack.c.l.b16 %v8706
  %v8739 = vunpack.c.l.b16 %v8707
  %v8740 = vunpack.c.l.b16 %v8708
  %v8741 = vunpack.c.l.b16 %v8709
  %v8742 = vpack.c.b16 %v8727, %v8726
  %v8743 = vpack.c.b16 %v8729, %v8728
  %v8744 = vpack.c.b16 %v8731, %v8730
  %v8745 = vpack.c.b16 %v8733, %v8732
  %v8746 = vpack.c.b16 %v8735, %v8734
  %v8747 = vpack.c.b16 %v8737, %v8736
  %v8748 = vpack.c.b16 %v8739, %v8738
  %v8749 = vpack.c.b16 %v8741, %v8740
  %8758 = vmatprep.subr.bf16.mxu0 0
  %8759 = vmatpush1.bf16.msra.mxu0 %v8749
  %8760 = vmatprep.subr.bf16.mxu0 0
  %8761 = vmatpush1.bf16.msra.mxu0 %v8748
  %8762 = vmatprep.subr.bf16.mxu0 0
  %8763 = vmatpush1.bf16.msra.mxu0 %v8747
  %8764 = vmatprep.subr.bf16.mxu0 0
  %8765 = vmatpush1.bf16.msra.mxu0 %v8746
  %8766 = vmatprep.subr.bf16.mxu0 0
  %8767 = vmatpush1.bf16.msra.mxu0 %v8745
  %8768 = vmatprep.subr.bf16.mxu0 0
  %8769 = vmatpush1.bf16.msra.mxu0 %v8744
  %8770 = vmatprep.subr.bf16.mxu0 0
  %8771 = vmatpush1.bf16.msra.mxu0 %v8743
  %8772 = vmatprep.subr.bf16.mxu0 0
  %8773 = vmatpush1.bf16.msra.mxu0 %v8742
  %8774 = vmatprep.subr.bf16.mxu0 0
  %8775 = vmatpush2.bf16.msra.mxu0 0
  %8776 = vmatprep.subr.bf16.mxu0 0
  %8777 = vmatpush2.bf16.msra.mxu0 0
  %8778 = vmatprep.subr.bf16.mxu0 0
  %8779 = vmatpush2.bf16.msra.mxu0 0
  %8780 = vmatprep.subr.bf16.mxu0 0
  %8781 = vmatpush2.bf16.msra.mxu0 0
  %8782 = vmatprep.subr.bf16.mxu0 0
  %8783 = vmatpush2.bf16.msra.mxu0 0
  %8784 = vmatprep.subr.bf16.mxu0 0
  %8785 = vmatpush2.bf16.msra.mxu0 0
  %8786 = vmatprep.subr.bf16.mxu0 0
  %8787 = vmatpush2.bf16.msra.mxu0 0
  %8788 = vmatprep.subr.bf16.mxu0 0
  %8789 = vmatpush2.bf16.msra.mxu0 0
  %8790 = vmatprep.mubr.bf16.mxu0 0
  %8791 = vmatmul.mubr.bf16.gmra.mxu0 %v8692
  %v8792 = vpop.f32.mrf.mxu0
  %v8793 = vadd.f32 0.0, %v8792
  %v8794 = vpop.f32.mrf.mxu0
  %v8795 = vpop.f32.mrf.mxu0
  %v8796 = vadd.f32 0.0, %v8795
  %v8797 = vpop.f32.mrf.mxu0
  %8798 = vdwg.mxu0
  %v8799 = vadd.f32 %v8640, %v8793
  %v8800 = vadd.f32 %v8641, %v8796
  %s8801 = scalar_lea.vmem %s6, 104
  %v8802 = vld [vmem:[%s8801] sm:$0xf]
  %v8803 = vld [vmem:[%s8801 + $0x4] sm:$0xf]
  %v8806 = vunpack.c.l.b16 %v8802
  %v8807 = vunpack.c.l.b16 %v8803
  %v8808 = vpack.c.b16 %v8807, %v8806
  %8810 = vmatprep.subr.bf16.mxu0 0
  %8811 = vmatpush1.bf16.msra.mxu0 %v6739
  %8812 = vmatprep.subr.bf16.mxu0 0
  %8813 = vmatpush1.bf16.msra.mxu0 %v6738
  %8814 = vmatprep.subr.bf16.mxu0 0
  %8815 = vmatpush1.bf16.msra.mxu0 %v6737
  %8816 = vmatprep.subr.bf16.mxu0 0
  %8817 = vmatpush1.bf16.msra.mxu0 %v6736
  %8818 = vmatprep.subr.bf16.mxu0 0
  %8819 = vmatpush1.bf16.msra.mxu0 %v6735
  %8820 = vmatprep.subr.bf16.mxu0 0
  %8821 = vmatpush1.bf16.msra.mxu0 %v6734
  %8822 = vmatprep.subr.bf16.mxu0 0
  %8823 = vmatpush1.bf16.msra.mxu0 %v6733
  %8824 = vmatprep.subr.bf16.mxu0 0
  %8825 = vmatpush1.bf16.msra.mxu0 %v6732
  %8826 = vmatprep.subr.bf16.mxu0 0
  %8827 = vmatpush2.bf16.msra.mxu0 0
  %8828 = vmatprep.subr.bf16.mxu0 0
  %8829 = vmatpush2.bf16.msra.mxu0 0
  %8830 = vmatprep.subr.bf16.mxu0 0
  %8831 = vmatpush2.bf16.msra.mxu0 0
  %8832 = vmatprep.subr.bf16.mxu0 0
  %8833 = vmatpush2.bf16.msra.mxu0 0
  %8834 = vmatprep.subr.bf16.mxu0 0
  %8835 = vmatpush2.bf16.msra.mxu0 0
  %8836 = vmatprep.subr.bf16.mxu0 0
  %8837 = vmatpush2.bf16.msra.mxu0 0
  %8838 = vmatprep.subr.bf16.mxu0 0
  %8839 = vmatpush2.bf16.msra.mxu0 0
  %8840 = vmatprep.subr.bf16.mxu0 0
  %8841 = vmatpush2.bf16.msra.mxu0 0
  %8842 = vmatprep.mubr.bf16.mxu0 0
  %8843 = vmatmul.mubr.bf16.gmra.mxu0 %v8808
  %v8844 = vpop.f32.mrf.mxu0
  %v8845 = vadd.f32 0.0, %v8844
  %v8846 = vpop.f32.mrf.mxu0
  %v8847 = vpop.f32.mrf.mxu0
  %v8848 = vadd.f32 0.0, %v8847
  %v8849 = vpop.f32.mrf.mxu0
  %8850 = vdwg.mxu0
  %v8851 = vpack.c.bf16 %v8848, %v8845
  %s8852 = scalar_lea.vmem %s7, 832
  %v8853 = vld [vmem:[%s8852] sm:$0xf]
  %v8854 = vld [vmem:[%s8852 + $0x4] sm:$0xf]
  %v8855 = vld [vmem:[%s8852 + $0x8] sm:$0xf]
  %v8856 = vld [vmem:[%s8852 + $0xc] sm:$0xf]
  %v8857 = vld [vmem:[%s8852 + $0x10] sm:$0xf]
  %v8858 = vld [vmem:[%s8852 + $0x14] sm:$0xf]
  %v8859 = vld [vmem:[%s8852 + $0x18] sm:$0xf]
  %v8860 = vld [vmem:[%s8852 + $0x1c] sm:$0xf]
  %v8861 = vld [vmem:[%s8852 + $0x20] sm:$0xf]
  %v8862 = vld [vmem:[%s8852 + $0x24] sm:$0xf]
  %v8863 = vld [vmem:[%s8852 + $0x28] sm:$0xf]
  %v8864 = vld [vmem:[%s8852 + $0x2c] sm:$0xf]
  %v8865 = vld [vmem:[%s8852 + $0x30] sm:$0xf]
  %v8866 = vld [vmem:[%s8852 + $0x34] sm:$0xf]
  %v8867 = vld [vmem:[%s8852 + $0x38] sm:$0xf]
  %v8868 = vld [vmem:[%s8852 + $0x3c] sm:$0xf]
  %v8885 = vunpack.c.l.b16 %v8853
  %v8886 = vunpack.c.l.b16 %v8854
  %v8887 = vunpack.c.l.b16 %v8855
  %v8888 = vunpack.c.l.b16 %v8856
  %v8889 = vunpack.c.l.b16 %v8857
  %v8890 = vunpack.c.l.b16 %v8858
  %v8891 = vunpack.c.l.b16 %v8859
  %v8892 = vunpack.c.l.b16 %v8860
  %v8893 = vunpack.c.l.b16 %v8861
  %v8894 = vunpack.c.l.b16 %v8862
  %v8895 = vunpack.c.l.b16 %v8863
  %v8896 = vunpack.c.l.b16 %v8864
  %v8897 = vunpack.c.l.b16 %v8865
  %v8898 = vunpack.c.l.b16 %v8866
  %v8899 = vunpack.c.l.b16 %v8867
  %v8900 = vunpack.c.l.b16 %v8868
  %v8901 = vpack.c.b16 %v8886, %v8885
  %v8902 = vpack.c.b16 %v8888, %v8887
  %v8903 = vpack.c.b16 %v8890, %v8889
  %v8904 = vpack.c.b16 %v8892, %v8891
  %v8905 = vpack.c.b16 %v8894, %v8893
  %v8906 = vpack.c.b16 %v8896, %v8895
  %v8907 = vpack.c.b16 %v8898, %v8897
  %v8908 = vpack.c.b16 %v8900, %v8899
  %8917 = vmatprep.subr.bf16.mxu0 0
  %8918 = vmatpush1.bf16.msra.mxu0 %v8908
  %8919 = vmatprep.subr.bf16.mxu0 0
  %8920 = vmatpush1.bf16.msra.mxu0 %v8907
  %8921 = vmatprep.subr.bf16.mxu0 0
  %8922 = vmatpush1.bf16.msra.mxu0 %v8906
  %8923 = vmatprep.subr.bf16.mxu0 0
  %8924 = vmatpush1.bf16.msra.mxu0 %v8905
  %8925 = vmatprep.subr.bf16.mxu0 0
  %8926 = vmatpush1.bf16.msra.mxu0 %v8904
  %8927 = vmatprep.subr.bf16.mxu0 0
  %8928 = vmatpush1.bf16.msra.mxu0 %v8903
  %8929 = vmatprep.subr.bf16.mxu0 0
  %8930 = vmatpush1.bf16.msra.mxu0 %v8902
  %8931 = vmatprep.subr.bf16.mxu0 0
  %8932 = vmatpush1.bf16.msra.mxu0 %v8901
  %8933 = vmatprep.subr.bf16.mxu0 0
  %8934 = vmatpush2.bf16.msra.mxu0 0
  %8935 = vmatprep.subr.bf16.mxu0 0
  %8936 = vmatpush2.bf16.msra.mxu0 0
  %8937 = vmatprep.subr.bf16.mxu0 0
  %8938 = vmatpush2.bf16.msra.mxu0 0
  %8939 = vmatprep.subr.bf16.mxu0 0
  %8940 = vmatpush2.bf16.msra.mxu0 0
  %8941 = vmatprep.subr.bf16.mxu0 0
  %8942 = vmatpush2.bf16.msra.mxu0 0
  %8943 = vmatprep.subr.bf16.mxu0 0
  %8944 = vmatpush2.bf16.msra.mxu0 0
  %8945 = vmatprep.subr.bf16.mxu0 0
  %8946 = vmatpush2.bf16.msra.mxu0 0
  %8947 = vmatprep.subr.bf16.mxu0 0
  %8948 = vmatpush2.bf16.msra.mxu0 0
  %8949 = vmatprep.mubr.bf16.mxu0 0
  %8950 = vmatmul.mubr.bf16.gmra.mxu0 %v8851
  %v8951 = vpop.f32.mrf.mxu0
  %v8952 = vadd.f32 0.0, %v8951
  %v8953 = vpop.f32.mrf.mxu0
  %v8954 = vpop.f32.mrf.mxu0
  %v8955 = vadd.f32 0.0, %v8954
  %v8956 = vpop.f32.mrf.mxu0
  %8957 = vdwg.mxu0
  %v8958 = vadd.f32 %v8799, %v8952
  %v8959 = vadd.f32 %v8800, %v8955
  %s8960 = scalar_lea.vmem %s6, 112
  %v8961 = vld [vmem:[%s8960] sm:$0xf]
  %v8962 = vld [vmem:[%s8960 + $0x4] sm:$0xf]
  %v8965 = vunpack.c.l.b16 %v8961
  %v8966 = vunpack.c.l.b16 %v8962
  %v8967 = vpack.c.b16 %v8966, %v8965
  %8969 = vmatprep.subr.bf16.mxu0 0
  %8970 = vmatpush1.bf16.msra.mxu0 %v6739
  %8971 = vmatprep.subr.bf16.mxu0 0
  %8972 = vmatpush1.bf16.msra.mxu0 %v6738
  %8973 = vmatprep.subr.bf16.mxu0 0
  %8974 = vmatpush1.bf16.msra.mxu0 %v6737
  %8975 = vmatprep.subr.bf16.mxu0 0
  %8976 = vmatpush1.bf16.msra.mxu0 %v6736
  %8977 = vmatprep.subr.bf16.mxu0 0
  %8978 = vmatpush1.bf16.msra.mxu0 %v6735
  %8979 = vmatprep.subr.bf16.mxu0 0
  %8980 = vmatpush1.bf16.msra.mxu0 %v6734
  %8981 = vmatprep.subr.bf16.mxu0 0
  %8982 = vmatpush1.bf16.msra.mxu0 %v6733
  %8983 = vmatprep.subr.bf16.mxu0 0
  %8984 = vmatpush1.bf16.msra.mxu0 %v6732
  %8985 = vmatprep.subr.bf16.mxu0 0
  %8986 = vmatpush2.bf16.msra.mxu0 0
  %8987 = vmatprep.subr.bf16.mxu0 0
  %8988 = vmatpush2.bf16.msra.mxu0 0
  %8989 = vmatprep.subr.bf16.mxu0 0
  %8990 = vmatpush2.bf16.msra.mxu0 0
  %8991 = vmatprep.subr.bf16.mxu0 0
  %8992 = vmatpush2.bf16.msra.mxu0 0
  %8993 = vmatprep.subr.bf16.mxu0 0
  %8994 = vmatpush2.bf16.msra.mxu0 0
  %8995 = vmatprep.subr.bf16.mxu0 0
  %8996 = vmatpush2.bf16.msra.mxu0 0
  %8997 = vmatprep.subr.bf16.mxu0 0
  %8998 = vmatpush2.bf16.msra.mxu0 0
  %8999 = vmatprep.subr.bf16.mxu0 0
  %9000 = vmatpush2.bf16.msra.mxu0 0
  %9001 = vmatprep.mubr.bf16.mxu0 0
  %9002 = vmatmul.mubr.bf16.gmra.mxu0 %v8967
  %v9003 = vpop.f32.mrf.mxu0
  %v9004 = vadd.f32 0.0, %v9003
  %v9005 = vpop.f32.mrf.mxu0
  %v9006 = vpop.f32.mrf.mxu0
  %v9007 = vadd.f32 0.0, %v9006
  %v9008 = vpop.f32.mrf.mxu0
  %9009 = vdwg.mxu0
  %v9010 = vpack.c.bf16 %v9007, %v9004
  %s9011 = scalar_lea.vmem %s7, 896
  %v9012 = vld [vmem:[%s9011] sm:$0xf]
  %v9013 = vld [vmem:[%s9011 + $0x4] sm:$0xf]
  %v9014 = vld [vmem:[%s9011 + $0x8] sm:$0xf]
  %v9015 = vld [vmem:[%s9011 + $0xc] sm:$0xf]
  %v9016 = vld [vmem:[%s9011 + $0x10] sm:$0xf]
  %v9017 = vld [vmem:[%s9011 + $0x14] sm:$0xf]
  %v9018 = vld [vmem:[%s9011 + $0x18] sm:$0xf]
  %v9019 = vld [vmem:[%s9011 + $0x1c] sm:$0xf]
  %v9020 = vld [vmem:[%s9011 + $0x20] sm:$0xf]
  %v9021 = vld [vmem:[%s9011 + $0x24] sm:$0xf]
  %v9022 = vld [vmem:[%s9011 + $0x28] sm:$0xf]
  %v9023 = vld [vmem:[%s9011 + $0x2c] sm:$0xf]
  %v9024 = vld [vmem:[%s9011 + $0x30] sm:$0xf]
  %v9025 = vld [vmem:[%s9011 + $0x34] sm:$0xf]
  %v9026 = vld [vmem:[%s9011 + $0x38] sm:$0xf]
  %v9027 = vld [vmem:[%s9011 + $0x3c] sm:$0xf]
  %v9044 = vunpack.c.l.b16 %v9012
  %v9045 = vunpack.c.l.b16 %v9013
  %v9046 = vunpack.c.l.b16 %v9014
  %v9047 = vunpack.c.l.b16 %v9015
  %v9048 = vunpack.c.l.b16 %v9016
  %v9049 = vunpack.c.l.b16 %v9017
  %v9050 = vunpack.c.l.b16 %v9018
  %v9051 = vunpack.c.l.b16 %v9019
  %v9052 = vunpack.c.l.b16 %v9020
  %v9053 = vunpack.c.l.b16 %v9021
  %v9054 = vunpack.c.l.b16 %v9022
  %v9055 = vunpack.c.l.b16 %v9023
  %v9056 = vunpack.c.l.b16 %v9024
  %v9057 = vunpack.c.l.b16 %v9025
  %v9058 = vunpack.c.l.b16 %v9026
  %v9059 = vunpack.c.l.b16 %v9027
  %v9060 = vpack.c.b16 %v9045, %v9044
  %v9061 = vpack.c.b16 %v9047, %v9046
  %v9062 = vpack.c.b16 %v9049, %v9048
  %v9063 = vpack.c.b16 %v9051, %v9050
  %v9064 = vpack.c.b16 %v9053, %v9052
  %v9065 = vpack.c.b16 %v9055, %v9054
  %v9066 = vpack.c.b16 %v9057, %v9056
  %v9067 = vpack.c.b16 %v9059, %v9058
  %9076 = vmatprep.subr.bf16.mxu0 0
  %9077 = vmatpush1.bf16.msra.mxu0 %v9067
  %9078 = vmatprep.subr.bf16.mxu0 0
  %9079 = vmatpush1.bf16.msra.mxu0 %v9066
  %9080 = vmatprep.subr.bf16.mxu0 0
  %9081 = vmatpush1.bf16.msra.mxu0 %v9065
  %9082 = vmatprep.subr.bf16.mxu0 0
  %9083 = vmatpush1.bf16.msra.mxu0 %v9064
  %9084 = vmatprep.subr.bf16.mxu0 0
  %9085 = vmatpush1.bf16.msra.mxu0 %v9063
  %9086 = vmatprep.subr.bf16.mxu0 0
  %9087 = vmatpush1.bf16.msra.mxu0 %v9062
  %9088 = vmatprep.subr.bf16.mxu0 0
  %9089 = vmatpush1.bf16.msra.mxu0 %v9061
  %9090 = vmatprep.subr.bf16.mxu0 0
  %9091 = vmatpush1.bf16.msra.mxu0 %v9060
  %9092 = vmatprep.subr.bf16.mxu0 0
  %9093 = vmatpush2.bf16.msra.mxu0 0
  %9094 = vmatprep.subr.bf16.mxu0 0
  %9095 = vmatpush2.bf16.msra.mxu0 0
  %9096 = vmatprep.subr.bf16.mxu0 0
  %9097 = vmatpush2.bf16.msra.mxu0 0
  %9098 = vmatprep.subr.bf16.mxu0 0
  %9099 = vmatpush2.bf16.msra.mxu0 0
  %9100 = vmatprep.subr.bf16.mxu0 0
  %9101 = vmatpush2.bf16.msra.mxu0 0
  %9102 = vmatprep.subr.bf16.mxu0 0
  %9103 = vmatpush2.bf16.msra.mxu0 0
  %9104 = vmatprep.subr.bf16.mxu0 0
  %9105 = vmatpush2.bf16.msra.mxu0 0
  %9106 = vmatprep.subr.bf16.mxu0 0
  %9107 = vmatpush2.bf16.msra.mxu0 0
  %9108 = vmatprep.mubr.bf16.mxu0 0
  %9109 = vmatmul.mubr.bf16.gmra.mxu0 %v9010
  %v9110 = vpop.f32.mrf.mxu0
  %v9111 = vadd.f32 0.0, %v9110
  %v9112 = vpop.f32.mrf.mxu0
  %v9113 = vpop.f32.mrf.mxu0
  %v9114 = vadd.f32 0.0, %v9113
  %v9115 = vpop.f32.mrf.mxu0
  %9116 = vdwg.mxu0
  %v9117 = vadd.f32 %v8958, %v9111
  %v9118 = vadd.f32 %v8959, %v9114
  %s9119 = scalar_lea.vmem %s6, 120
  %v9120 = vld [vmem:[%s9119] sm:$0xf]
  %v9121 = vld [vmem:[%s9119 + $0x4] sm:$0xf]
  %v9124 = vunpack.c.l.b16 %v9120
  %v9125 = vunpack.c.l.b16 %v9121
  %v9126 = vpack.c.b16 %v9125, %v9124
  %9128 = vmatprep.subr.bf16.mxu0 0
  %9129 = vmatpush1.bf16.msra.mxu0 %v6739
  %9130 = vmatprep.subr.bf16.mxu0 0
  %9131 = vmatpush1.bf16.msra.mxu0 %v6738
  %9132 = vmatprep.subr.bf16.mxu0 0
  %9133 = vmatpush1.bf16.msra.mxu0 %v6737
  %9134 = vmatprep.subr.bf16.mxu0 0
  %9135 = vmatpush1.bf16.msra.mxu0 %v6736
  %9136 = vmatprep.subr.bf16.mxu0 0
  %9137 = vmatpush1.bf16.msra.mxu0 %v6735
  %9138 = vmatprep.subr.bf16.mxu0 0
  %9139 = vmatpush1.bf16.msra.mxu0 %v6734
  %9140 = vmatprep.subr.bf16.mxu0 0
  %9141 = vmatpush1.bf16.msra.mxu0 %v6733
  %9142 = vmatprep.subr.bf16.mxu0 0
  %9143 = vmatpush1.bf16.msra.mxu0 %v6732
  %9144 = vmatprep.subr.bf16.mxu0 0
  %9145 = vmatpush2.bf16.msra.mxu0 0
  %9146 = vmatprep.subr.bf16.mxu0 0
  %9147 = vmatpush2.bf16.msra.mxu0 0
  %9148 = vmatprep.subr.bf16.mxu0 0
  %9149 = vmatpush2.bf16.msra.mxu0 0
  %9150 = vmatprep.subr.bf16.mxu0 0
  %9151 = vmatpush2.bf16.msra.mxu0 0
  %9152 = vmatprep.subr.bf16.mxu0 0
  %9153 = vmatpush2.bf16.msra.mxu0 0
  %9154 = vmatprep.subr.bf16.mxu0 0
  %9155 = vmatpush2.bf16.msra.mxu0 0
  %9156 = vmatprep.subr.bf16.mxu0 0
  %9157 = vmatpush2.bf16.msra.mxu0 0
  %9158 = vmatprep.subr.bf16.mxu0 0
  %9159 = vmatpush2.bf16.msra.mxu0 0
  %9160 = vmatprep.mubr.bf16.mxu0 0
  %9161 = vmatmul.mubr.bf16.gmra.mxu0 %v9126
  %v9162 = vpop.f32.mrf.mxu0
  %v9163 = vadd.f32 0.0, %v9162
  %v9164 = vpop.f32.mrf.mxu0
  %v9165 = vpop.f32.mrf.mxu0
  %v9166 = vadd.f32 0.0, %v9165
  %v9167 = vpop.f32.mrf.mxu0
  %9168 = vdwg.mxu0
  %v9169 = vpack.c.bf16 %v9166, %v9163
  %s9170 = scalar_lea.vmem %s7, 960
  %v9171 = vld [vmem:[%s9170] sm:$0xf]
  %v9172 = vld [vmem:[%s9170 + $0x4] sm:$0xf]
  %v9173 = vld [vmem:[%s9170 + $0x8] sm:$0xf]
  %v9174 = vld [vmem:[%s9170 + $0xc] sm:$0xf]
  %v9175 = vld [vmem:[%s9170 + $0x10] sm:$0xf]
  %v9176 = vld [vmem:[%s9170 + $0x14] sm:$0xf]
  %v9177 = vld [vmem:[%s9170 + $0x18] sm:$0xf]
  %v9178 = vld [vmem:[%s9170 + $0x1c] sm:$0xf]
  %v9179 = vld [vmem:[%s9170 + $0x20] sm:$0xf]
  %v9180 = vld [vmem:[%s9170 + $0x24] sm:$0xf]
  %v9181 = vld [vmem:[%s9170 + $0x28] sm:$0xf]
  %v9182 = vld [vmem:[%s9170 + $0x2c] sm:$0xf]
  %v9183 = vld [vmem:[%s9170 + $0x30] sm:$0xf]
  %v9184 = vld [vmem:[%s9170 + $0x34] sm:$0xf]
  %v9185 = vld [vmem:[%s9170 + $0x38] sm:$0xf]
  %v9186 = vld [vmem:[%s9170 + $0x3c] sm:$0xf]
  %v9203 = vunpack.c.l.b16 %v9171
  %v9204 = vunpack.c.l.b16 %v9172
  %v9205 = vunpack.c.l.b16 %v9173
  %v9206 = vunpack.c.l.b16 %v9174
  %v9207 = vunpack.c.l.b16 %v9175
  %v9208 = vunpack.c.l.b16 %v9176
  %v9209 = vunpack.c.l.b16 %v9177
  %v9210 = vunpack.c.l.b16 %v9178
  %v9211 = vunpack.c.l.b16 %v9179
  %v9212 = vunpack.c.l.b16 %v9180
  %v9213 = vunpack.c.l.b16 %v9181
  %v9214 = vunpack.c.l.b16 %v9182
  %v9215 = vunpack.c.l.b16 %v9183
  %v9216 = vunpack.c.l.b16 %v9184
  %v9217 = vunpack.c.l.b16 %v9185
  %v9218 = vunpack.c.l.b16 %v9186
  %v9219 = vpack.c.b16 %v9204, %v9203
  %v9220 = vpack.c.b16 %v9206, %v9205
  %v9221 = vpack.c.b16 %v9208, %v9207
  %v9222 = vpack.c.b16 %v9210, %v9209
  %v9223 = vpack.c.b16 %v9212, %v9211
  %v9224 = vpack.c.b16 %v9214, %v9213
  %v9225 = vpack.c.b16 %v9216, %v9215
  %v9226 = vpack.c.b16 %v9218, %v9217
  %9235 = vmatprep.subr.bf16.mxu0 0
  %9236 = vmatpush1.bf16.msra.mxu0 %v9226
  %9237 = vmatprep.subr.bf16.mxu0 0
  %9238 = vmatpush1.bf16.msra.mxu0 %v9225
  %9239 = vmatprep.subr.bf16.mxu0 0
  %9240 = vmatpush1.bf16.msra.mxu0 %v9224
  %9241 = vmatprep.subr.bf16.mxu0 0
  %9242 = vmatpush1.bf16.msra.mxu0 %v9223
  %9243 = vmatprep.subr.bf16.mxu0 0
  %9244 = vmatpush1.bf16.msra.mxu0 %v9222
  %9245 = vmatprep.subr.bf16.mxu0 0
  %9246 = vmatpush1.bf16.msra.mxu0 %v9221
  %9247 = vmatprep.subr.bf16.mxu0 0
  %9248 = vmatpush1.bf16.msra.mxu0 %v9220
  %9249 = vmatprep.subr.bf16.mxu0 0
  %9250 = vmatpush1.bf16.msra.mxu0 %v9219
  %9251 = vmatprep.subr.bf16.mxu0 0
  %9252 = vmatpush2.bf16.msra.mxu0 0
  %9253 = vmatprep.subr.bf16.mxu0 0
  %9254 = vmatpush2.bf16.msra.mxu0 0
  %9255 = vmatprep.subr.bf16.mxu0 0
  %9256 = vmatpush2.bf16.msra.mxu0 0
  %9257 = vmatprep.subr.bf16.mxu0 0
  %9258 = vmatpush2.bf16.msra.mxu0 0
  %9259 = vmatprep.subr.bf16.mxu0 0
  %9260 = vmatpush2.bf16.msra.mxu0 0
  %9261 = vmatprep.subr.bf16.mxu0 0
  %9262 = vmatpush2.bf16.msra.mxu0 0
  %9263 = vmatprep.subr.bf16.mxu0 0
  %9264 = vmatpush2.bf16.msra.mxu0 0
  %9265 = vmatprep.subr.bf16.mxu0 0
  %9266 = vmatpush2.bf16.msra.mxu0 0
  %9267 = vmatprep.mubr.bf16.mxu0 0
  %9268 = vmatmul.mubr.bf16.gmra.mxu0 %v9169
  %v9269 = vpop.f32.mrf.mxu0
  %v9270 = vadd.f32 0.0, %v9269
  %v9271 = vpop.f32.mrf.mxu0
  %v9272 = vpop.f32.mrf.mxu0
  %v9273 = vadd.f32 0.0, %v9272
  %v9274 = vpop.f32.mrf.mxu0
  %9275 = vdwg.mxu0
  %v9276 = vadd.f32 %v9117, %v9270
  %v9277 = vadd.f32 %v9118, %v9273
  %9278 = vst [vmem:[%s8] sm:$0xff] %v9276
  %9279 = vst [vmem:[%s8 + $0x8] sm:$0xff] %v9277
  // Predicated region
  $region34: #{encoder_forward.1} parent=0 // pred_check
    _
  $region35: #{encoder_forward.1} parent=0 // pred_check_branch
    %9281 = sbr.rel (0) target = $region37
  $region36: #{encoder_forward.1} parent=0 // pred_region
    _
  $region37: #{encoder_forward.1} parent=0 // pred_fallthru
    _
  // Predicated region
  $region38: #{encoder_forward.1} parent=0 // pred_check
    _
  $region39: #{encoder_forward.1} parent=0 // pred_check_branch
    %9283 = sbr.rel (0) target = $region41
  $region40: #{encoder_forward.1} parent=0 // pred_region
    _
  $region41: #{encoder_forward.1} parent=0 // pred_fallthru
    _

</llo_original>
